<compile_context>
chip_gen: v6e
topology: v6e:2x2x1
jax: 0.10.0
libtpu: 0.0.40
codegen_flags: <defaults>
</compile_context>

<pallas_src>
import functools
import math

import jax
import jax.numpy as jnp
from jax.experimental import pallas as pl
from jax.experimental.pallas import tpu as pltpu


# --------------------------- in-kernel value helpers ------------------------

def _layernorm(x, gamma, beta, eps=1e-5):
    mean = jnp.mean(x, axis=-1, keepdims=True)
    c = x - mean
    var = jnp.mean(c * c, axis=-1, keepdims=True)          # biased var (torch LN)
    return (c * jax.lax.rsqrt(var + eps)) * gamma + beta


def _mha(q, k, v, wo, bo, mask, nhead):
    """Multi-head attention on flattened (batch*seq, E) operands.

    Batch separation / causality is carried entirely by the additive `mask`
    of shape (Mq, Mk).  Heads are combined directly through the output
    projection:  concat_h(o_h) @ Wo  ==  sum_h o_h @ Wo[h*dh:(h+1)*dh, :].
    """
    E = q.shape[-1]
    dh = E // nhead
    scale = 1.0 / math.sqrt(dh)
    acc = None
    for h in range(nhead):
        sl = slice(h * dh, (h + 1) * dh)
        qh, kh, vh = q[:, sl], k[:, sl], v[:, sl]
        # contract last dims of both operands (no explicit transpose)
        s = jax.lax.dot_general(qh, kh, (((1,), (1,)), ((), ())),
                                preferred_element_type=jnp.float32)
        s = s * scale + mask
        m = jnp.max(s, axis=-1, keepdims=True)
        p = jnp.exp(s - m)
        p = p / jnp.sum(p, axis=-1, keepdims=True)
        oh = jnp.dot(p, vh, preferred_element_type=jnp.float32)
        part = jnp.dot(oh, wo[sl, :], preferred_element_type=jnp.float32)
        acc = part if acc is None else acc + part
    return acc + bo


# ------------------------------ fused kernels --------------------------------

def _encoder_kernel(*refs, nhead):
    (src_ref, pe_ref, tw_ref, tb_ref, mask_ref,
     wqkv_ref, bqkv_ref, wo_ref, bo_ref, ln1g_ref, ln1b_ref,
     w1_ref, b1_ref, w2_ref, b2_ref, ln2g_ref, ln2b_ref,
     mem_ref, x_scr) = refs

    l = pl.program_id(0)
    E = tw_ref.shape[1]

    # step 0: fused input projection + positional encoding (dropout = id)
    @pl.when(l == 0)
    def _():
        x0 = jnp.dot(src_ref[...], tw_ref[...], preferred_element_type=jnp.float32)
        x_scr[...] = x0 + tb_ref[...] + pe_ref[...]

    x = x_scr[...]

    # --- self attention (fused QKV projection, post-norm residual) ---
    qkv = jnp.dot(x, wqkv_ref[0], preferred_element_type=jnp.float32) + bqkv_ref[0]
    q, k, v = qkv[:, :E], qkv[:, E:2 * E], qkv[:, 2 * E:]
    attn = _mha(q, k, v, wo_ref[0], bo_ref[0], mask_ref[...], nhead)
    x1 = _layernorm(x + attn, ln1g_ref[0], ln1b_ref[0])

    # --- feed-forward (ReLU), intermediate never leaves VMEM ---
    h = jnp.maximum(
        jnp.dot(x1, w1_ref[0], preferred_element_type=jnp.float32) + b1_ref[0], 0.0)
    ff = jnp.dot(h, w2_ref[0], preferred_element_type=jnp.float32) + b2_ref[0]
    x2 = _layernorm(x1 + ff, ln2g_ref[0], ln2b_ref[0])

    x_scr[...] = x2

    @pl.when(l == pl.num_programs(0) - 1)
    def _():
        mem_ref[...] = x2


def _decoder_kernel(*refs, nhead):
    (tgt_ref, pe_ref, tw_ref, tb_ref, mem_ref, smask_ref, cmask_ref,
     s_wqkv_ref, s_bqkv_ref, s_wo_ref, s_bo_ref, ln1g_ref, ln1b_ref,
     c_wq_ref, c_bq_ref, c_wkv_ref, c_bkv_ref, c_wo_ref, c_bo_ref,
     ln2g_ref, ln2b_ref, w1_ref, b1_ref, w2_ref, b2_ref, ln3g_ref, ln3b_ref,
     fc1w_ref, fc1b_ref, fc2w_ref, fc2b_ref,
     out_ref, x_scr) = refs

    l = pl.program_id(0)
    E = tw_ref.shape[1]

    # step 0: fused target projection + positional encoding (dropout = id)
    @pl.when(l == 0)
    def _():
        x0 = jnp.dot(tgt_ref[...], tw_ref[...], preferred_element_type=jnp.float32)
        x_scr[...] = x0 + tb_ref[...] + pe_ref[...]

    x = x_scr[...]
    mem = mem_ref[...]

    # --- masked self attention ---
    qkv = jnp.dot(x, s_wqkv_ref[0], preferred_element_type=jnp.float32) + s_bqkv_ref[0]
    q, k, v = qkv[:, :E], qkv[:, E:2 * E], qkv[:, 2 * E:]
    sa = _mha(q, k, v, s_wo_ref[0], s_bo_ref[0], smask_ref[...], nhead)
    x1 = _layernorm(x + sa, ln1g_ref[0], ln1b_ref[0])

    # --- cross attention over encoder memory (fused KV projection) ---
    qc = jnp.dot(x1, c_wq_ref[0], preferred_element_type=jnp.float32) + c_bq_ref[0]
    kv = jnp.dot(mem, c_wkv_ref[0], preferred_element_type=jnp.float32) + c_bkv_ref[0]
    kc, vc = kv[:, :E], kv[:, E:]
    ca = _mha(qc, kc, vc, c_wo_ref[0], c_bo_ref[0], cmask_ref[...], nhead)
    x2 = _layernorm(x1 + ca, ln2g_ref[0], ln2b_ref[0])

    # --- feed-forward (ReLU) ---
    h = jnp.maximum(
        jnp.dot(x2, w1_ref[0], preferred_element_type=jnp.float32) + b1_ref[0], 0.0)
    ff = jnp.dot(h, w2_ref[0], preferred_element_type=jnp.float32) + b2_ref[0]
    x3 = _layernorm(x2 + ff, ln3g_ref[0], ln3b_ref[0])

    x_scr[...] = x3

    # last layer: fused output head Linear(E,64)->ReLU->Dropout(id)->Linear(64,In)
    @pl.when(l == pl.num_programs(0) - 1)
    def _():
        hh = jnp.maximum(
            jnp.dot(x3, fc1w_ref[...], preferred_element_type=jnp.float32) + fc1b_ref[...], 0.0)
        out_ref[...] = (jnp.dot(hh, fc2w_ref[...], preferred_element_type=jnp.float32)
                        + fc2b_ref[...])


# ------------------------------- BlockSpecs ----------------------------------

def _rep_spec(shape):
    """Full-array block, constant across the layer grid."""
    nd = len(shape)
    return pl.BlockSpec(tuple(shape), lambda l, _nd=nd: (0,) * _nd)


def _layer_spec(shape):
    """Per-layer block of a (L, ...) stacked parameter."""
    nd = len(shape)
    return pl.BlockSpec((1,) + tuple(shape[1:]),
                        lambda l, _nd=nd: (l,) + (0,) * (_nd - 1))


_ENC_STACKED = ("wqkv", "bqkv", "wo", "bo", "ln1_g", "ln1_b",
                "w1", "b1", "w2", "b2", "ln2_g", "ln2_b")
_DEC_STACKED = ("s_wqkv", "s_bqkv", "s_wo", "s_bo", "ln1_g", "ln1_b",
                "c_wq", "c_bq", "c_wkv", "c_bkv", "c_wo", "c_bo",
                "ln2_g", "ln2_b", "w1", "b1", "w2", "b2", "ln3_g", "ln3_b")


# ------------------------------- forward pass ---------------------------------

def transformer_forward(params, src, tgt, tgt_mask, nhead):
    pe = params["pe"]
    trans_w, trans_b = params["trans_w"], params["trans_b"]
    B, Ss, In = src.shape
    St = tgt.shape[1]
    E = trans_w.shape[1]
    Ms, Mt = B * Ss, B * St
    L = params["enc"]["wqkv"].shape[0]
    NEG = jnp.float32(-1e30)

    src_flat = src.reshape(Ms, In)
    tgt_flat = tgt.reshape(Mt, In)

    # Reference quirk: pe indexed by BATCH index, broadcast over sequence.
    pe_src = jnp.repeat(pe[:B], Ss, axis=0)                 # (Ms, E)
    pe_tgt = jnp.repeat(pe[:B], St, axis=0)                 # (Mt, E)

    # Additive masks encode batch-block-diagonal structure (+ causal for tgt).
    batch_s = jnp.repeat(jnp.arange(B), Ss)
    batch_t = jnp.repeat(jnp.arange(B), St)
    enc_mask = jnp.where(batch_s[:, None] == batch_s[None, :], 0.0, NEG).astype(jnp.float32)
    self_mask = jnp.where(batch_t[:, None] == batch_t[None, :],
                          jnp.tile(tgt_mask.astype(jnp.float32), (B, B)),
                          NEG).astype(jnp.float32)
    cross_mask = jnp.where(batch_t[:, None] == batch_s[None, :], 0.0, NEG).astype(jnp.float32)

    # ---- encoder: one fused kernel, grid over layers ----
    enc_args = [src_flat, pe_src, trans_w, trans_b, enc_mask]
    enc_specs = [_rep_spec(a.shape) for a in enc_args]
    for name in _ENC_STACKED:
        arr = params["enc"][name]
        enc_args.append(arr)
        enc_specs.append(_layer_spec(arr.shape))

    memory = pl.pallas_call(
        functools.partial(_encoder_kernel, nhead=nhead),
        out_shape=jax.ShapeDtypeStruct((Ms, E), jnp.float32),
        grid=(L,),
        in_specs=enc_specs,
        out_specs=_rep_spec((Ms, E)),
        scratch_shapes=[pltpu.VMEM((Ms, E), jnp.float32)],
        compiler_params=pltpu.CompilerParams(dimension_semantics=("arbitrary",)),
    )(*enc_args)

    # ---- decoder + output head: one fused kernel, grid over layers ----
    dec_args = [tgt_flat, pe_tgt, trans_w, trans_b, memory, self_mask, cross_mask]
    dec_specs = [_rep_spec(a.shape) for a in dec_args]
    for name in _DEC_STACKED:
        arr = params["dec"][name]
        dec_args.append(arr)
        dec_specs.append(_layer_spec(arr.shape))
    for arr in (params["fc1_w"], params["fc1_b"], params["fc2_w"], params["fc2_b"]):
        dec_args.append(arr)
        dec_specs.append(_rep_spec(arr.shape))

    out = pl.pallas_call(
        functools.partial(_decoder_kernel, nhead=nhead),
        out_shape=jax.ShapeDtypeStruct((Mt, In), jnp.float32),
        grid=(L,),
        in_specs=dec_specs,
        out_specs=_rep_spec((Mt, In)),
        scratch_shapes=[pltpu.VMEM((Mt, E), jnp.float32)],
        compiler_params=pltpu.CompilerParams(dimension_semantics=("arbitrary",)),
    )(*dec_args)

    return out.reshape(B, St, In)


# ------------------------------- parameter init --------------------------------

def _w(key, shape, scale=0.05):
    return scale * jax.random.normal(key, shape, jnp.float32)


def make_pe(max_len, d_model):
    position = jnp.arange(max_len, dtype=jnp.float32)[:, None]
    div_term = jnp.exp(jnp.arange(0, d_model, 2, dtype=jnp.float32)
                       * (-math.log(10000.0) / d_model))
    pe = jnp.zeros((max_len, d_model), jnp.float32)
    pe = pe.at[:, 0::2].set(jnp.sin(position * div_term))
    pe = pe.at[:, 1::2].set(jnp.cos(position * div_term))
    return pe


def _enc_layer_params(key, E):
    ks = jax.random.split(key, 4)
    F = 4 * E
    ones = lambda n: jnp.ones((1, n), jnp.float32)
    zeros = lambda n: jnp.zeros((1, n), jnp.float32)
    return dict(
        wqkv=_w(ks[0], (E, 3 * E)), bqkv=zeros(3 * E),
        wo=_w(ks[1], (E, E)), bo=zeros(E),
        ln1_g=ones(E), ln1_b=zeros(E),
        w1=_w(ks[2], (E, F)), b1=zeros(F),
        w2=_w(ks[3], (F, E)), b2=zeros(E),
        ln2_g=ones(E), ln2_b=zeros(E),
    )


def _dec_layer_params(key, E):
    ks = jax.random.split(key, 7)
    F = 4 * E
    ones = lambda n: jnp.ones((1, n), jnp.float32)
    zeros = lambda n: jnp.zeros((1, n), jnp.float32)
    return dict(
        s_wqkv=_w(ks[0], (E, 3 * E)), s_bqkv=zeros(3 * E),
        s_wo=_w(ks[1], (E, E)), s_bo=zeros(E),
        ln1_g=ones(E), ln1_b=zeros(E),
        c_wq=_w(ks[2], (E, E)), c_bq=zeros(E),
        c_wkv=_w(ks[3], (E, 2 * E)), c_bkv=zeros(2 * E),
        c_wo=_w(ks[4], (E, E)), c_bo=zeros(E),
        ln2_g=ones(E), ln2_b=zeros(E),
        w1=_w(ks[5], (E, F)), b1=zeros(F),
        w2=_w(ks[6], (F, E)), b2=zeros(E),
        ln3_g=ones(E), ln3_b=zeros(E),
    )


def init_params(key, input_size, d_model, nhead, num_layers, max_len=64):
    ks = jax.random.split(key, 3 + 2 * num_layers)
    enc_layers = [_enc_layer_params(ks[3 + i], d_model) for i in range(num_layers)]
    dec_layers = [_dec_layer_params(ks[3 + num_layers + i], d_model) for i in range(num_layers)]
    stack = lambda layers: {n: jnp.stack([lp[n] for lp in layers]) for n in layers[0]}
    return dict(
        trans_w=_w(ks[0], (input_size, d_model)),
        trans_b=jnp.zeros((1, d_model), jnp.float32),
        pe=make_pe(max_len, d_model),
        enc=stack(enc_layers),
        dec=stack(dec_layers),
        fc1_w=_w(ks[1], (d_model, 64)), fc1_b=jnp.zeros((1, 64), jnp.float32),
        fc2_w=_w(ks[2], (64, input_size)), fc2_b=jnp.zeros((1, input_size), jnp.float32),
    )


# ---------------------------------- main ---------------------------------------

if __name__ == "__main__":
    B, S_src, S_tgt = 2, 8, 8
    input_size, d_model, nhead, num_layers = 4, 32, 4, 2

    key = jax.random.PRNGKey(0)
    kp, ks, kt = jax.random.split(key, 3)
    params = init_params(kp, input_size, d_model, nhead, num_layers, max_len=64)

    src = jax.random.normal(ks, (B, S_src, input_size), jnp.float32)
    tgt = jax.random.normal(kt, (B, S_tgt, input_size), jnp.float32)
    # Causal mask (nn.Transformer.generate_square_subsequent_mask); -1e9 stands
    # in for -inf as the masked additive logit.
    tgt_mask = jnp.where(jnp.triu(jnp.ones((S_tgt, S_tgt), bool), k=1),
                         -1e9, 0.0).astype(jnp.float32)

    # TODO(synk): nn.Dropout layers (p=0.1/0.2/0.5) are treated as eval-mode identities.
    fwd = jax.jit(functools.partial(transformer_forward, nhead=nhead))
    out = fwd(params, src, tgt, tgt_mask)
    jax.block_until_ready(out)
    assert out.shape == (B, S_tgt, input_size) and out.dtype == jnp.float32
    print("KERNEL_OK")
</pallas_src>

<mosaic_0001>
module attributes {stable_mosaic.version = 11 : i64} {
  func.func @_encoder_kernel(%arg0: i32, %arg1: memref<16x4xf32, #tpu.memory_space<vmem>>, %arg2: memref<16x32xf32, #tpu.memory_space<vmem>>, %arg3: memref<4x32xf32, #tpu.memory_space<vmem>>, %arg4: memref<1x32xf32, #tpu.memory_space<vmem>>, %arg5: memref<16x16xf32, #tpu.memory_space<vmem>>, %arg6: memref<1x32x96xf32, #tpu.memory_space<vmem>>, %arg7: memref<1x1x96xf32, #tpu.memory_space<vmem>>, %arg8: memref<1x32x32xf32, #tpu.memory_space<vmem>>, %arg9: memref<1x1x32xf32, #tpu.memory_space<vmem>>, %arg10: memref<1x1x32xf32, #tpu.memory_space<vmem>>, %arg11: memref<1x1x32xf32, #tpu.memory_space<vmem>>, %arg12: memref<1x32x128xf32, #tpu.memory_space<vmem>>, %arg13: memref<1x1x128xf32, #tpu.memory_space<vmem>>, %arg14: memref<1x128x32xf32, #tpu.memory_space<vmem>>, %arg15: memref<1x1x32xf32, #tpu.memory_space<vmem>>, %arg16: memref<1x1x32xf32, #tpu.memory_space<vmem>>, %arg17: memref<1x1x32xf32, #tpu.memory_space<vmem>>, %arg18: memref<16x32xf32, #tpu.memory_space<vmem>>, %arg19: memref<16x32xf32, #tpu.memory_space<vmem>>) attributes {dimension_semantics = [#tpu.dimension_semantics<arbitrary>], iteration_bounds = array<i64: 2>, scalar_prefetch = 0 : i64, scratch_operands = 1 : i64, tpu.core_type = #tpu.core_type<tc>, window_params = [{pipeline_mode = #tpu.pipeline_mode<synchronous>, transform_indices = @transform_0, window_bounds = array<i64: 16, 4>}, {pipeline_mode = #tpu.pipeline_mode<synchronous>, transform_indices = @transform_1, window_bounds = array<i64: 16, 32>}, {pipeline_mode = #tpu.pipeline_mode<synchronous>, transform_indices = @transform_2, window_bounds = array<i64: 4, 32>}, {pipeline_mode = #tpu.pipeline_mode<synchronous>, transform_indices = @transform_3, window_bounds = array<i64: 1, 32>}, {pipeline_mode = #tpu.pipeline_mode<synchronous>, transform_indices = @transform_4, window_bounds = array<i64: 16, 16>}, {transform_indices = @transform_5, window_bounds = array<i64: 1, 32, 96>}, {transform_indices = @transform_6, window_bounds = array<i64: 1, 1, 96>}, {transform_indices = @transform_7, window_bounds = array<i64: 1, 32, 32>}, {transform_indices = @transform_8, window_bounds = array<i64: 1, 1, 32>}, {transform_indices = @transform_9, window_bounds = array<i64: 1, 1, 32>}, {transform_indices = @transform_10, window_bounds = array<i64: 1, 1, 32>}, {transform_indices = @transform_11, window_bounds = array<i64: 1, 32, 128>}, {transform_indices = @transform_12, window_bounds = array<i64: 1, 1, 128>}, {transform_indices = @transform_13, window_bounds = array<i64: 1, 128, 32>}, {transform_indices = @transform_14, window_bounds = array<i64: 1, 1, 32>}, {transform_indices = @transform_15, window_bounds = array<i64: 1, 1, 32>}, {transform_indices = @transform_16, window_bounds = array<i64: 1, 1, 32>}, {pipeline_mode = #tpu.pipeline_mode<synchronous>, transform_indices = @transform_17, window_bounds = array<i64: 16, 32>}]} {
    %c0_i32 = arith.constant 0 : i32
    %0 = arith.cmpi eq, %arg0, %c0_i32 : i32
    %1 = arith.extui %0 : i1 to i32
    %c0_i32_0 = arith.constant 0 : i32
    %2 = arith.cmpi ne, %1, %c0_i32_0 : i32
    scf.if %2 {
      %c0_80 = arith.constant 0 : index
      %c0_81 = arith.constant 0 : index
      %170 = vector.load %arg1[%c0_80, %c0_81] : memref<16x4xf32, #tpu.memory_space<vmem>>, vector<16x4xf32>
      %c0_82 = arith.constant 0 : index
      %c0_83 = arith.constant 0 : index
      %171 = vector.load %arg3[%c0_82, %c0_83] : memref<4x32xf32, #tpu.memory_space<vmem>>, vector<4x32xf32>
      %cst_84 = arith.constant dense<0.000000e+00> : vector<16x32xf32>
      %172 = tpu.matmul %170, %171, %cst_84 {dimension_numbers = #tpu.dot_dimension_numbers<[1], [0], [0], [1], [0, 0, 1, 1], [], []>} : vector<16x4xf32>, vector<4x32xf32>, vector<16x32xf32> -> vector<16x32xf32>
      %c0_85 = arith.constant 0 : index
      %c0_86 = arith.constant 0 : index
      %173 = vector.load %arg4[%c0_85, %c0_86] : memref<1x32xf32, #tpu.memory_space<vmem>>, vector<1x32xf32>
      %174 = vector.broadcast %173 : vector<1x32xf32> to vector<16x32xf32>
      %175 = arith.addf %172, %174 : vector<16x32xf32>
      %c0_87 = arith.constant 0 : index
      %c0_88 = arith.constant 0 : index
      %176 = vector.load %arg2[%c0_87, %c0_88] : memref<16x32xf32, #tpu.memory_space<vmem>>, vector<16x32xf32>
      %177 = arith.addf %175, %176 : vector<16x32xf32>
      %c0_89 = arith.constant 0 : index
      %c0_90 = arith.constant 0 : index
      %178 = vector.load %arg19[%c0_89, %c0_90] : memref<16x32xf32, #tpu.memory_space<vmem>>, vector<16x32xf32>
      tpu.vector_store %arg19[%c0_89, %c0_90], %177 {strides = array<i32>} : memref<16x32xf32, #tpu.memory_space<vmem>>, vector<16x32xf32>,
    } else {
    }
    %c0 = arith.constant 0 : index
    %c0_1 = arith.constant 0 : index
    %3 = vector.load %arg19[%c0, %c0_1] : memref<16x32xf32, #tpu.memory_space<vmem>>, vector<16x32xf32>
    %c0_2 = arith.constant 0 : index
    %c0_3 = arith.constant 0 : index
    %c0_4 = arith.constant 0 : index
    %4 = vector.load %arg6[%c0_2, %c0_3, %c0_4] : memref<1x32x96xf32, #tpu.memory_space<vmem>>, vector<1x32x96xf32>
    %5 = vector.shape_cast %4 : vector<1x32x96xf32> to vector<32x96xf32>
    %cst = arith.constant dense<0.000000e+00> : vector<16x96xf32>
    %6 = tpu.matmul %3, %5, %cst {dimension_numbers = #tpu.dot_dimension_numbers<[1], [0], [0], [1], [0, 0, 1, 1], [], []>} : vector<16x32xf32>, vector<32x96xf32>, vector<16x96xf32> -> vector<16x96xf32>
    %c0_5 = arith.constant 0 : index
    %c0_6 = arith.constant 0 : index
    %c0_7 = arith.constant 0 : index
    %7 = vector.load %arg7[%c0_5, %c0_6, %c0_7] : memref<1x1x96xf32, #tpu.memory_space<vmem>>, vector<1x1x96xf32>
    %8 = vector.shape_cast %7 : vector<1x1x96xf32> to vector<1x96xf32>
    %9 = vector.broadcast %8 : vector<1x96xf32> to vector<16x96xf32>
    %10 = arith.addf %6, %9 : vector<16x96xf32>
    %11 = vector.extract_strided_slice %10 {offsets = [0, 0], sizes = [16, 32], strides = [1, 1]} : vector<16x96xf32> to vector<16x32xf32>
    %12 = vector.extract_strided_slice %10 {offsets = [0, 32], sizes = [16, 32], strides = [1, 1]} : vector<16x96xf32> to vector<16x32xf32>
    %13 = vector.extract_strided_slice %10 {offsets = [0, 64], sizes = [16, 32], strides = [1, 1]} : vector<16x96xf32> to vector<16x32xf32>
    %c0_8 = arith.constant 0 : index
    %c0_9 = arith.constant 0 : index
    %c0_10 = arith.constant 0 : index
    %14 = vector.load %arg8[%c0_8, %c0_9, %c0_10] : memref<1x32x32xf32, #tpu.memory_space<vmem>>, vector<1x32x32xf32>
    %15 = vector.shape_cast %14 : vector<1x32x32xf32> to vector<32x32xf32>
    %c0_11 = arith.constant 0 : index
    %c0_12 = arith.constant 0 : index
    %c0_13 = arith.constant 0 : index
    %16 = vector.load %arg9[%c0_11, %c0_12, %c0_13] : memref<1x1x32xf32, #tpu.memory_space<vmem>>, vector<1x1x32xf32>
    %17 = vector.shape_cast %16 : vector<1x1x32xf32> to vector<1x32xf32>
    %c0_14 = arith.constant 0 : index
    %c0_15 = arith.constant 0 : index
    %18 = vector.load %arg5[%c0_14, %c0_15] : memref<16x16xf32, #tpu.memory_space<vmem>>, vector<16x16xf32>
    %19 = vector.extract_strided_slice %11 {offsets = [0, 0], sizes = [16, 8], strides = [1, 1]} : vector<16x32xf32> to vector<16x8xf32>
    %20 = vector.extract_strided_slice %12 {offsets = [0, 0], sizes = [16, 8], strides = [1, 1]} : vector<16x32xf32> to vector<16x8xf32>
    %21 = vector.extract_strided_slice %13 {offsets = [0, 0], sizes = [16, 8], strides = [1, 1]} : vector<16x32xf32> to vector<16x8xf32>
    %cst_16 = arith.constant dense<0.000000e+00> : vector<16x16xf32>
    %22 = tpu.matmul %19, %20, %cst_16 {dimension_numbers = #tpu.dot_dimension_numbers<[1], [1], [0], [0], [0, 0, 1, 0], [], []>} : vector<16x8xf32>, vector<16x8xf32>, vector<16x16xf32> -> vector<16x16xf32>
    %cst_17 = arith.constant 0.353553385 : f32
    %23 = vector.broadcast %cst_17 : f32 to vector<16x16xf32>
    %24 = arith.mulf %22, %23 : vector<16x16xf32>
    %25 = arith.addf %24, %18 : vector<16x16xf32>
    %cst_18 = arith.constant dense<0xFF800000> : vector<16xf32>
    %26 = vector.multi_reduction <maximumf>, %25, %cst_18 [1] : vector<16x16xf32> to vector<16xf32>
    %27 = vector.shape_cast %26 : vector<16xf32> to vector<16x1xf32>
    %28 = vector.broadcast %27 : vector<16x1xf32> to vector<16x16xf32>
    %29 = arith.subf %25, %28 : vector<16x16xf32>
    %30 = math.exp %29 : vector<16x16xf32>
    %cst_19 = arith.constant dense<0.000000e+00> : vector<16xf32>
    %31 = vector.multi_reduction <add>, %30, %cst_19 [1] : vector<16x16xf32> to vector<16xf32>
    %32 = vector.shape_cast %31 : vector<16xf32> to vector<16x1xf32>
    %33 = vector.broadcast %32 : vector<16x1xf32> to vector<16x16xf32>
    %34 = arith.divf %30, %33 : vector<16x16xf32>
    %cst_20 = arith.constant dense<0.000000e+00> : vector<16x8xf32>
    %35 = tpu.matmul %34, %21, %cst_20 {dimension_numbers = #tpu.dot_dimension_numbers<[1], [0], [0], [1], [0, 0, 1, 1], [], []>} : vector<16x16xf32>, vector<16x8xf32>, vector<16x8xf32> -> vector<16x8xf32>
    %36 = vector.extract_strided_slice %15 {offsets = [0, 0], sizes = [8, 32], strides = [1, 1]} : vector<32x32xf32> to vector<8x32xf32>
    %cst_21 = arith.constant dense<0.000000e+00> : vector<16x32xf32>
    %37 = tpu.matmul %35, %36, %cst_21 {dimension_numbers = #tpu.dot_dimension_numbers<[1], [0], [0], [1], [0, 0, 1, 1], [], []>} : vector<16x8xf32>, vector<8x32xf32>, vector<16x32xf32> -> vector<16x32xf32>
    %38 = vector.extract_strided_slice %11 {offsets = [0, 8], sizes = [16, 8], strides = [1, 1]} : vector<16x32xf32> to vector<16x8xf32>
    %39 = vector.extract_strided_slice %12 {offsets = [0, 8], sizes = [16, 8], strides = [1, 1]} : vector<16x32xf32> to vector<16x8xf32>
    %40 = vector.extract_strided_slice %13 {offsets = [0, 8], sizes = [16, 8], strides = [1, 1]} : vector<16x32xf32> to vector<16x8xf32>
    %cst_22 = arith.constant dense<0.000000e+00> : vector<16x16xf32>
    %41 = tpu.matmul %38, %39, %cst_22 {dimension_numbers = #tpu.dot_dimension_numbers<[1], [1], [0], [0], [0, 0, 1, 0], [], []>} : vector<16x8xf32>, vector<16x8xf32>, vector<16x16xf32> -> vector<16x16xf32>
    %cst_23 = arith.constant 0.353553385 : f32
    %42 = vector.broadcast %cst_23 : f32 to vector<16x16xf32>
    %43 = arith.mulf %41, %42 : vector<16x16xf32>
    %44 = arith.addf %43, %18 : vector<16x16xf32>
    %cst_24 = arith.constant dense<0xFF800000> : vector<16xf32>
    %45 = vector.multi_reduction <maximumf>, %44, %cst_24 [1] : vector<16x16xf32> to vector<16xf32>
    %46 = vector.shape_cast %45 : vector<16xf32> to vector<16x1xf32>
    %47 = vector.broadcast %46 : vector<16x1xf32> to vector<16x16xf32>
    %48 = arith.subf %44, %47 : vector<16x16xf32>
    %49 = math.exp %48 : vector<16x16xf32>
    %cst_25 = arith.constant dense<0.000000e+00> : vector<16xf32>
    %50 = vector.multi_reduction <add>, %49, %cst_25 [1] : vector<16x16xf32> to vector<16xf32>
    %51 = vector.shape_cast %50 : vector<16xf32> to vector<16x1xf32>
    %52 = vector.broadcast %51 : vector<16x1xf32> to vector<16x16xf32>
    %53 = arith.divf %49, %52 : vector<16x16xf32>
    %cst_26 = arith.constant dense<0.000000e+00> : vector<16x8xf32>
    %54 = tpu.matmul %53, %40, %cst_26 {dimension_numbers = #tpu.dot_dimension_numbers<[1], [0], [0], [1], [0, 0, 1, 1], [], []>} : vector<16x16xf32>, vector<16x8xf32>, vector<16x8xf32> -> vector<16x8xf32>
    %55 = vector.extract_strided_slice %15 {offsets = [8, 0], sizes = [8, 32], strides = [1, 1]} : vector<32x32xf32> to vector<8x32xf32>
    %cst_27 = arith.constant dense<0.000000e+00> : vector<16x32xf32>
    %56 = tpu.matmul %54, %55, %cst_27 {dimension_numbers = #tpu.dot_dimension_numbers<[1], [0], [0], [1], [0, 0, 1, 1], [], []>} : vector<16x8xf32>, vector<8x32xf32>, vector<16x32xf32> -> vector<16x32xf32>
    %57 = arith.addf %37, %56 : vector<16x32xf32>
    %58 = vector.extract_strided_slice %11 {offsets = [0, 16], sizes = [16, 8], strides = [1, 1]} : vector<16x32xf32> to vector<16x8xf32>
    %59 = vector.extract_strided_slice %12 {offsets = [0, 16], sizes = [16, 8], strides = [1, 1]} : vector<16x32xf32> to vector<16x8xf32>
    %60 = vector.extract_strided_slice %13 {offsets = [0, 16], sizes = [16, 8], strides = [1, 1]} : vector<16x32xf32> to vector<16x8xf32>
    %cst_28 = arith.constant dense<0.000000e+00> : vector<16x16xf32>
    %61 = tpu.matmul %58, %59, %cst_28 {dimension_numbers = #tpu.dot_dimension_numbers<[1], [1], [0], [0], [0, 0, 1, 0], [], []>} : vector<16x8xf32>, vector<16x8xf32>, vector<16x16xf32> -> vector<16x16xf32>
    %cst_29 = arith.constant 0.353553385 : f32
    %62 = vector.broadcast %cst_29 : f32 to vector<16x16xf32>
    %63 = arith.mulf %61, %62 : vector<16x16xf32>
    %64 = arith.addf %63, %18 : vector<16x16xf32>
    %cst_30 = arith.constant dense<0xFF800000> : vector<16xf32>
    %65 = vector.multi_reduction <maximumf>, %64, %cst_30 [1] : vector<16x16xf32> to vector<16xf32>
    %66 = vector.shape_cast %65 : vector<16xf32> to vector<16x1xf32>
    %67 = vector.broadcast %66 : vector<16x1xf32> to vector<16x16xf32>
    %68 = arith.subf %64, %67 : vector<16x16xf32>
    %69 = math.exp %68 : vector<16x16xf32>
    %cst_31 = arith.constant dense<0.000000e+00> : vector<16xf32>
    %70 = vector.multi_reduction <add>, %69, %cst_31 [1] : vector<16x16xf32> to vector<16xf32>
    %71 = vector.shape_cast %70 : vector<16xf32> to vector<16x1xf32>
    %72 = vector.broadcast %71 : vector<16x1xf32> to vector<16x16xf32>
    %73 = arith.divf %69, %72 : vector<16x16xf32>
    %cst_32 = arith.constant dense<0.000000e+00> : vector<16x8xf32>
    %74 = tpu.matmul %73, %60, %cst_32 {dimension_numbers = #tpu.dot_dimension_numbers<[1], [0], [0], [1], [0, 0, 1, 1], [], []>} : vector<16x16xf32>, vector<16x8xf32>, vector<16x8xf32> -> vector<16x8xf32>
    %75 = vector.extract_strided_slice %15 {offsets = [16, 0], sizes = [8, 32], strides = [1, 1]} : vector<32x32xf32> to vector<8x32xf32>
    %cst_33 = arith.constant dense<0.000000e+00> : vector<16x32xf32>
    %76 = tpu.matmul %74, %75, %cst_33 {dimension_numbers = #tpu.dot_dimension_numbers<[1], [0], [0], [1], [0, 0, 1, 1], [], []>} : vector<16x8xf32>, vector<8x32xf32>, vector<16x32xf32> -> vector<16x32xf32>
    %77 = arith.addf %57, %76 : vector<16x32xf32>
    %78 = vector.extract_strided_slice %11 {offsets = [0, 24], sizes = [16, 8], strides = [1, 1]} : vector<16x32xf32> to vector<16x8xf32>
    %79 = vector.extract_strided_slice %12 {offsets = [0, 24], sizes = [16, 8], strides = [1, 1]} : vector<16x32xf32> to vector<16x8xf32>
    %80 = vector.extract_strided_slice %13 {offsets = [0, 24], sizes = [16, 8], strides = [1, 1]} : vector<16x32xf32> to vector<16x8xf32>
    %cst_34 = arith.constant dense<0.000000e+00> : vector<16x16xf32>
    %81 = tpu.matmul %78, %79, %cst_34 {dimension_numbers = #tpu.dot_dimension_numbers<[1], [1], [0], [0], [0, 0, 1, 0], [], []>} : vector<16x8xf32>, vector<16x8xf32>, vector<16x16xf32> -> vector<16x16xf32>
    %cst_35 = arith.constant 0.353553385 : f32
    %82 = vector.broadcast %cst_35 : f32 to vector<16x16xf32>
    %83 = arith.mulf %81, %82 : vector<16x16xf32>
    %84 = arith.addf %83, %18 : vector<16x16xf32>
    %cst_36 = arith.constant dense<0xFF800000> : vector<16xf32>
    %85 = vector.multi_reduction <maximumf>, %84, %cst_36 [1] : vector<16x16xf32> to vector<16xf32>
    %86 = vector.shape_cast %85 : vector<16xf32> to vector<16x1xf32>
    %87 = vector.broadcast %86 : vector<16x1xf32> to vector<16x16xf32>
    %88 = arith.subf %84, %87 : vector<16x16xf32>
    %89 = math.exp %88 : vector<16x16xf32>
    %cst_37 = arith.constant dense<0.000000e+00> : vector<16xf32>
    %90 = vector.multi_reduction <add>, %89, %cst_37 [1] : vector<16x16xf32> to vector<16xf32>
    %91 = vector.shape_cast %90 : vector<16xf32> to vector<16x1xf32>
    %92 = vector.broadcast %91 : vector<16x1xf32> to vector<16x16xf32>
    %93 = arith.divf %89, %92 : vector<16x16xf32>
    %cst_38 = arith.constant dense<0.000000e+00> : vector<16x8xf32>
    %94 = tpu.matmul %93, %80, %cst_38 {dimension_numbers = #tpu.dot_dimension_numbers<[1], [0], [0], [1], [0, 0, 1, 1], [], []>} : vector<16x16xf32>, vector<16x8xf32>, vector<16x8xf32> -> vector<16x8xf32>
    %95 = vector.extract_strided_slice %15 {offsets = [24, 0], sizes = [8, 32], strides = [1, 1]} : vector<32x32xf32> to vector<8x32xf32>
    %cst_39 = arith.constant dense<0.000000e+00> : vector<16x32xf32>
    %96 = tpu.matmul %94, %95, %cst_39 {dimension_numbers = #tpu.dot_dimension_numbers<[1], [0], [0], [1], [0, 0, 1, 1], [], []>} : vector<16x8xf32>, vector<8x32xf32>, vector<16x32xf32> -> vector<16x32xf32>
    %97 = arith.addf %77, %96 : vector<16x32xf32>
    %98 = vector.broadcast %17 : vector<1x32xf32> to vector<16x32xf32>
    %99 = arith.addf %97, %98 : vector<16x32xf32>
    %100 = arith.addf %3, %99 : vector<16x32xf32>
    %c0_40 = arith.constant 0 : index
    %c0_41 = arith.constant 0 : index
    %c0_42 = arith.constant 0 : index
    %101 = vector.load %arg10[%c0_40, %c0_41, %c0_42] : memref<1x1x32xf32, #tpu.memory_space<vmem>>, vector<1x1x32xf32>
    %102 = vector.shape_cast %101 : vector<1x1x32xf32> to vector<1x32xf32>
    %c0_43 = arith.constant 0 : index
    %c0_44 = arith.constant 0 : index
    %c0_45 = arith.constant 0 : index
    %103 = vector.load %arg11[%c0_43, %c0_44, %c0_45] : memref<1x1x32xf32, #tpu.memory_space<vmem>>, vector<1x1x32xf32>
    %104 = vector.shape_cast %103 : vector<1x1x32xf32> to vector<1x32xf32>
    %cst_46 = arith.constant dense<0.000000e+00> : vector<16xf32>
    %105 = vector.multi_reduction <add>, %100, %cst_46 [1] : vector<16x32xf32> to vector<16xf32>
    %106 = vector.shape_cast %105 : vector<16xf32> to vector<16x1xf32>
    %cst_47 = arith.constant 3.200000e+01 : f32
    %107 = vector.broadcast %cst_47 : f32 to vector<16x1xf32>
    %108 = arith.divf %106, %107 : vector<16x1xf32>
    %109 = vector.broadcast %108 : vector<16x1xf32> to vector<16x32xf32>
    %110 = arith.subf %100, %109 : vector<16x32xf32>
    %111 = arith.mulf %110, %110 : vector<16x32xf32>
    %cst_48 = arith.constant dense<0.000000e+00> : vector<16xf32>
    %112 = vector.multi_reduction <add>, %111, %cst_48 [1] : vector<16x32xf32> to vector<16xf32>
    %113 = vector.shape_cast %112 : vector<16xf32> to vector<16x1xf32>
    %cst_49 = arith.constant 3.200000e+01 : f32
    %114 = vector.broadcast %cst_49 : f32 to vector<16x1xf32>
    %115 = arith.divf %113, %114 : vector<16x1xf32>
    %cst_50 = arith.constant 9.99999974E-6 : f32
    %116 = vector.broadcast %cst_50 : f32 to vector<16x1xf32>
    %117 = arith.addf %115, %116 : vector<16x1xf32>
    %118 = math.rsqrt %117 : vector<16x1xf32>
    %119 = vector.broadcast %118 : vector<16x1xf32> to vector<16x32xf32>
    %120 = arith.mulf %110, %119 : vector<16x32xf32>
    %121 = vector.broadcast %102 : vector<1x32xf32> to vector<16x32xf32>
    %122 = arith.mulf %120, %121 : vector<16x32xf32>
    %123 = vector.broadcast %104 : vector<1x32xf32> to vector<16x32xf32>
    %124 = arith.addf %122, %123 : vector<16x32xf32>
    %c0_51 = arith.constant 0 : index
    %c0_52 = arith.constant 0 : index
    %c0_53 = arith.constant 0 : index
    %125 = vector.load %arg12[%c0_51, %c0_52, %c0_53] : memref<1x32x128xf32, #tpu.memory_space<vmem>>, vector<1x32x128xf32>
    %126 = vector.shape_cast %125 : vector<1x32x128xf32> to vector<32x128xf32>
    %cst_54 = arith.constant dense<0.000000e+00> : vector<16x128xf32>
    %127 = tpu.matmul %124, %126, %cst_54 {dimension_numbers = #tpu.dot_dimension_numbers<[1], [0], [0], [1], [0, 0, 1, 1], [], []>} : vector<16x32xf32>, vector<32x128xf32>, vector<16x128xf32> -> vector<16x128xf32>
    %c0_55 = arith.constant 0 : index
    %c0_56 = arith.constant 0 : index
    %c0_57 = arith.constant 0 : index
    %128 = vector.load %arg13[%c0_55, %c0_56, %c0_57] : memref<1x1x128xf32, #tpu.memory_space<vmem>>, vector<1x1x128xf32>
    %129 = vector.shape_cast %128 : vector<1x1x128xf32> to vector<1x128xf32>
    %130 = vector.broadcast %129 : vector<1x128xf32> to vector<16x128xf32>
    %131 = arith.addf %127, %130 : vector<16x128xf32>
    %cst_58 = arith.constant 0.000000e+00 : f32
    %132 = vector.broadcast %cst_58 : f32 to vector<16x128xf32>
    %133 = arith.maximumf %131, %132 : vector<16x128xf32>
    %c0_59 = arith.constant 0 : index
    %c0_60 = arith.constant 0 : index
    %c0_61 = arith.constant 0 : index
    %134 = vector.load %arg14[%c0_59, %c0_60, %c0_61] : memref<1x128x32xf32, #tpu.memory_space<vmem>>, vector<1x128x32xf32>
    %135 = vector.shape_cast %134 : vector<1x128x32xf32> to vector<128x32xf32>
    %cst_62 = arith.constant dense<0.000000e+00> : vector<16x32xf32>
    %136 = tpu.matmul %133, %135, %cst_62 {dimension_numbers = #tpu.dot_dimension_numbers<[1], [0], [0], [1], [0, 0, 1, 1], [], []>} : vector<16x128xf32>, vector<128x32xf32>, vector<16x32xf32> -> vector<16x32xf32>
    %c0_63 = arith.constant 0 : index
    %c0_64 = arith.constant 0 : index
    %c0_65 = arith.constant 0 : index
    %137 = vector.load %arg15[%c0_63, %c0_64, %c0_65] : memref<1x1x32xf32, #tpu.memory_space<vmem>>, vector<1x1x32xf32>
    %138 = vector.shape_cast %137 : vector<1x1x32xf32> to vector<1x32xf32>
    %139 = vector.broadcast %138 : vector<1x32xf32> to vector<16x32xf32>
    %140 = arith.addf %136, %139 : vector<16x32xf32>
    %141 = arith.addf %124, %140 : vector<16x32xf32>
    %c0_66 = arith.constant 0 : index
    %c0_67 = arith.constant 0 : index
    %c0_68 = arith.constant 0 : index
    %142 = vector.load %arg16[%c0_66, %c0_67, %c0_68] : memref<1x1x32xf32, #tpu.memory_space<vmem>>, vector<1x1x32xf32>
    %143 = vector.shape_cast %142 : vector<1x1x32xf32> to vector<1x32xf32>
    %c0_69 = arith.constant 0 : index
    %c0_70 = arith.constant 0 : index
    %c0_71 = arith.constant 0 : index
    %144 = vector.load %arg17[%c0_69, %c0_70, %c0_71] : memref<1x1x32xf32, #tpu.memory_space<vmem>>, vector<1x1x32xf32>
    %145 = vector.shape_cast %144 : vector<1x1x32xf32> to vector<1x32xf32>
    %cst_72 = arith.constant dense<0.000000e+00> : vector<16xf32>
    %146 = vector.multi_reduction <add>, %141, %cst_72 [1] : vector<16x32xf32> to vector<16xf32>
    %147 = vector.shape_cast %146 : vector<16xf32> to vector<16x1xf32>
    %cst_73 = arith.constant 3.200000e+01 : f32
    %148 = vector.broadcast %cst_73 : f32 to vector<16x1xf32>
    %149 = arith.divf %147, %148 : vector<16x1xf32>
    %150 = vector.broadcast %149 : vector<16x1xf32> to vector<16x32xf32>
    %151 = arith.subf %141, %150 : vector<16x32xf32>
    %152 = arith.mulf %151, %151 : vector<16x32xf32>
    %cst_74 = arith.constant dense<0.000000e+00> : vector<16xf32>
    %153 = vector.multi_reduction <add>, %152, %cst_74 [1] : vector<16x32xf32> to vector<16xf32>
    %154 = vector.shape_cast %153 : vector<16xf32> to vector<16x1xf32>
    %cst_75 = arith.constant 3.200000e+01 : f32
    %155 = vector.broadcast %cst_75 : f32 to vector<16x1xf32>
    %156 = arith.divf %154, %155 : vector<16x1xf32>
    %cst_76 = arith.constant 9.99999974E-6 : f32
    %157 = vector.broadcast %cst_76 : f32 to vector<16x1xf32>
    %158 = arith.addf %156, %157 : vector<16x1xf32>
    %159 = math.rsqrt %158 : vector<16x1xf32>
    %160 = vector.broadcast %159 : vector<16x1xf32> to vector<16x32xf32>
    %161 = arith.mulf %151, %160 : vector<16x32xf32>
    %162 = vector.broadcast %143 : vector<1x32xf32> to vector<16x32xf32>
    %163 = arith.mulf %161, %162 : vector<16x32xf32>
    %164 = vector.broadcast %145 : vector<1x32xf32> to vector<16x32xf32>
    %165 = arith.addf %163, %164 : vector<16x32xf32>
    %c0_77 = arith.constant 0 : index
    %c0_78 = arith.constant 0 : index
    %166 = vector.load %arg19[%c0_77, %c0_78] : memref<16x32xf32, #tpu.memory_space<vmem>>, vector<16x32xf32>
    tpu.vector_store %arg19[%c0_77, %c0_78], %165 {strides = array<i32>} : memref<16x32xf32, #tpu.memory_space<vmem>>, vector<16x32xf32>,
    %c1_i32 = arith.constant 1 : i32
    %167 = arith.cmpi eq, %arg0, %c1_i32 : i32
    %168 = arith.extui %167 : i1 to i32
    %c0_i32_79 = arith.constant 0 : i32
    %169 = arith.cmpi ne, %168, %c0_i32_79 : i32
    scf.if %169 {
      %c0_80 = arith.constant 0 : index
      %c0_81 = arith.constant 0 : index
      %170 = vector.load %arg18[%c0_80, %c0_81] : memref<16x32xf32, #tpu.memory_space<vmem>>, vector<16x32xf32>
      tpu.vector_store %arg18[%c0_80, %c0_81], %165 {strides = array<i32>} : memref<16x32xf32, #tpu.memory_space<vmem>>, vector<16x32xf32>,
    } else {
    }
    return
  }
  func.func @transform_0(%arg0: i32) -> (i32, i32) {
    %c0_i32 = arith.constant 0 : i32
    %c0_i32_0 = arith.constant 0 : i32
    %c0_i32_1 = arith.constant 0 : i32
    return %c0_i32, %c0_i32_0 : i32, i32
  }
  func.func @transform_1(%arg0: i32) -> (i32, i32) {
    %c0_i32 = arith.constant 0 : i32
    %c0_i32_0 = arith.constant 0 : i32
    %c0_i32_1 = arith.constant 0 : i32
    return %c0_i32, %c0_i32_0 : i32, i32
  }
  func.func @transform_2(%arg0: i32) -> (i32, i32) {
    %c0_i32 = arith.constant 0 : i32
    %c0_i32_0 = arith.constant 0 : i32
    %c0_i32_1 = arith.constant 0 : i32
    return %c0_i32, %c0_i32_0 : i32, i32
  }
  func.func @transform_3(%arg0: i32) -> (i32, i32) {
    %c0_i32 = arith.constant 0 : i32
    %c0_i32_0 = arith.constant 0 : i32
    %c0_i32_1 = arith.constant 0 : i32
    return %c0_i32, %c0_i32_0 : i32, i32
  }
  func.func @transform_4(%arg0: i32) -> (i32, i32) {
    %c0_i32 = arith.constant 0 : i32
    %c0_i32_0 = arith.constant 0 : i32
    %c0_i32_1 = arith.constant 0 : i32
    return %c0_i32, %c0_i32_0 : i32, i32
  }
  func.func @transform_5(%arg0: i32) -> (i32, i32, i32) {
    %c0_i32 = arith.constant 0 : i32
    %c0_i32_0 = arith.constant 0 : i32
    %c0_i32_1 = arith.constant 0 : i32
    return %arg0, %c0_i32, %c0_i32_0 : i32, i32, i32
  }
  func.func @transform_6(%arg0: i32) -> (i32, i32, i32) {
    %c0_i32 = arith.constant 0 : i32
    %c0_i32_0 = arith.constant 0 : i32
    %c0_i32_1 = arith.constant 0 : i32
    return %arg0, %c0_i32, %c0_i32_0 : i32, i32, i32
  }
  func.func @transform_7(%arg0: i32) -> (i32, i32, i32) {
    %c0_i32 = arith.constant 0 : i32
    %c0_i32_0 = arith.constant 0 : i32
    %c0_i32_1 = arith.constant 0 : i32
    return %arg0, %c0_i32, %c0_i32_0 : i32, i32, i32
  }
  func.func @transform_8(%arg0: i32) -> (i32, i32, i32) {
    %c0_i32 = arith.constant 0 : i32
    %c0_i32_0 = arith.constant 0 : i32
    %c0_i32_1 = arith.constant 0 : i32
    return %arg0, %c0_i32, %c0_i32_0 : i32, i32, i32
  }
  func.func @transform_9(%arg0: i32) -> (i32, i32, i32) {
    %c0_i32 = arith.constant 0 : i32
    %c0_i32_0 = arith.constant 0 : i32
    %c0_i32_1 = arith.constant 0 : i32
    return %arg0, %c0_i32, %c0_i32_0 : i32, i32, i32
  }
  func.func @transform_10(%arg0: i32) -> (i32, i32, i32) {
    %c0_i32 = arith.constant 0 : i32
    %c0_i32_0 = arith.constant 0 : i32
    %c0_i32_1 = arith.constant 0 : i32
    return %arg0, %c0_i32, %c0_i32_0 : i32, i32, i32
  }
  func.func @transform_11(%arg0: i32) -> (i32, i32, i32) {
    %c0_i32 = arith.constant 0 : i32
    %c0_i32_0 = arith.constant 0 : i32
    %c0_i32_1 = arith.constant 0 : i32
    return %arg0, %c0_i32, %c0_i32_0 : i32, i32, i32
  }
  func.func @transform_12(%arg0: i32) -> (i32, i32, i32) {
    %c0_i32 = arith.constant 0 : i32
    %c0_i32_0 = arith.constant 0 : i32
    %c0_i32_1 = arith.constant 0 : i32
    return %arg0, %c0_i32, %c0_i32_0 : i32, i32, i32
  }
  func.func @transform_13(%arg0: i32) -> (i32, i32, i32) {
    %c0_i32 = arith.constant 0 : i32
    %c0_i32_0 = arith.constant 0 : i32
    %c0_i32_1 = arith.constant 0 : i32
    return %arg0, %c0_i32, %c0_i32_0 : i32, i32, i32
  }
  func.func @transform_14(%arg0: i32) -> (i32, i32, i32) {
    %c0_i32 = arith.constant 0 : i32
    %c0_i32_0 = arith.constant 0 : i32
    %c0_i32_1 = arith.constant 0 : i32
    return %arg0, %c0_i32, %c0_i32_0 : i32, i32, i32
  }
  func.func @transform_15(%arg0: i32) -> (i32, i32, i32) {
    %c0_i32 = arith.constant 0 : i32
    %c0_i32_0 = arith.constant 0 : i32
    %c0_i32_1 = arith.constant 0 : i32
    return %arg0, %c0_i32, %c0_i32_0 : i32, i32, i32
  }
  func.func @transform_16(%arg0: i32) -> (i32, i32, i32) {
    %c0_i32 = arith.constant 0 : i32
    %c0_i32_0 = arith.constant 0 : i32
    %c0_i32_1 = arith.constant 0 : i32
    return %arg0, %c0_i32, %c0_i32_0 : i32, i32, i32
  }
  func.func @transform_17(%arg0: i32) -> (i32, i32) {
    %c0_i32 = arith.constant 0 : i32
    %c0_i32_0 = arith.constant 0 : i32
    %c0_i32_1 = arith.constant 0 : i32
    return %c0_i32, %c0_i32_0 : i32, i32
  }
}

module attributes {stable_mosaic.version = 11 : i64} {
  func.func @_decoder_kernel(%arg0: i32, %arg1: memref<16x4xf32, #tpu.memory_space<vmem>>, %arg2: memref<16x32xf32, #tpu.memory_space<vmem>>, %arg3: memref<4x32xf32, #tpu.memory_space<vmem>>, %arg4: memref<1x32xf32, #tpu.memory_space<vmem>>, %arg5: memref<16x32xf32, #tpu.memory_space<vmem>>, %arg6: memref<16x16xf32, #tpu.memory_space<vmem>>, %arg7: memref<16x16xf32, #tpu.memory_space<vmem>>, %arg8: memref<1x32x96xf32, #tpu.memory_space<vmem>>, %arg9: memref<1x1x96xf32, #tpu.memory_space<vmem>>, %arg10: memref<1x32x32xf32, #tpu.memory_space<vmem>>, %arg11: memref<1x1x32xf32, #tpu.memory_space<vmem>>, %arg12: memref<1x1x32xf32, #tpu.memory_space<vmem>>, %arg13: memref<1x1x32xf32, #tpu.memory_space<vmem>>, %arg14: memref<1x32x32xf32, #tpu.memory_space<vmem>>, %arg15: memref<1x1x32xf32, #tpu.memory_space<vmem>>, %arg16: memref<1x32x64xf32, #tpu.memory_space<vmem>>, %arg17: memref<1x1x64xf32, #tpu.memory_space<vmem>>, %arg18: memref<1x32x32xf32, #tpu.memory_space<vmem>>, %arg19: memref<1x1x32xf32, #tpu.memory_space<vmem>>, %arg20: memref<1x1x32xf32, #tpu.memory_space<vmem>>, %arg21: memref<1x1x32xf32, #tpu.memory_space<vmem>>, %arg22: memref<1x32x128xf32, #tpu.memory_space<vmem>>, %arg23: memref<1x1x128xf32, #tpu.memory_space<vmem>>, %arg24: memref<1x128x32xf32, #tpu.memory_space<vmem>>, %arg25: memref<1x1x32xf32, #tpu.memory_space<vmem>>, %arg26: memref<1x1x32xf32, #tpu.memory_space<vmem>>, %arg27: memref<1x1x32xf32, #tpu.memory_space<vmem>>, %arg28: memref<32x64xf32, #tpu.memory_space<vmem>>, %arg29: memref<1x64xf32, #tpu.memory_space<vmem>>, %arg30: memref<64x4xf32, #tpu.memory_space<vmem>>, %arg31: memref<1x4xf32, #tpu.memory_space<vmem>>, %arg32: memref<16x4xf32, #tpu.memory_space<vmem>>, %arg33: memref<16x32xf32, #tpu.memory_space<vmem>>) attributes {dimension_semantics = [#tpu.dimension_semantics<arbitrary>], iteration_bounds = array<i64: 2>, scalar_prefetch = 0 : i64, scratch_operands = 1 : i64, tpu.core_type = #tpu.core_type<tc>, window_params = [{pipeline_mode = #tpu.pipeline_mode<synchronous>, transform_indices = @transform_0, window_bounds = array<i64: 16, 4>}, {pipeline_mode = #tpu.pipeline_mode<synchronous>, transform_indices = @transform_1, window_bounds = array<i64: 16, 32>}, {pipeline_mode = #tpu.pipeline_mode<synchronous>, transform_indices = @transform_2, window_bounds = array<i64: 4, 32>}, {pipeline_mode = #tpu.pipeline_mode<synchronous>, transform_indices = @transform_3, window_bounds = array<i64: 1, 32>}, {pipeline_mode = #tpu.pipeline_mode<synchronous>, transform_indices = @transform_4, window_bounds = array<i64: 16, 32>}, {pipeline_mode = #tpu.pipeline_mode<synchronous>, transform_indices = @transform_5, window_bounds = array<i64: 16, 16>}, {pipeline_mode = #tpu.pipeline_mode<synchronous>, transform_indices = @transform_6, window_bounds = array<i64: 16, 16>}, {transform_indices = @transform_7, window_bounds = array<i64: 1, 32, 96>}, {transform_indices = @transform_8, window_bounds = array<i64: 1, 1, 96>}, {transform_indices = @transform_9, window_bounds = array<i64: 1, 32, 32>}, {transform_indices = @transform_10, window_bounds = array<i64: 1, 1, 32>}, {transform_indices = @transform_11, window_bounds = array<i64: 1, 1, 32>}, {transform_indices = @transform_12, window_bounds = array<i64: 1, 1, 32>}, {transform_indices = @transform_13, window_bounds = array<i64: 1, 32, 32>}, {transform_indices = @transform_14, window_bounds = array<i64: 1, 1, 32>}, {transform_indices = @transform_15, window_bounds = array<i64: 1, 32, 64>}, {transform_indices = @transform_16, window_bounds = array<i64: 1, 1, 64>}, {transform_indices = @transform_17, window_bounds = array<i64: 1, 32, 32>}, {transform_indices = @transform_18, window_bounds = array<i64: 1, 1, 32>}, {transform_indices = @transform_19, window_bounds = array<i64: 1, 1, 32>}, {transform_indices = @transform_20, window_bounds = array<i64: 1, 1, 32>}, {transform_indices = @transform_21, window_bounds = array<i64: 1, 32, 128>}, {transform_indices = @transform_22, window_bounds = array<i64: 1, 1, 128>}, {transform_indices = @transform_23, window_bounds = array<i64: 1, 128, 32>}, {transform_indices = @transform_24, window_bounds = array<i64: 1, 1, 32>}, {transform_indices = @transform_25, window_bounds = array<i64: 1, 1, 32>}, {transform_indices = @transform_26, window_bounds = array<i64: 1, 1, 32>}, {pipeline_mode = #tpu.pipeline_mode<synchronous>, transform_indices = @transform_27, window_bounds = array<i64: 32, 64>}, {pipeline_mode = #tpu.pipeline_mode<synchronous>, transform_indices = @transform_28, window_bounds = array<i64: 1, 64>}, {pipeline_mode = #tpu.pipeline_mode<synchronous>, transform_indices = @transform_29, window_bounds = array<i64: 64, 4>}, {pipeline_mode = #tpu.pipeline_mode<synchronous>, transform_indices = @transform_30, window_bounds = array<i64: 1, 4>}, {pipeline_mode = #tpu.pipeline_mode<synchronous>, transform_indices = @transform_31, window_bounds = array<i64: 16, 4>}]} {
    %c0_i32 = arith.constant 0 : i32
    %0 = arith.cmpi eq, %arg0, %c0_i32 : i32
    %1 = arith.extui %0 : i1 to i32
    %c0_i32_0 = arith.constant 0 : i32
    %2 = arith.cmpi ne, %1, %c0_i32_0 : i32
    scf.if %2 {
      %c0_139 = arith.constant 0 : index
      %c0_140 = arith.constant 0 : index
      %298 = vector.load %arg1[%c0_139, %c0_140] : memref<16x4xf32, #tpu.memory_space<vmem>>, vector<16x4xf32>
      %c0_141 = arith.constant 0 : index
      %c0_142 = arith.constant 0 : index
      %299 = vector.load %arg3[%c0_141, %c0_142] : memref<4x32xf32, #tpu.memory_space<vmem>>, vector<4x32xf32>
      %cst_143 = arith.constant dense<0.000000e+00> : vector<16x32xf32>
      %300 = tpu.matmul %298, %299, %cst_143 {dimension_numbers = #tpu.dot_dimension_numbers<[1], [0], [0], [1], [0, 0, 1, 1], [], []>} : vector<16x4xf32>, vector<4x32xf32>, vector<16x32xf32> -> vector<16x32xf32>
      %c0_144 = arith.constant 0 : index
      %c0_145 = arith.constant 0 : index
      %301 = vector.load %arg4[%c0_144, %c0_145] : memref<1x32xf32, #tpu.memory_space<vmem>>, vector<1x32xf32>
      %302 = vector.broadcast %301 : vector<1x32xf32> to vector<16x32xf32>
      %303 = arith.addf %300, %302 : vector<16x32xf32>
      %c0_146 = arith.constant 0 : index
      %c0_147 = arith.constant 0 : index
      %304 = vector.load %arg2[%c0_146, %c0_147] : memref<16x32xf32, #tpu.memory_space<vmem>>, vector<16x32xf32>
      %305 = arith.addf %303, %304 : vector<16x32xf32>
      %c0_148 = arith.constant 0 : index
      %c0_149 = arith.constant 0 : index
      %306 = vector.load %arg33[%c0_148, %c0_149] : memref<16x32xf32, #tpu.memory_space<vmem>>, vector<16x32xf32>
      tpu.vector_store %arg33[%c0_148, %c0_149], %305 {strides = array<i32>} : memref<16x32xf32, #tpu.memory_space<vmem>>, vector<16x32xf32>,
    } else {
    }
    %c0 = arith.constant 0 : index
    %c0_1 = arith.constant 0 : index
    %3 = vector.load %arg33[%c0, %c0_1] : memref<16x32xf32, #tpu.memory_space<vmem>>, vector<16x32xf32>
    %c0_2 = arith.constant 0 : index
    %c0_3 = arith.constant 0 : index
    %4 = vector.load %arg5[%c0_2, %c0_3] : memref<16x32xf32, #tpu.memory_space<vmem>>, vector<16x32xf32>
    %c0_4 = arith.constant 0 : index
    %c0_5 = arith.constant 0 : index
    %c0_6 = arith.constant 0 : index
    %5 = vector.load %arg8[%c0_4, %c0_5, %c0_6] : memref<1x32x96xf32, #tpu.memory_space<vmem>>, vector<1x32x96xf32>
    %6 = vector.shape_cast %5 : vector<1x32x96xf32> to vector<32x96xf32>
    %cst = arith.constant dense<0.000000e+00> : vector<16x96xf32>
    %7 = tpu.matmul %3, %6, %cst {dimension_numbers = #tpu.dot_dimension_numbers<[1], [0], [0], [1], [0, 0, 1, 1], [], []>} : vector<16x32xf32>, vector<32x96xf32>, vector<16x96xf32> -> vector<16x96xf32>
    %c0_7 = arith.constant 0 : index
    %c0_8 = arith.constant 0 : index
    %c0_9 = arith.constant 0 : index
    %8 = vector.load %arg9[%c0_7, %c0_8, %c0_9] : memref<1x1x96xf32, #tpu.memory_space<vmem>>, vector<1x1x96xf32>
    %9 = vector.shape_cast %8 : vector<1x1x96xf32> to vector<1x96xf32>
    %10 = vector.broadcast %9 : vector<1x96xf32> to vector<16x96xf32>
    %11 = arith.addf %7, %10 : vector<16x96xf32>
    %12 = vector.extract_strided_slice %11 {offsets = [0, 0], sizes = [16, 32], strides = [1, 1]} : vector<16x96xf32> to vector<16x32xf32>
    %13 = vector.extract_strided_slice %11 {offsets = [0, 32], sizes = [16, 32], strides = [1, 1]} : vector<16x96xf32> to vector<16x32xf32>
    %14 = vector.extract_strided_slice %11 {offsets = [0, 64], sizes = [16, 32], strides = [1, 1]} : vector<16x96xf32> to vector<16x32xf32>
    %c0_10 = arith.constant 0 : index
    %c0_11 = arith.constant 0 : index
    %c0_12 = arith.constant 0 : index
    %15 = vector.load %arg10[%c0_10, %c0_11, %c0_12] : memref<1x32x32xf32, #tpu.memory_space<vmem>>, vector<1x32x32xf32>
    %16 = vector.shape_cast %15 : vector<1x32x32xf32> to vector<32x32xf32>
    %c0_13 = arith.constant 0 : index
    %c0_14 = arith.constant 0 : index
    %c0_15 = arith.constant 0 : index
    %17 = vector.load %arg11[%c0_13, %c0_14, %c0_15] : memref<1x1x32xf32, #tpu.memory_space<vmem>>, vector<1x1x32xf32>
    %18 = vector.shape_cast %17 : vector<1x1x32xf32> to vector<1x32xf32>
    %c0_16 = arith.constant 0 : index
    %c0_17 = arith.constant 0 : index
    %19 = vector.load %arg6[%c0_16, %c0_17] : memref<16x16xf32, #tpu.memory_space<vmem>>, vector<16x16xf32>
    %20 = vector.extract_strided_slice %12 {offsets = [0, 0], sizes = [16, 8], strides = [1, 1]} : vector<16x32xf32> to vector<16x8xf32>
    %21 = vector.extract_strided_slice %13 {offsets = [0, 0], sizes = [16, 8], strides = [1, 1]} : vector<16x32xf32> to vector<16x8xf32>
    %22 = vector.extract_strided_slice %14 {offsets = [0, 0], sizes = [16, 8], strides = [1, 1]} : vector<16x32xf32> to vector<16x8xf32>
    %cst_18 = arith.constant dense<0.000000e+00> : vector<16x16xf32>
    %23 = tpu.matmul %20, %21, %cst_18 {dimension_numbers = #tpu.dot_dimension_numbers<[1], [1], [0], [0], [0, 0, 1, 0], [], []>} : vector<16x8xf32>, vector<16x8xf32>, vector<16x16xf32> -> vector<16x16xf32>
    %cst_19 = arith.constant 0.353553385 : f32
    %24 = vector.broadcast %cst_19 : f32 to vector<16x16xf32>
    %25 = arith.mulf %23, %24 : vector<16x16xf32>
    %26 = arith.addf %25, %19 : vector<16x16xf32>
    %cst_20 = arith.constant dense<0xFF800000> : vector<16xf32>
    %27 = vector.multi_reduction <maximumf>, %26, %cst_20 [1] : vector<16x16xf32> to vector<16xf32>
    %28 = vector.shape_cast %27 : vector<16xf32> to vector<16x1xf32>
    %29 = vector.broadcast %28 : vector<16x1xf32> to vector<16x16xf32>
    %30 = arith.subf %26, %29 : vector<16x16xf32>
    %31 = math.exp %30 : vector<16x16xf32>
    %cst_21 = arith.constant dense<0.000000e+00> : vector<16xf32>
    %32 = vector.multi_reduction <add>, %31, %cst_21 [1] : vector<16x16xf32> to vector<16xf32>
    %33 = vector.shape_cast %32 : vector<16xf32> to vector<16x1xf32>
    %34 = vector.broadcast %33 : vector<16x1xf32> to vector<16x16xf32>
    %35 = arith.divf %31, %34 : vector<16x16xf32>
    %cst_22 = arith.constant dense<0.000000e+00> : vector<16x8xf32>
    %36 = tpu.matmul %35, %22, %cst_22 {dimension_numbers = #tpu.dot_dimension_numbers<[1], [0], [0], [1], [0, 0, 1, 1], [], []>} : vector<16x16xf32>, vector<16x8xf32>, vector<16x8xf32> -> vector<16x8xf32>
    %37 = vector.extract_strided_slice %16 {offsets = [0, 0], sizes = [8, 32], strides = [1, 1]} : vector<32x32xf32> to vector<8x32xf32>
    %cst_23 = arith.constant dense<0.000000e+00> : vector<16x32xf32>
    %38 = tpu.matmul %36, %37, %cst_23 {dimension_numbers = #tpu.dot_dimension_numbers<[1], [0], [0], [1], [0, 0, 1, 1], [], []>} : vector<16x8xf32>, vector<8x32xf32>, vector<16x32xf32> -> vector<16x32xf32>
    %39 = vector.extract_strided_slice %12 {offsets = [0, 8], sizes = [16, 8], strides = [1, 1]} : vector<16x32xf32> to vector<16x8xf32>
    %40 = vector.extract_strided_slice %13 {offsets = [0, 8], sizes = [16, 8], strides = [1, 1]} : vector<16x32xf32> to vector<16x8xf32>
    %41 = vector.extract_strided_slice %14 {offsets = [0, 8], sizes = [16, 8], strides = [1, 1]} : vector<16x32xf32> to vector<16x8xf32>
    %cst_24 = arith.constant dense<0.000000e+00> : vector<16x16xf32>
    %42 = tpu.matmul %39, %40, %cst_24 {dimension_numbers = #tpu.dot_dimension_numbers<[1], [1], [0], [0], [0, 0, 1, 0], [], []>} : vector<16x8xf32>, vector<16x8xf32>, vector<16x16xf32> -> vector<16x16xf32>
    %cst_25 = arith.constant 0.353553385 : f32
    %43 = vector.broadcast %cst_25 : f32 to vector<16x16xf32>
    %44 = arith.mulf %42, %43 : vector<16x16xf32>
    %45 = arith.addf %44, %19 : vector<16x16xf32>
    %cst_26 = arith.constant dense<0xFF800000> : vector<16xf32>
    %46 = vector.multi_reduction <maximumf>, %45, %cst_26 [1] : vector<16x16xf32> to vector<16xf32>
    %47 = vector.shape_cast %46 : vector<16xf32> to vector<16x1xf32>
    %48 = vector.broadcast %47 : vector<16x1xf32> to vector<16x16xf32>
    %49 = arith.subf %45, %48 : vector<16x16xf32>
    %50 = math.exp %49 : vector<16x16xf32>
    %cst_27 = arith.constant dense<0.000000e+00> : vector<16xf32>
    %51 = vector.multi_reduction <add>, %50, %cst_27 [1] : vector<16x16xf32> to vector<16xf32>
    %52 = vector.shape_cast %51 : vector<16xf32> to vector<16x1xf32>
    %53 = vector.broadcast %52 : vector<16x1xf32> to vector<16x16xf32>
    %54 = arith.divf %50, %53 : vector<16x16xf32>
    %cst_28 = arith.constant dense<0.000000e+00> : vector<16x8xf32>
    %55 = tpu.matmul %54, %41, %cst_28 {dimension_numbers = #tpu.dot_dimension_numbers<[1], [0], [0], [1], [0, 0, 1, 1], [], []>} : vector<16x16xf32>, vector<16x8xf32>, vector<16x8xf32> -> vector<16x8xf32>
    %56 = vector.extract_strided_slice %16 {offsets = [8, 0], sizes = [8, 32], strides = [1, 1]} : vector<32x32xf32> to vector<8x32xf32>
    %cst_29 = arith.constant dense<0.000000e+00> : vector<16x32xf32>
    %57 = tpu.matmul %55, %56, %cst_29 {dimension_numbers = #tpu.dot_dimension_numbers<[1], [0], [0], [1], [0, 0, 1, 1], [], []>} : vector<16x8xf32>, vector<8x32xf32>, vector<16x32xf32> -> vector<16x32xf32>
    %58 = arith.addf %38, %57 : vector<16x32xf32>
    %59 = vector.extract_strided_slice %12 {offsets = [0, 16], sizes = [16, 8], strides = [1, 1]} : vector<16x32xf32> to vector<16x8xf32>
    %60 = vector.extract_strided_slice %13 {offsets = [0, 16], sizes = [16, 8], strides = [1, 1]} : vector<16x32xf32> to vector<16x8xf32>
    %61 = vector.extract_strided_slice %14 {offsets = [0, 16], sizes = [16, 8], strides = [1, 1]} : vector<16x32xf32> to vector<16x8xf32>
    %cst_30 = arith.constant dense<0.000000e+00> : vector<16x16xf32>
    %62 = tpu.matmul %59, %60, %cst_30 {dimension_numbers = #tpu.dot_dimension_numbers<[1], [1], [0], [0], [0, 0, 1, 0], [], []>} : vector<16x8xf32>, vector<16x8xf32>, vector<16x16xf32> -> vector<16x16xf32>
    %cst_31 = arith.constant 0.353553385 : f32
    %63 = vector.broadcast %cst_31 : f32 to vector<16x16xf32>
    %64 = arith.mulf %62, %63 : vector<16x16xf32>
    %65 = arith.addf %64, %19 : vector<16x16xf32>
    %cst_32 = arith.constant dense<0xFF800000> : vector<16xf32>
    %66 = vector.multi_reduction <maximumf>, %65, %cst_32 [1] : vector<16x16xf32> to vector<16xf32>
    %67 = vector.shape_cast %66 : vector<16xf32> to vector<16x1xf32>
    %68 = vector.broadcast %67 : vector<16x1xf32> to vector<16x16xf32>
    %69 = arith.subf %65, %68 : vector<16x16xf32>
    %70 = math.exp %69 : vector<16x16xf32>
    %cst_33 = arith.constant dense<0.000000e+00> : vector<16xf32>
    %71 = vector.multi_reduction <add>, %70, %cst_33 [1] : vector<16x16xf32> to vector<16xf32>
    %72 = vector.shape_cast %71 : vector<16xf32> to vector<16x1xf32>
    %73 = vector.broadcast %72 : vector<16x1xf32> to vector<16x16xf32>
    %74 = arith.divf %70, %73 : vector<16x16xf32>
    %cst_34 = arith.constant dense<0.000000e+00> : vector<16x8xf32>
    %75 = tpu.matmul %74, %61, %cst_34 {dimension_numbers = #tpu.dot_dimension_numbers<[1], [0], [0], [1], [0, 0, 1, 1], [], []>} : vector<16x16xf32>, vector<16x8xf32>, vector<16x8xf32> -> vector<16x8xf32>
    %76 = vector.extract_strided_slice %16 {offsets = [16, 0], sizes = [8, 32], strides = [1, 1]} : vector<32x32xf32> to vector<8x32xf32>
    %cst_35 = arith.constant dense<0.000000e+00> : vector<16x32xf32>
    %77 = tpu.matmul %75, %76, %cst_35 {dimension_numbers = #tpu.dot_dimension_numbers<[1], [0], [0], [1], [0, 0, 1, 1], [], []>} : vector<16x8xf32>, vector<8x32xf32>, vector<16x32xf32> -> vector<16x32xf32>
    %78 = arith.addf %58, %77 : vector<16x32xf32>
    %79 = vector.extract_strided_slice %12 {offsets = [0, 24], sizes = [16, 8], strides = [1, 1]} : vector<16x32xf32> to vector<16x8xf32>
    %80 = vector.extract_strided_slice %13 {offsets = [0, 24], sizes = [16, 8], strides = [1, 1]} : vector<16x32xf32> to vector<16x8xf32>
    %81 = vector.extract_strided_slice %14 {offsets = [0, 24], sizes = [16, 8], strides = [1, 1]} : vector<16x32xf32> to vector<16x8xf32>
    %cst_36 = arith.constant dense<0.000000e+00> : vector<16x16xf32>
    %82 = tpu.matmul %79, %80, %cst_36 {dimension_numbers = #tpu.dot_dimension_numbers<[1], [1], [0], [0], [0, 0, 1, 0], [], []>} : vector<16x8xf32>, vector<16x8xf32>, vector<16x16xf32> -> vector<16x16xf32>
    %cst_37 = arith.constant 0.353553385 : f32
    %83 = vector.broadcast %cst_37 : f32 to vector<16x16xf32>
    %84 = arith.mulf %82, %83 : vector<16x16xf32>
    %85 = arith.addf %84, %19 : vector<16x16xf32>
    %cst_38 = arith.constant dense<0xFF800000> : vector<16xf32>
    %86 = vector.multi_reduction <maximumf>, %85, %cst_38 [1] : vector<16x16xf32> to vector<16xf32>
    %87 = vector.shape_cast %86 : vector<16xf32> to vector<16x1xf32>
    %88 = vector.broadcast %87 : vector<16x1xf32> to vector<16x16xf32>
    %89 = arith.subf %85, %88 : vector<16x16xf32>
    %90 = math.exp %89 : vector<16x16xf32>
    %cst_39 = arith.constant dense<0.000000e+00> : vector<16xf32>
    %91 = vector.multi_reduction <add>, %90, %cst_39 [1] : vector<16x16xf32> to vector<16xf32>
    %92 = vector.shape_cast %91 : vector<16xf32> to vector<16x1xf32>
    %93 = vector.broadcast %92 : vector<16x1xf32> to vector<16x16xf32>
    %94 = arith.divf %90, %93 : vector<16x16xf32>
    %cst_40 = arith.constant dense<0.000000e+00> : vector<16x8xf32>
    %95 = tpu.matmul %94, %81, %cst_40 {dimension_numbers = #tpu.dot_dimension_numbers<[1], [0], [0], [1], [0, 0, 1, 1], [], []>} : vector<16x16xf32>, vector<16x8xf32>, vector<16x8xf32> -> vector<16x8xf32>
    %96 = vector.extract_strided_slice %16 {offsets = [24, 0], sizes = [8, 32], strides = [1, 1]} : vector<32x32xf32> to vector<8x32xf32>
    %cst_41 = arith.constant dense<0.000000e+00> : vector<16x32xf32>
    %97 = tpu.matmul %95, %96, %cst_41 {dimension_numbers = #tpu.dot_dimension_numbers<[1], [0], [0], [1], [0, 0, 1, 1], [], []>} : vector<16x8xf32>, vector<8x32xf32>, vector<16x32xf32> -> vector<16x32xf32>
    %98 = arith.addf %78, %97 : vector<16x32xf32>
    %99 = vector.broadcast %18 : vector<1x32xf32> to vector<16x32xf32>
    %100 = arith.addf %98, %99 : vector<16x32xf32>
    %101 = arith.addf %3, %100 : vector<16x32xf32>
    %c0_42 = arith.constant 0 : index
    %c0_43 = arith.constant 0 : index
    %c0_44 = arith.constant 0 : index
    %102 = vector.load %arg12[%c0_42, %c0_43, %c0_44] : memref<1x1x32xf32, #tpu.memory_space<vmem>>, vector<1x1x32xf32>
    %103 = vector.shape_cast %102 : vector<1x1x32xf32> to vector<1x32xf32>
    %c0_45 = arith.constant 0 : index
    %c0_46 = arith.constant 0 : index
    %c0_47 = arith.constant 0 : index
    %104 = vector.load %arg13[%c0_45, %c0_46, %c0_47] : memref<1x1x32xf32, #tpu.memory_space<vmem>>, vector<1x1x32xf32>
    %105 = vector.shape_cast %104 : vector<1x1x32xf32> to vector<1x32xf32>
    %cst_48 = arith.constant dense<0.000000e+00> : vector<16xf32>
    %106 = vector.multi_reduction <add>, %101, %cst_48 [1] : vector<16x32xf32> to vector<16xf32>
    %107 = vector.shape_cast %106 : vector<16xf32> to vector<16x1xf32>
    %cst_49 = arith.constant 3.200000e+01 : f32
    %108 = vector.broadcast %cst_49 : f32 to vector<16x1xf32>
    %109 = arith.divf %107, %108 : vector<16x1xf32>
    %110 = vector.broadcast %109 : vector<16x1xf32> to vector<16x32xf32>
    %111 = arith.subf %101, %110 : vector<16x32xf32>
    %112 = arith.mulf %111, %111 : vector<16x32xf32>
    %cst_50 = arith.constant dense<0.000000e+00> : vector<16xf32>
    %113 = vector.multi_reduction <add>, %112, %cst_50 [1] : vector<16x32xf32> to vector<16xf32>
    %114 = vector.shape_cast %113 : vector<16xf32> to vector<16x1xf32>
    %cst_51 = arith.constant 3.200000e+01 : f32
    %115 = vector.broadcast %cst_51 : f32 to vector<16x1xf32>
    %116 = arith.divf %114, %115 : vector<16x1xf32>
    %cst_52 = arith.constant 9.99999974E-6 : f32
    %117 = vector.broadcast %cst_52 : f32 to vector<16x1xf32>
    %118 = arith.addf %116, %117 : vector<16x1xf32>
    %119 = math.rsqrt %118 : vector<16x1xf32>
    %120 = vector.broadcast %119 : vector<16x1xf32> to vector<16x32xf32>
    %121 = arith.mulf %111, %120 : vector<16x32xf32>
    %122 = vector.broadcast %103 : vector<1x32xf32> to vector<16x32xf32>
    %123 = arith.mulf %121, %122 : vector<16x32xf32>
    %124 = vector.broadcast %105 : vector<1x32xf32> to vector<16x32xf32>
    %125 = arith.addf %123, %124 : vector<16x32xf32>
    %c0_53 = arith.constant 0 : index
    %c0_54 = arith.constant 0 : index
    %c0_55 = arith.constant 0 : index
    %126 = vector.load %arg14[%c0_53, %c0_54, %c0_55] : memref<1x32x32xf32, #tpu.memory_space<vmem>>, vector<1x32x32xf32>
    %127 = vector.shape_cast %126 : vector<1x32x32xf32> to vector<32x32xf32>
    %cst_56 = arith.constant dense<0.000000e+00> : vector<16x32xf32>
    %128 = tpu.matmul %125, %127, %cst_56 {dimension_numbers = #tpu.dot_dimension_numbers<[1], [0], [0], [1], [0, 0, 1, 1], [], []>} : vector<16x32xf32>, vector<32x32xf32>, vector<16x32xf32> -> vector<16x32xf32>
    %c0_57 = arith.constant 0 : index
    %c0_58 = arith.constant 0 : index
    %c0_59 = arith.constant 0 : index
    %129 = vector.load %arg15[%c0_57, %c0_58, %c0_59] : memref<1x1x32xf32, #tpu.memory_space<vmem>>, vector<1x1x32xf32>
    %130 = vector.shape_cast %129 : vector<1x1x32xf32> to vector<1x32xf32>
    %131 = vector.broadcast %130 : vector<1x32xf32> to vector<16x32xf32>
    %132 = arith.addf %128, %131 : vector<16x32xf32>
    %c0_60 = arith.constant 0 : index
    %c0_61 = arith.constant 0 : index
    %c0_62 = arith.constant 0 : index
    %133 = vector.load %arg16[%c0_60, %c0_61, %c0_62] : memref<1x32x64xf32, #tpu.memory_space<vmem>>, vector<1x32x64xf32>
    %134 = vector.shape_cast %133 : vector<1x32x64xf32> to vector<32x64xf32>
    %cst_63 = arith.constant dense<0.000000e+00> : vector<16x64xf32>
    %135 = tpu.matmul %4, %134, %cst_63 {dimension_numbers = #tpu.dot_dimension_numbers<[1], [0], [0], [1], [0, 0, 1, 1], [], []>} : vector<16x32xf32>, vector<32x64xf32>, vector<16x64xf32> -> vector<16x64xf32>
    %c0_64 = arith.constant 0 : index
    %c0_65 = arith.constant 0 : index
    %c0_66 = arith.constant 0 : index
    %136 = vector.load %arg17[%c0_64, %c0_65, %c0_66] : memref<1x1x64xf32, #tpu.memory_space<vmem>>, vector<1x1x64xf32>
    %137 = vector.shape_cast %136 : vector<1x1x64xf32> to vector<1x64xf32>
    %138 = vector.broadcast %137 : vector<1x64xf32> to vector<16x64xf32>
    %139 = arith.addf %135, %138 : vector<16x64xf32>
    %140 = vector.extract_strided_slice %139 {offsets = [0, 0], sizes = [16, 32], strides = [1, 1]} : vector<16x64xf32> to vector<16x32xf32>
    %141 = vector.extract_strided_slice %139 {offsets = [0, 32], sizes = [16, 32], strides = [1, 1]} : vector<16x64xf32> to vector<16x32xf32>
    %c0_67 = arith.constant 0 : index
    %c0_68 = arith.constant 0 : index
    %c0_69 = arith.constant 0 : index
    %142 = vector.load %arg18[%c0_67, %c0_68, %c0_69] : memref<1x32x32xf32, #tpu.memory_space<vmem>>, vector<1x32x32xf32>
    %143 = vector.shape_cast %142 : vector<1x32x32xf32> to vector<32x32xf32>
    %c0_70 = arith.constant 0 : index
    %c0_71 = arith.constant 0 : index
    %c0_72 = arith.constant 0 : index
    %144 = vector.load %arg19[%c0_70, %c0_71, %c0_72] : memref<1x1x32xf32, #tpu.memory_space<vmem>>, vector<1x1x32xf32>
    %145 = vector.shape_cast %144 : vector<1x1x32xf32> to vector<1x32xf32>
    %c0_73 = arith.constant 0 : index
    %c0_74 = arith.constant 0 : index
    %146 = vector.load %arg7[%c0_73, %c0_74] : memref<16x16xf32, #tpu.memory_space<vmem>>, vector<16x16xf32>
    %147 = vector.extract_strided_slice %132 {offsets = [0, 0], sizes = [16, 8], strides = [1, 1]} : vector<16x32xf32> to vector<16x8xf32>
    %148 = vector.extract_strided_slice %140 {offsets = [0, 0], sizes = [16, 8], strides = [1, 1]} : vector<16x32xf32> to vector<16x8xf32>
    %149 = vector.extract_strided_slice %141 {offsets = [0, 0], sizes = [16, 8], strides = [1, 1]} : vector<16x32xf32> to vector<16x8xf32>
    %cst_75 = arith.constant dense<0.000000e+00> : vector<16x16xf32>
    %150 = tpu.matmul %147, %148, %cst_75 {dimension_numbers = #tpu.dot_dimension_numbers<[1], [1], [0], [0], [0, 0, 1, 0], [], []>} : vector<16x8xf32>, vector<16x8xf32>, vector<16x16xf32> -> vector<16x16xf32>
    %cst_76 = arith.constant 0.353553385 : f32
    %151 = vector.broadcast %cst_76 : f32 to vector<16x16xf32>
    %152 = arith.mulf %150, %151 : vector<16x16xf32>
    %153 = arith.addf %152, %146 : vector<16x16xf32>
    %cst_77 = arith.constant dense<0xFF800000> : vector<16xf32>
    %154 = vector.multi_reduction <maximumf>, %153, %cst_77 [1] : vector<16x16xf32> to vector<16xf32>
    %155 = vector.shape_cast %154 : vector<16xf32> to vector<16x1xf32>
    %156 = vector.broadcast %155 : vector<16x1xf32> to vector<16x16xf32>
    %157 = arith.subf %153, %156 : vector<16x16xf32>
    %158 = math.exp %157 : vector<16x16xf32>
    %cst_78 = arith.constant dense<0.000000e+00> : vector<16xf32>
    %159 = vector.multi_reduction <add>, %158, %cst_78 [1] : vector<16x16xf32> to vector<16xf32>
    %160 = vector.shape_cast %159 : vector<16xf32> to vector<16x1xf32>
    %161 = vector.broadcast %160 : vector<16x1xf32> to vector<16x16xf32>
    %162 = arith.divf %158, %161 : vector<16x16xf32>
    %cst_79 = arith.constant dense<0.000000e+00> : vector<16x8xf32>
    %163 = tpu.matmul %162, %149, %cst_79 {dimension_numbers = #tpu.dot_dimension_numbers<[1], [0], [0], [1], [0, 0, 1, 1], [], []>} : vector<16x16xf32>, vector<16x8xf32>, vector<16x8xf32> -> vector<16x8xf32>
    %164 = vector.extract_strided_slice %143 {offsets = [0, 0], sizes = [8, 32], strides = [1, 1]} : vector<32x32xf32> to vector<8x32xf32>
    %cst_80 = arith.constant dense<0.000000e+00> : vector<16x32xf32>
    %165 = tpu.matmul %163, %164, %cst_80 {dimension_numbers = #tpu.dot_dimension_numbers<[1], [0], [0], [1], [0, 0, 1, 1], [], []>} : vector<16x8xf32>, vector<8x32xf32>, vector<16x32xf32> -> vector<16x32xf32>
    %166 = vector.extract_strided_slice %132 {offsets = [0, 8], sizes = [16, 8], strides = [1, 1]} : vector<16x32xf32> to vector<16x8xf32>
    %167 = vector.extract_strided_slice %140 {offsets = [0, 8], sizes = [16, 8], strides = [1, 1]} : vector<16x32xf32> to vector<16x8xf32>
    %168 = vector.extract_strided_slice %141 {offsets = [0, 8], sizes = [16, 8], strides = [1, 1]} : vector<16x32xf32> to vector<16x8xf32>
    %cst_81 = arith.constant dense<0.000000e+00> : vector<16x16xf32>
    %169 = tpu.matmul %166, %167, %cst_81 {dimension_numbers = #tpu.dot_dimension_numbers<[1], [1], [0], [0], [0, 0, 1, 0], [], []>} : vector<16x8xf32>, vector<16x8xf32>, vector<16x16xf32> -> vector<16x16xf32>
    %cst_82 = arith.constant 0.353553385 : f32
    %170 = vector.broadcast %cst_82 : f32 to vector<16x16xf32>
    %171 = arith.mulf %169, %170 : vector<16x16xf32>
    %172 = arith.addf %171, %146 : vector<16x16xf32>
    %cst_83 = arith.constant dense<0xFF800000> : vector<16xf32>
    %173 = vector.multi_reduction <maximumf>, %172, %cst_83 [1] : vector<16x16xf32> to vector<16xf32>
    %174 = vector.shape_cast %173 : vector<16xf32> to vector<16x1xf32>
    %175 = vector.broadcast %174 : vector<16x1xf32> to vector<16x16xf32>
    %176 = arith.subf %172, %175 : vector<16x16xf32>
    %177 = math.exp %176 : vector<16x16xf32>
    %cst_84 = arith.constant dense<0.000000e+00> : vector<16xf32>
    %178 = vector.multi_reduction <add>, %177, %cst_84 [1] : vector<16x16xf32> to vector<16xf32>
    %179 = vector.shape_cast %178 : vector<16xf32> to vector<16x1xf32>
    %180 = vector.broadcast %179 : vector<16x1xf32> to vector<16x16xf32>
    %181 = arith.divf %177, %180 : vector<16x16xf32>
    %cst_85 = arith.constant dense<0.000000e+00> : vector<16x8xf32>
    %182 = tpu.matmul %181, %168, %cst_85 {dimension_numbers = #tpu.dot_dimension_numbers<[1], [0], [0], [1], [0, 0, 1, 1], [], []>} : vector<16x16xf32>, vector<16x8xf32>, vector<16x8xf32> -> vector<16x8xf32>
    %183 = vector.extract_strided_slice %143 {offsets = [8, 0], sizes = [8, 32], strides = [1, 1]} : vector<32x32xf32> to vector<8x32xf32>
    %cst_86 = arith.constant dense<0.000000e+00> : vector<16x32xf32>
    %184 = tpu.matmul %182, %183, %cst_86 {dimension_numbers = #tpu.dot_dimension_numbers<[1], [0], [0], [1], [0, 0, 1, 1], [], []>} : vector<16x8xf32>, vector<8x32xf32>, vector<16x32xf32> -> vector<16x32xf32>
    %185 = arith.addf %165, %184 : vector<16x32xf32>
    %186 = vector.extract_strided_slice %132 {offsets = [0, 16], sizes = [16, 8], strides = [1, 1]} : vector<16x32xf32> to vector<16x8xf32>
    %187 = vector.extract_strided_slice %140 {offsets = [0, 16], sizes = [16, 8], strides = [1, 1]} : vector<16x32xf32> to vector<16x8xf32>
    %188 = vector.extract_strided_slice %141 {offsets = [0, 16], sizes = [16, 8], strides = [1, 1]} : vector<16x32xf32> to vector<16x8xf32>
    %cst_87 = arith.constant dense<0.000000e+00> : vector<16x16xf32>
    %189 = tpu.matmul %186, %187, %cst_87 {dimension_numbers = #tpu.dot_dimension_numbers<[1], [1], [0], [0], [0, 0, 1, 0], [], []>} : vector<16x8xf32>, vector<16x8xf32>, vector<16x16xf32> -> vector<16x16xf32>
    %cst_88 = arith.constant 0.353553385 : f32
    %190 = vector.broadcast %cst_88 : f32 to vector<16x16xf32>
    %191 = arith.mulf %189, %190 : vector<16x16xf32>
    %192 = arith.addf %191, %146 : vector<16x16xf32>
    %cst_89 = arith.constant dense<0xFF800000> : vector<16xf32>
    %193 = vector.multi_reduction <maximumf>, %192, %cst_89 [1] : vector<16x16xf32> to vector<16xf32>
    %194 = vector.shape_cast %193 : vector<16xf32> to vector<16x1xf32>
    %195 = vector.broadcast %194 : vector<16x1xf32> to vector<16x16xf32>
    %196 = arith.subf %192, %195 : vector<16x16xf32>
    %197 = math.exp %196 : vector<16x16xf32>
    %cst_90 = arith.constant dense<0.000000e+00> : vector<16xf32>
    %198 = vector.multi_reduction <add>, %197, %cst_90 [1] : vector<16x16xf32> to vector<16xf32>
    %199 = vector.shape_cast %198 : vector<16xf32> to vector<16x1xf32>
    %200 = vector.broadcast %199 : vector<16x1xf32> to vector<16x16xf32>
    %201 = arith.divf %197, %200 : vector<16x16xf32>
    %cst_91 = arith.constant dense<0.000000e+00> : vector<16x8xf32>
    %202 = tpu.matmul %201, %188, %cst_91 {dimension_numbers = #tpu.dot_dimension_numbers<[1], [0], [0], [1], [0, 0, 1, 1], [], []>} : vector<16x16xf32>, vector<16x8xf32>, vector<16x8xf32> -> vector<16x8xf32>
    %203 = vector.extract_strided_slice %143 {offsets = [16, 0], sizes = [8, 32], strides = [1, 1]} : vector<32x32xf32> to vector<8x32xf32>
    %cst_92 = arith.constant dense<0.000000e+00> : vector<16x32xf32>
    %204 = tpu.matmul %202, %203, %cst_92 {dimension_numbers = #tpu.dot_dimension_numbers<[1], [0], [0], [1], [0, 0, 1, 1], [], []>} : vector<16x8xf32>, vector<8x32xf32>, vector<16x32xf32> -> vector<16x32xf32>
    %205 = arith.addf %185, %204 : vector<16x32xf32>
    %206 = vector.extract_strided_slice %132 {offsets = [0, 24], sizes = [16, 8], strides = [1, 1]} : vector<16x32xf32> to vector<16x8xf32>
    %207 = vector.extract_strided_slice %140 {offsets = [0, 24], sizes = [16, 8], strides = [1, 1]} : vector<16x32xf32> to vector<16x8xf32>
    %208 = vector.extract_strided_slice %141 {offsets = [0, 24], sizes = [16, 8], strides = [1, 1]} : vector<16x32xf32> to vector<16x8xf32>
    %cst_93 = arith.constant dense<0.000000e+00> : vector<16x16xf32>
    %209 = tpu.matmul %206, %207, %cst_93 {dimension_numbers = #tpu.dot_dimension_numbers<[1], [1], [0], [0], [0, 0, 1, 0], [], []>} : vector<16x8xf32>, vector<16x8xf32>, vector<16x16xf32> -> vector<16x16xf32>
    %cst_94 = arith.constant 0.353553385 : f32
    %210 = vector.broadcast %cst_94 : f32 to vector<16x16xf32>
    %211 = arith.mulf %209, %210 : vector<16x16xf32>
    %212 = arith.addf %211, %146 : vector<16x16xf32>
    %cst_95 = arith.constant dense<0xFF800000> : vector<16xf32>
    %213 = vector.multi_reduction <maximumf>, %212, %cst_95 [1] : vector<16x16xf32> to vector<16xf32>
    %214 = vector.shape_cast %213 : vector<16xf32> to vector<16x1xf32>
    %215 = vector.broadcast %214 : vector<16x1xf32> to vector<16x16xf32>
    %216 = arith.subf %212, %215 : vector<16x16xf32>
    %217 = math.exp %216 : vector<16x16xf32>
    %cst_96 = arith.constant dense<0.000000e+00> : vector<16xf32>
    %218 = vector.multi_reduction <add>, %217, %cst_96 [1] : vector<16x16xf32> to vector<16xf32>
    %219 = vector.shape_cast %218 : vector<16xf32> to vector<16x1xf32>
    %220 = vector.broadcast %219 : vector<16x1xf32> to vector<16x16xf32>
    %221 = arith.divf %217, %220 : vector<16x16xf32>
    %cst_97 = arith.constant dense<0.000000e+00> : vector<16x8xf32>
    %222 = tpu.matmul %221, %208, %cst_97 {dimension_numbers = #tpu.dot_dimension_numbers<[1], [0], [0], [1], [0, 0, 1, 1], [], []>} : vector<16x16xf32>, vector<16x8xf32>, vector<16x8xf32> -> vector<16x8xf32>
    %223 = vector.extract_strided_slice %143 {offsets = [24, 0], sizes = [8, 32], strides = [1, 1]} : vector<32x32xf32> to vector<8x32xf32>
    %cst_98 = arith.constant dense<0.000000e+00> : vector<16x32xf32>
    %224 = tpu.matmul %222, %223, %cst_98 {dimension_numbers = #tpu.dot_dimension_numbers<[1], [0], [0], [1], [0, 0, 1, 1], [], []>} : vector<16x8xf32>, vector<8x32xf32>, vector<16x32xf32> -> vector<16x32xf32>
    %225 = arith.addf %205, %224 : vector<16x32xf32>
    %226 = vector.broadcast %145 : vector<1x32xf32> to vector<16x32xf32>
    %227 = arith.addf %225, %226 : vector<16x32xf32>
    %228 = arith.addf %125, %227 : vector<16x32xf32>
    %c0_99 = arith.constant 0 : index
    %c0_100 = arith.constant 0 : index
    %c0_101 = arith.constant 0 : index
    %229 = vector.load %arg20[%c0_99, %c0_100, %c0_101] : memref<1x1x32xf32, #tpu.memory_space<vmem>>, vector<1x1x32xf32>
    %230 = vector.shape_cast %229 : vector<1x1x32xf32> to vector<1x32xf32>
    %c0_102 = arith.constant 0 : index
    %c0_103 = arith.constant 0 : index
    %c0_104 = arith.constant 0 : index
    %231 = vector.load %arg21[%c0_102, %c0_103, %c0_104] : memref<1x1x32xf32, #tpu.memory_space<vmem>>, vector<1x1x32xf32>
    %232 = vector.shape_cast %231 : vector<1x1x32xf32> to vector<1x32xf32>
    %cst_105 = arith.constant dense<0.000000e+00> : vector<16xf32>
    %233 = vector.multi_reduction <add>, %228, %cst_105 [1] : vector<16x32xf32> to vector<16xf32>
    %234 = vector.shape_cast %233 : vector<16xf32> to vector<16x1xf32>
    %cst_106 = arith.constant 3.200000e+01 : f32
    %235 = vector.broadcast %cst_106 : f32 to vector<16x1xf32>
    %236 = arith.divf %234, %235 : vector<16x1xf32>
    %237 = vector.broadcast %236 : vector<16x1xf32> to vector<16x32xf32>
    %238 = arith.subf %228, %237 : vector<16x32xf32>
    %239 = arith.mulf %238, %238 : vector<16x32xf32>
    %cst_107 = arith.constant dense<0.000000e+00> : vector<16xf32>
    %240 = vector.multi_reduction <add>, %239, %cst_107 [1] : vector<16x32xf32> to vector<16xf32>
    %241 = vector.shape_cast %240 : vector<16xf32> to vector<16x1xf32>
    %cst_108 = arith.constant 3.200000e+01 : f32
    %242 = vector.broadcast %cst_108 : f32 to vector<16x1xf32>
    %243 = arith.divf %241, %242 : vector<16x1xf32>
    %cst_109 = arith.constant 9.99999974E-6 : f32
    %244 = vector.broadcast %cst_109 : f32 to vector<16x1xf32>
    %245 = arith.addf %243, %244 : vector<16x1xf32>
    %246 = math.rsqrt %245 : vector<16x1xf32>
    %247 = vector.broadcast %246 : vector<16x1xf32> to vector<16x32xf32>
    %248 = arith.mulf %238, %247 : vector<16x32xf32>
    %249 = vector.broadcast %230 : vector<1x32xf32> to vector<16x32xf32>
    %250 = arith.mulf %248, %249 : vector<16x32xf32>
    %251 = vector.broadcast %232 : vector<1x32xf32> to vector<16x32xf32>
    %252 = arith.addf %250, %251 : vector<16x32xf32>
    %c0_110 = arith.constant 0 : index
    %c0_111 = arith.constant 0 : index
    %c0_112 = arith.constant 0 : index
    %253 = vector.load %arg22[%c0_110, %c0_111, %c0_112] : memref<1x32x128xf32, #tpu.memory_space<vmem>>, vector<1x32x128xf32>
    %254 = vector.shape_cast %253 : vector<1x32x128xf32> to vector<32x128xf32>
    %cst_113 = arith.constant dense<0.000000e+00> : vector<16x128xf32>
    %255 = tpu.matmul %252, %254, %cst_113 {dimension_numbers = #tpu.dot_dimension_numbers<[1], [0], [0], [1], [0, 0, 1, 1], [], []>} : vector<16x32xf32>, vector<32x128xf32>, vector<16x128xf32> -> vector<16x128xf32>
    %c0_114 = arith.constant 0 : index
    %c0_115 = arith.constant 0 : index
    %c0_116 = arith.constant 0 : index
    %256 = vector.load %arg23[%c0_114, %c0_115, %c0_116] : memref<1x1x128xf32, #tpu.memory_space<vmem>>, vector<1x1x128xf32>
    %257 = vector.shape_cast %256 : vector<1x1x128xf32> to vector<1x128xf32>
    %258 = vector.broadcast %257 : vector<1x128xf32> to vector<16x128xf32>
    %259 = arith.addf %255, %258 : vector<16x128xf32>
    %cst_117 = arith.constant 0.000000e+00 : f32
    %260 = vector.broadcast %cst_117 : f32 to vector<16x128xf32>
    %261 = arith.maximumf %259, %260 : vector<16x128xf32>
    %c0_118 = arith.constant 0 : index
    %c0_119 = arith.constant 0 : index
    %c0_120 = arith.constant 0 : index
    %262 = vector.load %arg24[%c0_118, %c0_119, %c0_120] : memref<1x128x32xf32, #tpu.memory_space<vmem>>, vector<1x128x32xf32>
    %263 = vector.shape_cast %262 : vector<1x128x32xf32> to vector<128x32xf32>
    %cst_121 = arith.constant dense<0.000000e+00> : vector<16x32xf32>
    %264 = tpu.matmul %261, %263, %cst_121 {dimension_numbers = #tpu.dot_dimension_numbers<[1], [0], [0], [1], [0, 0, 1, 1], [], []>} : vector<16x128xf32>, vector<128x32xf32>, vector<16x32xf32> -> vector<16x32xf32>
    %c0_122 = arith.constant 0 : index
    %c0_123 = arith.constant 0 : index
    %c0_124 = arith.constant 0 : index
    %265 = vector.load %arg25[%c0_122, %c0_123, %c0_124] : memref<1x1x32xf32, #tpu.memory_space<vmem>>, vector<1x1x32xf32>
    %266 = vector.shape_cast %265 : vector<1x1x32xf32> to vector<1x32xf32>
    %267 = vector.broadcast %266 : vector<1x32xf32> to vector<16x32xf32>
    %268 = arith.addf %264, %267 : vector<16x32xf32>
    %269 = arith.addf %252, %268 : vector<16x32xf32>
    %c0_125 = arith.constant 0 : index
    %c0_126 = arith.constant 0 : index
    %c0_127 = arith.constant 0 : index
    %270 = vector.load %arg26[%c0_125, %c0_126, %c0_127] : memref<1x1x32xf32, #tpu.memory_space<vmem>>, vector<1x1x32xf32>
    %271 = vector.shape_cast %270 : vector<1x1x32xf32> to vector<1x32xf32>
    %c0_128 = arith.constant 0 : index
    %c0_129 = arith.constant 0 : index
    %c0_130 = arith.constant 0 : index
    %272 = vector.load %arg27[%c0_128, %c0_129, %c0_130] : memref<1x1x32xf32, #tpu.memory_space<vmem>>, vector<1x1x32xf32>
    %273 = vector.shape_cast %272 : vector<1x1x32xf32> to vector<1x32xf32>
    %cst_131 = arith.constant dense<0.000000e+00> : vector<16xf32>
    %274 = vector.multi_reduction <add>, %269, %cst_131 [1] : vector<16x32xf32> to vector<16xf32>
    %275 = vector.shape_cast %274 : vector<16xf32> to vector<16x1xf32>
    %cst_132 = arith.constant 3.200000e+01 : f32
    %276 = vector.broadcast %cst_132 : f32 to vector<16x1xf32>
    %277 = arith.divf %275, %276 : vector<16x1xf32>
    %278 = vector.broadcast %277 : vector<16x1xf32> to vector<16x32xf32>
    %279 = arith.subf %269, %278 : vector<16x32xf32>
    %280 = arith.mulf %279, %279 : vector<16x32xf32>
    %cst_133 = arith.constant dense<0.000000e+00> : vector<16xf32>
    %281 = vector.multi_reduction <add>, %280, %cst_133 [1] : vector<16x32xf32> to vector<16xf32>
    %282 = vector.shape_cast %281 : vector<16xf32> to vector<16x1xf32>
    %cst_134 = arith.constant 3.200000e+01 : f32
    %283 = vector.broadcast %cst_134 : f32 to vector<16x1xf32>
    %284 = arith.divf %282, %283 : vector<16x1xf32>
    %cst_135 = arith.constant 9.99999974E-6 : f32
    %285 = vector.broadcast %cst_135 : f32 to vector<16x1xf32>
    %286 = arith.addf %284, %285 : vector<16x1xf32>
    %287 = math.rsqrt %286 : vector<16x1xf32>
    %288 = vector.broadcast %287 : vector<16x1xf32> to vector<16x32xf32>
    %289 = arith.mulf %279, %288 : vector<16x32xf32>
    %290 = vector.broadcast %271 : vector<1x32xf32> to vector<16x32xf32>
    %291 = arith.mulf %289, %290 : vector<16x32xf32>
    %292 = vector.broadcast %273 : vector<1x32xf32> to vector<16x32xf32>
    %293 = arith.addf %291, %292 : vector<16x32xf32>
    %c0_136 = arith.constant 0 : index
    %c0_137 = arith.constant 0 : index
    %294 = vector.load %arg33[%c0_136, %c0_137] : memref<16x32xf32, #tpu.memory_space<vmem>>, vector<16x32xf32>
    tpu.vector_store %arg33[%c0_136, %c0_137], %293 {strides = array<i32>} : memref<16x32xf32, #tpu.memory_space<vmem>>, vector<16x32xf32>,
    %c1_i32 = arith.constant 1 : i32
    %295 = arith.cmpi eq, %arg0, %c1_i32 : i32
    %296 = arith.extui %295 : i1 to i32
    %c0_i32_138 = arith.constant 0 : i32
    %297 = arith.cmpi ne, %296, %c0_i32_138 : i32
    scf.if %297 {
      %c0_139 = arith.constant 0 : index
      %c0_140 = arith.constant 0 : index
      %298 = vector.load %arg28[%c0_139, %c0_140] : memref<32x64xf32, #tpu.memory_space<vmem>>, vector<32x64xf32>
      %cst_141 = arith.constant dense<0.000000e+00> : vector<16x64xf32>
      %299 = tpu.matmul %293, %298, %cst_141 {dimension_numbers = #tpu.dot_dimension_numbers<[1], [0], [0], [1], [0, 0, 1, 1], [], []>} : vector<16x32xf32>, vector<32x64xf32>, vector<16x64xf32> -> vector<16x64xf32>
      %c0_142 = arith.constant 0 : index
      %c0_143 = arith.constant 0 : index
      %300 = vector.load %arg29[%c0_142, %c0_143] : memref<1x64xf32, #tpu.memory_space<vmem>>, vector<1x64xf32>
      %301 = vector.broadcast %300 : vector<1x64xf32> to vector<16x64xf32>
      %302 = arith.addf %299, %301 : vector<16x64xf32>
      %cst_144 = arith.constant 0.000000e+00 : f32
      %303 = vector.broadcast %cst_144 : f32 to vector<16x64xf32>
      %304 = arith.maximumf %302, %303 : vector<16x64xf32>
      %c0_145 = arith.constant 0 : index
      %c0_146 = arith.constant 0 : index
      %305 = vector.load %arg30[%c0_145, %c0_146] : memref<64x4xf32, #tpu.memory_space<vmem>>, vector<64x4xf32>
      %cst_147 = arith.constant dense<0.000000e+00> : vector<16x4xf32>
      %306 = tpu.matmul %304, %305, %cst_147 {dimension_numbers = #tpu.dot_dimension_numbers<[1], [0], [0], [1], [0, 0, 1, 1], [], []>} : vector<16x64xf32>, vector<64x4xf32>, vector<16x4xf32> -> vector<16x4xf32>
      %c0_148 = arith.constant 0 : index
      %c0_149 = arith.constant 0 : index
      %307 = vector.load %arg31[%c0_148, %c0_149] : memref<1x4xf32, #tpu.memory_space<vmem>>, vector<1x4xf32>
      %308 = vector.broadcast %307 : vector<1x4xf32> to vector<16x4xf32>
      %309 = arith.addf %306, %308 : vector<16x4xf32>
      %c0_150 = arith.constant 0 : index
      %c0_151 = arith.constant 0 : index
      %310 = vector.load %arg32[%c0_150, %c0_151] : memref<16x4xf32, #tpu.memory_space<vmem>>, vector<16x4xf32>
      tpu.vector_store %arg32[%c0_150, %c0_151], %309 {strides = array<i32>} : memref<16x4xf32, #tpu.memory_space<vmem>>, vector<16x4xf32>,
    } else {
    }
    return
  }
  func.func @transform_0(%arg0: i32) -> (i32, i32) {
    %c0_i32 = arith.constant 0 : i32
    %c0_i32_0 = arith.constant 0 : i32
    %c0_i32_1 = arith.constant 0 : i32
    return %c0_i32, %c0_i32_0 : i32, i32
  }
  func.func @transform_1(%arg0: i32) -> (i32, i32) {
    %c0_i32 = arith.constant 0 : i32
    %c0_i32_0 = arith.constant 0 : i32
    %c0_i32_1 = arith.constant 0 : i32
    return %c0_i32, %c0_i32_0 : i32, i32
  }
  func.func @transform_2(%arg0: i32) -> (i32, i32) {
    %c0_i32 = arith.constant 0 : i32
    %c0_i32_0 = arith.constant 0 : i32
    %c0_i32_1 = arith.constant 0 : i32
    return %c0_i32, %c0_i32_0 : i32, i32
  }
  func.func @transform_3(%arg0: i32) -> (i32, i32) {
    %c0_i32 = arith.constant 0 : i32
    %c0_i32_0 = arith.constant 0 : i32
    %c0_i32_1 = arith.constant 0 : i32
    return %c0_i32, %c0_i32_0 : i32, i32
  }
  func.func @transform_4(%arg0: i32) -> (i32, i32) {
    %c0_i32 = arith.constant 0 : i32
    %c0_i32_0 = arith.constant 0 : i32
    %c0_i32_1 = arith.constant 0 : i32
    return %c0_i32, %c0_i32_0 : i32, i32
  }
  func.func @transform_5(%arg0: i32) -> (i32, i32) {
    %c0_i32 = arith.constant 0 : i32
    %c0_i32_0 = arith.constant 0 : i32
    %c0_i32_1 = arith.constant 0 : i32
    return %c0_i32, %c0_i32_0 : i32, i32
  }
  func.func @transform_6(%arg0: i32) -> (i32, i32) {
    %c0_i32 = arith.constant 0 : i32
    %c0_i32_0 = arith.constant 0 : i32
    %c0_i32_1 = arith.constant 0 : i32
    return %c0_i32, %c0_i32_0 : i32, i32
  }
  func.func @transform_7(%arg0: i32) -> (i32, i32, i32) {
    %c0_i32 = arith.constant 0 : i32
    %c0_i32_0 = arith.constant 0 : i32
    %c0_i32_1 = arith.constant 0 : i32
    return %arg0, %c0_i32, %c0_i32_0 : i32, i32, i32
  }
  func.func @transform_8(%arg0: i32) -> (i32, i32, i32) {
    %c0_i32 = arith.constant 0 : i32
    %c0_i32_0 = arith.constant 0 : i32
    %c0_i32_1 = arith.constant 0 : i32
    return %arg0, %c0_i32, %c0_i32_0 : i32, i32, i32
  }
  func.func @transform_9(%arg0: i32) -> (i32, i32, i32) {
    %c0_i32 = arith.constant 0 : i32
    %c0_i32_0 = arith.constant 0 : i32
    %c0_i32_1 = arith.constant 0 : i32
    return %arg0, %c0_i32, %c0_i32_0 : i32, i32, i32
  }
  func.func @transform_10(%arg0: i32) -> (i32, i32, i32) {
    %c0_i32 = arith.constant 0 : i32
    %c0_i32_0 = arith.constant 0 : i32
    %c0_i32_1 = arith.constant 0 : i32
    return %arg0, %c0_i32, %c0_i32_0 : i32, i32, i32
  }
  func.func @transform_11(%arg0: i32) -> (i32, i32, i32) {
    %c0_i32 = arith.constant 0 : i32
    %c0_i32_0 = arith.constant 0 : i32
    %c0_i32_1 = arith.constant 0 : i32
    return %arg0, %c0_i32, %c0_i32_0 : i32, i32, i32
  }
  func.func @transform_12(%arg0: i32) -> (i32, i32, i32) {
    %c0_i32 = arith.constant 0 : i32
    %c0_i32_0 = arith.constant 0 : i32
    %c0_i32_1 = arith.constant 0 : i32
    return %arg0, %c0_i32, %c0_i32_0 : i32, i32, i32
  }
  func.func @transform_13(%arg0: i32) -> (i32, i32, i32) {
    %c0_i32 = arith.constant 0 : i32
    %c0_i32_0 = arith.constant 0 : i32
    %c0_i32_1 = arith.constant 0 : i32
    return %arg0, %c0_i32, %c0_i32_0 : i32, i32, i32
  }
  func.func @transform_14(%arg0: i32) -> (i32, i32, i32) {
    %c0_i32 = arith.constant 0 : i32
    %c0_i32_0 = arith.constant 0 : i32
    %c0_i32_1 = arith.constant 0 : i32
    return %arg0, %c0_i32, %c0_i32_0 : i32, i32, i32
  }
  func.func @transform_15(%arg0: i32) -> (i32, i32, i32) {
    %c0_i32 = arith.constant 0 : i32
    %c0_i32_0 = arith.constant 0 : i32
    %c0_i32_1 = arith.constant 0 : i32
    return %arg0, %c0_i32, %c0_i32_0 : i32, i32, i32
  }
  func.func @transform_16(%arg0: i32) -> (i32, i32, i32) {
    %c0_i32 = arith.constant 0 : i32
    %c0_i32_0 = arith.constant 0 : i32
    %c0_i32_1 = arith.constant 0 : i32
    return %arg0, %c0_i32, %c0_i32_0 : i32, i32, i32
  }
  func.func @transform_17(%arg0: i32) -> (i32, i32, i32) {
    %c0_i32 = arith.constant 0 : i32
    %c0_i32_0 = arith.constant 0 : i32
    %c0_i32_1 = arith.constant 0 : i32
    return %arg0, %c0_i32, %c0_i32_0 : i32, i32, i32
  }
  func.func @transform_18(%arg0: i32) -> (i32, i32, i32) {
    %c0_i32 = arith.constant 0 : i32
    %c0_i32_0 = arith.constant 0 : i32
    %c0_i32_1 = arith.constant 0 : i32
    return %arg0, %c0_i32, %c0_i32_0 : i32, i32, i32
  }
  func.func @transform_19(%arg0: i32) -> (i32, i32, i32) {
    %c0_i32 = arith.constant 0 : i32
    %c0_i32_0 = arith.constant 0 : i32
    %c0_i32_1 = arith.constant 0 : i32
    return %arg0, %c0_i32, %c0_i32_0 : i32, i32, i32
  }
  func.func @transform_20(%arg0: i32) -> (i32, i32, i32) {
    %c0_i32 = arith.constant 0 : i32
    %c0_i32_0 = arith.constant 0 : i32
    %c0_i32_1 = arith.constant 0 : i32
    return %arg0, %c0_i32, %c0_i32_0 : i32, i32, i32
  }
  func.func @transform_21(%arg0: i32) -> (i32, i32, i32) {
    %c0_i32 = arith.constant 0 : i32
    %c0_i32_0 = arith.constant 0 : i32
    %c0_i32_1 = arith.constant 0 : i32
    return %arg0, %c0_i32, %c0_i32_0 : i32, i32, i32
  }
  func.func @transform_22(%arg0: i32) -> (i32, i32, i32) {
    %c0_i32 = arith.constant 0 : i32
    %c0_i32_0 = arith.constant 0 : i32
    %c0_i32_1 = arith.constant 0 : i32
    return %arg0, %c0_i32, %c0_i32_0 : i32, i32, i32
  }
  func.func @transform_23(%arg0: i32) -> (i32, i32, i32) {
    %c0_i32 = arith.constant 0 : i32
    %c0_i32_0 = arith.constant 0 : i32
    %c0_i32_1 = arith.constant 0 : i32
    return %arg0, %c0_i32, %c0_i32_0 : i32, i32, i32
  }
  func.func @transform_24(%arg0: i32) -> (i32, i32, i32) {
    %c0_i32 = arith.constant 0 : i32
    %c0_i32_0 = arith.constant 0 : i32
    %c0_i32_1 = arith.constant 0 : i32
    return %arg0, %c0_i32, %c0_i32_0 : i32, i32, i32
  }
  func.func @transform_25(%arg0: i32) -> (i32, i32, i32) {
    %c0_i32 = arith.constant 0 : i32
    %c0_i32_0 = arith.constant 0 : i32
    %c0_i32_1 = arith.constant 0 : i32
    return %arg0, %c0_i32, %c0_i32_0 : i32, i32, i32
  }
  func.func @transform_26(%arg0: i32) -> (i32, i32, i32) {
    %c0_i32 = arith.constant 0 : i32
    %c0_i32_0 = arith.constant 0 : i32
    %c0_i32_1 = arith.constant 0 : i32
    return %arg0, %c0_i32, %c0_i32_0 : i32, i32, i32
  }
  func.func @transform_27(%arg0: i32) -> (i32, i32) {
    %c0_i32 = arith.constant 0 : i32
    %c0_i32_0 = arith.constant 0 : i32
    %c0_i32_1 = arith.constant 0 : i32
    return %c0_i32, %c0_i32_0 : i32, i32
  }
  func.func @transform_28(%arg0: i32) -> (i32, i32) {
    %c0_i32 = arith.constant 0 : i32
    %c0_i32_0 = arith.constant 0 : i32
    %c0_i32_1 = arith.constant 0 : i32
    return %c0_i32, %c0_i32_0 : i32, i32
  }
  func.func @transform_29(%arg0: i32) -> (i32, i32) {
    %c0_i32 = arith.constant 0 : i32
    %c0_i32_0 = arith.constant 0 : i32
    %c0_i32_1 = arith.constant 0 : i32
    return %c0_i32, %c0_i32_0 : i32, i32
  }
  func.func @transform_30(%arg0: i32) -> (i32, i32) {
    %c0_i32 = arith.constant 0 : i32
    %c0_i32_0 = arith.constant 0 : i32
    %c0_i32_1 = arith.constant 0 : i32
    return %c0_i32, %c0_i32_0 : i32, i32
  }
  func.func @transform_31(%arg0: i32) -> (i32, i32) {
    %c0_i32 = arith.constant 0 : i32
    %c0_i32_0 = arith.constant 0 : i32
    %c0_i32_1 = arith.constant 0 : i32
    return %c0_i32, %c0_i32_0 : i32, i32
  }
}

</mosaic_0001>

<llo_original>
// kernel: tile.8
$region0: #{tile.8}
  #allocation0 [shape = 's32[1]{0}', space=sflag, size = 0x4, scoped, tag = 'scoped memory for tile.8']
  %s0 = inlined_call_operand.vmem [shape: f32[8,8], index: 0, kind: input, shape index: {}]
  %s1 = inlined_call_operand.vmem [shape: f32[2,8,2,8], index: 1, kind: output, shape index: {}]
  // Predicated region
  $region2: #{tile.8} parent=0 // pred_check
    _
  $region3: #{tile.8} parent=0 // pred_check_branch
    %3 = sbr.rel (0) target = $region5
  $region4: #{tile.8} parent=0 // pred_region
    _
  $region5: #{tile.8} parent=0 // pred_fallthru
    _
  %v4 = vld [vmem:[%s0] ss:$0 sm:$0xff]
  %5 = vst [vmem:[%s1] sm:$0x3] %v4
  %s6 = scalar_lea.vmem %s1, 16
  %7 = vst [vmem:[%s6] sm:$0x3] %v4
  %s8 = scalar_lea.vmem %s0, 1
  %v9 = vld [vmem:[%s8] ss:$0 sm:$0xff]
  %s10 = scalar_lea.vmem %s1, 2
  %11 = vst [vmem:[%s10] sm:$0x3] %v9
  %s12 = scalar_lea.vmem %s1, 18
  %13 = vst [vmem:[%s12] sm:$0x3] %v9
  %s14 = scalar_lea.vmem %s0, 2
  %v15 = vld [vmem:[%s14] ss:$0 sm:$0xff]
  %s16 = scalar_lea.vmem %s1, 4
  %17 = vst [vmem:[%s16] sm:$0x3] %v15
  %s18 = scalar_lea.vmem %s1, 20
  %19 = vst [vmem:[%s18] sm:$0x3] %v15
  %s20 = scalar_lea.vmem %s0, 3
  %v21 = vld [vmem:[%s20] ss:$0 sm:$0xff]
  %s22 = scalar_lea.vmem %s1, 6
  %23 = vst [vmem:[%s22] sm:$0x3] %v21
  %s24 = scalar_lea.vmem %s1, 22
  %25 = vst [vmem:[%s24] sm:$0x3] %v21
  %s26 = scalar_lea.vmem %s0, 4
  %v27 = vld [vmem:[%s26] ss:$0 sm:$0xff]
  %s28 = scalar_lea.vmem %s1, 8
  %29 = vst [vmem:[%s28] sm:$0x3] %v27
  %s30 = scalar_lea.vmem %s1, 24
  %31 = vst [vmem:[%s30] sm:$0x3] %v27
  %s32 = scalar_lea.vmem %s0, 5
  %v33 = vld [vmem:[%s32] ss:$0 sm:$0xff]
  %s34 = scalar_lea.vmem %s1, 10
  %35 = vst [vmem:[%s34] sm:$0x3] %v33
  %s36 = scalar_lea.vmem %s1, 26
  %37 = vst [vmem:[%s36] sm:$0x3] %v33
  %s38 = scalar_lea.vmem %s0, 6
  %v39 = vld [vmem:[%s38] ss:$0 sm:$0xff]
  %s40 = scalar_lea.vmem %s1, 12
  %41 = vst [vmem:[%s40] sm:$0x3] %v39
  %s42 = scalar_lea.vmem %s1, 28
  %43 = vst [vmem:[%s42] sm:$0x3] %v39
  %s44 = scalar_lea.vmem %s0, 7
  %v45 = vld [vmem:[%s44] ss:$0 sm:$0xff]
  %s46 = scalar_lea.vmem %s1, 14
  %47 = vst [vmem:[%s46] sm:$0x3] %v45
  %s48 = scalar_lea.vmem %s1, 30
  %49 = vst [vmem:[%s48] sm:$0x3] %v45

// kernel: eq.22
$region0: #{eq.22}
  %s0 = inlined_call_operand.vmem [shape: s32[2,8], index: 0, kind: input, shape index: {}]
  %s1 = inlined_call_operand.vmem [shape: s32[16], index: 1, kind: output, shape index: {}]
  $region1: #{eq.22} parent=0
    #allocation0 [shape = 'u8[4096]{0}', space=vmem, size = 0x1000, scoped, tag = 'scoped mem for output reshape']
    #allocation1 [shape = 'u8[4096]{0}', space=vmem, size = 0x1000, scoped, tag = 'scoped mem for input reshape']
    %s3 = sshll.u32 1, 2
    %s4 = ssub.s32 %s3, 1
    %v5 = vld [vmem:[%s0] sm:%s4]
    %6 = vst [vmem:[#allocation1] sm:%s4] %v5
    %v7 = vld [vmem:[#allocation1] sm:$0x1]
    %vm8 = vcmask 64512
    %9 = vst.msk [vmem:[#allocation0] sm:$0x1] %vm8, %v7
    %s10 = scalar_lea.vmem [#allocation1], 1
    %v11 = vld [vmem:[%s10] sm:$0x1]
    %12 = vrot.lane.b32.xlu0 %v11, 8
    %v13 = vpop.permute.xlu0 %12
    %vm14 = vcmask 130112
    %15 = vst.msk [vmem:[#allocation0] sm:$0x1] %vm14, %v13
    %s17 = sshll.u32 1, 1
    %s18 = ssub.s32 %s17, 1
    %v20 = vld [vmem:[#allocation0] sm:%s18]
    %s21 = sshll.u32 1, 1
    %s22 = ssub.s32 %s21, 1
    %23 = vst [vmem:[%s1] sm:%s22] %v20

// kernel: tile.9
$region0: #{tile.9}
  %s0 = inlined_call_operand.vmem [shape: f32[2,8,2,8], index: 0, kind: input, shape index: {}]
  %s1 = inlined_call_operand.vmem [shape: f32[16,16], index: 1, kind: output, shape index: {}]
  $region1: #{tile.9} parent=0
    #allocation0 [shape = 'u8[65536]{0}', space=vmem, size = 0x10000, scoped, tag = 'scoped mem for input reshape']
    %s3 = sshll.u32 1, 2
    %s4 = ssub.s32 %s3, 1
    %s5 = smul.addr 2, 15
    %s6 = scalar_lea.vmem %s0, %s5
    %v7 = vld [vmem:[%s6] sm:%s4]
    %s8 = scalar_lea.vmem [#allocation0], 120
    %9 = vst [vmem:[%s8] sm:%s4] %v7
    %s10 = smul.addr 2, 14
    %s11 = scalar_lea.vmem %s0, %s10
    %v12 = vld [vmem:[%s11] sm:%s4]
    %s13 = scalar_lea.vmem [#allocation0], 112
    %14 = vst [vmem:[%s13] sm:%s4] %v12
    %s15 = smul.addr 2, 13
    %s16 = scalar_lea.vmem %s0, %s15
    %v17 = vld [vmem:[%s16] sm:%s4]
    %s18 = scalar_lea.vmem [#allocation0], 104
    %19 = vst [vmem:[%s18] sm:%s4] %v17
    %s20 = smul.addr 2, 12
    %s21 = scalar_lea.vmem %s0, %s20
    %v22 = vld [vmem:[%s21] sm:%s4]
    %s23 = scalar_lea.vmem [#allocation0], 96
    %24 = vst [vmem:[%s23] sm:%s4] %v22
    %s25 = smul.addr 2, 11
    %s26 = scalar_lea.vmem %s0, %s25
    %v27 = vld [vmem:[%s26] sm:%s4]
    %s28 = scalar_lea.vmem [#allocation0], 88
    %29 = vst [vmem:[%s28] sm:%s4] %v27
    %s30 = smul.addr 2, 10
    %s31 = scalar_lea.vmem %s0, %s30
    %v32 = vld [vmem:[%s31] sm:%s4]
    %s33 = scalar_lea.vmem [#allocation0], 80
    %34 = vst [vmem:[%s33] sm:%s4] %v32
    %s35 = smul.addr 2, 9
    %s36 = scalar_lea.vmem %s0, %s35
    %v37 = vld [vmem:[%s36] sm:%s4]
    %s38 = scalar_lea.vmem [#allocation0], 72
    %39 = vst [vmem:[%s38] sm:%s4] %v37
    %s40 = smul.addr 2, 8
    %s41 = scalar_lea.vmem %s0, %s40
    %v42 = vld [vmem:[%s41] sm:%s4]
    %s43 = scalar_lea.vmem [#allocation0], 64
    %44 = vst [vmem:[%s43] sm:%s4] %v42
    %s45 = smul.addr 2, 7
    %s46 = scalar_lea.vmem %s0, %s45
    %v47 = vld [vmem:[%s46] sm:%s4]
    %s48 = scalar_lea.vmem [#allocation0], 56
    %49 = vst [vmem:[%s48] sm:%s4] %v47
    %s50 = smul.addr 2, 6
    %s51 = scalar_lea.vmem %s0, %s50
    %v52 = vld [vmem:[%s51] sm:%s4]
    %s53 = scalar_lea.vmem [#allocation0], 48
    %54 = vst [vmem:[%s53] sm:%s4] %v52
    %s55 = smul.addr 2, 5
    %s56 = scalar_lea.vmem %s0, %s55
    %v57 = vld [vmem:[%s56] sm:%s4]
    %s58 = scalar_lea.vmem [#allocation0], 40
    %59 = vst [vmem:[%s58] sm:%s4] %v57
    %s60 = smul.addr 2, 4
    %s61 = scalar_lea.vmem %s0, %s60
    %v62 = vld [vmem:[%s61] sm:%s4]
    %s63 = scalar_lea.vmem [#allocation0], 32
    %64 = vst [vmem:[%s63] sm:%s4] %v62
    %s65 = smul.addr 2, 3
    %s66 = scalar_lea.vmem %s0, %s65
    %v67 = vld [vmem:[%s66] sm:%s4]
    %s68 = scalar_lea.vmem [#allocation0], 24
    %69 = vst [vmem:[%s68] sm:%s4] %v67
    %s70 = smul.addr 2, 2
    %s71 = scalar_lea.vmem %s0, %s70
    %v72 = vld [vmem:[%s71] sm:%s4]
    %s73 = scalar_lea.vmem [#allocation0], 16
    %74 = vst [vmem:[%s73] sm:%s4] %v72
    %s75 = scalar_lea.vmem %s0, 2
    %v76 = vld [vmem:[%s75] sm:%s4]
    %s77 = scalar_lea.vmem [#allocation0], 8
    %78 = vst [vmem:[%s77] sm:%s4] %v76
    %v79 = vld [vmem:[%s0] sm:%s4]
    %80 = vst [vmem:[#allocation0] sm:%s4] %v79
    %v81 = vld [vmem:[#allocation0] ss:$8 sm:$0xf]
    %v82 = vld [vmem:[#allocation0] ss:$8 sm:$0xf0]
    %vm83 = vcmask 1047556
    %v84 = vsel %vm83, %v82, %v81
    %vm85 = vcmask 64512
    %86 = vst.msk [vmem:[%s1] sm:$0xff] %vm85, %v84
    %s87 = scalar_lea.vmem [#allocation0], 64
    %v88 = vld [vmem:[%s87] ss:$8 sm:$0xf]
    %s89 = scalar_lea.vmem [#allocation0], 64
    %v90 = vld [vmem:[%s89] ss:$8 sm:$0xf0]
    %vm91 = vcmask 1047556
    %v92 = vsel %vm91, %v90, %v88
    %vm93 = vcmask 64512
    %s94 = scalar_lea.vmem %s1, 8
    %95 = vst.msk [vmem:[%s94] sm:$0xff] %vm93, %v92
    %s96 = scalar_lea.vmem [#allocation0], 1
    %v97 = vld [vmem:[%s96] ss:$8 sm:$0xf]
    %s98 = scalar_lea.vmem [#allocation0], 1
    %v99 = vld [vmem:[%s98] ss:$8 sm:$0xf0]
    %vm100 = vcmask 1047556
    %v101 = vsel %vm100, %v99, %v97
    %102 = vrot.lane.b32.xlu0 %v101, 8
    %v103 = vpop.permute.xlu0 %102
    %vm104 = vcmask 130112
    %105 = vst.msk [vmem:[%s1] sm:$0xff] %vm104, %v103
    %s106 = scalar_lea.vmem [#allocation0], 65
    %v107 = vld [vmem:[%s106] ss:$8 sm:$0xf]
    %s108 = scalar_lea.vmem [#allocation0], 65
    %v109 = vld [vmem:[%s108] ss:$8 sm:$0xf0]
    %vm110 = vcmask 1047556
    %v111 = vsel %vm110, %v109, %v107
    %112 = vrot.lane.b32.xlu0 %v111, 8
    %v113 = vpop.permute.xlu0 %112
    %vm114 = vcmask 130112
    %s115 = scalar_lea.vmem %s1, 8
    %116 = vst.msk [vmem:[%s115] sm:$0xff] %vm114, %v113

// kernel: transformer_forward.2
$region0: #{transformer_forward.2}
  #allocation0 [shape = 'u32[]', space=smem, size = 0x4, offset = 0x4, fixed_abs, tag = 'smem constant byte address 0x4 - core index']
  #allocation1 [shape = 'u32[144,128]{1,0:T(1,128)}', space=vmem, size = 0x12000, scoped, tag = 'internal scratch']
  #allocation2 [shape = 'f32[16,32]{1,0:T(8,128)}', space=vmem, size = 0x2000, scoped, tag = 'scratch operand']
  %s0 = inlined_call_operand.vmem [shape: f32[16,4], index: 0, kind: input, shape index: {}]
  %s1 = inlined_call_operand.vmem [shape: f32[16,32], index: 1, kind: input, shape index: {}]
  %s2 = inlined_call_operand.vmem [shape: f32[4,32], index: 2, kind: input, shape index: {}]
  %s3 = inlined_call_operand.vmem [shape: f32[1,32], index: 3, kind: input, shape index: {}]
  %s4 = inlined_call_operand.vmem [shape: f32[16,16], index: 4, kind: input, shape index: {}]
  %s5 = inlined_call_operand.vmem [shape: f32[2,32,96], index: 5, kind: input, shape index: {}]
  %s6 = inlined_call_operand.vmem [shape: f32[2,1,96], index: 6, kind: input, shape index: {}]
  %s7 = inlined_call_operand.vmem [shape: f32[2,32,32], index: 7, kind: input, shape index: {}]
  %s8 = inlined_call_operand.vmem [shape: f32[2,1,32], index: 8, kind: input, shape index: {}]
  %s9 = inlined_call_operand.vmem [shape: f32[2,1,32], index: 9, kind: input, shape index: {}]
  %s10 = inlined_call_operand.vmem [shape: f32[2,1,32], index: 10, kind: input, shape index: {}]
  %s11 = inlined_call_operand.vmem [shape: f32[2,32,128], index: 11, kind: input, shape index: {}]
  %s12 = inlined_call_operand.vmem [shape: f32[2,1,128], index: 12, kind: input, shape index: {}]
  %s13 = inlined_call_operand.vmem [shape: f32[2,128,32], index: 13, kind: input, shape index: {}]
  %s14 = inlined_call_operand.vmem [shape: f32[2,1,32], index: 14, kind: input, shape index: {}]
  %s15 = inlined_call_operand.vmem [shape: f32[2,1,32], index: 15, kind: input, shape index: {}]
  %s16 = inlined_call_operand.vmem [shape: f32[2,1,32], index: 16, kind: input, shape index: {}]
  %s17 = inlined_call_operand.vmem [shape: f32[16,32], index: 17, kind: output, shape index: {}]
  %s18 = sld [smem:[#allocation0]]
  $region109: #{transformer_forward.2} parent=0
    _
  %s20 = ssub.s32 1, %s18
  %s21 = scalar_select 0, %s20, %s18
  loop: start=0, step=1, limit=4
  $region2: #{transformer_forward.2} parent=0 // loop_pre_header
    _
  $region3: #{transformer_forward.2} parent=0 // loop_header
    %s23 = sphi 0, %s27
    %p24 = scmp.ge.s32.totalorder %s23, 4
    %s31 = sphi 0, %s31
    %s33 = sphi 0, %s31
    %s34 = sphi 0, %s33
    %s48 = sphi 0, %s34
    %s52 = sphi 0, %s52
    %s54 = sphi 0, %s52
    %s55 = sphi 0, %s54
    %s69 = sphi 0, %s55
    %s73 = sphi 0, %s73
    %s75 = sphi 0, %s73
    %s76 = sphi 0, %s75
    %s90 = sphi 0, %s76
    %s94 = sphi 0, %s94
    %s96 = sphi 0, %s94
    %s97 = sphi 0, %s96
    %s111 = sphi 0, %s97
    %s115 = sphi 0, %s115
    %s117 = sphi 0, %s115
    %s118 = sphi 0, %s117
    %s132 = sphi 0, %s118
    %s138 = sphi 0, %s140
    %s141 = sphi 0, %s138
    %s142 = sphi 0, %s141
    %s158 = sphi 0, %s142
    %s164 = sphi 0, %s166
    %s167 = sphi 0, %s164
    %s168 = sphi 0, %s167
    %s184 = sphi 0, %s168
    %s190 = sphi 0, %s192
    %s193 = sphi 0, %s190
    %s194 = sphi 0, %s193
    %s210 = sphi 0, %s194
    %s216 = sphi 0, %s218
    %s219 = sphi 0, %s216
    %s220 = sphi 0, %s219
    %s236 = sphi 0, %s220
    %s242 = sphi 0, %s244
    %s245 = sphi 0, %s242
    %s246 = sphi 0, %s245
    %s262 = sphi 0, %s246
    %s268 = sphi 0, %s270
    %s271 = sphi 0, %s268
    %s272 = sphi 0, %s271
    %s288 = sphi 0, %s272
    %s294 = sphi 0, %s296
    %s297 = sphi 0, %s294
    %s298 = sphi 0, %s297
    %s314 = sphi 0, %s298
    %s320 = sphi 0, %s322
    %s323 = sphi 0, %s320
    %s324 = sphi 0, %s323
    %s340 = sphi 0, %s324
    %s346 = sphi 0, %s348
    %s349 = sphi 0, %s346
    %s350 = sphi 0, %s349
    %s366 = sphi 0, %s350
    %s372 = sphi 0, %s374
    %s375 = sphi 0, %s372
    %s376 = sphi 0, %s375
    %s392 = sphi 0, %s376
    %s398 = sphi 0, %s400
    %s401 = sphi 0, %s398
    %s402 = sphi 0, %s401
    %s418 = sphi 0, %s402
    %s424 = sphi 0, %s426
    %s427 = sphi 0, %s424
    %s428 = sphi 0, %s427
    %s444 = sphi 0, %s428
    %s448 = sphi 0, %s448
    %s450 = sphi 0, %s448
    %s451 = sphi 0, %s450
    %s465 = sphi 0, %s451
  $region4: #{transformer_forward.2} parent=0 // loop_header_branch
    %26 = sbr.rel (%p24) target = $region8
  $region5: #{transformer_forward.2} parent=0 // loop_body
    %s28 = ssub.s32 %s23, 1
    %s29 = ssub.s32 %s23, 2
    %s30 = sadd.s32 %s23, 1
    %s32 = sadd.s32 %s31, 1
    %p35 = scmp.eq.s32.totalorder %s23, 1
    %p36 = scmp.ne.s32.totalorder %s31, %s33
    %p37 = scmp.eq.s32.totalorder %s23, 0
    %p38 = por %p36, %p37
    %p39 = scmp.ne.s32.totalorder %s31, %s33
    %p40 = scmp.eq.s32.totalorder %s28, 1
    %p41 = por %p39, %p40
    %p42 = scmp.ne.s32.totalorder %s33, %s34
    %p43 = scmp.eq.s32.totalorder %s28, 0
    %p44 = por %p42, %p43
    %p45 = scmp.ne.s32.totalorder %s33, %s34
    %p46 = scmp.eq.s32.totalorder %s29, 1
    %p47 = por %p45, %p46
    %p49 = scmp.ne.s32.totalorder %s34, %s48
    %p50 = scmp.eq.s32.totalorder %s29, 0
    %p51 = por %p49, %p50
    %s53 = sadd.s32 %s52, 1
    %p56 = scmp.eq.s32.totalorder %s23, 1
    %p57 = scmp.ne.s32.totalorder %s52, %s54
    %p58 = scmp.eq.s32.totalorder %s23, 0
    %p59 = por %p57, %p58
    %p60 = scmp.ne.s32.totalorder %s52, %s54
    %p61 = scmp.eq.s32.totalorder %s28, 1
    %p62 = por %p60, %p61
    %p63 = scmp.ne.s32.totalorder %s54, %s55
    %p64 = scmp.eq.s32.totalorder %s28, 0
    %p65 = por %p63, %p64
    %p66 = scmp.ne.s32.totalorder %s54, %s55
    %p67 = scmp.eq.s32.totalorder %s29, 1
    %p68 = por %p66, %p67
    %p70 = scmp.ne.s32.totalorder %s55, %s69
    %p71 = scmp.eq.s32.totalorder %s29, 0
    %p72 = por %p70, %p71
    %s74 = sadd.s32 %s73, 1
    %p77 = scmp.eq.s32.totalorder %s23, 1
    %p78 = scmp.ne.s32.totalorder %s73, %s75
    %p79 = scmp.eq.s32.totalorder %s23, 0
    %p80 = por %p78, %p79
    %p81 = scmp.ne.s32.totalorder %s73, %s75
    %p82 = scmp.eq.s32.totalorder %s28, 1
    %p83 = por %p81, %p82
    %p84 = scmp.ne.s32.totalorder %s75, %s76
    %p85 = scmp.eq.s32.totalorder %s28, 0
    %p86 = por %p84, %p85
    %p87 = scmp.ne.s32.totalorder %s75, %s76
    %p88 = scmp.eq.s32.totalorder %s29, 1
    %p89 = por %p87, %p88
    %p91 = scmp.ne.s32.totalorder %s76, %s90
    %p92 = scmp.eq.s32.totalorder %s29, 0
    %p93 = por %p91, %p92
    %s95 = sadd.s32 %s94, 1
    %p98 = scmp.eq.s32.totalorder %s23, 1
    %p99 = scmp.ne.s32.totalorder %s94, %s96
    %p100 = scmp.eq.s32.totalorder %s23, 0
    %p101 = por %p99, %p100
    %p102 = scmp.ne.s32.totalorder %s94, %s96
    %p103 = scmp.eq.s32.totalorder %s28, 1
    %p104 = por %p102, %p103
    %p105 = scmp.ne.s32.totalorder %s96, %s97
    %p106 = scmp.eq.s32.totalorder %s28, 0
    %p107 = por %p105, %p106
    %p108 = scmp.ne.s32.totalorder %s96, %s97
    %p109 = scmp.eq.s32.totalorder %s29, 1
    %p110 = por %p108, %p109
    %p112 = scmp.ne.s32.totalorder %s97, %s111
    %p113 = scmp.eq.s32.totalorder %s29, 0
    %p114 = por %p112, %p113
    %s116 = sadd.s32 %s115, 1
    %p119 = scmp.eq.s32.totalorder %s23, 1
    %p120 = scmp.ne.s32.totalorder %s115, %s117
    %p121 = scmp.eq.s32.totalorder %s23, 0
    %p122 = por %p120, %p121
    %p123 = scmp.ne.s32.totalorder %s115, %s117
    %p124 = scmp.eq.s32.totalorder %s28, 1
    %p125 = por %p123, %p124
    %p126 = scmp.ne.s32.totalorder %s117, %s118
    %p127 = scmp.eq.s32.totalorder %s28, 0
    %p128 = por %p126, %p127
    %p129 = scmp.ne.s32.totalorder %s117, %s118
    %p130 = scmp.eq.s32.totalorder %s29, 1
    %p131 = por %p129, %p130
    %p133 = scmp.ne.s32.totalorder %s118, %s132
    %p134 = scmp.eq.s32.totalorder %s29, 0
    %p135 = por %p133, %p134
    %s136 = ssub.s32 %s23, %s30
    %p137 = scmp.eq.s32.totalorder %s136, 0
    %s139 = sadd.s32 %s138, 1
    %s140 = scalar_select %p137, %s138, %s139
    %p143 = pneg %p137
    %p144 = scmp.eq.s32.totalorder %s23, 1
    %p145 = por %p143, %p144
    %p146 = scmp.ne.s32.totalorder %s138, %s141
    %p147 = scmp.eq.s32.totalorder %s23, 0
    %p148 = por %p146, %p147
    %p149 = scmp.ne.s32.totalorder %s138, %s141
    %p150 = scmp.eq.s32.totalorder %s28, 1
    %p151 = por %p149, %p150
    %p152 = scmp.ne.s32.totalorder %s141, %s142
    %p153 = scmp.eq.s32.totalorder %s28, 0
    %p154 = por %p152, %p153
    %p155 = scmp.ne.s32.totalorder %s141, %s142
    %p156 = scmp.eq.s32.totalorder %s29, 1
    %p157 = por %p155, %p156
    %p159 = scmp.ne.s32.totalorder %s142, %s158
    %p160 = scmp.eq.s32.totalorder %s29, 0
    %p161 = por %p159, %p160
    %s162 = ssub.s32 %s23, %s30
    %p163 = scmp.eq.s32.totalorder %s162, 0
    %s165 = sadd.s32 %s164, 1
    %s166 = scalar_select %p163, %s164, %s165
    %p169 = pneg %p163
    %p170 = scmp.eq.s32.totalorder %s23, 1
    %p171 = por %p169, %p170
    %p172 = scmp.ne.s32.totalorder %s164, %s167
    %p173 = scmp.eq.s32.totalorder %s23, 0
    %p174 = por %p172, %p173
    %p175 = scmp.ne.s32.totalorder %s164, %s167
    %p176 = scmp.eq.s32.totalorder %s28, 1
    %p177 = por %p175, %p176
    %p178 = scmp.ne.s32.totalorder %s167, %s168
    %p179 = scmp.eq.s32.totalorder %s28, 0
    %p180 = por %p178, %p179
    %p181 = scmp.ne.s32.totalorder %s167, %s168
    %p182 = scmp.eq.s32.totalorder %s29, 1
    %p183 = por %p181, %p182
    %p185 = scmp.ne.s32.totalorder %s168, %s184
    %p186 = scmp.eq.s32.totalorder %s29, 0
    %p187 = por %p185, %p186
    %s188 = ssub.s32 %s23, %s30
    %p189 = scmp.eq.s32.totalorder %s188, 0
    %s191 = sadd.s32 %s190, 1
    %s192 = scalar_select %p189, %s190, %s191
    %p195 = pneg %p189
    %p196 = scmp.eq.s32.totalorder %s23, 1
    %p197 = por %p195, %p196
    %p198 = scmp.ne.s32.totalorder %s190, %s193
    %p199 = scmp.eq.s32.totalorder %s23, 0
    %p200 = por %p198, %p199
    %p201 = scmp.ne.s32.totalorder %s190, %s193
    %p202 = scmp.eq.s32.totalorder %s28, 1
    %p203 = por %p201, %p202
    %p204 = scmp.ne.s32.totalorder %s193, %s194
    %p205 = scmp.eq.s32.totalorder %s28, 0
    %p206 = por %p204, %p205
    %p207 = scmp.ne.s32.totalorder %s193, %s194
    %p208 = scmp.eq.s32.totalorder %s29, 1
    %p209 = por %p207, %p208
    %p211 = scmp.ne.s32.totalorder %s194, %s210
    %p212 = scmp.eq.s32.totalorder %s29, 0
    %p213 = por %p211, %p212
    %s214 = ssub.s32 %s23, %s30
    %p215 = scmp.eq.s32.totalorder %s214, 0
    %s217 = sadd.s32 %s216, 1
    %s218 = scalar_select %p215, %s216, %s217
    %p221 = pneg %p215
    %p222 = scmp.eq.s32.totalorder %s23, 1
    %p223 = por %p221, %p222
    %p224 = scmp.ne.s32.totalorder %s216, %s219
    %p225 = scmp.eq.s32.totalorder %s23, 0
    %p226 = por %p224, %p225
    %p227 = scmp.ne.s32.totalorder %s216, %s219
    %p228 = scmp.eq.s32.totalorder %s28, 1
    %p229 = por %p227, %p228
    %p230 = scmp.ne.s32.totalorder %s219, %s220
    %p231 = scmp.eq.s32.totalorder %s28, 0
    %p232 = por %p230, %p231
    %p233 = scmp.ne.s32.totalorder %s219, %s220
    %p234 = scmp.eq.s32.totalorder %s29, 1
    %p235 = por %p233, %p234
    %p237 = scmp.ne.s32.totalorder %s220, %s236
    %p238 = scmp.eq.s32.totalorder %s29, 0
    %p239 = por %p237, %p238
    %s240 = ssub.s32 %s23, %s30
    %p241 = scmp.eq.s32.totalorder %s240, 0
    %s243 = sadd.s32 %s242, 1
    %s244 = scalar_select %p241, %s242, %s243
    %p247 = pneg %p241
    %p248 = scmp.eq.s32.totalorder %s23, 1
    %p249 = por %p247, %p248
    %p250 = scmp.ne.s32.totalorder %s242, %s245
    %p251 = scmp.eq.s32.totalorder %s23, 0
    %p252 = por %p250, %p251
    %p253 = scmp.ne.s32.totalorder %s242, %s245
    %p254 = scmp.eq.s32.totalorder %s28, 1
    %p255 = por %p253, %p254
    %p256 = scmp.ne.s32.totalorder %s245, %s246
    %p257 = scmp.eq.s32.totalorder %s28, 0
    %p258 = por %p256, %p257
    %p259 = scmp.ne.s32.totalorder %s245, %s246
    %p260 = scmp.eq.s32.totalorder %s29, 1
    %p261 = por %p259, %p260
    %p263 = scmp.ne.s32.totalorder %s246, %s262
    %p264 = scmp.eq.s32.totalorder %s29, 0
    %p265 = por %p263, %p264
    %s266 = ssub.s32 %s23, %s30
    %p267 = scmp.eq.s32.totalorder %s266, 0
    %s269 = sadd.s32 %s268, 1
    %s270 = scalar_select %p267, %s268, %s269
    %p273 = pneg %p267
    %p274 = scmp.eq.s32.totalorder %s23, 1
    %p275 = por %p273, %p274
    %p276 = scmp.ne.s32.totalorder %s268, %s271
    %p277 = scmp.eq.s32.totalorder %s23, 0
    %p278 = por %p276, %p277
    %p279 = scmp.ne.s32.totalorder %s268, %s271
    %p280 = scmp.eq.s32.totalorder %s28, 1
    %p281 = por %p279, %p280
    %p282 = scmp.ne.s32.totalorder %s271, %s272
    %p283 = scmp.eq.s32.totalorder %s28, 0
    %p284 = por %p282, %p283
    %p285 = scmp.ne.s32.totalorder %s271, %s272
    %p286 = scmp.eq.s32.totalorder %s29, 1
    %p287 = por %p285, %p286
    %p289 = scmp.ne.s32.totalorder %s272, %s288
    %p290 = scmp.eq.s32.totalorder %s29, 0
    %p291 = por %p289, %p290
    %s292 = ssub.s32 %s23, %s30
    %p293 = scmp.eq.s32.totalorder %s292, 0
    %s295 = sadd.s32 %s294, 1
    %s296 = scalar_select %p293, %s294, %s295
    %p299 = pneg %p293
    %p300 = scmp.eq.s32.totalorder %s23, 1
    %p301 = por %p299, %p300
    %p302 = scmp.ne.s32.totalorder %s294, %s297
    %p303 = scmp.eq.s32.totalorder %s23, 0
    %p304 = por %p302, %p303
    %p305 = scmp.ne.s32.totalorder %s294, %s297
    %p306 = scmp.eq.s32.totalorder %s28, 1
    %p307 = por %p305, %p306
    %p308 = scmp.ne.s32.totalorder %s297, %s298
    %p309 = scmp.eq.s32.totalorder %s28, 0
    %p310 = por %p308, %p309
    %p311 = scmp.ne.s32.totalorder %s297, %s298
    %p312 = scmp.eq.s32.totalorder %s29, 1
    %p313 = por %p311, %p312
    %p315 = scmp.ne.s32.totalorder %s298, %s314
    %p316 = scmp.eq.s32.totalorder %s29, 0
    %p317 = por %p315, %p316
    %s318 = ssub.s32 %s23, %s30
    %p319 = scmp.eq.s32.totalorder %s318, 0
    %s321 = sadd.s32 %s320, 1
    %s322 = scalar_select %p319, %s320, %s321
    %p325 = pneg %p319
    %p326 = scmp.eq.s32.totalorder %s23, 1
    %p327 = por %p325, %p326
    %p328 = scmp.ne.s32.totalorder %s320, %s323
    %p329 = scmp.eq.s32.totalorder %s23, 0
    %p330 = por %p328, %p329
    %p331 = scmp.ne.s32.totalorder %s320, %s323
    %p332 = scmp.eq.s32.totalorder %s28, 1
    %p333 = por %p331, %p332
    %p334 = scmp.ne.s32.totalorder %s323, %s324
    %p335 = scmp.eq.s32.totalorder %s28, 0
    %p336 = por %p334, %p335
    %p337 = scmp.ne.s32.totalorder %s323, %s324
    %p338 = scmp.eq.s32.totalorder %s29, 1
    %p339 = por %p337, %p338
    %p341 = scmp.ne.s32.totalorder %s324, %s340
    %p342 = scmp.eq.s32.totalorder %s29, 0
    %p343 = por %p341, %p342
    %s344 = ssub.s32 %s23, %s30
    %p345 = scmp.eq.s32.totalorder %s344, 0
    %s347 = sadd.s32 %s346, 1
    %s348 = scalar_select %p345, %s346, %s347
    %p351 = pneg %p345
    %p352 = scmp.eq.s32.totalorder %s23, 1
    %p353 = por %p351, %p352
    %p354 = scmp.ne.s32.totalorder %s346, %s349
    %p355 = scmp.eq.s32.totalorder %s23, 0
    %p356 = por %p354, %p355
    %p357 = scmp.ne.s32.totalorder %s346, %s349
    %p358 = scmp.eq.s32.totalorder %s28, 1
    %p359 = por %p357, %p358
    %p360 = scmp.ne.s32.totalorder %s349, %s350
    %p361 = scmp.eq.s32.totalorder %s28, 0
    %p362 = por %p360, %p361
    %p363 = scmp.ne.s32.totalorder %s349, %s350
    %p364 = scmp.eq.s32.totalorder %s29, 1
    %p365 = por %p363, %p364
    %p367 = scmp.ne.s32.totalorder %s350, %s366
    %p368 = scmp.eq.s32.totalorder %s29, 0
    %p369 = por %p367, %p368
    %s370 = ssub.s32 %s23, %s30
    %p371 = scmp.eq.s32.totalorder %s370, 0
    %s373 = sadd.s32 %s372, 1
    %s374 = scalar_select %p371, %s372, %s373
    %p377 = pneg %p371
    %p378 = scmp.eq.s32.totalorder %s23, 1
    %p379 = por %p377, %p378
    %p380 = scmp.ne.s32.totalorder %s372, %s375
    %p381 = scmp.eq.s32.totalorder %s23, 0
    %p382 = por %p380, %p381
    %p383 = scmp.ne.s32.totalorder %s372, %s375
    %p384 = scmp.eq.s32.totalorder %s28, 1
    %p385 = por %p383, %p384
    %p386 = scmp.ne.s32.totalorder %s375, %s376
    %p387 = scmp.eq.s32.totalorder %s28, 0
    %p388 = por %p386, %p387
    %p389 = scmp.ne.s32.totalorder %s375, %s376
    %p390 = scmp.eq.s32.totalorder %s29, 1
    %p391 = por %p389, %p390
    %p393 = scmp.ne.s32.totalorder %s376, %s392
    %p394 = scmp.eq.s32.totalorder %s29, 0
    %p395 = por %p393, %p394
    %s396 = ssub.s32 %s23, %s30
    %p397 = scmp.eq.s32.totalorder %s396, 0
    %s399 = sadd.s32 %s398, 1
    %s400 = scalar_select %p397, %s398, %s399
    %p403 = pneg %p397
    %p404 = scmp.eq.s32.totalorder %s23, 1
    %p405 = por %p403, %p404
    %p406 = scmp.ne.s32.totalorder %s398, %s401
    %p407 = scmp.eq.s32.totalorder %s23, 0
    %p408 = por %p406, %p407
    %p409 = scmp.ne.s32.totalorder %s398, %s401
    %p410 = scmp.eq.s32.totalorder %s28, 1
    %p411 = por %p409, %p410
    %p412 = scmp.ne.s32.totalorder %s401, %s402
    %p413 = scmp.eq.s32.totalorder %s28, 0
    %p414 = por %p412, %p413
    %p415 = scmp.ne.s32.totalorder %s401, %s402
    %p416 = scmp.eq.s32.totalorder %s29, 1
    %p417 = por %p415, %p416
    %p419 = scmp.ne.s32.totalorder %s402, %s418
    %p420 = scmp.eq.s32.totalorder %s29, 0
    %p421 = por %p419, %p420
    %s422 = ssub.s32 %s23, %s30
    %p423 = scmp.eq.s32.totalorder %s422, 0
    %s425 = sadd.s32 %s424, 1
    %s426 = scalar_select %p423, %s424, %s425
    %p429 = pneg %p423
    %p430 = scmp.eq.s32.totalorder %s23, 1
    %p431 = por %p429, %p430
    %p432 = scmp.ne.s32.totalorder %s424, %s427
    %p433 = scmp.eq.s32.totalorder %s23, 0
    %p434 = por %p432, %p433
    %p435 = scmp.ne.s32.totalorder %s424, %s427
    %p436 = scmp.eq.s32.totalorder %s28, 1
    %p437 = por %p435, %p436
    %p438 = scmp.ne.s32.totalorder %s427, %s428
    %p439 = scmp.eq.s32.totalorder %s28, 0
    %p440 = por %p438, %p439
    %p441 = scmp.ne.s32.totalorder %s427, %s428
    %p442 = scmp.eq.s32.totalorder %s29, 1
    %p443 = por %p441, %p442
    %p445 = scmp.ne.s32.totalorder %s428, %s444
    %p446 = scmp.eq.s32.totalorder %s29, 0
    %p447 = por %p445, %p446
    %s449 = sadd.s32 %s448, 1
    %p452 = scmp.eq.s32.totalorder %s23, 1
    %p453 = scmp.ne.s32.totalorder %s448, %s450
    %p454 = scmp.eq.s32.totalorder %s23, 0
    %p455 = por %p453, %p454
    %p456 = scmp.ne.s32.totalorder %s448, %s450
    %p457 = scmp.eq.s32.totalorder %s28, 1
    %p458 = por %p456, %p457
    %p459 = scmp.ne.s32.totalorder %s450, %s451
    %p460 = scmp.eq.s32.totalorder %s28, 0
    %p461 = por %p459, %p460
    %p462 = scmp.ne.s32.totalorder %s450, %s451
    %p463 = scmp.eq.s32.totalorder %s29, 1
    %p464 = por %p462, %p463
    %p466 = scmp.ne.s32.totalorder %s451, %s465
    %p467 = scmp.eq.s32.totalorder %s29, 0
    %p468 = por %p466, %p467
    %p469 = scmp.le.s32.totalorder 1, %s23
    %p470 = scmp.lt.s32.totalorder %s23, 3
    %p471 = pnand %p469, %p470
    %p472 = pneg %p471
    // Predicated region
    $region9: #{transformer_forward.2} parent=5 // pred_check
      _
    $region10: #{transformer_forward.2} parent=5 // pred_check_branch
      %474 = sbr.rel (%p471) target = $region12
    $region11: #{transformer_forward.2} parent=5 // pred_region
      %s475 = ssub.s32 %s23, 1
      // Predicated region
      $region13: #{transformer_forward.2} parent=11 // pred_check
        %p476 = pneg %p44
      $region14: #{transformer_forward.2} parent=11 // pred_check_branch
        %478 = sbr.rel (%p476) target = $region16
      $region15: #{transformer_forward.2} parent=11 // pred_region
        _
      $region16: #{transformer_forward.2} parent=11 // pred_fallthru
        _
      // Predicated region
      $region17: #{transformer_forward.2} parent=11 // pred_check
        %p479 = pneg %p65
      $region18: #{transformer_forward.2} parent=11 // pred_check_branch
        %481 = sbr.rel (%p479) target = $region20
      $region19: #{transformer_forward.2} parent=11 // pred_region
        _
      $region20: #{transformer_forward.2} parent=11 // pred_fallthru
        _
      // Predicated region
      $region21: #{transformer_forward.2} parent=11 // pred_check
        %p482 = pneg %p86
      $region22: #{transformer_forward.2} parent=11 // pred_check_branch
        %484 = sbr.rel (%p482) target = $region24
      $region23: #{transformer_forward.2} parent=11 // pred_region
        _
      $region24: #{transformer_forward.2} parent=11 // pred_fallthru
        _
      // Predicated region
      $region25: #{transformer_forward.2} parent=11 // pred_check
        %p485 = pneg %p107
      $region26: #{transformer_forward.2} parent=11 // pred_check_branch
        %487 = sbr.rel (%p485) target = $region28
      $region27: #{transformer_forward.2} parent=11 // pred_region
        _
      $region28: #{transformer_forward.2} parent=11 // pred_fallthru
        _
      // Predicated region
      $region29: #{transformer_forward.2} parent=11 // pred_check
        %p488 = pneg %p128
      $region30: #{transformer_forward.2} parent=11 // pred_check_branch
        %490 = sbr.rel (%p488) target = $region32
      $region31: #{transformer_forward.2} parent=11 // pred_region
        _
      $region32: #{transformer_forward.2} parent=11 // pred_fallthru
        _
    $region12: #{transformer_forward.2} parent=5 // pred_fallthru
      _
    %p491 = scmp.lt.s32.totalorder %s23, 2
    // Predicated region
    $region33: #{transformer_forward.2} parent=5 // pred_check
      %p492 = pneg %p491
    $region34: #{transformer_forward.2} parent=5 // pred_check_branch
      %494 = sbr.rel (%p492) target = $region36
    $region35: #{transformer_forward.2} parent=5 // pred_region
      // Predicated region
      $region37: #{transformer_forward.2} parent=35 // pred_check
        %p495 = pneg %p148
      $region38: #{transformer_forward.2} parent=35 // pred_check_branch
        %497 = sbr.rel (%p495) target = $region40
      $region39: #{transformer_forward.2} parent=35 // pred_region
        %p498 = scmp.lt.s32.totalorder %s23, 1
        %s499 = scalar_select %p498, %s23, 1
        %s500 = smul.addr %s499, 4
        %s501 = smul.addr %s500, 8
        %s502 = scalar_lea.vmem %s5, %s501
      $region40: #{transformer_forward.2} parent=35 // pred_fallthru
        _
      // Predicated region
      $region41: #{transformer_forward.2} parent=35 // pred_check
        %p503 = pneg %p174
      $region42: #{transformer_forward.2} parent=35 // pred_check_branch
        %505 = sbr.rel (%p503) target = $region44
      $region43: #{transformer_forward.2} parent=35 // pred_region
        %p506 = scmp.lt.s32.totalorder %s23, 1
        %s507 = scalar_select %p506, %s23, 1
        %s508 = scalar_lea.vmem %s6, %s507
      $region44: #{transformer_forward.2} parent=35 // pred_fallthru
        _
      // Predicated region
      $region45: #{transformer_forward.2} parent=35 // pred_check
        %p509 = pneg %p200
      $region46: #{transformer_forward.2} parent=35 // pred_check_branch
        %511 = sbr.rel (%p509) target = $region48
      $region47: #{transformer_forward.2} parent=35 // pred_region
        %p512 = scmp.lt.s32.totalorder %s23, 1
        %s513 = scalar_select %p512, %s23, 1
        %s514 = smul.addr %s513, 4
        %s515 = smul.addr %s514, 8
        %s516 = scalar_lea.vmem %s7, %s515
      $region48: #{transformer_forward.2} parent=35 // pred_fallthru
        _
      // Predicated region
      $region49: #{transformer_forward.2} parent=35 // pred_check
        %p517 = pneg %p226
      $region50: #{transformer_forward.2} parent=35 // pred_check_branch
        %519 = sbr.rel (%p517) target = $region52
      $region51: #{transformer_forward.2} parent=35 // pred_region
        %p520 = scmp.lt.s32.totalorder %s23, 1
        %s521 = scalar_select %p520, %s23, 1
        %s522 = scalar_lea.vmem %s8, %s521
      $region52: #{transformer_forward.2} parent=35 // pred_fallthru
        _
      // Predicated region
      $region53: #{transformer_forward.2} parent=35 // pred_check
        %p523 = pneg %p252
      $region54: #{transformer_forward.2} parent=35 // pred_check_branch
        %525 = sbr.rel (%p523) target = $region56
      $region55: #{transformer_forward.2} parent=35 // pred_region
        %p526 = scmp.lt.s32.totalorder %s23, 1
        %s527 = scalar_select %p526, %s23, 1
        %s528 = scalar_lea.vmem %s9, %s527
      $region56: #{transformer_forward.2} parent=35 // pred_fallthru
        _
      // Predicated region
      $region57: #{transformer_forward.2} parent=35 // pred_check
        %p529 = pneg %p278
      $region58: #{transformer_forward.2} parent=35 // pred_check_branch
        %531 = sbr.rel (%p529) target = $region60
      $region59: #{transformer_forward.2} parent=35 // pred_region
        %p532 = scmp.lt.s32.totalorder %s23, 1
        %s533 = scalar_select %p532, %s23, 1
        %s534 = scalar_lea.vmem %s10, %s533
      $region60: #{transformer_forward.2} parent=35 // pred_fallthru
        _
      // Predicated region
      $region61: #{transformer_forward.2} parent=35 // pred_check
        %p535 = pneg %p304
      $region62: #{transformer_forward.2} parent=35 // pred_check_branch
        %537 = sbr.rel (%p535) target = $region64
      $region63: #{transformer_forward.2} parent=35 // pred_region
        %p538 = scmp.lt.s32.totalorder %s23, 1
        %s539 = scalar_select %p538, %s23, 1
        %s540 = smul.addr %s539, 4
        %s541 = smul.addr %s540, 8
        %s542 = scalar_lea.vmem %s11, %s541
      $region64: #{transformer_forward.2} parent=35 // pred_fallthru
        _
      // Predicated region
      $region65: #{transformer_forward.2} parent=35 // pred_check
        %p543 = pneg %p330
      $region66: #{transformer_forward.2} parent=35 // pred_check_branch
        %545 = sbr.rel (%p543) target = $region68
      $region67: #{transformer_forward.2} parent=35 // pred_region
        %p546 = scmp.lt.s32.totalorder %s23, 1
        %s547 = scalar_select %p546, %s23, 1
        %s548 = scalar_lea.vmem %s12, %s547
      $region68: #{transformer_forward.2} parent=35 // pred_fallthru
        _
      // Predicated region
      $region69: #{transformer_forward.2} parent=35 // pred_check
        %p549 = pneg %p356
      $region70: #{transformer_forward.2} parent=35 // pred_check_branch
        %551 = sbr.rel (%p549) target = $region72
      $region71: #{transformer_forward.2} parent=35 // pred_region
        %p552 = scmp.lt.s32.totalorder %s23, 1
        %s553 = scalar_select %p552, %s23, 1
        %s554 = smul.addr %s553, 16
        %s555 = smul.addr %s554, 8
        %s556 = scalar_lea.vmem %s13, %s555
      $region72: #{transformer_forward.2} parent=35 // pred_fallthru
        _
      // Predicated region
      $region73: #{transformer_forward.2} parent=35 // pred_check
        %p557 = pneg %p382
      $region74: #{transformer_forward.2} parent=35 // pred_check_branch
        %559 = sbr.rel (%p557) target = $region76
      $region75: #{transformer_forward.2} parent=35 // pred_region
        %p560 = scmp.lt.s32.totalorder %s23, 1
        %s561 = scalar_select %p560, %s23, 1
        %s562 = scalar_lea.vmem %s14, %s561
      $region76: #{transformer_forward.2} parent=35 // pred_fallthru
        _
      // Predicated region
      $region77: #{transformer_forward.2} parent=35 // pred_check
        %p563 = pneg %p408
      $region78: #{transformer_forward.2} parent=35 // pred_check_branch
        %565 = sbr.rel (%p563) target = $region80
      $region79: #{transformer_forward.2} parent=35 // pred_region
        %p566 = scmp.lt.s32.totalorder %s23, 1
        %s567 = scalar_select %p566, %s23, 1
        %s568 = scalar_lea.vmem %s15, %s567
      $region80: #{transformer_forward.2} parent=35 // pred_fallthru
        _
      // Predicated region
      $region81: #{transformer_forward.2} parent=35 // pred_check
        %p569 = pneg %p434
      $region82: #{transformer_forward.2} parent=35 // pred_check_branch
        %571 = sbr.rel (%p569) target = $region84
      $region83: #{transformer_forward.2} parent=35 // pred_region
        %p572 = scmp.lt.s32.totalorder %s23, 1
        %s573 = scalar_select %p572, %s23, 1
        %s574 = scalar_lea.vmem %s16, %s573
      $region84: #{transformer_forward.2} parent=35 // pred_fallthru
        _
    $region36: #{transformer_forward.2} parent=5 // pred_fallthru
      _
    %p575 = scmp.le.s32.totalorder 1, %s23
    %p576 = scmp.lt.s32.totalorder %s23, 3
    %p577 = pnand %p575, %p576
    %p578 = pneg %p577
    // Predicated region
    $region85: #{transformer_forward.2} parent=5 // pred_check
      _
    $region86: #{transformer_forward.2} parent=5 // pred_check_branch
      %580 = sbr.rel (%p577) target = $region88
    $region87: #{transformer_forward.2} parent=5 // pred_region
      %s581 = ssub.s32 %s23, 1
      %p582 = pneg %p44
      %p583 = pneg %p41
      %p584 = pneg %p65
      %p585 = pneg %p62
      %p586 = pneg %p86
      %p587 = pneg %p83
      %p588 = pneg %p107
      %p589 = pneg %p104
      %p590 = pneg %p128
      %p591 = pneg %p125
      %p592 = scmp.lt.s32.totalorder %s28, 1
      %s593 = scalar_select %p592, %s28, 1
      %s594 = smul.addr %s593, 4
      %s595 = smul.addr %s594, 8
      %s596 = scalar_lea.vmem %s5, %s595
      %p597 = pneg %p154
      %p598 = pneg %p151
      %p599 = scmp.lt.s32.totalorder %s28, 1
      %s600 = scalar_select %p599, %s28, 1
      %s601 = scalar_lea.vmem %s6, %s600
      %p602 = pneg %p180
      %p603 = pneg %p177
      %p604 = scmp.lt.s32.totalorder %s28, 1
      %s605 = scalar_select %p604, %s28, 1
      %s606 = smul.addr %s605, 4
      %s607 = smul.addr %s606, 8
      %s608 = scalar_lea.vmem %s7, %s607
      %p609 = pneg %p206
      %p610 = pneg %p203
      %p611 = scmp.lt.s32.totalorder %s28, 1
      %s612 = scalar_select %p611, %s28, 1
      %s613 = scalar_lea.vmem %s8, %s612
      %p614 = pneg %p232
      %p615 = pneg %p229
      %p616 = scmp.lt.s32.totalorder %s28, 1
      %s617 = scalar_select %p616, %s28, 1
      %s618 = scalar_lea.vmem %s9, %s617
      %p619 = pneg %p258
      %p620 = pneg %p255
      %p621 = scmp.lt.s32.totalorder %s28, 1
      %s622 = scalar_select %p621, %s28, 1
      %s623 = scalar_lea.vmem %s10, %s622
      %p624 = pneg %p284
      %p625 = pneg %p281
      %p626 = scmp.lt.s32.totalorder %s28, 1
      %s627 = scalar_select %p626, %s28, 1
      %s628 = smul.addr %s627, 4
      %s629 = smul.addr %s628, 8
      %s630 = scalar_lea.vmem %s11, %s629
      %p631 = pneg %p310
      %p632 = pneg %p307
      %p633 = scmp.lt.s32.totalorder %s28, 1
      %s634 = scalar_select %p633, %s28, 1
      %s635 = scalar_lea.vmem %s12, %s634
      %p636 = pneg %p336
      %p637 = pneg %p333
      %p638 = scmp.lt.s32.totalorder %s28, 1
      %s639 = scalar_select %p638, %s28, 1
      %s640 = smul.addr %s639, 16
      %s641 = smul.addr %s640, 8
      %s642 = scalar_lea.vmem %s13, %s641
      %p643 = pneg %p362
      %p644 = pneg %p359
      %p645 = scmp.lt.s32.totalorder %s28, 1
      %s646 = scalar_select %p645, %s28, 1
      %s647 = scalar_lea.vmem %s14, %s646
      %p648 = pneg %p388
      %p649 = pneg %p385
      %p650 = scmp.lt.s32.totalorder %s28, 1
      %s651 = scalar_select %p650, %s28, 1
      %s652 = scalar_lea.vmem %s15, %s651
      %p653 = pneg %p414
      %p654 = pneg %p411
      %p655 = scmp.lt.s32.totalorder %s28, 1
      %s656 = scalar_select %p655, %s28, 1
      %s657 = scalar_lea.vmem %s16, %s656
      %p658 = pneg %p440
      %p659 = pneg %p437
      %p660 = pneg %p461
      %p661 = pneg %p458
      %p662 = scmp.lt.s32.totalorder %s28, 1
      %s663 = scalar_select %p662, %s28, 1
      %s664 = smul.addr %s663, 4
      %s665 = smul.addr %s664, 8
      %s666 = scalar_lea.vmem %s5, %s665
      %p667 = scmp.lt.s32.totalorder %s28, 1
      %s668 = scalar_select %p667, %s28, 1
      %s669 = scalar_lea.vmem %s6, %s668
      %p670 = scmp.lt.s32.totalorder %s28, 1
      %s671 = scalar_select %p670, %s28, 1
      %s672 = smul.addr %s671, 4
      %s673 = smul.addr %s672, 8
      %s674 = scalar_lea.vmem %s7, %s673
      %p675 = scmp.lt.s32.totalorder %s28, 1
      %s676 = scalar_select %p675, %s28, 1
      %s677 = scalar_lea.vmem %s8, %s676
      %p678 = scmp.lt.s32.totalorder %s28, 1
      %s679 = scalar_select %p678, %s28, 1
      %s680 = scalar_lea.vmem %s9, %s679
      %p681 = scmp.lt.s32.totalorder %s28, 1
      %s682 = scalar_select %p681, %s28, 1
      %s683 = scalar_lea.vmem %s10, %s682
      %p684 = scmp.lt.s32.totalorder %s28, 1
      %s685 = scalar_select %p684, %s28, 1
      %s686 = smul.addr %s685, 4
      %s687 = smul.addr %s686, 8
      %s688 = scalar_lea.vmem %s11, %s687
      %p689 = scmp.lt.s32.totalorder %s28, 1
      %s690 = scalar_select %p689, %s28, 1
      %s691 = scalar_lea.vmem %s12, %s690
      %p692 = scmp.lt.s32.totalorder %s28, 1
      %s693 = scalar_select %p692, %s28, 1
      %s694 = smul.addr %s693, 16
      %s695 = smul.addr %s694, 8
      %s696 = scalar_lea.vmem %s13, %s695
      %p697 = scmp.lt.s32.totalorder %s28, 1
      %s698 = scalar_select %p697, %s28, 1
      %s699 = scalar_lea.vmem %s14, %s698
      %p700 = scmp.lt.s32.totalorder %s28, 1
      %s701 = scalar_select %p700, %s28, 1
      %s702 = scalar_lea.vmem %s15, %s701
      %p703 = scmp.lt.s32.totalorder %s28, 1
      %s704 = scalar_select %p703, %s28, 1
      %s705 = scalar_lea.vmem %s16, %s704
      %p706 = scmp.eq.s32.totalorder %s28, 0
      // Predicated region
      $region89: #{transformer_forward.2} parent=87 // pred_check
        %p707 = pneg %p706
      $region90: #{transformer_forward.2} parent=87 // pred_check_branch
        %709 = sbr.rel (%p707) target = $region92
      $region91: #{transformer_forward.2} parent=87 // pred_region
        %v710 = vld [vmem:[%s0] sm:$0xff]
        %v711 = vld [vmem:[%s0 + $0x8] sm:$0xff]
        %v712 = vld [vmem:[%s2] sm:$0xf]
        %v713 = vld [vmem:[%s3] sm:$0x1]
        %v715 = vlaneseq
        %v716 = vshrl.u32 %v715, 7
        %v717 = vsub.s32 0, %v716
        %v718 = vrot.slane %v713, %v717
        %vm720 = vcmask 31744
        %v722 = vsel %vm720, %v710, 0
        %v725 = vsel %vm720, %v711, 0
        %vm727 = vcmask 1043456
        %v729 = vsel %vm727, %v712, 0
        %731 = vmatprep.subr.mxu0 0.0
        %732 = vmatpush1.msra.mxu0 0.0
        %733 = vmatprep.subr.mxu0 0.0
        %734 = vmatpush1.msra.mxu0 0.0
        %735 = vmatprep.subr.mxu0 0.0
        %736 = vmatpush1.msra.mxu0 0.0
        %737 = vmatprep.subr.mxu0 0.0
        %738 = vmatpush1.msra.mxu0 0.0
        %739 = vmatprep.subr.mxu0 0.0
        %740 = vmatpush1.msra.mxu0 0.0
        %741 = vmatprep.subr.mxu0 0.0
        %742 = vmatpush1.msra.mxu0 0.0
        %743 = vmatprep.subr.mxu0 0.0
        %744 = vmatpush1.msra.mxu0 0.0
        %745 = vmatprep.subr.mxu0 0.0
        %746 = vmatpush1.msra.mxu0 0.0
        %747 = vmatprep.subr.mxu0 0.0
        %748 = vmatpush1.msra.mxu0 0.0
        %749 = vmatprep.subr.mxu0 0.0
        %750 = vmatpush1.msra.mxu0 0.0
        %751 = vmatprep.subr.mxu0 0.0
        %752 = vmatpush1.msra.mxu0 0.0
        %753 = vmatprep.subr.mxu0 0.0
        %754 = vmatpush1.msra.mxu0 0.0
        %755 = vmatprep.subr.mxu0 0.0
        %756 = vmatpush1.msra.mxu0 0.0
        %757 = vmatprep.subr.mxu0 0.0
        %758 = vmatpush1.msra.mxu0 0.0
        %759 = vmatprep.subr.mxu0 0.0
        %760 = vmatpush1.msra.mxu0 0.0
        %761 = vmatprep.subr.mxu0 0.0
        %762 = vmatpush1.msra.mxu0 %v729
        %763 = vmatprep.subr.mxu0 0.0
        %764 = vmatpush2.msra.mxu0 0.0
        %765 = vmatprep.subr.mxu0 0.0
        %766 = vmatpush2.msra.mxu0 0.0
        %767 = vmatprep.subr.mxu0 0.0
        %768 = vmatpush2.msra.mxu0 0.0
        %769 = vmatprep.subr.mxu0 0.0
        %770 = vmatpush2.msra.mxu0 0.0
        %771 = vmatprep.subr.mxu0 0.0
        %772 = vmatpush2.msra.mxu0 0.0
        %773 = vmatprep.subr.mxu0 0.0
        %774 = vmatpush2.msra.mxu0 0.0
        %775 = vmatprep.subr.mxu0 0.0
        %776 = vmatpush2.msra.mxu0 0.0
        %777 = vmatprep.subr.mxu0 0.0
        %778 = vmatpush2.msra.mxu0 0.0
        %779 = vmatprep.subr.mxu0 0.0
        %780 = vmatpush2.msra.mxu0 0.0
        %781 = vmatprep.subr.mxu0 0.0
        %782 = vmatpush2.msra.mxu0 0.0
        %783 = vmatprep.subr.mxu0 0.0
        %784 = vmatpush2.msra.mxu0 0.0
        %785 = vmatprep.subr.mxu0 0.0
        %786 = vmatpush2.msra.mxu0 0.0
        %787 = vmatprep.subr.mxu0 0.0
        %788 = vmatpush2.msra.mxu0 0.0
        %789 = vmatprep.subr.mxu0 0.0
        %790 = vmatpush2.msra.mxu0 0.0
        %791 = vmatprep.subr.mxu0 0.0
        %792 = vmatpush2.msra.mxu0 0.0
        %793 = vmatprep.subr.mxu0 0.0
        %794 = vmatpush2.msra.mxu0 0.0
        %795 = vmatprep.mubr.f32.mxu0 0.0
        %796 = vmatmul.mubr.f32.gmra.mxu0 %v722
        %v797 = vpop.f32.mrf.mxu0
        %v798 = vadd.f32 %v718, %v797
        %v799 = vpop.f32.mrf.mxu0
        %800 = vmatprep.mubr.f32.mxu0 0.0
        %801 = vmatmul.mubr.f32.gmra.mxu0 %v725
        %v802 = vpop.f32.mrf.mxu0
        %v803 = vadd.f32 %v718, %v802
        %v804 = vpop.f32.mrf.mxu0
        %805 = vdwg.mxu0
        %v806 = vld [vmem:[%s1] sm:$0xff]
        %v807 = vld [vmem:[%s1 + $0x8] sm:$0xff]
        %v808 = vadd.f32 %v798, %v806
        %v809 = vadd.f32 %v803, %v807
        %vm810 = vcmask 261120
        %811 = vst.msk [vmem:[#allocation2] sm:$0xff] %vm810, %v808
        %812 = vst.msk [vmem:[#allocation2 + $0x8] sm:$0xff] %vm810, %v809
      $region92: #{transformer_forward.2} parent=87 // pred_fallthru
        _
      %v813 = vld [vmem:[#allocation2] sm:$0xff]
      %v814 = vld [vmem:[#allocation2 + $0x8] sm:$0xff]
      %v815 = vld [vmem:[%s666] sm:$0xff]
      %v816 = vld [vmem:[%s666 + $0x8] sm:$0xff]
      %v817 = vld [vmem:[%s666 + $0x10] sm:$0xff]
      %v818 = vld [vmem:[%s666 + $0x18] sm:$0xff]
      %v819 = vld [vmem:[%s669] sm:$0x1]
      %v821 = vlaneseq
      %v822 = vshrl.u32 %v821, 7
      %v823 = vsub.s32 0, %v822
      %v824 = vrot.slane %v819, %v823
      %vm826 = vcmask 261120
      %v828 = vsel %vm826, %v813, 0
      %v831 = vsel %vm826, %v814, 0
      %833 = vmatprep.subr.mxu0 0.0
      %834 = vmatpush1.msra.mxu0 0.0
      %835 = vmatprep.subr.mxu0 0.0
      %836 = vmatpush1.msra.mxu0 0.0
      %837 = vmatprep.subr.mxu0 0.0
      %838 = vmatpush1.msra.mxu0 0.0
      %839 = vmatprep.subr.mxu0 0.0
      %840 = vmatpush1.msra.mxu0 0.0
      %841 = vmatprep.subr.mxu0 0.0
      %842 = vmatpush1.msra.mxu0 0.0
      %843 = vmatprep.subr.mxu0 0.0
      %844 = vmatpush1.msra.mxu0 0.0
      %845 = vmatprep.subr.mxu0 0.0
      %846 = vmatpush1.msra.mxu0 0.0
      %847 = vmatprep.subr.mxu0 0.0
      %848 = vmatpush1.msra.mxu0 0.0
      %849 = vmatprep.subr.mxu0 0.0
      %850 = vmatpush1.msra.mxu0 0.0
      %851 = vmatprep.subr.mxu0 0.0
      %852 = vmatpush1.msra.mxu0 0.0
      %853 = vmatprep.subr.mxu0 0.0
      %854 = vmatpush1.msra.mxu0 0.0
      %855 = vmatprep.subr.mxu0 0.0
      %856 = vmatpush1.msra.mxu0 0.0
      %857 = vmatprep.subr.mxu0 0.0
      %858 = vmatpush1.msra.mxu0 %v818
      %859 = vmatprep.subr.mxu0 0.0
      %860 = vmatpush1.msra.mxu0 %v817
      %861 = vmatprep.subr.mxu0 0.0
      %862 = vmatpush1.msra.mxu0 %v816
      %863 = vmatprep.subr.mxu0 0.0
      %864 = vmatpush1.msra.mxu0 %v815
      %865 = vmatprep.subr.mxu0 0.0
      %866 = vmatpush2.msra.mxu0 0.0
      %867 = vmatprep.subr.mxu0 0.0
      %868 = vmatpush2.msra.mxu0 0.0
      %869 = vmatprep.subr.mxu0 0.0
      %870 = vmatpush2.msra.mxu0 0.0
      %871 = vmatprep.subr.mxu0 0.0
      %872 = vmatpush2.msra.mxu0 0.0
      %873 = vmatprep.subr.mxu0 0.0
      %874 = vmatpush2.msra.mxu0 0.0
      %875 = vmatprep.subr.mxu0 0.0
      %876 = vmatpush2.msra.mxu0 0.0
      %877 = vmatprep.subr.mxu0 0.0
      %878 = vmatpush2.msra.mxu0 0.0
      %879 = vmatprep.subr.mxu0 0.0
      %880 = vmatpush2.msra.mxu0 0.0
      %881 = vmatprep.subr.mxu0 0.0
      %882 = vmatpush2.msra.mxu0 0.0
      %883 = vmatprep.subr.mxu0 0.0
      %884 = vmatpush2.msra.mxu0 0.0
      %885 = vmatprep.subr.mxu0 0.0
      %886 = vmatpush2.msra.mxu0 0.0
      %887 = vmatprep.subr.mxu0 0.0
      %888 = vmatpush2.msra.mxu0 0.0
      %889 = vmatprep.subr.mxu0 0.0
      %890 = vmatpush2.msra.mxu0 0.0
      %891 = vmatprep.subr.mxu0 0.0
      %892 = vmatpush2.msra.mxu0 0.0
      %893 = vmatprep.subr.mxu0 0.0
      %894 = vmatpush2.msra.mxu0 0.0
      %895 = vmatprep.subr.mxu0 0.0
      %896 = vmatpush2.msra.mxu0 0.0
      %897 = vmatprep.mubr.f32.mxu0 0.0
      %898 = vmatmul.mubr.f32.gmra.mxu0 %v828
      %v899 = vpop.f32.mrf.mxu0
      %v900 = vadd.f32 %v824, %v899
      %v901 = vpop.f32.mrf.mxu0
      %902 = vmatprep.mubr.f32.mxu0 0.0
      %903 = vmatmul.mubr.f32.gmra.mxu0 %v831
      %v904 = vpop.f32.mrf.mxu0
      %v905 = vadd.f32 %v824, %v904
      %v906 = vpop.f32.mrf.mxu0
      %907 = vdwg.mxu0
      %v908 = vld [vmem:[%s674] sm:$0xff]
      %v909 = vld [vmem:[%s674 + $0x8] sm:$0xff]
      %v910 = vld [vmem:[%s674 + $0x10] sm:$0xff]
      %v911 = vld [vmem:[%s674 + $0x18] sm:$0xff]
      %v912 = vld [vmem:[%s677] sm:$0x1]
      %v913 = vld [vmem:[%s4] sm:$0xff]
      %v914 = vld [vmem:[%s4 + $0x8] sm:$0xff]
      %917 = vrot.lane.b32.xlu0 %v900, 96
      %v918 = vpop.permute.xlu0 %917
      %919 = vrot.lane.b32.xlu0 %v905, 96
      %v920 = vpop.permute.xlu0 %919
      %vm921 = vcmask 64512
      %v922 = vsel %vm921, %v900, 0
      %v924 = vsel %vm921, %v905, 0
      %v926 = vsel %vm921, %v918, 0
      %v928 = vsel %vm921, %v920, 0
      %930 = vmatprep.subr.mxu0 0.0
      %931 = vmatpush1.xpose.msra.mxu0 0.0
      %932 = vmatprep.subr.mxu0 0.0
      %933 = vmatpush1.xpose.msra.mxu0 0.0
      %934 = vmatprep.subr.mxu0 0.0
      %935 = vmatpush1.xpose.msra.mxu0 0.0
      %936 = vmatprep.subr.mxu0 0.0
      %937 = vmatpush1.xpose.msra.mxu0 0.0
      %938 = vmatprep.subr.mxu0 0.0
      %939 = vmatpush1.xpose.msra.mxu0 0.0
      %940 = vmatprep.subr.mxu0 0.0
      %941 = vmatpush1.xpose.msra.mxu0 0.0
      %942 = vmatprep.subr.mxu0 0.0
      %943 = vmatpush1.xpose.msra.mxu0 0.0
      %944 = vmatprep.subr.mxu0 0.0
      %945 = vmatpush1.xpose.msra.mxu0 0.0
      %946 = vmatprep.subr.mxu0 0.0
      %947 = vmatpush1.xpose.msra.mxu0 0.0
      %948 = vmatprep.subr.mxu0 0.0
      %949 = vmatpush1.xpose.msra.mxu0 0.0
      %950 = vmatprep.subr.mxu0 0.0
      %951 = vmatpush1.xpose.msra.mxu0 0.0
      %952 = vmatprep.subr.mxu0 0.0
      %953 = vmatpush1.xpose.msra.mxu0 0.0
      %954 = vmatprep.subr.mxu0 0.0
      %955 = vmatpush1.xpose.msra.mxu0 0.0
      %956 = vmatprep.subr.mxu0 0.0
      %957 = vmatpush1.xpose.msra.mxu0 0.0
      %958 = vmatprep.subr.mxu0 0.0
      %959 = vmatpush1.xpose.msra.mxu0 %v928
      %960 = vmatprep.subr.mxu0 0.0
      %961 = vmatpush1.xpose.msra.mxu0 %v926
      %962 = vmatprep.subr.mxu0 0.0
      %963 = vmatpush2.xpose.msra.mxu0 0.0
      %964 = vmatprep.subr.mxu0 0.0
      %965 = vmatpush2.xpose.msra.mxu0 0.0
      %966 = vmatprep.subr.mxu0 0.0
      %967 = vmatpush2.xpose.msra.mxu0 0.0
      %968 = vmatprep.subr.mxu0 0.0
      %969 = vmatpush2.xpose.msra.mxu0 0.0
      %970 = vmatprep.subr.mxu0 0.0
      %971 = vmatpush2.xpose.msra.mxu0 0.0
      %972 = vmatprep.subr.mxu0 0.0
      %973 = vmatpush2.xpose.msra.mxu0 0.0
      %974 = vmatprep.subr.mxu0 0.0
      %975 = vmatpush2.xpose.msra.mxu0 0.0
      %976 = vmatprep.subr.mxu0 0.0
      %977 = vmatpush2.xpose.msra.mxu0 0.0
      %978 = vmatprep.subr.mxu0 0.0
      %979 = vmatpush2.xpose.msra.mxu0 0.0
      %980 = vmatprep.subr.mxu0 0.0
      %981 = vmatpush2.xpose.msra.mxu0 0.0
      %982 = vmatprep.subr.mxu0 0.0
      %983 = vmatpush2.xpose.msra.mxu0 0.0
      %984 = vmatprep.subr.mxu0 0.0
      %985 = vmatpush2.xpose.msra.mxu0 0.0
      %986 = vmatprep.subr.mxu0 0.0
      %987 = vmatpush2.xpose.msra.mxu0 0.0
      %988 = vmatprep.subr.mxu0 0.0
      %989 = vmatpush2.xpose.msra.mxu0 0.0
      %990 = vmatprep.subr.mxu0 0.0
      %991 = vmatpush2.xpose.msra.mxu0 0.0
      %992 = vmatprep.subr.mxu0 0.0
      %993 = vmatpush2.xpose.msra.mxu0 0.0
      %994 = vmatprep.mubr.f32.mxu0 0.0
      %995 = vmatmul.mubr.f32.gmra.mxu0 %v922
      %v996 = vpop.f32.mrf.mxu0
      %v997 = vadd.f32 0.0, %v996
      %v998 = vpop.f32.mrf.mxu0
      %999 = vmatprep.mubr.f32.mxu0 0.0
      %1000 = vmatmul.mubr.f32.gmra.mxu0 %v924
      %v1001 = vpop.f32.mrf.mxu0
      %v1002 = vadd.f32 0.0, %v1001
      %v1003 = vpop.f32.mrf.mxu0
      %1004 = vdwg.mxu0
      %v1005 = vmul.f32 %v997, 0.35355338
      %v1006 = vmul.f32 %v1002, 0.35355338
      %v1007 = vadd.f32 %v1005, %v913
      %v1008 = vadd.f32 %v1006, %v914
      %vm1009 = vcmask 130048
      %v1010 = vsel %vm1009, %v1007, -inf
      %1011 = vmax.xlane.f32.xlu0 %v1010
      %v1012 = vpop.xlane.xlu0 %1011
      %v1013 = vsel %vm1009, %v1008, -inf
      %1014 = vmax.xlane.f32.xlu0 %v1013
      %v1015 = vpop.xlane.xlu0 %1014
      %v1016 = vsub.f32 %v1007, %v1012
      %v1017 = vsub.f32 %v1008, %v1015
      %v1018 = vmul.f32 %v1016, 1.442695
      %v1019 = vpow.pop %v1018
      %v1020 = vmul.f32 %v1017, 1.442695
      %v1021 = vpow.pop %v1020
      %v1022 = vsel %vm1009, %v1019, 0.0
      %1023 = vadd.xlane.f32.xlu0 %v1022
      %v1024 = vpop.xlane.xlu0 %1023
      %v1025 = vsel %vm1009, %v1021, 0.0
      %1026 = vadd.xlane.f32.xlu0 %v1025
      %v1027 = vpop.xlane.xlu0 %1026
      %v1028 = vrcp.pop %v1024
      %v1029 = vmul.f32 %v1019, %v1028
      %v1030 = vrcp.pop %v1027
      %v1031 = vmul.f32 %v1021, %v1030
      %1032 = vrot.lane.b32.xlu0 %v900, 64
      %v1033 = vpop.permute.xlu0 %1032
      %1034 = vrot.lane.b32.xlu0 %v905, 64
      %v1035 = vpop.permute.xlu0 %1034
      %v1039 = vsel %vm1009, %v1029, 0
      %v1042 = vsel %vm1009, %v1031, 0
      %1044 = vmatprep.subr.mxu0 0.0
      %1045 = vmatpush1.msra.mxu0 0.0
      %1046 = vmatprep.subr.mxu0 0.0
      %1047 = vmatpush1.msra.mxu0 0.0
      %1048 = vmatprep.subr.mxu0 0.0
      %1049 = vmatpush1.msra.mxu0 0.0
      %1050 = vmatprep.subr.mxu0 0.0
      %1051 = vmatpush1.msra.mxu0 0.0
      %1052 = vmatprep.subr.mxu0 0.0
      %1053 = vmatpush1.msra.mxu0 0.0
      %1054 = vmatprep.subr.mxu0 0.0
      %1055 = vmatpush1.msra.mxu0 0.0
      %1056 = vmatprep.subr.mxu0 0.0
      %1057 = vmatpush1.msra.mxu0 0.0
      %1058 = vmatprep.subr.mxu0 0.0
      %1059 = vmatpush1.msra.mxu0 0.0
      %1060 = vmatprep.subr.mxu0 0.0
      %1061 = vmatpush1.msra.mxu0 0.0
      %1062 = vmatprep.subr.mxu0 0.0
      %1063 = vmatpush1.msra.mxu0 0.0
      %1064 = vmatprep.subr.mxu0 0.0
      %1065 = vmatpush1.msra.mxu0 0.0
      %1066 = vmatprep.subr.mxu0 0.0
      %1067 = vmatpush1.msra.mxu0 0.0
      %1068 = vmatprep.subr.mxu0 0.0
      %1069 = vmatpush1.msra.mxu0 0.0
      %1070 = vmatprep.subr.mxu0 0.0
      %1071 = vmatpush1.msra.mxu0 0.0
      %1072 = vmatprep.subr.mxu0 0.0
      %1073 = vmatpush1.msra.mxu0 %v1035
      %1074 = vmatprep.subr.mxu0 0.0
      %1075 = vmatpush1.msra.mxu0 %v1033
      %1076 = vmatprep.subr.mxu0 0.0
      %1077 = vmatpush2.msra.mxu0 0.0
      %1078 = vmatprep.subr.mxu0 0.0
      %1079 = vmatpush2.msra.mxu0 0.0
      %1080 = vmatprep.subr.mxu0 0.0
      %1081 = vmatpush2.msra.mxu0 0.0
      %1082 = vmatprep.subr.mxu0 0.0
      %1083 = vmatpush2.msra.mxu0 0.0
      %1084 = vmatprep.subr.mxu0 0.0
      %1085 = vmatpush2.msra.mxu0 0.0
      %1086 = vmatprep.subr.mxu0 0.0
      %1087 = vmatpush2.msra.mxu0 0.0
      %1088 = vmatprep.subr.mxu0 0.0
      %1089 = vmatpush2.msra.mxu0 0.0
      %1090 = vmatprep.subr.mxu0 0.0
      %1091 = vmatpush2.msra.mxu0 0.0
      %1092 = vmatprep.subr.mxu0 0.0
      %1093 = vmatpush2.msra.mxu0 0.0
      %1094 = vmatprep.subr.mxu0 0.0
      %1095 = vmatpush2.msra.mxu0 0.0
      %1096 = vmatprep.subr.mxu0 0.0
      %1097 = vmatpush2.msra.mxu0 0.0
      %1098 = vmatprep.subr.mxu0 0.0
      %1099 = vmatpush2.msra.mxu0 0.0
      %1100 = vmatprep.subr.mxu0 0.0
      %1101 = vmatpush2.msra.mxu0 0.0
      %1102 = vmatprep.subr.mxu0 0.0
      %1103 = vmatpush2.msra.mxu0 0.0
      %1104 = vmatprep.subr.mxu0 0.0
      %1105 = vmatpush2.msra.mxu0 0.0
      %1106 = vmatprep.subr.mxu0 0.0
      %1107 = vmatpush2.msra.mxu0 0.0
      %1108 = vmatprep.mubr.f32.mxu0 0.0
      %1109 = vmatmul.mubr.f32.gmra.mxu0 %v1039
      %v1110 = vpop.f32.mrf.mxu0
      %v1111 = vadd.f32 0.0, %v1110
      %v1112 = vpop.f32.mrf.mxu0
      %1113 = vmatprep.mubr.f32.mxu0 0.0
      %1114 = vmatmul.mubr.f32.gmra.mxu0 %v1042
      %v1115 = vpop.f32.mrf.mxu0
      %v1116 = vadd.f32 0.0, %v1115
      %v1117 = vpop.f32.mrf.mxu0
      %1118 = vdwg.mxu0
      %1119 = vrot.lane.b32.xlu0 %v900, 120
      %v1120 = vpop.permute.xlu0 %1119
      %1121 = vrot.lane.b32.xlu0 %v905, 120
      %v1122 = vpop.permute.xlu0 %1121
      %1123 = vrot.lane.b32.xlu0 %v900, 88
      %v1124 = vpop.permute.xlu0 %1123
      %1125 = vrot.lane.b32.xlu0 %v905, 88
      %v1126 = vpop.permute.xlu0 %1125
      %v1127 = vsel %vm921, %v1120, 0
      %v1129 = vsel %vm921, %v1122, 0
      %v1131 = vsel %vm921, %v1124, 0
      %v1133 = vsel %vm921, %v1126, 0
      %1135 = vmatprep.subr.mxu0 0.0
      %1136 = vmatpush1.xpose.msra.mxu0 0.0
      %1137 = vmatprep.subr.mxu0 0.0
      %1138 = vmatpush1.xpose.msra.mxu0 0.0
      %1139 = vmatprep.subr.mxu0 0.0
      %1140 = vmatpush1.xpose.msra.mxu0 0.0
      %1141 = vmatprep.subr.mxu0 0.0
      %1142 = vmatpush1.xpose.msra.mxu0 0.0
      %1143 = vmatprep.subr.mxu0 0.0
      %1144 = vmatpush1.xpose.msra.mxu0 0.0
      %1145 = vmatprep.subr.mxu0 0.0
      %1146 = vmatpush1.xpose.msra.mxu0 0.0
      %1147 = vmatprep.subr.mxu0 0.0
      %1148 = vmatpush1.xpose.msra.mxu0 0.0
      %1149 = vmatprep.subr.mxu0 0.0
      %1150 = vmatpush1.xpose.msra.mxu0 0.0
      %1151 = vmatprep.subr.mxu0 0.0
      %1152 = vmatpush1.xpose.msra.mxu0 0.0
      %1153 = vmatprep.subr.mxu0 0.0
      %1154 = vmatpush1.xpose.msra.mxu0 0.0
      %1155 = vmatprep.subr.mxu0 0.0
      %1156 = vmatpush1.xpose.msra.mxu0 0.0
      %1157 = vmatprep.subr.mxu0 0.0
      %1158 = vmatpush1.xpose.msra.mxu0 0.0
      %1159 = vmatprep.subr.mxu0 0.0
      %1160 = vmatpush1.xpose.msra.mxu0 0.0
      %1161 = vmatprep.subr.mxu0 0.0
      %1162 = vmatpush1.xpose.msra.mxu0 0.0
      %1163 = vmatprep.subr.mxu0 0.0
      %1164 = vmatpush1.xpose.msra.mxu0 %v1133
      %1165 = vmatprep.subr.mxu0 0.0
      %1166 = vmatpush1.xpose.msra.mxu0 %v1131
      %1167 = vmatprep.subr.mxu0 0.0
      %1168 = vmatpush2.xpose.msra.mxu0 0.0
      %1169 = vmatprep.subr.mxu0 0.0
      %1170 = vmatpush2.xpose.msra.mxu0 0.0
      %1171 = vmatprep.subr.mxu0 0.0
      %1172 = vmatpush2.xpose.msra.mxu0 0.0
      %1173 = vmatprep.subr.mxu0 0.0
      %1174 = vmatpush2.xpose.msra.mxu0 0.0
      %1175 = vmatprep.subr.mxu0 0.0
      %1176 = vmatpush2.xpose.msra.mxu0 0.0
      %1177 = vmatprep.subr.mxu0 0.0
      %1178 = vmatpush2.xpose.msra.mxu0 0.0
      %1179 = vmatprep.subr.mxu0 0.0
      %1180 = vmatpush2.xpose.msra.mxu0 0.0
      %1181 = vmatprep.subr.mxu0 0.0
      %1182 = vmatpush2.xpose.msra.mxu0 0.0
      %1183 = vmatprep.subr.mxu0 0.0
      %1184 = vmatpush2.xpose.msra.mxu0 0.0
      %1185 = vmatprep.subr.mxu0 0.0
      %1186 = vmatpush2.xpose.msra.mxu0 0.0
      %1187 = vmatprep.subr.mxu0 0.0
      %1188 = vmatpush2.xpose.msra.mxu0 0.0
      %1189 = vmatprep.subr.mxu0 0.0
      %1190 = vmatpush2.xpose.msra.mxu0 0.0
      %1191 = vmatprep.subr.mxu0 0.0
      %1192 = vmatpush2.xpose.msra.mxu0 0.0
      %1193 = vmatprep.subr.mxu0 0.0
      %1194 = vmatpush2.xpose.msra.mxu0 0.0
      %1195 = vmatprep.subr.mxu0 0.0
      %1196 = vmatpush2.xpose.msra.mxu0 0.0
      %1197 = vmatprep.subr.mxu0 0.0
      %1198 = vmatpush2.xpose.msra.mxu0 0.0
      %1199 = vmatprep.mubr.f32.mxu0 0.0
      %1200 = vmatmul.mubr.f32.gmra.mxu0 %v1127
      %v1201 = vpop.f32.mrf.mxu0
      %v1202 = vadd.f32 0.0, %v1201
      %v1203 = vpop.f32.mrf.mxu0
      %1204 = vmatprep.mubr.f32.mxu0 0.0
      %1205 = vmatmul.mubr.f32.gmra.mxu0 %v1129
      %v1206 = vpop.f32.mrf.mxu0
      %v1207 = vadd.f32 0.0, %v1206
      %v1208 = vpop.f32.mrf.mxu0
      %1209 = vdwg.mxu0
      %v1210 = vmul.f32 %v1202, 0.35355338
      %v1211 = vmul.f32 %v1207, 0.35355338
      %v1212 = vadd.f32 %v1210, %v913
      %v1213 = vadd.f32 %v1211, %v914
      %v1214 = vsel %vm1009, %v1212, -inf
      %1215 = vmax.xlane.f32.xlu0 %v1214
      %v1216 = vpop.xlane.xlu0 %1215
      %v1217 = vsel %vm1009, %v1213, -inf
      %1218 = vmax.xlane.f32.xlu0 %v1217
      %v1219 = vpop.xlane.xlu0 %1218
      %v1220 = vsub.f32 %v1212, %v1216
      %v1221 = vsub.f32 %v1213, %v1219
      %v1222 = vmul.f32 %v1220, 1.442695
      %v1223 = vpow.pop %v1222
      %v1224 = vmul.f32 %v1221, 1.442695
      %v1225 = vpow.pop %v1224
      %v1226 = vsel %vm1009, %v1223, 0.0
      %1227 = vadd.xlane.f32.xlu0 %v1226
      %v1228 = vpop.xlane.xlu0 %1227
      %v1229 = vsel %vm1009, %v1225, 0.0
      %1230 = vadd.xlane.f32.xlu0 %v1229
      %v1231 = vpop.xlane.xlu0 %1230
      %v1232 = vrcp.pop %v1228
      %v1233 = vmul.f32 %v1223, %v1232
      %v1234 = vrcp.pop %v1231
      %v1235 = vmul.f32 %v1225, %v1234
      %1236 = vrot.lane.b32.xlu0 %v900, 56
      %v1237 = vpop.permute.xlu0 %1236
      %1238 = vrot.lane.b32.xlu0 %v905, 56
      %v1239 = vpop.permute.xlu0 %1238
      %v1243 = vsel %vm1009, %v1233, 0
      %v1246 = vsel %vm1009, %v1235, 0
      %1248 = vmatprep.subr.mxu0 0.0
      %1249 = vmatpush1.msra.mxu0 0.0
      %1250 = vmatprep.subr.mxu0 0.0
      %1251 = vmatpush1.msra.mxu0 0.0
      %1252 = vmatprep.subr.mxu0 0.0
      %1253 = vmatpush1.msra.mxu0 0.0
      %1254 = vmatprep.subr.mxu0 0.0
      %1255 = vmatpush1.msra.mxu0 0.0
      %1256 = vmatprep.subr.mxu0 0.0
      %1257 = vmatpush1.msra.mxu0 0.0
      %1258 = vmatprep.subr.mxu0 0.0
      %1259 = vmatpush1.msra.mxu0 0.0
      %1260 = vmatprep.subr.mxu0 0.0
      %1261 = vmatpush1.msra.mxu0 0.0
      %1262 = vmatprep.subr.mxu0 0.0
      %1263 = vmatpush1.msra.mxu0 0.0
      %1264 = vmatprep.subr.mxu0 0.0
      %1265 = vmatpush1.msra.mxu0 0.0
      %1266 = vmatprep.subr.mxu0 0.0
      %1267 = vmatpush1.msra.mxu0 0.0
      %1268 = vmatprep.subr.mxu0 0.0
      %1269 = vmatpush1.msra.mxu0 0.0
      %1270 = vmatprep.subr.mxu0 0.0
      %1271 = vmatpush1.msra.mxu0 0.0
      %1272 = vmatprep.subr.mxu0 0.0
      %1273 = vmatpush1.msra.mxu0 0.0
      %1274 = vmatprep.subr.mxu0 0.0
      %1275 = vmatpush1.msra.mxu0 0.0
      %1276 = vmatprep.subr.mxu0 0.0
      %1277 = vmatpush1.msra.mxu0 %v1239
      %1278 = vmatprep.subr.mxu0 0.0
      %1279 = vmatpush1.msra.mxu0 %v1237
      %1280 = vmatprep.subr.mxu0 0.0
      %1281 = vmatpush2.msra.mxu0 0.0
      %1282 = vmatprep.subr.mxu0 0.0
      %1283 = vmatpush2.msra.mxu0 0.0
      %1284 = vmatprep.subr.mxu0 0.0
      %1285 = vmatpush2.msra.mxu0 0.0
      %1286 = vmatprep.subr.mxu0 0.0
      %1287 = vmatpush2.msra.mxu0 0.0
      %1288 = vmatprep.subr.mxu0 0.0
      %1289 = vmatpush2.msra.mxu0 0.0
      %1290 = vmatprep.subr.mxu0 0.0
      %1291 = vmatpush2.msra.mxu0 0.0
      %1292 = vmatprep.subr.mxu0 0.0
      %1293 = vmatpush2.msra.mxu0 0.0
      %1294 = vmatprep.subr.mxu0 0.0
      %1295 = vmatpush2.msra.mxu0 0.0
      %1296 = vmatprep.subr.mxu0 0.0
      %1297 = vmatpush2.msra.mxu0 0.0
      %1298 = vmatprep.subr.mxu0 0.0
      %1299 = vmatpush2.msra.mxu0 0.0
      %1300 = vmatprep.subr.mxu0 0.0
      %1301 = vmatpush2.msra.mxu0 0.0
      %1302 = vmatprep.subr.mxu0 0.0
      %1303 = vmatpush2.msra.mxu0 0.0
      %1304 = vmatprep.subr.mxu0 0.0
      %1305 = vmatpush2.msra.mxu0 0.0
      %1306 = vmatprep.subr.mxu0 0.0
      %1307 = vmatpush2.msra.mxu0 0.0
      %1308 = vmatprep.subr.mxu0 0.0
      %1309 = vmatpush2.msra.mxu0 0.0
      %1310 = vmatprep.subr.mxu0 0.0
      %1311 = vmatpush2.msra.mxu0 0.0
      %1312 = vmatprep.mubr.f32.mxu0 0.0
      %1313 = vmatmul.mubr.f32.gmra.mxu0 %v1243
      %v1314 = vpop.f32.mrf.mxu0
      %v1315 = vadd.f32 0.0, %v1314
      %v1316 = vpop.f32.mrf.mxu0
      %1317 = vmatprep.mubr.f32.mxu0 0.0
      %1318 = vmatmul.mubr.f32.gmra.mxu0 %v1246
      %v1319 = vpop.f32.mrf.mxu0
      %v1320 = vadd.f32 0.0, %v1319
      %v1321 = vpop.f32.mrf.mxu0
      %1322 = vdwg.mxu0
      %v1324 = vsel %vm921, %v1315, 0
      %v1327 = vsel %vm921, %v1320, 0
      %1329 = vmatprep.subr.mxu0 0.0
      %1330 = vmatpush1.msra.mxu0 0.0
      %1331 = vmatprep.subr.mxu0 0.0
      %1332 = vmatpush1.msra.mxu0 0.0
      %1333 = vmatprep.subr.mxu0 0.0
      %1334 = vmatpush1.msra.mxu0 0.0
      %1335 = vmatprep.subr.mxu0 0.0
      %1336 = vmatpush1.msra.mxu0 0.0
      %1337 = vmatprep.subr.mxu0 0.0
      %1338 = vmatpush1.msra.mxu0 0.0
      %1339 = vmatprep.subr.mxu0 0.0
      %1340 = vmatpush1.msra.mxu0 0.0
      %1341 = vmatprep.subr.mxu0 0.0
      %1342 = vmatpush1.msra.mxu0 0.0
      %1343 = vmatprep.subr.mxu0 0.0
      %1344 = vmatpush1.msra.mxu0 0.0
      %1345 = vmatprep.subr.mxu0 0.0
      %1346 = vmatpush1.msra.mxu0 0.0
      %1347 = vmatprep.subr.mxu0 0.0
      %1348 = vmatpush1.msra.mxu0 0.0
      %1349 = vmatprep.subr.mxu0 0.0
      %1350 = vmatpush1.msra.mxu0 0.0
      %1351 = vmatprep.subr.mxu0 0.0
      %1352 = vmatpush1.msra.mxu0 0.0
      %1353 = vmatprep.subr.mxu0 0.0
      %1354 = vmatpush1.msra.mxu0 0.0
      %1355 = vmatprep.subr.mxu0 0.0
      %1356 = vmatpush1.msra.mxu0 0.0
      %1357 = vmatprep.subr.mxu0 0.0
      %1358 = vmatpush1.msra.mxu0 0.0
      %1359 = vmatprep.subr.mxu0 0.0
      %1360 = vmatpush1.msra.mxu0 %v909
      %1361 = vmatprep.subr.mxu0 0.0
      %1362 = vmatpush2.msra.mxu0 0.0
      %1363 = vmatprep.subr.mxu0 0.0
      %1364 = vmatpush2.msra.mxu0 0.0
      %1365 = vmatprep.subr.mxu0 0.0
      %1366 = vmatpush2.msra.mxu0 0.0
      %1367 = vmatprep.subr.mxu0 0.0
      %1368 = vmatpush2.msra.mxu0 0.0
      %1369 = vmatprep.subr.mxu0 0.0
      %1370 = vmatpush2.msra.mxu0 0.0
      %1371 = vmatprep.subr.mxu0 0.0
      %1372 = vmatpush2.msra.mxu0 0.0
      %1373 = vmatprep.subr.mxu0 0.0
      %1374 = vmatpush2.msra.mxu0 0.0
      %1375 = vmatprep.subr.mxu0 0.0
      %1376 = vmatpush2.msra.mxu0 0.0
      %1377 = vmatprep.subr.mxu0 0.0
      %1378 = vmatpush2.msra.mxu0 0.0
      %1379 = vmatprep.subr.mxu0 0.0
      %1380 = vmatpush2.msra.mxu0 0.0
      %1381 = vmatprep.subr.mxu0 0.0
      %1382 = vmatpush2.msra.mxu0 0.0
      %1383 = vmatprep.subr.mxu0 0.0
      %1384 = vmatpush2.msra.mxu0 0.0
      %1385 = vmatprep.subr.mxu0 0.0
      %1386 = vmatpush2.msra.mxu0 0.0
      %1387 = vmatprep.subr.mxu0 0.0
      %1388 = vmatpush2.msra.mxu0 0.0
      %1389 = vmatprep.subr.mxu0 0.0
      %1390 = vmatpush2.msra.mxu0 0.0
      %1391 = vmatprep.subr.mxu0 0.0
      %1392 = vmatpush2.msra.mxu0 0.0
      %1393 = vmatprep.mubr.f32.mxu0 0.0
      %1394 = vmatmul.mubr.f32.gmra.mxu0 %v1324
      %v1395 = vpop.f32.mrf.mxu0
      %v1396 = vadd.f32 0.0, %v1395
      %v1397 = vpop.f32.mrf.mxu0
      %1398 = vmatprep.mubr.f32.mxu0 0.0
      %1399 = vmatmul.mubr.f32.gmra.mxu0 %v1327
      %v1400 = vpop.f32.mrf.mxu0
      %v1401 = vadd.f32 0.0, %v1400
      %v1402 = vpop.f32.mrf.mxu0
      %1403 = vdwg.mxu0
      %v1405 = vsel %vm921, %v1111, 0
      %v1408 = vsel %vm921, %v1116, 0
      %1410 = vmatprep.subr.mxu0 0.0
      %1411 = vmatpush1.msra.mxu0 0.0
      %1412 = vmatprep.subr.mxu0 0.0
      %1413 = vmatpush1.msra.mxu0 0.0
      %1414 = vmatprep.subr.mxu0 0.0
      %1415 = vmatpush1.msra.mxu0 0.0
      %1416 = vmatprep.subr.mxu0 0.0
      %1417 = vmatpush1.msra.mxu0 0.0
      %1418 = vmatprep.subr.mxu0 0.0
      %1419 = vmatpush1.msra.mxu0 0.0
      %1420 = vmatprep.subr.mxu0 0.0
      %1421 = vmatpush1.msra.mxu0 0.0
      %1422 = vmatprep.subr.mxu0 0.0
      %1423 = vmatpush1.msra.mxu0 0.0
      %1424 = vmatprep.subr.mxu0 0.0
      %1425 = vmatpush1.msra.mxu0 0.0
      %1426 = vmatprep.subr.mxu0 0.0
      %1427 = vmatpush1.msra.mxu0 0.0
      %1428 = vmatprep.subr.mxu0 0.0
      %1429 = vmatpush1.msra.mxu0 0.0
      %1430 = vmatprep.subr.mxu0 0.0
      %1431 = vmatpush1.msra.mxu0 0.0
      %1432 = vmatprep.subr.mxu0 0.0
      %1433 = vmatpush1.msra.mxu0 0.0
      %1434 = vmatprep.subr.mxu0 0.0
      %1435 = vmatpush1.msra.mxu0 0.0
      %1436 = vmatprep.subr.mxu0 0.0
      %1437 = vmatpush1.msra.mxu0 0.0
      %1438 = vmatprep.subr.mxu0 0.0
      %1439 = vmatpush1.msra.mxu0 0.0
      %1440 = vmatprep.subr.mxu0 0.0
      %1441 = vmatpush1.msra.mxu0 %v908
      %1442 = vmatprep.subr.mxu0 0.0
      %1443 = vmatpush2.msra.mxu0 0.0
      %1444 = vmatprep.subr.mxu0 0.0
      %1445 = vmatpush2.msra.mxu0 0.0
      %1446 = vmatprep.subr.mxu0 0.0
      %1447 = vmatpush2.msra.mxu0 0.0
      %1448 = vmatprep.subr.mxu0 0.0
      %1449 = vmatpush2.msra.mxu0 0.0
      %1450 = vmatprep.subr.mxu0 0.0
      %1451 = vmatpush2.msra.mxu0 0.0
      %1452 = vmatprep.subr.mxu0 0.0
      %1453 = vmatpush2.msra.mxu0 0.0
      %1454 = vmatprep.subr.mxu0 0.0
      %1455 = vmatpush2.msra.mxu0 0.0
      %1456 = vmatprep.subr.mxu0 0.0
      %1457 = vmatpush2.msra.mxu0 0.0
      %1458 = vmatprep.subr.mxu0 0.0
      %1459 = vmatpush2.msra.mxu0 0.0
      %1460 = vmatprep.subr.mxu0 0.0
      %1461 = vmatpush2.msra.mxu0 0.0
      %1462 = vmatprep.subr.mxu0 0.0
      %1463 = vmatpush2.msra.mxu0 0.0
      %1464 = vmatprep.subr.mxu0 0.0
      %1465 = vmatpush2.msra.mxu0 0.0
      %1466 = vmatprep.subr.mxu0 0.0
      %1467 = vmatpush2.msra.mxu0 0.0
      %1468 = vmatprep.subr.mxu0 0.0
      %1469 = vmatpush2.msra.mxu0 0.0
      %1470 = vmatprep.subr.mxu0 0.0
      %1471 = vmatpush2.msra.mxu0 0.0
      %1472 = vmatprep.subr.mxu0 0.0
      %1473 = vmatpush2.msra.mxu0 0.0
      %1474 = vmatprep.mubr.f32.mxu0 0.0
      %1475 = vmatmul.mubr.f32.gmra.mxu0 %v1405
      %v1476 = vpop.f32.mrf.mxu0
      %v1477 = vadd.f32 %v1396, %v1476
      %v1478 = vpop.f32.mrf.mxu0
      %1479 = vmatprep.mubr.f32.mxu0 0.0
      %1480 = vmatmul.mubr.f32.gmra.mxu0 %v1408
      %v1481 = vpop.f32.mrf.mxu0
      %v1482 = vadd.f32 %v1401, %v1481
      %v1483 = vpop.f32.mrf.mxu0
      %1484 = vdwg.mxu0
      %1485 = vrot.lane.b32.xlu0 %v900, 112
      %v1486 = vpop.permute.xlu0 %1485
      %1487 = vrot.lane.b32.xlu0 %v905, 112
      %v1488 = vpop.permute.xlu0 %1487
      %1489 = vrot.lane.b32.xlu0 %v900, 80
      %v1490 = vpop.permute.xlu0 %1489
      %1491 = vrot.lane.b32.xlu0 %v905, 80
      %v1492 = vpop.permute.xlu0 %1491
      %v1493 = vsel %vm921, %v1486, 0
      %v1495 = vsel %vm921, %v1488, 0
      %v1497 = vsel %vm921, %v1490, 0
      %v1499 = vsel %vm921, %v1492, 0
      %1501 = vmatprep.subr.mxu0 0.0
      %1502 = vmatpush1.xpose.msra.mxu0 0.0
      %1503 = vmatprep.subr.mxu0 0.0
      %1504 = vmatpush1.xpose.msra.mxu0 0.0
      %1505 = vmatprep.subr.mxu0 0.0
      %1506 = vmatpush1.xpose.msra.mxu0 0.0
      %1507 = vmatprep.subr.mxu0 0.0
      %1508 = vmatpush1.xpose.msra.mxu0 0.0
      %1509 = vmatprep.subr.mxu0 0.0
      %1510 = vmatpush1.xpose.msra.mxu0 0.0
      %1511 = vmatprep.subr.mxu0 0.0
      %1512 = vmatpush1.xpose.msra.mxu0 0.0
      %1513 = vmatprep.subr.mxu0 0.0
      %1514 = vmatpush1.xpose.msra.mxu0 0.0
      %1515 = vmatprep.subr.mxu0 0.0
      %1516 = vmatpush1.xpose.msra.mxu0 0.0
      %1517 = vmatprep.subr.mxu0 0.0
      %1518 = vmatpush1.xpose.msra.mxu0 0.0
      %1519 = vmatprep.subr.mxu0 0.0
      %1520 = vmatpush1.xpose.msra.mxu0 0.0
      %1521 = vmatprep.subr.mxu0 0.0
      %1522 = vmatpush1.xpose.msra.mxu0 0.0
      %1523 = vmatprep.subr.mxu0 0.0
      %1524 = vmatpush1.xpose.msra.mxu0 0.0
      %1525 = vmatprep.subr.mxu0 0.0
      %1526 = vmatpush1.xpose.msra.mxu0 0.0
      %1527 = vmatprep.subr.mxu0 0.0
      %1528 = vmatpush1.xpose.msra.mxu0 0.0
      %1529 = vmatprep.subr.mxu0 0.0
      %1530 = vmatpush1.xpose.msra.mxu0 %v1499
      %1531 = vmatprep.subr.mxu0 0.0
      %1532 = vmatpush1.xpose.msra.mxu0 %v1497
      %1533 = vmatprep.subr.mxu0 0.0
      %1534 = vmatpush2.xpose.msra.mxu0 0.0
      %1535 = vmatprep.subr.mxu0 0.0
      %1536 = vmatpush2.xpose.msra.mxu0 0.0
      %1537 = vmatprep.subr.mxu0 0.0
      %1538 = vmatpush2.xpose.msra.mxu0 0.0
      %1539 = vmatprep.subr.mxu0 0.0
      %1540 = vmatpush2.xpose.msra.mxu0 0.0
      %1541 = vmatprep.subr.mxu0 0.0
      %1542 = vmatpush2.xpose.msra.mxu0 0.0
      %1543 = vmatprep.subr.mxu0 0.0
      %1544 = vmatpush2.xpose.msra.mxu0 0.0
      %1545 = vmatprep.subr.mxu0 0.0
      %1546 = vmatpush2.xpose.msra.mxu0 0.0
      %1547 = vmatprep.subr.mxu0 0.0
      %1548 = vmatpush2.xpose.msra.mxu0 0.0
      %1549 = vmatprep.subr.mxu0 0.0
      %1550 = vmatpush2.xpose.msra.mxu0 0.0
      %1551 = vmatprep.subr.mxu0 0.0
      %1552 = vmatpush2.xpose.msra.mxu0 0.0
      %1553 = vmatprep.subr.mxu0 0.0
      %1554 = vmatpush2.xpose.msra.mxu0 0.0
      %1555 = vmatprep.subr.mxu0 0.0
      %1556 = vmatpush2.xpose.msra.mxu0 0.0
      %1557 = vmatprep.subr.mxu0 0.0
      %1558 = vmatpush2.xpose.msra.mxu0 0.0
      %1559 = vmatprep.subr.mxu0 0.0
      %1560 = vmatpush2.xpose.msra.mxu0 0.0
      %1561 = vmatprep.subr.mxu0 0.0
      %1562 = vmatpush2.xpose.msra.mxu0 0.0
      %1563 = vmatprep.subr.mxu0 0.0
      %1564 = vmatpush2.xpose.msra.mxu0 0.0
      %1565 = vmatprep.mubr.f32.mxu0 0.0
      %1566 = vmatmul.mubr.f32.gmra.mxu0 %v1493
      %v1567 = vpop.f32.mrf.mxu0
      %v1568 = vadd.f32 0.0, %v1567
      %v1569 = vpop.f32.mrf.mxu0
      %1570 = vmatprep.mubr.f32.mxu0 0.0
      %1571 = vmatmul.mubr.f32.gmra.mxu0 %v1495
      %v1572 = vpop.f32.mrf.mxu0
      %v1573 = vadd.f32 0.0, %v1572
      %v1574 = vpop.f32.mrf.mxu0
      %1575 = vdwg.mxu0
      %v1576 = vmul.f32 %v1568, 0.35355338
      %v1577 = vmul.f32 %v1573, 0.35355338
      %v1578 = vadd.f32 %v1576, %v913
      %v1579 = vadd.f32 %v1577, %v914
      %v1580 = vsel %vm1009, %v1578, -inf
      %1581 = vmax.xlane.f32.xlu0 %v1580
      %v1582 = vpop.xlane.xlu0 %1581
      %v1583 = vsel %vm1009, %v1579, -inf
      %1584 = vmax.xlane.f32.xlu0 %v1583
      %v1585 = vpop.xlane.xlu0 %1584
      %v1586 = vsub.f32 %v1578, %v1582
      %v1587 = vsub.f32 %v1579, %v1585
      %v1588 = vmul.f32 %v1586, 1.442695
      %v1589 = vpow.pop %v1588
      %v1590 = vmul.f32 %v1587, 1.442695
      %v1591 = vpow.pop %v1590
      %v1592 = vsel %vm1009, %v1589, 0.0
      %1593 = vadd.xlane.f32.xlu0 %v1592
      %v1594 = vpop.xlane.xlu0 %1593
      %v1595 = vsel %vm1009, %v1591, 0.0
      %1596 = vadd.xlane.f32.xlu0 %v1595
      %v1597 = vpop.xlane.xlu0 %1596
      %v1598 = vrcp.pop %v1594
      %v1599 = vmul.f32 %v1589, %v1598
      %v1600 = vrcp.pop %v1597
      %v1601 = vmul.f32 %v1591, %v1600
      %1602 = vrot.lane.b32.xlu0 %v900, 48
      %v1603 = vpop.permute.xlu0 %1602
      %1604 = vrot.lane.b32.xlu0 %v905, 48
      %v1605 = vpop.permute.xlu0 %1604
      %v1609 = vsel %vm1009, %v1599, 0
      %v1612 = vsel %vm1009, %v1601, 0
      %1614 = vmatprep.subr.mxu0 0.0
      %1615 = vmatpush1.msra.mxu0 0.0
      %1616 = vmatprep.subr.mxu0 0.0
      %1617 = vmatpush1.msra.mxu0 0.0
      %1618 = vmatprep.subr.mxu0 0.0
      %1619 = vmatpush1.msra.mxu0 0.0
      %1620 = vmatprep.subr.mxu0 0.0
      %1621 = vmatpush1.msra.mxu0 0.0
      %1622 = vmatprep.subr.mxu0 0.0
      %1623 = vmatpush1.msra.mxu0 0.0
      %1624 = vmatprep.subr.mxu0 0.0
      %1625 = vmatpush1.msra.mxu0 0.0
      %1626 = vmatprep.subr.mxu0 0.0
      %1627 = vmatpush1.msra.mxu0 0.0
      %1628 = vmatprep.subr.mxu0 0.0
      %1629 = vmatpush1.msra.mxu0 0.0
      %1630 = vmatprep.subr.mxu0 0.0
      %1631 = vmatpush1.msra.mxu0 0.0
      %1632 = vmatprep.subr.mxu0 0.0
      %1633 = vmatpush1.msra.mxu0 0.0
      %1634 = vmatprep.subr.mxu0 0.0
      %1635 = vmatpush1.msra.mxu0 0.0
      %1636 = vmatprep.subr.mxu0 0.0
      %1637 = vmatpush1.msra.mxu0 0.0
      %1638 = vmatprep.subr.mxu0 0.0
      %1639 = vmatpush1.msra.mxu0 0.0
      %1640 = vmatprep.subr.mxu0 0.0
      %1641 = vmatpush1.msra.mxu0 0.0
      %1642 = vmatprep.subr.mxu0 0.0
      %1643 = vmatpush1.msra.mxu0 %v1605
      %1644 = vmatprep.subr.mxu0 0.0
      %1645 = vmatpush1.msra.mxu0 %v1603
      %1646 = vmatprep.subr.mxu0 0.0
      %1647 = vmatpush2.msra.mxu0 0.0
      %1648 = vmatprep.subr.mxu0 0.0
      %1649 = vmatpush2.msra.mxu0 0.0
      %1650 = vmatprep.subr.mxu0 0.0
      %1651 = vmatpush2.msra.mxu0 0.0
      %1652 = vmatprep.subr.mxu0 0.0
      %1653 = vmatpush2.msra.mxu0 0.0
      %1654 = vmatprep.subr.mxu0 0.0
      %1655 = vmatpush2.msra.mxu0 0.0
      %1656 = vmatprep.subr.mxu0 0.0
      %1657 = vmatpush2.msra.mxu0 0.0
      %1658 = vmatprep.subr.mxu0 0.0
      %1659 = vmatpush2.msra.mxu0 0.0
      %1660 = vmatprep.subr.mxu0 0.0
      %1661 = vmatpush2.msra.mxu0 0.0
      %1662 = vmatprep.subr.mxu0 0.0
      %1663 = vmatpush2.msra.mxu0 0.0
      %1664 = vmatprep.subr.mxu0 0.0
      %1665 = vmatpush2.msra.mxu0 0.0
      %1666 = vmatprep.subr.mxu0 0.0
      %1667 = vmatpush2.msra.mxu0 0.0
      %1668 = vmatprep.subr.mxu0 0.0
      %1669 = vmatpush2.msra.mxu0 0.0
      %1670 = vmatprep.subr.mxu0 0.0
      %1671 = vmatpush2.msra.mxu0 0.0
      %1672 = vmatprep.subr.mxu0 0.0
      %1673 = vmatpush2.msra.mxu0 0.0
      %1674 = vmatprep.subr.mxu0 0.0
      %1675 = vmatpush2.msra.mxu0 0.0
      %1676 = vmatprep.subr.mxu0 0.0
      %1677 = vmatpush2.msra.mxu0 0.0
      %1678 = vmatprep.mubr.f32.mxu0 0.0
      %1679 = vmatmul.mubr.f32.gmra.mxu0 %v1609
      %v1680 = vpop.f32.mrf.mxu0
      %v1681 = vadd.f32 0.0, %v1680
      %v1682 = vpop.f32.mrf.mxu0
      %1683 = vmatprep.mubr.f32.mxu0 0.0
      %1684 = vmatmul.mubr.f32.gmra.mxu0 %v1612
      %v1685 = vpop.f32.mrf.mxu0
      %v1686 = vadd.f32 0.0, %v1685
      %v1687 = vpop.f32.mrf.mxu0
      %1688 = vdwg.mxu0
      %v1690 = vsel %vm921, %v1681, 0
      %v1693 = vsel %vm921, %v1686, 0
      %1695 = vmatprep.subr.mxu0 0.0
      %1696 = vmatpush1.msra.mxu0 0.0
      %1697 = vmatprep.subr.mxu0 0.0
      %1698 = vmatpush1.msra.mxu0 0.0
      %1699 = vmatprep.subr.mxu0 0.0
      %1700 = vmatpush1.msra.mxu0 0.0
      %1701 = vmatprep.subr.mxu0 0.0
      %1702 = vmatpush1.msra.mxu0 0.0
      %1703 = vmatprep.subr.mxu0 0.0
      %1704 = vmatpush1.msra.mxu0 0.0
      %1705 = vmatprep.subr.mxu0 0.0
      %1706 = vmatpush1.msra.mxu0 0.0
      %1707 = vmatprep.subr.mxu0 0.0
      %1708 = vmatpush1.msra.mxu0 0.0
      %1709 = vmatprep.subr.mxu0 0.0
      %1710 = vmatpush1.msra.mxu0 0.0
      %1711 = vmatprep.subr.mxu0 0.0
      %1712 = vmatpush1.msra.mxu0 0.0
      %1713 = vmatprep.subr.mxu0 0.0
      %1714 = vmatpush1.msra.mxu0 0.0
      %1715 = vmatprep.subr.mxu0 0.0
      %1716 = vmatpush1.msra.mxu0 0.0
      %1717 = vmatprep.subr.mxu0 0.0
      %1718 = vmatpush1.msra.mxu0 0.0
      %1719 = vmatprep.subr.mxu0 0.0
      %1720 = vmatpush1.msra.mxu0 0.0
      %1721 = vmatprep.subr.mxu0 0.0
      %1722 = vmatpush1.msra.mxu0 0.0
      %1723 = vmatprep.subr.mxu0 0.0
      %1724 = vmatpush1.msra.mxu0 0.0
      %1725 = vmatprep.subr.mxu0 0.0
      %1726 = vmatpush1.msra.mxu0 %v910
      %1727 = vmatprep.subr.mxu0 0.0
      %1728 = vmatpush2.msra.mxu0 0.0
      %1729 = vmatprep.subr.mxu0 0.0
      %1730 = vmatpush2.msra.mxu0 0.0
      %1731 = vmatprep.subr.mxu0 0.0
      %1732 = vmatpush2.msra.mxu0 0.0
      %1733 = vmatprep.subr.mxu0 0.0
      %1734 = vmatpush2.msra.mxu0 0.0
      %1735 = vmatprep.subr.mxu0 0.0
      %1736 = vmatpush2.msra.mxu0 0.0
      %1737 = vmatprep.subr.mxu0 0.0
      %1738 = vmatpush2.msra.mxu0 0.0
      %1739 = vmatprep.subr.mxu0 0.0
      %1740 = vmatpush2.msra.mxu0 0.0
      %1741 = vmatprep.subr.mxu0 0.0
      %1742 = vmatpush2.msra.mxu0 0.0
      %1743 = vmatprep.subr.mxu0 0.0
      %1744 = vmatpush2.msra.mxu0 0.0
      %1745 = vmatprep.subr.mxu0 0.0
      %1746 = vmatpush2.msra.mxu0 0.0
      %1747 = vmatprep.subr.mxu0 0.0
      %1748 = vmatpush2.msra.mxu0 0.0
      %1749 = vmatprep.subr.mxu0 0.0
      %1750 = vmatpush2.msra.mxu0 0.0
      %1751 = vmatprep.subr.mxu0 0.0
      %1752 = vmatpush2.msra.mxu0 0.0
      %1753 = vmatprep.subr.mxu0 0.0
      %1754 = vmatpush2.msra.mxu0 0.0
      %1755 = vmatprep.subr.mxu0 0.0
      %1756 = vmatpush2.msra.mxu0 0.0
      %1757 = vmatprep.subr.mxu0 0.0
      %1758 = vmatpush2.msra.mxu0 0.0
      %1759 = vmatprep.mubr.f32.mxu0 0.0
      %1760 = vmatmul.mubr.f32.gmra.mxu0 %v1690
      %v1761 = vpop.f32.mrf.mxu0
      %v1762 = vadd.f32 0.0, %v1761
      %v1763 = vpop.f32.mrf.mxu0
      %1764 = vmatprep.mubr.f32.mxu0 0.0
      %1765 = vmatmul.mubr.f32.gmra.mxu0 %v1693
      %v1766 = vpop.f32.mrf.mxu0
      %v1767 = vadd.f32 0.0, %v1766
      %v1768 = vpop.f32.mrf.mxu0
      %1769 = vdwg.mxu0
      %v1770 = vadd.f32 %v1477, %v1762
      %v1771 = vadd.f32 %v1482, %v1767
      %1772 = vrot.lane.b32.xlu0 %v900, 104
      %v1773 = vpop.permute.xlu0 %1772
      %1774 = vrot.lane.b32.xlu0 %v905, 104
      %v1775 = vpop.permute.xlu0 %1774
      %1776 = vrot.lane.b32.xlu0 %v900, 72
      %v1777 = vpop.permute.xlu0 %1776
      %1778 = vrot.lane.b32.xlu0 %v905, 72
      %v1779 = vpop.permute.xlu0 %1778
      %v1780 = vsel %vm921, %v1773, 0
      %v1782 = vsel %vm921, %v1775, 0
      %v1784 = vsel %vm921, %v1777, 0
      %v1786 = vsel %vm921, %v1779, 0
      %1788 = vmatprep.subr.mxu0 0.0
      %1789 = vmatpush1.xpose.msra.mxu0 0.0
      %1790 = vmatprep.subr.mxu0 0.0
      %1791 = vmatpush1.xpose.msra.mxu0 0.0
      %1792 = vmatprep.subr.mxu0 0.0
      %1793 = vmatpush1.xpose.msra.mxu0 0.0
      %1794 = vmatprep.subr.mxu0 0.0
      %1795 = vmatpush1.xpose.msra.mxu0 0.0
      %1796 = vmatprep.subr.mxu0 0.0
      %1797 = vmatpush1.xpose.msra.mxu0 0.0
      %1798 = vmatprep.subr.mxu0 0.0
      %1799 = vmatpush1.xpose.msra.mxu0 0.0
      %1800 = vmatprep.subr.mxu0 0.0
      %1801 = vmatpush1.xpose.msra.mxu0 0.0
      %1802 = vmatprep.subr.mxu0 0.0
      %1803 = vmatpush1.xpose.msra.mxu0 0.0
      %1804 = vmatprep.subr.mxu0 0.0
      %1805 = vmatpush1.xpose.msra.mxu0 0.0
      %1806 = vmatprep.subr.mxu0 0.0
      %1807 = vmatpush1.xpose.msra.mxu0 0.0
      %1808 = vmatprep.subr.mxu0 0.0
      %1809 = vmatpush1.xpose.msra.mxu0 0.0
      %1810 = vmatprep.subr.mxu0 0.0
      %1811 = vmatpush1.xpose.msra.mxu0 0.0
      %1812 = vmatprep.subr.mxu0 0.0
      %1813 = vmatpush1.xpose.msra.mxu0 0.0
      %1814 = vmatprep.subr.mxu0 0.0
      %1815 = vmatpush1.xpose.msra.mxu0 0.0
      %1816 = vmatprep.subr.mxu0 0.0
      %1817 = vmatpush1.xpose.msra.mxu0 %v1786
      %1818 = vmatprep.subr.mxu0 0.0
      %1819 = vmatpush1.xpose.msra.mxu0 %v1784
      %1820 = vmatprep.subr.mxu0 0.0
      %1821 = vmatpush2.xpose.msra.mxu0 0.0
      %1822 = vmatprep.subr.mxu0 0.0
      %1823 = vmatpush2.xpose.msra.mxu0 0.0
      %1824 = vmatprep.subr.mxu0 0.0
      %1825 = vmatpush2.xpose.msra.mxu0 0.0
      %1826 = vmatprep.subr.mxu0 0.0
      %1827 = vmatpush2.xpose.msra.mxu0 0.0
      %1828 = vmatprep.subr.mxu0 0.0
      %1829 = vmatpush2.xpose.msra.mxu0 0.0
      %1830 = vmatprep.subr.mxu0 0.0
      %1831 = vmatpush2.xpose.msra.mxu0 0.0
      %1832 = vmatprep.subr.mxu0 0.0
      %1833 = vmatpush2.xpose.msra.mxu0 0.0
      %1834 = vmatprep.subr.mxu0 0.0
      %1835 = vmatpush2.xpose.msra.mxu0 0.0
      %1836 = vmatprep.subr.mxu0 0.0
      %1837 = vmatpush2.xpose.msra.mxu0 0.0
      %1838 = vmatprep.subr.mxu0 0.0
      %1839 = vmatpush2.xpose.msra.mxu0 0.0
      %1840 = vmatprep.subr.mxu0 0.0
      %1841 = vmatpush2.xpose.msra.mxu0 0.0
      %1842 = vmatprep.subr.mxu0 0.0
      %1843 = vmatpush2.xpose.msra.mxu0 0.0
      %1844 = vmatprep.subr.mxu0 0.0
      %1845 = vmatpush2.xpose.msra.mxu0 0.0
      %1846 = vmatprep.subr.mxu0 0.0
      %1847 = vmatpush2.xpose.msra.mxu0 0.0
      %1848 = vmatprep.subr.mxu0 0.0
      %1849 = vmatpush2.xpose.msra.mxu0 0.0
      %1850 = vmatprep.subr.mxu0 0.0
      %1851 = vmatpush2.xpose.msra.mxu0 0.0
      %1852 = vmatprep.mubr.f32.mxu0 0.0
      %1853 = vmatmul.mubr.f32.gmra.mxu0 %v1780
      %v1854 = vpop.f32.mrf.mxu0
      %v1855 = vadd.f32 0.0, %v1854
      %v1856 = vpop.f32.mrf.mxu0
      %1857 = vmatprep.mubr.f32.mxu0 0.0
      %1858 = vmatmul.mubr.f32.gmra.mxu0 %v1782
      %v1859 = vpop.f32.mrf.mxu0
      %v1860 = vadd.f32 0.0, %v1859
      %v1861 = vpop.f32.mrf.mxu0
      %1862 = vdwg.mxu0
      %v1863 = vmul.f32 %v1855, 0.35355338
      %v1864 = vmul.f32 %v1860, 0.35355338
      %v1865 = vadd.f32 %v1863, %v913
      %v1866 = vadd.f32 %v1864, %v914
      %v1867 = vsel %vm1009, %v1865, -inf
      %1868 = vmax.xlane.f32.xlu0 %v1867
      %v1869 = vpop.xlane.xlu0 %1868
      %v1870 = vsel %vm1009, %v1866, -inf
      %1871 = vmax.xlane.f32.xlu0 %v1870
      %v1872 = vpop.xlane.xlu0 %1871
      %v1873 = vsub.f32 %v1865, %v1869
      %v1874 = vsub.f32 %v1866, %v1872
      %v1875 = vmul.f32 %v1873, 1.442695
      %v1876 = vpow.pop %v1875
      %v1877 = vmul.f32 %v1874, 1.442695
      %v1878 = vpow.pop %v1877
      %v1879 = vsel %vm1009, %v1876, 0.0
      %1880 = vadd.xlane.f32.xlu0 %v1879
      %v1881 = vpop.xlane.xlu0 %1880
      %v1882 = vsel %vm1009, %v1878, 0.0
      %1883 = vadd.xlane.f32.xlu0 %v1882
      %v1884 = vpop.xlane.xlu0 %1883
      %v1885 = vrcp.pop %v1881
      %v1886 = vmul.f32 %v1876, %v1885
      %v1887 = vrcp.pop %v1884
      %v1888 = vmul.f32 %v1878, %v1887
      %1889 = vrot.lane.b32.xlu0 %v900, 40
      %v1890 = vpop.permute.xlu0 %1889
      %1891 = vrot.lane.b32.xlu0 %v905, 40
      %v1892 = vpop.permute.xlu0 %1891
      %v1896 = vsel %vm1009, %v1886, 0
      %v1899 = vsel %vm1009, %v1888, 0
      %1901 = vmatprep.subr.mxu0 0.0
      %1902 = vmatpush1.msra.mxu0 0.0
      %1903 = vmatprep.subr.mxu0 0.0
      %1904 = vmatpush1.msra.mxu0 0.0
      %1905 = vmatprep.subr.mxu0 0.0
      %1906 = vmatpush1.msra.mxu0 0.0
      %1907 = vmatprep.subr.mxu0 0.0
      %1908 = vmatpush1.msra.mxu0 0.0
      %1909 = vmatprep.subr.mxu0 0.0
      %1910 = vmatpush1.msra.mxu0 0.0
      %1911 = vmatprep.subr.mxu0 0.0
      %1912 = vmatpush1.msra.mxu0 0.0
      %1913 = vmatprep.subr.mxu0 0.0
      %1914 = vmatpush1.msra.mxu0 0.0
      %1915 = vmatprep.subr.mxu0 0.0
      %1916 = vmatpush1.msra.mxu0 0.0
      %1917 = vmatprep.subr.mxu0 0.0
      %1918 = vmatpush1.msra.mxu0 0.0
      %1919 = vmatprep.subr.mxu0 0.0
      %1920 = vmatpush1.msra.mxu0 0.0
      %1921 = vmatprep.subr.mxu0 0.0
      %1922 = vmatpush1.msra.mxu0 0.0
      %1923 = vmatprep.subr.mxu0 0.0
      %1924 = vmatpush1.msra.mxu0 0.0
      %1925 = vmatprep.subr.mxu0 0.0
      %1926 = vmatpush1.msra.mxu0 0.0
      %1927 = vmatprep.subr.mxu0 0.0
      %1928 = vmatpush1.msra.mxu0 0.0
      %1929 = vmatprep.subr.mxu0 0.0
      %1930 = vmatpush1.msra.mxu0 %v1892
      %1931 = vmatprep.subr.mxu0 0.0
      %1932 = vmatpush1.msra.mxu0 %v1890
      %1933 = vmatprep.subr.mxu0 0.0
      %1934 = vmatpush2.msra.mxu0 0.0
      %1935 = vmatprep.subr.mxu0 0.0
      %1936 = vmatpush2.msra.mxu0 0.0
      %1937 = vmatprep.subr.mxu0 0.0
      %1938 = vmatpush2.msra.mxu0 0.0
      %1939 = vmatprep.subr.mxu0 0.0
      %1940 = vmatpush2.msra.mxu0 0.0
      %1941 = vmatprep.subr.mxu0 0.0
      %1942 = vmatpush2.msra.mxu0 0.0
      %1943 = vmatprep.subr.mxu0 0.0
      %1944 = vmatpush2.msra.mxu0 0.0
      %1945 = vmatprep.subr.mxu0 0.0
      %1946 = vmatpush2.msra.mxu0 0.0
      %1947 = vmatprep.subr.mxu0 0.0
      %1948 = vmatpush2.msra.mxu0 0.0
      %1949 = vmatprep.subr.mxu0 0.0
      %1950 = vmatpush2.msra.mxu0 0.0
      %1951 = vmatprep.subr.mxu0 0.0
      %1952 = vmatpush2.msra.mxu0 0.0
      %1953 = vmatprep.subr.mxu0 0.0
      %1954 = vmatpush2.msra.mxu0 0.0
      %1955 = vmatprep.subr.mxu0 0.0
      %1956 = vmatpush2.msra.mxu0 0.0
      %1957 = vmatprep.subr.mxu0 0.0
      %1958 = vmatpush2.msra.mxu0 0.0
      %1959 = vmatprep.subr.mxu0 0.0
      %1960 = vmatpush2.msra.mxu0 0.0
      %1961 = vmatprep.subr.mxu0 0.0
      %1962 = vmatpush2.msra.mxu0 0.0
      %1963 = vmatprep.subr.mxu0 0.0
      %1964 = vmatpush2.msra.mxu0 0.0
      %1965 = vmatprep.mubr.f32.mxu0 0.0
      %1966 = vmatmul.mubr.f32.gmra.mxu0 %v1896
      %v1967 = vpop.f32.mrf.mxu0
      %v1968 = vadd.f32 0.0, %v1967
      %v1969 = vpop.f32.mrf.mxu0
      %1970 = vmatprep.mubr.f32.mxu0 0.0
      %1971 = vmatmul.mubr.f32.gmra.mxu0 %v1899
      %v1972 = vpop.f32.mrf.mxu0
      %v1973 = vadd.f32 0.0, %v1972
      %v1974 = vpop.f32.mrf.mxu0
      %1975 = vdwg.mxu0
      %v1977 = vsel %vm921, %v1968, 0
      %v1980 = vsel %vm921, %v1973, 0
      %1982 = vmatprep.subr.mxu0 0.0
      %1983 = vmatpush1.msra.mxu0 0.0
      %1984 = vmatprep.subr.mxu0 0.0
      %1985 = vmatpush1.msra.mxu0 0.0
      %1986 = vmatprep.subr.mxu0 0.0
      %1987 = vmatpush1.msra.mxu0 0.0
      %1988 = vmatprep.subr.mxu0 0.0
      %1989 = vmatpush1.msra.mxu0 0.0
      %1990 = vmatprep.subr.mxu0 0.0
      %1991 = vmatpush1.msra.mxu0 0.0
      %1992 = vmatprep.subr.mxu0 0.0
      %1993 = vmatpush1.msra.mxu0 0.0
      %1994 = vmatprep.subr.mxu0 0.0
      %1995 = vmatpush1.msra.mxu0 0.0
      %1996 = vmatprep.subr.mxu0 0.0
      %1997 = vmatpush1.msra.mxu0 0.0
      %1998 = vmatprep.subr.mxu0 0.0
      %1999 = vmatpush1.msra.mxu0 0.0
      %2000 = vmatprep.subr.mxu0 0.0
      %2001 = vmatpush1.msra.mxu0 0.0
      %2002 = vmatprep.subr.mxu0 0.0
      %2003 = vmatpush1.msra.mxu0 0.0
      %2004 = vmatprep.subr.mxu0 0.0
      %2005 = vmatpush1.msra.mxu0 0.0
      %2006 = vmatprep.subr.mxu0 0.0
      %2007 = vmatpush1.msra.mxu0 0.0
      %2008 = vmatprep.subr.mxu0 0.0
      %2009 = vmatpush1.msra.mxu0 0.0
      %2010 = vmatprep.subr.mxu0 0.0
      %2011 = vmatpush1.msra.mxu0 0.0
      %2012 = vmatprep.subr.mxu0 0.0
      %2013 = vmatpush1.msra.mxu0 %v911
      %2014 = vmatprep.subr.mxu0 0.0
      %2015 = vmatpush2.msra.mxu0 0.0
      %2016 = vmatprep.subr.mxu0 0.0
      %2017 = vmatpush2.msra.mxu0 0.0
      %2018 = vmatprep.subr.mxu0 0.0
      %2019 = vmatpush2.msra.mxu0 0.0
      %2020 = vmatprep.subr.mxu0 0.0
      %2021 = vmatpush2.msra.mxu0 0.0
      %2022 = vmatprep.subr.mxu0 0.0
      %2023 = vmatpush2.msra.mxu0 0.0
      %2024 = vmatprep.subr.mxu0 0.0
      %2025 = vmatpush2.msra.mxu0 0.0
      %2026 = vmatprep.subr.mxu0 0.0
      %2027 = vmatpush2.msra.mxu0 0.0
      %2028 = vmatprep.subr.mxu0 0.0
      %2029 = vmatpush2.msra.mxu0 0.0
      %2030 = vmatprep.subr.mxu0 0.0
      %2031 = vmatpush2.msra.mxu0 0.0
      %2032 = vmatprep.subr.mxu0 0.0
      %2033 = vmatpush2.msra.mxu0 0.0
      %2034 = vmatprep.subr.mxu0 0.0
      %2035 = vmatpush2.msra.mxu0 0.0
      %2036 = vmatprep.subr.mxu0 0.0
      %2037 = vmatpush2.msra.mxu0 0.0
      %2038 = vmatprep.subr.mxu0 0.0
      %2039 = vmatpush2.msra.mxu0 0.0
      %2040 = vmatprep.subr.mxu0 0.0
      %2041 = vmatpush2.msra.mxu0 0.0
      %2042 = vmatprep.subr.mxu0 0.0
      %2043 = vmatpush2.msra.mxu0 0.0
      %2044 = vmatprep.subr.mxu0 0.0
      %2045 = vmatpush2.msra.mxu0 0.0
      %2046 = vmatprep.mubr.f32.mxu0 0.0
      %2047 = vmatmul.mubr.f32.gmra.mxu0 %v1977
      %v2048 = vpop.f32.mrf.mxu0
      %v2049 = vadd.f32 0.0, %v2048
      %v2050 = vpop.f32.mrf.mxu0
      %2051 = vmatprep.mubr.f32.mxu0 0.0
      %2052 = vmatmul.mubr.f32.gmra.mxu0 %v1980
      %v2053 = vpop.f32.mrf.mxu0
      %v2054 = vadd.f32 0.0, %v2053
      %v2055 = vpop.f32.mrf.mxu0
      %2056 = vdwg.mxu0
      %v2057 = vadd.f32 %v1770, %v2049
      %v2058 = vadd.f32 %v1771, %v2054
      %v2060 = vlaneseq
      %v2061 = vshrl.u32 %v2060, 7
      %v2062 = vsub.s32 0, %v2061
      %v2063 = vrot.slane %v912, %v2062
      %v2065 = vadd.f32 %v2057, %v2063
      %v2066 = vadd.f32 %v2058, %v2063
      %v2067 = vadd.f32 %v813, %v2065
      %v2068 = vadd.f32 %v814, %v2066
      %v2069 = vld [vmem:[%s680] sm:$0x1]
      %v2070 = vld [vmem:[%s683] sm:$0x1]
      %v2071 = vsel %vm826, %v2067, 0.0
      %2072 = vadd.xlane.f32.xlu0 %v2071
      %v2073 = vpop.xlane.xlu0 %2072
      %v2074 = vsel %vm826, %v2068, 0.0
      %2075 = vadd.xlane.f32.xlu0 %v2074
      %v2076 = vpop.xlane.xlu0 %2075
      %v2077 = vrcp.pop 32.0
      %v2078 = vmul.f32 %v2073, %v2077
      %v2079 = vmul.f32 %v2076, %v2077
      %v2080 = vsub.f32 %v2067, %v2078
      %v2081 = vsub.f32 %v2068, %v2079
      %v2082 = vmul.f32 %v2080, %v2080
      %v2083 = vmul.f32 %v2081, %v2081
      %v2084 = vsel %vm826, %v2082, 0.0
      %2085 = vadd.xlane.f32.xlu0 %v2084
      %v2086 = vpop.xlane.xlu0 %2085
      %v2087 = vsel %vm826, %v2083, 0.0
      %2088 = vadd.xlane.f32.xlu0 %v2087
      %v2089 = vpop.xlane.xlu0 %2088
      %v2090 = vmul.f32 %v2086, %v2077
      %v2091 = vmul.f32 %v2089, %v2077
      %v2092 = vadd.f32 %v2090, 1e-05
      %v2093 = vadd.f32 %v2091, 1e-05
      %v2094 = vrsqrt.pop %v2092
      %v2095 = vrsqrt.pop %v2093
      %v2096 = vmul.f32 %v2080, %v2094
      %v2097 = vmul.f32 %v2081, %v2095
      %v2099 = vlaneseq
      %v2100 = vshrl.u32 %v2099, 7
      %v2101 = vsub.s32 0, %v2100
      %v2102 = vrot.slane %v2069, %v2101
      %v2104 = vmul.f32 %v2096, %v2102
      %v2105 = vmul.f32 %v2097, %v2102
      %v2107 = vlaneseq
      %v2108 = vshrl.u32 %v2107, 7
      %v2109 = vsub.s32 0, %v2108
      %v2110 = vrot.slane %v2070, %v2109
      %v2112 = vadd.f32 %v2104, %v2110
      %v2113 = vadd.f32 %v2105, %v2110
      %v2114 = vld [vmem:[%s688] sm:$0xff]
      %v2115 = vld [vmem:[%s688 + $0x8] sm:$0xff]
      %v2116 = vld [vmem:[%s688 + $0x10] sm:$0xff]
      %v2117 = vld [vmem:[%s688 + $0x18] sm:$0xff]
      %v2118 = vld [vmem:[%s691] sm:$0x1]
      %v2120 = vlaneseq
      %v2121 = vshrl.u32 %v2120, 7
      %v2122 = vsub.s32 0, %v2121
      %v2123 = vrot.slane %v2118, %v2122
      %v2126 = vsel %vm826, %v2112, 0
      %v2129 = vsel %vm826, %v2113, 0
      %2131 = vmatprep.subr.mxu0 0.0
      %2132 = vmatpush1.msra.mxu0 0.0
      %2133 = vmatprep.subr.mxu0 0.0
      %2134 = vmatpush1.msra.mxu0 0.0
      %2135 = vmatprep.subr.mxu0 0.0
      %2136 = vmatpush1.msra.mxu0 0.0
      %2137 = vmatprep.subr.mxu0 0.0
      %2138 = vmatpush1.msra.mxu0 0.0
      %2139 = vmatprep.subr.mxu0 0.0
      %2140 = vmatpush1.msra.mxu0 0.0
      %2141 = vmatprep.subr.mxu0 0.0
      %2142 = vmatpush1.msra.mxu0 0.0
      %2143 = vmatprep.subr.mxu0 0.0
      %2144 = vmatpush1.msra.mxu0 0.0
      %2145 = vmatprep.subr.mxu0 0.0
      %2146 = vmatpush1.msra.mxu0 0.0
      %2147 = vmatprep.subr.mxu0 0.0
      %2148 = vmatpush1.msra.mxu0 0.0
      %2149 = vmatprep.subr.mxu0 0.0
      %2150 = vmatpush1.msra.mxu0 0.0
      %2151 = vmatprep.subr.mxu0 0.0
      %2152 = vmatpush1.msra.mxu0 0.0
      %2153 = vmatprep.subr.mxu0 0.0
      %2154 = vmatpush1.msra.mxu0 0.0
      %2155 = vmatprep.subr.mxu0 0.0
      %2156 = vmatpush1.msra.mxu0 %v2117
      %2157 = vmatprep.subr.mxu0 0.0
      %2158 = vmatpush1.msra.mxu0 %v2116
      %2159 = vmatprep.subr.mxu0 0.0
      %2160 = vmatpush1.msra.mxu0 %v2115
      %2161 = vmatprep.subr.mxu0 0.0
      %2162 = vmatpush1.msra.mxu0 %v2114
      %2163 = vmatprep.subr.mxu0 0.0
      %2164 = vmatpush2.msra.mxu0 0.0
      %2165 = vmatprep.subr.mxu0 0.0
      %2166 = vmatpush2.msra.mxu0 0.0
      %2167 = vmatprep.subr.mxu0 0.0
      %2168 = vmatpush2.msra.mxu0 0.0
      %2169 = vmatprep.subr.mxu0 0.0
      %2170 = vmatpush2.msra.mxu0 0.0
      %2171 = vmatprep.subr.mxu0 0.0
      %2172 = vmatpush2.msra.mxu0 0.0
      %2173 = vmatprep.subr.mxu0 0.0
      %2174 = vmatpush2.msra.mxu0 0.0
      %2175 = vmatprep.subr.mxu0 0.0
      %2176 = vmatpush2.msra.mxu0 0.0
      %2177 = vmatprep.subr.mxu0 0.0
      %2178 = vmatpush2.msra.mxu0 0.0
      %2179 = vmatprep.subr.mxu0 0.0
      %2180 = vmatpush2.msra.mxu0 0.0
      %2181 = vmatprep.subr.mxu0 0.0
      %2182 = vmatpush2.msra.mxu0 0.0
      %2183 = vmatprep.subr.mxu0 0.0
      %2184 = vmatpush2.msra.mxu0 0.0
      %2185 = vmatprep.subr.mxu0 0.0
      %2186 = vmatpush2.msra.mxu0 0.0
      %2187 = vmatprep.subr.mxu0 0.0
      %2188 = vmatpush2.msra.mxu0 0.0
      %2189 = vmatprep.subr.mxu0 0.0
      %2190 = vmatpush2.msra.mxu0 0.0
      %2191 = vmatprep.subr.mxu0 0.0
      %2192 = vmatpush2.msra.mxu0 0.0
      %2193 = vmatprep.subr.mxu0 0.0
      %2194 = vmatpush2.msra.mxu0 0.0
      %2195 = vmatprep.mubr.f32.mxu0 0.0
      %2196 = vmatmul.mubr.f32.gmra.mxu0 %v2126
      %v2197 = vpop.f32.mrf.mxu0
      %v2198 = vadd.f32 %v2123, %v2197
      %v2199 = vpop.f32.mrf.mxu0
      %2200 = vmatprep.mubr.f32.mxu0 0.0
      %2201 = vmatmul.mubr.f32.gmra.mxu0 %v2129
      %v2202 = vpop.f32.mrf.mxu0
      %v2203 = vadd.f32 %v2123, %v2202
      %v2204 = vpop.f32.mrf.mxu0
      %2205 = vdwg.mxu0
      %v2206 = vmax.f32 %v2198, 0.0
      %v2207 = vmax.f32 %v2203, 0.0
      %v2208 = vld [vmem:[%s696] sm:$0xff]
      %v2209 = vld [vmem:[%s696 + $0x8] sm:$0xff]
      %v2210 = vld [vmem:[%s696 + $0x10] sm:$0xff]
      %v2211 = vld [vmem:[%s696 + $0x18] sm:$0xff]
      %v2212 = vld [vmem:[%s696 + $0x20] sm:$0xff]
      %v2213 = vld [vmem:[%s696 + $0x28] sm:$0xff]
      %v2214 = vld [vmem:[%s696 + $0x30] sm:$0xff]
      %v2215 = vld [vmem:[%s696 + $0x38] sm:$0xff]
      %v2216 = vld [vmem:[%s696 + $0x40] sm:$0xff]
      %v2217 = vld [vmem:[%s696 + $0x48] sm:$0xff]
      %v2218 = vld [vmem:[%s696 + $0x50] sm:$0xff]
      %v2219 = vld [vmem:[%s696 + $0x58] sm:$0xff]
      %v2220 = vld [vmem:[%s696 + $0x60] sm:$0xff]
      %v2221 = vld [vmem:[%s696 + $0x68] sm:$0xff]
      %v2222 = vld [vmem:[%s696 + $0x70] sm:$0xff]
      %v2223 = vld [vmem:[%s696 + $0x78] sm:$0xff]
      %v2224 = vld [vmem:[%s699] sm:$0x1]
      %v2226 = vlaneseq
      %v2227 = vshrl.u32 %v2226, 7
      %v2228 = vsub.s32 0, %v2227
      %v2229 = vrot.slane %v2224, %v2228
      %2231 = vmatprep.subr.mxu0 0.0
      %2232 = vmatpush1.msra.mxu0 %v2223
      %2233 = vmatprep.subr.mxu0 0.0
      %2234 = vmatpush1.msra.mxu0 %v2222
      %2235 = vmatprep.subr.mxu0 0.0
      %2236 = vmatpush1.msra.mxu0 %v2221
      %2237 = vmatprep.subr.mxu0 0.0
      %2238 = vmatpush1.msra.mxu0 %v2220
      %2239 = vmatprep.subr.mxu0 0.0
      %2240 = vmatpush1.msra.mxu0 %v2219
      %2241 = vmatprep.subr.mxu0 0.0
      %2242 = vmatpush1.msra.mxu0 %v2218
      %2243 = vmatprep.subr.mxu0 0.0
      %2244 = vmatpush1.msra.mxu0 %v2217
      %2245 = vmatprep.subr.mxu0 0.0
      %2246 = vmatpush1.msra.mxu0 %v2216
      %2247 = vmatprep.subr.mxu0 0.0
      %2248 = vmatpush1.msra.mxu0 %v2215
      %2249 = vmatprep.subr.mxu0 0.0
      %2250 = vmatpush1.msra.mxu0 %v2214
      %2251 = vmatprep.subr.mxu0 0.0
      %2252 = vmatpush1.msra.mxu0 %v2213
      %2253 = vmatprep.subr.mxu0 0.0
      %2254 = vmatpush1.msra.mxu0 %v2212
      %2255 = vmatprep.subr.mxu0 0.0
      %2256 = vmatpush1.msra.mxu0 %v2211
      %2257 = vmatprep.subr.mxu0 0.0
      %2258 = vmatpush1.msra.mxu0 %v2210
      %2259 = vmatprep.subr.mxu0 0.0
      %2260 = vmatpush1.msra.mxu0 %v2209
      %2261 = vmatprep.subr.mxu0 0.0
      %2262 = vmatpush1.msra.mxu0 %v2208
      %2263 = vmatprep.subr.mxu0 0.0
      %2264 = vmatpush2.msra.mxu0 0.0
      %2265 = vmatprep.subr.mxu0 0.0
      %2266 = vmatpush2.msra.mxu0 0.0
      %2267 = vmatprep.subr.mxu0 0.0
      %2268 = vmatpush2.msra.mxu0 0.0
      %2269 = vmatprep.subr.mxu0 0.0
      %2270 = vmatpush2.msra.mxu0 0.0
      %2271 = vmatprep.subr.mxu0 0.0
      %2272 = vmatpush2.msra.mxu0 0.0
      %2273 = vmatprep.subr.mxu0 0.0
      %2274 = vmatpush2.msra.mxu0 0.0
      %2275 = vmatprep.subr.mxu0 0.0
      %2276 = vmatpush2.msra.mxu0 0.0
      %2277 = vmatprep.subr.mxu0 0.0
      %2278 = vmatpush2.msra.mxu0 0.0
      %2279 = vmatprep.subr.mxu0 0.0
      %2280 = vmatpush2.msra.mxu0 0.0
      %2281 = vmatprep.subr.mxu0 0.0
      %2282 = vmatpush2.msra.mxu0 0.0
      %2283 = vmatprep.subr.mxu0 0.0
      %2284 = vmatpush2.msra.mxu0 0.0
      %2285 = vmatprep.subr.mxu0 0.0
      %2286 = vmatpush2.msra.mxu0 0.0
      %2287 = vmatprep.subr.mxu0 0.0
      %2288 = vmatpush2.msra.mxu0 0.0
      %2289 = vmatprep.subr.mxu0 0.0
      %2290 = vmatpush2.msra.mxu0 0.0
      %2291 = vmatprep.subr.mxu0 0.0
      %2292 = vmatpush2.msra.mxu0 0.0
      %2293 = vmatprep.subr.mxu0 0.0
      %2294 = vmatpush2.msra.mxu0 0.0
      %2295 = vmatprep.mubr.f32.mxu0 0.0
      %2296 = vmatmul.mubr.f32.gmra.mxu0 %v2206
      %v2297 = vpop.f32.mrf.mxu0
      %v2298 = vadd.f32 %v2229, %v2297
      %v2299 = vpop.f32.mrf.mxu0
      %2300 = vmatprep.mubr.f32.mxu0 0.0
      %2301 = vmatmul.mubr.f32.gmra.mxu0 %v2207
      %v2302 = vpop.f32.mrf.mxu0
      %v2303 = vadd.f32 %v2229, %v2302
      %v2304 = vpop.f32.mrf.mxu0
      %2305 = vdwg.mxu0
      %v2306 = vadd.f32 %v2112, %v2298
      %v2307 = vadd.f32 %v2113, %v2303
      %v2308 = vld [vmem:[%s702] sm:$0x1]
      %v2309 = vld [vmem:[%s705] sm:$0x1]
      %v2310 = vsel %vm826, %v2306, 0.0
      %2311 = vadd.xlane.f32.xlu0 %v2310
      %v2312 = vpop.xlane.xlu0 %2311
      %v2313 = vsel %vm826, %v2307, 0.0
      %2314 = vadd.xlane.f32.xlu0 %v2313
      %v2315 = vpop.xlane.xlu0 %2314
      %v2316 = vmul.f32 %v2312, %v2077
      %v2317 = vmul.f32 %v2315, %v2077
      %v2318 = vsub.f32 %v2306, %v2316
      %v2319 = vsub.f32 %v2307, %v2317
      %v2320 = vmul.f32 %v2318, %v2318
      %v2321 = vmul.f32 %v2319, %v2319
      %v2322 = vsel %vm826, %v2320, 0.0
      %2323 = vadd.xlane.f32.xlu0 %v2322
      %v2324 = vpop.xlane.xlu0 %2323
      %v2325 = vsel %vm826, %v2321, 0.0
      %2326 = vadd.xlane.f32.xlu0 %v2325
      %v2327 = vpop.xlane.xlu0 %2326
      %v2328 = vmul.f32 %v2324, %v2077
      %v2329 = vmul.f32 %v2327, %v2077
      %v2330 = vadd.f32 %v2328, 1e-05
      %v2331 = vadd.f32 %v2329, 1e-05
      %v2332 = vrsqrt.pop %v2330
      %v2333 = vrsqrt.pop %v2331
      %v2334 = vmul.f32 %v2318, %v2332
      %v2335 = vmul.f32 %v2319, %v2333
      %v2337 = vlaneseq
      %v2338 = vshrl.u32 %v2337, 7
      %v2339 = vsub.s32 0, %v2338
      %v2340 = vrot.slane %v2308, %v2339
      %v2342 = vmul.f32 %v2334, %v2340
      %v2343 = vmul.f32 %v2335, %v2340
      %v2345 = vlaneseq
      %v2346 = vshrl.u32 %v2345, 7
      %v2347 = vsub.s32 0, %v2346
      %v2348 = vrot.slane %v2309, %v2347
      %v2350 = vadd.f32 %v2342, %v2348
      %v2351 = vadd.f32 %v2343, %v2348
      %2352 = vst.msk [vmem:[#allocation2] sm:$0xff] %vm826, %v2350
      %2353 = vst.msk [vmem:[#allocation2 + $0x8] sm:$0xff] %vm826, %v2351
      %p2354 = scmp.eq.s32.totalorder %s28, 1
      // Predicated region
      $region93: #{transformer_forward.2} parent=87 // pred_check
        %p2355 = pneg %p2354
      $region94: #{transformer_forward.2} parent=87 // pred_check_branch
        %2357 = sbr.rel (%p2355) target = $region96
      $region95: #{transformer_forward.2} parent=87 // pred_region
        %2358 = vst.msk [vmem:[%s17] sm:$0xff] %vm826, %v2350
        %2359 = vst.msk [vmem:[%s17 + $0x8] sm:$0xff] %vm826, %v2351
      $region96: #{transformer_forward.2} parent=87 // pred_fallthru
        _
      // Predicated region
      $region97: #{transformer_forward.2} parent=87 // pred_check
        %p2360 = pneg %p458
      $region98: #{transformer_forward.2} parent=87 // pred_check_branch
        %2362 = sbr.rel (%p2360) target = $region100
      $region99: #{transformer_forward.2} parent=87 // pred_region
        _
      $region100: #{transformer_forward.2} parent=87 // pred_fallthru
        _
      // Predicated region
      $region101: #{transformer_forward.2} parent=87 // pred_check
        %p2363 = pneg %p458
      $region102: #{transformer_forward.2} parent=87 // pred_check_branch
        %2365 = sbr.rel (%p2363) target = $region104
      $region103: #{transformer_forward.2} parent=87 // pred_region
        _
      $region104: #{transformer_forward.2} parent=87 // pred_fallthru
        _
    $region88: #{transformer_forward.2} parent=5 // pred_fallthru
      _
    %p2366 = scmp.le.s32.totalorder 2, %s23
    // Predicated region
    $region105: #{transformer_forward.2} parent=5 // pred_check
      %p2367 = pneg %p2366
    $region106: #{transformer_forward.2} parent=5 // pred_check_branch
      %2369 = sbr.rel (%p2367) target = $region108
    $region107: #{transformer_forward.2} parent=5 // pred_region
      %s2370 = ssub.s32 %s23, 2
    $region108: #{transformer_forward.2} parent=5 // pred_fallthru
      _
  $region6: #{transformer_forward.2} parent=0 // loop_footer
    %s27 = sadd.s32 1, %s23
  $region7: #{transformer_forward.2} parent=0 // loop_footer_branch
    %22 = sbr.rel target = $region3
  $region8: #{transformer_forward.2} parent=0 // loop_exit
    _

// kernel: transformer_forward.3
$region0: #{transformer_forward.3}
  #allocation0 [shape = 'u32[]', space=smem, size = 0x4, offset = 0x4, fixed_abs, tag = 'smem constant byte address 0x4 - core index']
  #allocation1 [shape = 'u32[144,128]{1,0:T(1,128)}', space=vmem, size = 0x12000, scoped, tag = 'internal scratch']
  #allocation2 [shape = 'f32[16,32]{1,0:T(8,128)}', space=vmem, size = 0x2000, scoped, tag = 'scratch operand']
  %s0 = inlined_call_operand.smem [shape: u32[32], index: -1, kind: input, shape index: {}]
  %s1 = sld [smem:[%s0]]
  %s2 = scalar_lea.smem %s0, 1
  %s3 = sld [smem:[%s2]]
  %s4 = scalar_lea.smem %s0, 2
  %s5 = sld [smem:[%s4]]
  %s6 = scalar_lea.smem %s0, 3
  %s7 = sld [smem:[%s6]]
  %s8 = scalar_lea.smem %s0, 4
  %s9 = sld [smem:[%s8]]
  %s10 = scalar_lea.smem %s0, 5
  %s11 = sld [smem:[%s10]]
  %s12 = scalar_lea.smem %s0, 6
  %s13 = sld [smem:[%s12]]
  %s14 = scalar_lea.smem %s0, 7
  %s15 = sld [smem:[%s14]]
  %s16 = scalar_lea.smem %s0, 8
  %s17 = sld [smem:[%s16]]
  %s18 = scalar_lea.smem %s0, 9
  %s19 = sld [smem:[%s18]]
  %s20 = scalar_lea.smem %s0, 10
  %s21 = sld [smem:[%s20]]
  %s22 = scalar_lea.smem %s0, 11
  %s23 = sld [smem:[%s22]]
  %s24 = scalar_lea.smem %s0, 12
  %s25 = sld [smem:[%s24]]
  %s26 = scalar_lea.smem %s0, 13
  %s27 = sld [smem:[%s26]]
  %s28 = scalar_lea.smem %s0, 14
  %s29 = sld [smem:[%s28]]
  %s30 = scalar_lea.smem %s0, 15
  %s31 = sld [smem:[%s30]]
  %s32 = scalar_lea.smem %s0, 16
  %s33 = sld [smem:[%s32]]
  %s34 = scalar_lea.smem %s0, 17
  %s35 = sld [smem:[%s34]]
  %s36 = scalar_lea.smem %s0, 18
  %s37 = sld [smem:[%s36]]
  %s38 = scalar_lea.smem %s0, 19
  %s39 = sld [smem:[%s38]]
  %s40 = scalar_lea.smem %s0, 20
  %s41 = sld [smem:[%s40]]
  %s42 = scalar_lea.smem %s0, 21
  %s43 = sld [smem:[%s42]]
  %s44 = scalar_lea.smem %s0, 22
  %s45 = sld [smem:[%s44]]
  %s46 = scalar_lea.smem %s0, 23
  %s47 = sld [smem:[%s46]]
  %s48 = scalar_lea.smem %s0, 24
  %s49 = sld [smem:[%s48]]
  %s50 = scalar_lea.smem %s0, 25
  %s51 = sld [smem:[%s50]]
  %s52 = scalar_lea.smem %s0, 26
  %s53 = sld [smem:[%s52]]
  %s54 = scalar_lea.smem %s0, 27
  %s55 = sld [smem:[%s54]]
  %s56 = scalar_lea.smem %s0, 28
  %s57 = sld [smem:[%s56]]
  %s58 = scalar_lea.smem %s0, 29
  %s59 = sld [smem:[%s58]]
  %s60 = scalar_lea.smem %s0, 30
  %s61 = sld [smem:[%s60]]
  %s62 = scalar_lea.smem %s0, 31
  %s63 = sld [smem:[%s62]]
  %s64 = sld [smem:[#allocation0]]
  $region165: #{transformer_forward.3} parent=0
    _
  %s66 = ssub.s32 1, %s64
  %s67 = scalar_select 0, %s66, %s64
  loop: start=0, step=1, limit=4
  $region2: #{transformer_forward.3} parent=0 // loop_pre_header
    _
  $region3: #{transformer_forward.3} parent=0 // loop_header
    %s69 = sphi 0, %s73
    %p70 = scmp.ge.s32.totalorder %s69, 4
    %s77 = sphi 0, %s77
    %s79 = sphi 0, %s77
    %s80 = sphi 0, %s79
    %s94 = sphi 0, %s80
    %s98 = sphi 0, %s98
    %s100 = sphi 0, %s98
    %s101 = sphi 0, %s100
    %s115 = sphi 0, %s101
    %s119 = sphi 0, %s119
    %s121 = sphi 0, %s119
    %s122 = sphi 0, %s121
    %s136 = sphi 0, %s122
    %s140 = sphi 0, %s140
    %s142 = sphi 0, %s140
    %s143 = sphi 0, %s142
    %s157 = sphi 0, %s143
    %s161 = sphi 0, %s161
    %s163 = sphi 0, %s161
    %s164 = sphi 0, %s163
    %s178 = sphi 0, %s164
    %s182 = sphi 0, %s182
    %s184 = sphi 0, %s182
    %s185 = sphi 0, %s184
    %s199 = sphi 0, %s185
    %s203 = sphi 0, %s203
    %s205 = sphi 0, %s203
    %s206 = sphi 0, %s205
    %s220 = sphi 0, %s206
    %s226 = sphi 0, %s228
    %s229 = sphi 0, %s226
    %s230 = sphi 0, %s229
    %s246 = sphi 0, %s230
    %s252 = sphi 0, %s254
    %s255 = sphi 0, %s252
    %s256 = sphi 0, %s255
    %s272 = sphi 0, %s256
    %s278 = sphi 0, %s280
    %s281 = sphi 0, %s278
    %s282 = sphi 0, %s281
    %s298 = sphi 0, %s282
    %s304 = sphi 0, %s306
    %s307 = sphi 0, %s304
    %s308 = sphi 0, %s307
    %s324 = sphi 0, %s308
    %s330 = sphi 0, %s332
    %s333 = sphi 0, %s330
    %s334 = sphi 0, %s333
    %s350 = sphi 0, %s334
    %s356 = sphi 0, %s358
    %s359 = sphi 0, %s356
    %s360 = sphi 0, %s359
    %s376 = sphi 0, %s360
    %s382 = sphi 0, %s384
    %s385 = sphi 0, %s382
    %s386 = sphi 0, %s385
    %s402 = sphi 0, %s386
    %s408 = sphi 0, %s410
    %s411 = sphi 0, %s408
    %s412 = sphi 0, %s411
    %s428 = sphi 0, %s412
    %s434 = sphi 0, %s436
    %s437 = sphi 0, %s434
    %s438 = sphi 0, %s437
    %s454 = sphi 0, %s438
    %s460 = sphi 0, %s462
    %s463 = sphi 0, %s460
    %s464 = sphi 0, %s463
    %s480 = sphi 0, %s464
    %s486 = sphi 0, %s488
    %s489 = sphi 0, %s486
    %s490 = sphi 0, %s489
    %s506 = sphi 0, %s490
    %s512 = sphi 0, %s514
    %s515 = sphi 0, %s512
    %s516 = sphi 0, %s515
    %s532 = sphi 0, %s516
    %s538 = sphi 0, %s540
    %s541 = sphi 0, %s538
    %s542 = sphi 0, %s541
    %s558 = sphi 0, %s542
    %s564 = sphi 0, %s566
    %s567 = sphi 0, %s564
    %s568 = sphi 0, %s567
    %s584 = sphi 0, %s568
    %s590 = sphi 0, %s592
    %s593 = sphi 0, %s590
    %s594 = sphi 0, %s593
    %s610 = sphi 0, %s594
    %s616 = sphi 0, %s618
    %s619 = sphi 0, %s616
    %s620 = sphi 0, %s619
    %s636 = sphi 0, %s620
    %s642 = sphi 0, %s644
    %s645 = sphi 0, %s642
    %s646 = sphi 0, %s645
    %s662 = sphi 0, %s646
    %s668 = sphi 0, %s670
    %s671 = sphi 0, %s668
    %s672 = sphi 0, %s671
    %s688 = sphi 0, %s672
    %s694 = sphi 0, %s696
    %s697 = sphi 0, %s694
    %s698 = sphi 0, %s697
    %s714 = sphi 0, %s698
    %s720 = sphi 0, %s722
    %s723 = sphi 0, %s720
    %s724 = sphi 0, %s723
    %s740 = sphi 0, %s724
    %s744 = sphi 0, %s744
    %s746 = sphi 0, %s744
    %s747 = sphi 0, %s746
    %s761 = sphi 0, %s747
    %s765 = sphi 0, %s765
    %s767 = sphi 0, %s765
    %s768 = sphi 0, %s767
    %s782 = sphi 0, %s768
    %s786 = sphi 0, %s786
    %s788 = sphi 0, %s786
    %s789 = sphi 0, %s788
    %s803 = sphi 0, %s789
    %s807 = sphi 0, %s807
    %s809 = sphi 0, %s807
    %s810 = sphi 0, %s809
    %s824 = sphi 0, %s810
    %s828 = sphi 0, %s828
    %s830 = sphi 0, %s828
    %s831 = sphi 0, %s830
    %s845 = sphi 0, %s831
  $region4: #{transformer_forward.3} parent=0 // loop_header_branch
    %72 = sbr.rel (%p70) target = $region8
  $region5: #{transformer_forward.3} parent=0 // loop_body
    %s74 = ssub.s32 %s69, 1
    %s75 = ssub.s32 %s69, 2
    %s76 = sadd.s32 %s69, 1
    %s78 = sadd.s32 %s77, 1
    %p81 = scmp.eq.s32.totalorder %s69, 1
    %p82 = scmp.ne.s32.totalorder %s77, %s79
    %p83 = scmp.eq.s32.totalorder %s69, 0
    %p84 = por %p82, %p83
    %p85 = scmp.ne.s32.totalorder %s77, %s79
    %p86 = scmp.eq.s32.totalorder %s74, 1
    %p87 = por %p85, %p86
    %p88 = scmp.ne.s32.totalorder %s79, %s80
    %p89 = scmp.eq.s32.totalorder %s74, 0
    %p90 = por %p88, %p89
    %p91 = scmp.ne.s32.totalorder %s79, %s80
    %p92 = scmp.eq.s32.totalorder %s75, 1
    %p93 = por %p91, %p92
    %p95 = scmp.ne.s32.totalorder %s80, %s94
    %p96 = scmp.eq.s32.totalorder %s75, 0
    %p97 = por %p95, %p96
    %s99 = sadd.s32 %s98, 1
    %p102 = scmp.eq.s32.totalorder %s69, 1
    %p103 = scmp.ne.s32.totalorder %s98, %s100
    %p104 = scmp.eq.s32.totalorder %s69, 0
    %p105 = por %p103, %p104
    %p106 = scmp.ne.s32.totalorder %s98, %s100
    %p107 = scmp.eq.s32.totalorder %s74, 1
    %p108 = por %p106, %p107
    %p109 = scmp.ne.s32.totalorder %s100, %s101
    %p110 = scmp.eq.s32.totalorder %s74, 0
    %p111 = por %p109, %p110
    %p112 = scmp.ne.s32.totalorder %s100, %s101
    %p113 = scmp.eq.s32.totalorder %s75, 1
    %p114 = por %p112, %p113
    %p116 = scmp.ne.s32.totalorder %s101, %s115
    %p117 = scmp.eq.s32.totalorder %s75, 0
    %p118 = por %p116, %p117
    %s120 = sadd.s32 %s119, 1
    %p123 = scmp.eq.s32.totalorder %s69, 1
    %p124 = scmp.ne.s32.totalorder %s119, %s121
    %p125 = scmp.eq.s32.totalorder %s69, 0
    %p126 = por %p124, %p125
    %p127 = scmp.ne.s32.totalorder %s119, %s121
    %p128 = scmp.eq.s32.totalorder %s74, 1
    %p129 = por %p127, %p128
    %p130 = scmp.ne.s32.totalorder %s121, %s122
    %p131 = scmp.eq.s32.totalorder %s74, 0
    %p132 = por %p130, %p131
    %p133 = scmp.ne.s32.totalorder %s121, %s122
    %p134 = scmp.eq.s32.totalorder %s75, 1
    %p135 = por %p133, %p134
    %p137 = scmp.ne.s32.totalorder %s122, %s136
    %p138 = scmp.eq.s32.totalorder %s75, 0
    %p139 = por %p137, %p138
    %s141 = sadd.s32 %s140, 1
    %p144 = scmp.eq.s32.totalorder %s69, 1
    %p145 = scmp.ne.s32.totalorder %s140, %s142
    %p146 = scmp.eq.s32.totalorder %s69, 0
    %p147 = por %p145, %p146
    %p148 = scmp.ne.s32.totalorder %s140, %s142
    %p149 = scmp.eq.s32.totalorder %s74, 1
    %p150 = por %p148, %p149
    %p151 = scmp.ne.s32.totalorder %s142, %s143
    %p152 = scmp.eq.s32.totalorder %s74, 0
    %p153 = por %p151, %p152
    %p154 = scmp.ne.s32.totalorder %s142, %s143
    %p155 = scmp.eq.s32.totalorder %s75, 1
    %p156 = por %p154, %p155
    %p158 = scmp.ne.s32.totalorder %s143, %s157
    %p159 = scmp.eq.s32.totalorder %s75, 0
    %p160 = por %p158, %p159
    %s162 = sadd.s32 %s161, 1
    %p165 = scmp.eq.s32.totalorder %s69, 1
    %p166 = scmp.ne.s32.totalorder %s161, %s163
    %p167 = scmp.eq.s32.totalorder %s69, 0
    %p168 = por %p166, %p167
    %p169 = scmp.ne.s32.totalorder %s161, %s163
    %p170 = scmp.eq.s32.totalorder %s74, 1
    %p171 = por %p169, %p170
    %p172 = scmp.ne.s32.totalorder %s163, %s164
    %p173 = scmp.eq.s32.totalorder %s74, 0
    %p174 = por %p172, %p173
    %p175 = scmp.ne.s32.totalorder %s163, %s164
    %p176 = scmp.eq.s32.totalorder %s75, 1
    %p177 = por %p175, %p176
    %p179 = scmp.ne.s32.totalorder %s164, %s178
    %p180 = scmp.eq.s32.totalorder %s75, 0
    %p181 = por %p179, %p180
    %s183 = sadd.s32 %s182, 1
    %p186 = scmp.eq.s32.totalorder %s69, 1
    %p187 = scmp.ne.s32.totalorder %s182, %s184
    %p188 = scmp.eq.s32.totalorder %s69, 0
    %p189 = por %p187, %p188
    %p190 = scmp.ne.s32.totalorder %s182, %s184
    %p191 = scmp.eq.s32.totalorder %s74, 1
    %p192 = por %p190, %p191
    %p193 = scmp.ne.s32.totalorder %s184, %s185
    %p194 = scmp.eq.s32.totalorder %s74, 0
    %p195 = por %p193, %p194
    %p196 = scmp.ne.s32.totalorder %s184, %s185
    %p197 = scmp.eq.s32.totalorder %s75, 1
    %p198 = por %p196, %p197
    %p200 = scmp.ne.s32.totalorder %s185, %s199
    %p201 = scmp.eq.s32.totalorder %s75, 0
    %p202 = por %p200, %p201
    %s204 = sadd.s32 %s203, 1
    %p207 = scmp.eq.s32.totalorder %s69, 1
    %p208 = scmp.ne.s32.totalorder %s203, %s205
    %p209 = scmp.eq.s32.totalorder %s69, 0
    %p210 = por %p208, %p209
    %p211 = scmp.ne.s32.totalorder %s203, %s205
    %p212 = scmp.eq.s32.totalorder %s74, 1
    %p213 = por %p211, %p212
    %p214 = scmp.ne.s32.totalorder %s205, %s206
    %p215 = scmp.eq.s32.totalorder %s74, 0
    %p216 = por %p214, %p215
    %p217 = scmp.ne.s32.totalorder %s205, %s206
    %p218 = scmp.eq.s32.totalorder %s75, 1
    %p219 = por %p217, %p218
    %p221 = scmp.ne.s32.totalorder %s206, %s220
    %p222 = scmp.eq.s32.totalorder %s75, 0
    %p223 = por %p221, %p222
    %s224 = ssub.s32 %s69, %s76
    %p225 = scmp.eq.s32.totalorder %s224, 0
    %s227 = sadd.s32 %s226, 1
    %s228 = scalar_select %p225, %s226, %s227
    %p231 = pneg %p225
    %p232 = scmp.eq.s32.totalorder %s69, 1
    %p233 = por %p231, %p232
    %p234 = scmp.ne.s32.totalorder %s226, %s229
    %p235 = scmp.eq.s32.totalorder %s69, 0
    %p236 = por %p234, %p235
    %p237 = scmp.ne.s32.totalorder %s226, %s229
    %p238 = scmp.eq.s32.totalorder %s74, 1
    %p239 = por %p237, %p238
    %p240 = scmp.ne.s32.totalorder %s229, %s230
    %p241 = scmp.eq.s32.totalorder %s74, 0
    %p242 = por %p240, %p241
    %p243 = scmp.ne.s32.totalorder %s229, %s230
    %p244 = scmp.eq.s32.totalorder %s75, 1
    %p245 = por %p243, %p244
    %p247 = scmp.ne.s32.totalorder %s230, %s246
    %p248 = scmp.eq.s32.totalorder %s75, 0
    %p249 = por %p247, %p248
    %s250 = ssub.s32 %s69, %s76
    %p251 = scmp.eq.s32.totalorder %s250, 0
    %s253 = sadd.s32 %s252, 1
    %s254 = scalar_select %p251, %s252, %s253
    %p257 = pneg %p251
    %p258 = scmp.eq.s32.totalorder %s69, 1
    %p259 = por %p257, %p258
    %p260 = scmp.ne.s32.totalorder %s252, %s255
    %p261 = scmp.eq.s32.totalorder %s69, 0
    %p262 = por %p260, %p261
    %p263 = scmp.ne.s32.totalorder %s252, %s255
    %p264 = scmp.eq.s32.totalorder %s74, 1
    %p265 = por %p263, %p264
    %p266 = scmp.ne.s32.totalorder %s255, %s256
    %p267 = scmp.eq.s32.totalorder %s74, 0
    %p268 = por %p266, %p267
    %p269 = scmp.ne.s32.totalorder %s255, %s256
    %p270 = scmp.eq.s32.totalorder %s75, 1
    %p271 = por %p269, %p270
    %p273 = scmp.ne.s32.totalorder %s256, %s272
    %p274 = scmp.eq.s32.totalorder %s75, 0
    %p275 = por %p273, %p274
    %s276 = ssub.s32 %s69, %s76
    %p277 = scmp.eq.s32.totalorder %s276, 0
    %s279 = sadd.s32 %s278, 1
    %s280 = scalar_select %p277, %s278, %s279
    %p283 = pneg %p277
    %p284 = scmp.eq.s32.totalorder %s69, 1
    %p285 = por %p283, %p284
    %p286 = scmp.ne.s32.totalorder %s278, %s281
    %p287 = scmp.eq.s32.totalorder %s69, 0
    %p288 = por %p286, %p287
    %p289 = scmp.ne.s32.totalorder %s278, %s281
    %p290 = scmp.eq.s32.totalorder %s74, 1
    %p291 = por %p289, %p290
    %p292 = scmp.ne.s32.totalorder %s281, %s282
    %p293 = scmp.eq.s32.totalorder %s74, 0
    %p294 = por %p292, %p293
    %p295 = scmp.ne.s32.totalorder %s281, %s282
    %p296 = scmp.eq.s32.totalorder %s75, 1
    %p297 = por %p295, %p296
    %p299 = scmp.ne.s32.totalorder %s282, %s298
    %p300 = scmp.eq.s32.totalorder %s75, 0
    %p301 = por %p299, %p300
    %s302 = ssub.s32 %s69, %s76
    %p303 = scmp.eq.s32.totalorder %s302, 0
    %s305 = sadd.s32 %s304, 1
    %s306 = scalar_select %p303, %s304, %s305
    %p309 = pneg %p303
    %p310 = scmp.eq.s32.totalorder %s69, 1
    %p311 = por %p309, %p310
    %p312 = scmp.ne.s32.totalorder %s304, %s307
    %p313 = scmp.eq.s32.totalorder %s69, 0
    %p314 = por %p312, %p313
    %p315 = scmp.ne.s32.totalorder %s304, %s307
    %p316 = scmp.eq.s32.totalorder %s74, 1
    %p317 = por %p315, %p316
    %p318 = scmp.ne.s32.totalorder %s307, %s308
    %p319 = scmp.eq.s32.totalorder %s74, 0
    %p320 = por %p318, %p319
    %p321 = scmp.ne.s32.totalorder %s307, %s308
    %p322 = scmp.eq.s32.totalorder %s75, 1
    %p323 = por %p321, %p322
    %p325 = scmp.ne.s32.totalorder %s308, %s324
    %p326 = scmp.eq.s32.totalorder %s75, 0
    %p327 = por %p325, %p326
    %s328 = ssub.s32 %s69, %s76
    %p329 = scmp.eq.s32.totalorder %s328, 0
    %s331 = sadd.s32 %s330, 1
    %s332 = scalar_select %p329, %s330, %s331
    %p335 = pneg %p329
    %p336 = scmp.eq.s32.totalorder %s69, 1
    %p337 = por %p335, %p336
    %p338 = scmp.ne.s32.totalorder %s330, %s333
    %p339 = scmp.eq.s32.totalorder %s69, 0
    %p340 = por %p338, %p339
    %p341 = scmp.ne.s32.totalorder %s330, %s333
    %p342 = scmp.eq.s32.totalorder %s74, 1
    %p343 = por %p341, %p342
    %p344 = scmp.ne.s32.totalorder %s333, %s334
    %p345 = scmp.eq.s32.totalorder %s74, 0
    %p346 = por %p344, %p345
    %p347 = scmp.ne.s32.totalorder %s333, %s334
    %p348 = scmp.eq.s32.totalorder %s75, 1
    %p349 = por %p347, %p348
    %p351 = scmp.ne.s32.totalorder %s334, %s350
    %p352 = scmp.eq.s32.totalorder %s75, 0
    %p353 = por %p351, %p352
    %s354 = ssub.s32 %s69, %s76
    %p355 = scmp.eq.s32.totalorder %s354, 0
    %s357 = sadd.s32 %s356, 1
    %s358 = scalar_select %p355, %s356, %s357
    %p361 = pneg %p355
    %p362 = scmp.eq.s32.totalorder %s69, 1
    %p363 = por %p361, %p362
    %p364 = scmp.ne.s32.totalorder %s356, %s359
    %p365 = scmp.eq.s32.totalorder %s69, 0
    %p366 = por %p364, %p365
    %p367 = scmp.ne.s32.totalorder %s356, %s359
    %p368 = scmp.eq.s32.totalorder %s74, 1
    %p369 = por %p367, %p368
    %p370 = scmp.ne.s32.totalorder %s359, %s360
    %p371 = scmp.eq.s32.totalorder %s74, 0
    %p372 = por %p370, %p371
    %p373 = scmp.ne.s32.totalorder %s359, %s360
    %p374 = scmp.eq.s32.totalorder %s75, 1
    %p375 = por %p373, %p374
    %p377 = scmp.ne.s32.totalorder %s360, %s376
    %p378 = scmp.eq.s32.totalorder %s75, 0
    %p379 = por %p377, %p378
    %s380 = ssub.s32 %s69, %s76
    %p381 = scmp.eq.s32.totalorder %s380, 0
    %s383 = sadd.s32 %s382, 1
    %s384 = scalar_select %p381, %s382, %s383
    %p387 = pneg %p381
    %p388 = scmp.eq.s32.totalorder %s69, 1
    %p389 = por %p387, %p388
    %p390 = scmp.ne.s32.totalorder %s382, %s385
    %p391 = scmp.eq.s32.totalorder %s69, 0
    %p392 = por %p390, %p391
    %p393 = scmp.ne.s32.totalorder %s382, %s385
    %p394 = scmp.eq.s32.totalorder %s74, 1
    %p395 = por %p393, %p394
    %p396 = scmp.ne.s32.totalorder %s385, %s386
    %p397 = scmp.eq.s32.totalorder %s74, 0
    %p398 = por %p396, %p397
    %p399 = scmp.ne.s32.totalorder %s385, %s386
    %p400 = scmp.eq.s32.totalorder %s75, 1
    %p401 = por %p399, %p400
    %p403 = scmp.ne.s32.totalorder %s386, %s402
    %p404 = scmp.eq.s32.totalorder %s75, 0
    %p405 = por %p403, %p404
    %s406 = ssub.s32 %s69, %s76
    %p407 = scmp.eq.s32.totalorder %s406, 0
    %s409 = sadd.s32 %s408, 1
    %s410 = scalar_select %p407, %s408, %s409
    %p413 = pneg %p407
    %p414 = scmp.eq.s32.totalorder %s69, 1
    %p415 = por %p413, %p414
    %p416 = scmp.ne.s32.totalorder %s408, %s411
    %p417 = scmp.eq.s32.totalorder %s69, 0
    %p418 = por %p416, %p417
    %p419 = scmp.ne.s32.totalorder %s408, %s411
    %p420 = scmp.eq.s32.totalorder %s74, 1
    %p421 = por %p419, %p420
    %p422 = scmp.ne.s32.totalorder %s411, %s412
    %p423 = scmp.eq.s32.totalorder %s74, 0
    %p424 = por %p422, %p423
    %p425 = scmp.ne.s32.totalorder %s411, %s412
    %p426 = scmp.eq.s32.totalorder %s75, 1
    %p427 = por %p425, %p426
    %p429 = scmp.ne.s32.totalorder %s412, %s428
    %p430 = scmp.eq.s32.totalorder %s75, 0
    %p431 = por %p429, %p430
    %s432 = ssub.s32 %s69, %s76
    %p433 = scmp.eq.s32.totalorder %s432, 0
    %s435 = sadd.s32 %s434, 1
    %s436 = scalar_select %p433, %s434, %s435
    %p439 = pneg %p433
    %p440 = scmp.eq.s32.totalorder %s69, 1
    %p441 = por %p439, %p440
    %p442 = scmp.ne.s32.totalorder %s434, %s437
    %p443 = scmp.eq.s32.totalorder %s69, 0
    %p444 = por %p442, %p443
    %p445 = scmp.ne.s32.totalorder %s434, %s437
    %p446 = scmp.eq.s32.totalorder %s74, 1
    %p447 = por %p445, %p446
    %p448 = scmp.ne.s32.totalorder %s437, %s438
    %p449 = scmp.eq.s32.totalorder %s74, 0
    %p450 = por %p448, %p449
    %p451 = scmp.ne.s32.totalorder %s437, %s438
    %p452 = scmp.eq.s32.totalorder %s75, 1
    %p453 = por %p451, %p452
    %p455 = scmp.ne.s32.totalorder %s438, %s454
    %p456 = scmp.eq.s32.totalorder %s75, 0
    %p457 = por %p455, %p456
    %s458 = ssub.s32 %s69, %s76
    %p459 = scmp.eq.s32.totalorder %s458, 0
    %s461 = sadd.s32 %s460, 1
    %s462 = scalar_select %p459, %s460, %s461
    %p465 = pneg %p459
    %p466 = scmp.eq.s32.totalorder %s69, 1
    %p467 = por %p465, %p466
    %p468 = scmp.ne.s32.totalorder %s460, %s463
    %p469 = scmp.eq.s32.totalorder %s69, 0
    %p470 = por %p468, %p469
    %p471 = scmp.ne.s32.totalorder %s460, %s463
    %p472 = scmp.eq.s32.totalorder %s74, 1
    %p473 = por %p471, %p472
    %p474 = scmp.ne.s32.totalorder %s463, %s464
    %p475 = scmp.eq.s32.totalorder %s74, 0
    %p476 = por %p474, %p475
    %p477 = scmp.ne.s32.totalorder %s463, %s464
    %p478 = scmp.eq.s32.totalorder %s75, 1
    %p479 = por %p477, %p478
    %p481 = scmp.ne.s32.totalorder %s464, %s480
    %p482 = scmp.eq.s32.totalorder %s75, 0
    %p483 = por %p481, %p482
    %s484 = ssub.s32 %s69, %s76
    %p485 = scmp.eq.s32.totalorder %s484, 0
    %s487 = sadd.s32 %s486, 1
    %s488 = scalar_select %p485, %s486, %s487
    %p491 = pneg %p485
    %p492 = scmp.eq.s32.totalorder %s69, 1
    %p493 = por %p491, %p492
    %p494 = scmp.ne.s32.totalorder %s486, %s489
    %p495 = scmp.eq.s32.totalorder %s69, 0
    %p496 = por %p494, %p495
    %p497 = scmp.ne.s32.totalorder %s486, %s489
    %p498 = scmp.eq.s32.totalorder %s74, 1
    %p499 = por %p497, %p498
    %p500 = scmp.ne.s32.totalorder %s489, %s490
    %p501 = scmp.eq.s32.totalorder %s74, 0
    %p502 = por %p500, %p501
    %p503 = scmp.ne.s32.totalorder %s489, %s490
    %p504 = scmp.eq.s32.totalorder %s75, 1
    %p505 = por %p503, %p504
    %p507 = scmp.ne.s32.totalorder %s490, %s506
    %p508 = scmp.eq.s32.totalorder %s75, 0
    %p509 = por %p507, %p508
    %s510 = ssub.s32 %s69, %s76
    %p511 = scmp.eq.s32.totalorder %s510, 0
    %s513 = sadd.s32 %s512, 1
    %s514 = scalar_select %p511, %s512, %s513
    %p517 = pneg %p511
    %p518 = scmp.eq.s32.totalorder %s69, 1
    %p519 = por %p517, %p518
    %p520 = scmp.ne.s32.totalorder %s512, %s515
    %p521 = scmp.eq.s32.totalorder %s69, 0
    %p522 = por %p520, %p521
    %p523 = scmp.ne.s32.totalorder %s512, %s515
    %p524 = scmp.eq.s32.totalorder %s74, 1
    %p525 = por %p523, %p524
    %p526 = scmp.ne.s32.totalorder %s515, %s516
    %p527 = scmp.eq.s32.totalorder %s74, 0
    %p528 = por %p526, %p527
    %p529 = scmp.ne.s32.totalorder %s515, %s516
    %p530 = scmp.eq.s32.totalorder %s75, 1
    %p531 = por %p529, %p530
    %p533 = scmp.ne.s32.totalorder %s516, %s532
    %p534 = scmp.eq.s32.totalorder %s75, 0
    %p535 = por %p533, %p534
    %s536 = ssub.s32 %s69, %s76
    %p537 = scmp.eq.s32.totalorder %s536, 0
    %s539 = sadd.s32 %s538, 1
    %s540 = scalar_select %p537, %s538, %s539
    %p543 = pneg %p537
    %p544 = scmp.eq.s32.totalorder %s69, 1
    %p545 = por %p543, %p544
    %p546 = scmp.ne.s32.totalorder %s538, %s541
    %p547 = scmp.eq.s32.totalorder %s69, 0
    %p548 = por %p546, %p547
    %p549 = scmp.ne.s32.totalorder %s538, %s541
    %p550 = scmp.eq.s32.totalorder %s74, 1
    %p551 = por %p549, %p550
    %p552 = scmp.ne.s32.totalorder %s541, %s542
    %p553 = scmp.eq.s32.totalorder %s74, 0
    %p554 = por %p552, %p553
    %p555 = scmp.ne.s32.totalorder %s541, %s542
    %p556 = scmp.eq.s32.totalorder %s75, 1
    %p557 = por %p555, %p556
    %p559 = scmp.ne.s32.totalorder %s542, %s558
    %p560 = scmp.eq.s32.totalorder %s75, 0
    %p561 = por %p559, %p560
    %s562 = ssub.s32 %s69, %s76
    %p563 = scmp.eq.s32.totalorder %s562, 0
    %s565 = sadd.s32 %s564, 1
    %s566 = scalar_select %p563, %s564, %s565
    %p569 = pneg %p563
    %p570 = scmp.eq.s32.totalorder %s69, 1
    %p571 = por %p569, %p570
    %p572 = scmp.ne.s32.totalorder %s564, %s567
    %p573 = scmp.eq.s32.totalorder %s69, 0
    %p574 = por %p572, %p573
    %p575 = scmp.ne.s32.totalorder %s564, %s567
    %p576 = scmp.eq.s32.totalorder %s74, 1
    %p577 = por %p575, %p576
    %p578 = scmp.ne.s32.totalorder %s567, %s568
    %p579 = scmp.eq.s32.totalorder %s74, 0
    %p580 = por %p578, %p579
    %p581 = scmp.ne.s32.totalorder %s567, %s568
    %p582 = scmp.eq.s32.totalorder %s75, 1
    %p583 = por %p581, %p582
    %p585 = scmp.ne.s32.totalorder %s568, %s584
    %p586 = scmp.eq.s32.totalorder %s75, 0
    %p587 = por %p585, %p586
    %s588 = ssub.s32 %s69, %s76
    %p589 = scmp.eq.s32.totalorder %s588, 0
    %s591 = sadd.s32 %s590, 1
    %s592 = scalar_select %p589, %s590, %s591
    %p595 = pneg %p589
    %p596 = scmp.eq.s32.totalorder %s69, 1
    %p597 = por %p595, %p596
    %p598 = scmp.ne.s32.totalorder %s590, %s593
    %p599 = scmp.eq.s32.totalorder %s69, 0
    %p600 = por %p598, %p599
    %p601 = scmp.ne.s32.totalorder %s590, %s593
    %p602 = scmp.eq.s32.totalorder %s74, 1
    %p603 = por %p601, %p602
    %p604 = scmp.ne.s32.totalorder %s593, %s594
    %p605 = scmp.eq.s32.totalorder %s74, 0
    %p606 = por %p604, %p605
    %p607 = scmp.ne.s32.totalorder %s593, %s594
    %p608 = scmp.eq.s32.totalorder %s75, 1
    %p609 = por %p607, %p608
    %p611 = scmp.ne.s32.totalorder %s594, %s610
    %p612 = scmp.eq.s32.totalorder %s75, 0
    %p613 = por %p611, %p612
    %s614 = ssub.s32 %s69, %s76
    %p615 = scmp.eq.s32.totalorder %s614, 0
    %s617 = sadd.s32 %s616, 1
    %s618 = scalar_select %p615, %s616, %s617
    %p621 = pneg %p615
    %p622 = scmp.eq.s32.totalorder %s69, 1
    %p623 = por %p621, %p622
    %p624 = scmp.ne.s32.totalorder %s616, %s619
    %p625 = scmp.eq.s32.totalorder %s69, 0
    %p626 = por %p624, %p625
    %p627 = scmp.ne.s32.totalorder %s616, %s619
    %p628 = scmp.eq.s32.totalorder %s74, 1
    %p629 = por %p627, %p628
    %p630 = scmp.ne.s32.totalorder %s619, %s620
    %p631 = scmp.eq.s32.totalorder %s74, 0
    %p632 = por %p630, %p631
    %p633 = scmp.ne.s32.totalorder %s619, %s620
    %p634 = scmp.eq.s32.totalorder %s75, 1
    %p635 = por %p633, %p634
    %p637 = scmp.ne.s32.totalorder %s620, %s636
    %p638 = scmp.eq.s32.totalorder %s75, 0
    %p639 = por %p637, %p638
    %s640 = ssub.s32 %s69, %s76
    %p641 = scmp.eq.s32.totalorder %s640, 0
    %s643 = sadd.s32 %s642, 1
    %s644 = scalar_select %p641, %s642, %s643
    %p647 = pneg %p641
    %p648 = scmp.eq.s32.totalorder %s69, 1
    %p649 = por %p647, %p648
    %p650 = scmp.ne.s32.totalorder %s642, %s645
    %p651 = scmp.eq.s32.totalorder %s69, 0
    %p652 = por %p650, %p651
    %p653 = scmp.ne.s32.totalorder %s642, %s645
    %p654 = scmp.eq.s32.totalorder %s74, 1
    %p655 = por %p653, %p654
    %p656 = scmp.ne.s32.totalorder %s645, %s646
    %p657 = scmp.eq.s32.totalorder %s74, 0
    %p658 = por %p656, %p657
    %p659 = scmp.ne.s32.totalorder %s645, %s646
    %p660 = scmp.eq.s32.totalorder %s75, 1
    %p661 = por %p659, %p660
    %p663 = scmp.ne.s32.totalorder %s646, %s662
    %p664 = scmp.eq.s32.totalorder %s75, 0
    %p665 = por %p663, %p664
    %s666 = ssub.s32 %s69, %s76
    %p667 = scmp.eq.s32.totalorder %s666, 0
    %s669 = sadd.s32 %s668, 1
    %s670 = scalar_select %p667, %s668, %s669
    %p673 = pneg %p667
    %p674 = scmp.eq.s32.totalorder %s69, 1
    %p675 = por %p673, %p674
    %p676 = scmp.ne.s32.totalorder %s668, %s671
    %p677 = scmp.eq.s32.totalorder %s69, 0
    %p678 = por %p676, %p677
    %p679 = scmp.ne.s32.totalorder %s668, %s671
    %p680 = scmp.eq.s32.totalorder %s74, 1
    %p681 = por %p679, %p680
    %p682 = scmp.ne.s32.totalorder %s671, %s672
    %p683 = scmp.eq.s32.totalorder %s74, 0
    %p684 = por %p682, %p683
    %p685 = scmp.ne.s32.totalorder %s671, %s672
    %p686 = scmp.eq.s32.totalorder %s75, 1
    %p687 = por %p685, %p686
    %p689 = scmp.ne.s32.totalorder %s672, %s688
    %p690 = scmp.eq.s32.totalorder %s75, 0
    %p691 = por %p689, %p690
    %s692 = ssub.s32 %s69, %s76
    %p693 = scmp.eq.s32.totalorder %s692, 0
    %s695 = sadd.s32 %s694, 1
    %s696 = scalar_select %p693, %s694, %s695
    %p699 = pneg %p693
    %p700 = scmp.eq.s32.totalorder %s69, 1
    %p701 = por %p699, %p700
    %p702 = scmp.ne.s32.totalorder %s694, %s697
    %p703 = scmp.eq.s32.totalorder %s69, 0
    %p704 = por %p702, %p703
    %p705 = scmp.ne.s32.totalorder %s694, %s697
    %p706 = scmp.eq.s32.totalorder %s74, 1
    %p707 = por %p705, %p706
    %p708 = scmp.ne.s32.totalorder %s697, %s698
    %p709 = scmp.eq.s32.totalorder %s74, 0
    %p710 = por %p708, %p709
    %p711 = scmp.ne.s32.totalorder %s697, %s698
    %p712 = scmp.eq.s32.totalorder %s75, 1
    %p713 = por %p711, %p712
    %p715 = scmp.ne.s32.totalorder %s698, %s714
    %p716 = scmp.eq.s32.totalorder %s75, 0
    %p717 = por %p715, %p716
    %s718 = ssub.s32 %s69, %s76
    %p719 = scmp.eq.s32.totalorder %s718, 0
    %s721 = sadd.s32 %s720, 1
    %s722 = scalar_select %p719, %s720, %s721
    %p725 = pneg %p719
    %p726 = scmp.eq.s32.totalorder %s69, 1
    %p727 = por %p725, %p726
    %p728 = scmp.ne.s32.totalorder %s720, %s723
    %p729 = scmp.eq.s32.totalorder %s69, 0
    %p730 = por %p728, %p729
    %p731 = scmp.ne.s32.totalorder %s720, %s723
    %p732 = scmp.eq.s32.totalorder %s74, 1
    %p733 = por %p731, %p732
    %p734 = scmp.ne.s32.totalorder %s723, %s724
    %p735 = scmp.eq.s32.totalorder %s74, 0
    %p736 = por %p734, %p735
    %p737 = scmp.ne.s32.totalorder %s723, %s724
    %p738 = scmp.eq.s32.totalorder %s75, 1
    %p739 = por %p737, %p738
    %p741 = scmp.ne.s32.totalorder %s724, %s740
    %p742 = scmp.eq.s32.totalorder %s75, 0
    %p743 = por %p741, %p742
    %s745 = sadd.s32 %s744, 1
    %p748 = scmp.eq.s32.totalorder %s69, 1
    %p749 = scmp.ne.s32.totalorder %s744, %s746
    %p750 = scmp.eq.s32.totalorder %s69, 0
    %p751 = por %p749, %p750
    %p752 = scmp.ne.s32.totalorder %s744, %s746
    %p753 = scmp.eq.s32.totalorder %s74, 1
    %p754 = por %p752, %p753
    %p755 = scmp.ne.s32.totalorder %s746, %s747
    %p756 = scmp.eq.s32.totalorder %s74, 0
    %p757 = por %p755, %p756
    %p758 = scmp.ne.s32.totalorder %s746, %s747
    %p759 = scmp.eq.s32.totalorder %s75, 1
    %p760 = por %p758, %p759
    %p762 = scmp.ne.s32.totalorder %s747, %s761
    %p763 = scmp.eq.s32.totalorder %s75, 0
    %p764 = por %p762, %p763
    %s766 = sadd.s32 %s765, 1
    %p769 = scmp.eq.s32.totalorder %s69, 1
    %p770 = scmp.ne.s32.totalorder %s765, %s767
    %p771 = scmp.eq.s32.totalorder %s69, 0
    %p772 = por %p770, %p771
    %p773 = scmp.ne.s32.totalorder %s765, %s767
    %p774 = scmp.eq.s32.totalorder %s74, 1
    %p775 = por %p773, %p774
    %p776 = scmp.ne.s32.totalorder %s767, %s768
    %p777 = scmp.eq.s32.totalorder %s74, 0
    %p778 = por %p776, %p777
    %p779 = scmp.ne.s32.totalorder %s767, %s768
    %p780 = scmp.eq.s32.totalorder %s75, 1
    %p781 = por %p779, %p780
    %p783 = scmp.ne.s32.totalorder %s768, %s782
    %p784 = scmp.eq.s32.totalorder %s75, 0
    %p785 = por %p783, %p784
    %s787 = sadd.s32 %s786, 1
    %p790 = scmp.eq.s32.totalorder %s69, 1
    %p791 = scmp.ne.s32.totalorder %s786, %s788
    %p792 = scmp.eq.s32.totalorder %s69, 0
    %p793 = por %p791, %p792
    %p794 = scmp.ne.s32.totalorder %s786, %s788
    %p795 = scmp.eq.s32.totalorder %s74, 1
    %p796 = por %p794, %p795
    %p797 = scmp.ne.s32.totalorder %s788, %s789
    %p798 = scmp.eq.s32.totalorder %s74, 0
    %p799 = por %p797, %p798
    %p800 = scmp.ne.s32.totalorder %s788, %s789
    %p801 = scmp.eq.s32.totalorder %s75, 1
    %p802 = por %p800, %p801
    %p804 = scmp.ne.s32.totalorder %s789, %s803
    %p805 = scmp.eq.s32.totalorder %s75, 0
    %p806 = por %p804, %p805
    %s808 = sadd.s32 %s807, 1
    %p811 = scmp.eq.s32.totalorder %s69, 1
    %p812 = scmp.ne.s32.totalorder %s807, %s809
    %p813 = scmp.eq.s32.totalorder %s69, 0
    %p814 = por %p812, %p813
    %p815 = scmp.ne.s32.totalorder %s807, %s809
    %p816 = scmp.eq.s32.totalorder %s74, 1
    %p817 = por %p815, %p816
    %p818 = scmp.ne.s32.totalorder %s809, %s810
    %p819 = scmp.eq.s32.totalorder %s74, 0
    %p820 = por %p818, %p819
    %p821 = scmp.ne.s32.totalorder %s809, %s810
    %p822 = scmp.eq.s32.totalorder %s75, 1
    %p823 = por %p821, %p822
    %p825 = scmp.ne.s32.totalorder %s810, %s824
    %p826 = scmp.eq.s32.totalorder %s75, 0
    %p827 = por %p825, %p826
    %s829 = sadd.s32 %s828, 1
    %p832 = scmp.eq.s32.totalorder %s69, 1
    %p833 = scmp.ne.s32.totalorder %s828, %s830
    %p834 = scmp.eq.s32.totalorder %s69, 0
    %p835 = por %p833, %p834
    %p836 = scmp.ne.s32.totalorder %s828, %s830
    %p837 = scmp.eq.s32.totalorder %s74, 1
    %p838 = por %p836, %p837
    %p839 = scmp.ne.s32.totalorder %s830, %s831
    %p840 = scmp.eq.s32.totalorder %s74, 0
    %p841 = por %p839, %p840
    %p842 = scmp.ne.s32.totalorder %s830, %s831
    %p843 = scmp.eq.s32.totalorder %s75, 1
    %p844 = por %p842, %p843
    %p846 = scmp.ne.s32.totalorder %s831, %s845
    %p847 = scmp.eq.s32.totalorder %s75, 0
    %p848 = por %p846, %p847
    %p849 = scmp.le.s32.totalorder 1, %s69
    %p850 = scmp.lt.s32.totalorder %s69, 3
    %p851 = pnand %p849, %p850
    %p852 = pneg %p851
    // Predicated region
    $region9: #{transformer_forward.3} parent=5 // pred_check
      _
    $region10: #{transformer_forward.3} parent=5 // pred_check_branch
      %854 = sbr.rel (%p851) target = $region12
    $region11: #{transformer_forward.3} parent=5 // pred_region
      %s855 = ssub.s32 %s69, 1
      // Predicated region
      $region13: #{transformer_forward.3} parent=11 // pred_check
        %p856 = pneg %p90
      $region14: #{transformer_forward.3} parent=11 // pred_check_branch
        %858 = sbr.rel (%p856) target = $region16
      $region15: #{transformer_forward.3} parent=11 // pred_region
        _
      $region16: #{transformer_forward.3} parent=11 // pred_fallthru
        _
      // Predicated region
      $region17: #{transformer_forward.3} parent=11 // pred_check
        %p859 = pneg %p111
      $region18: #{transformer_forward.3} parent=11 // pred_check_branch
        %861 = sbr.rel (%p859) target = $region20
      $region19: #{transformer_forward.3} parent=11 // pred_region
        _
      $region20: #{transformer_forward.3} parent=11 // pred_fallthru
        _
      // Predicated region
      $region21: #{transformer_forward.3} parent=11 // pred_check
        %p862 = pneg %p132
      $region22: #{transformer_forward.3} parent=11 // pred_check_branch
        %864 = sbr.rel (%p862) target = $region24
      $region23: #{transformer_forward.3} parent=11 // pred_region
        _
      $region24: #{transformer_forward.3} parent=11 // pred_fallthru
        _
      // Predicated region
      $region25: #{transformer_forward.3} parent=11 // pred_check
        %p865 = pneg %p153
      $region26: #{transformer_forward.3} parent=11 // pred_check_branch
        %867 = sbr.rel (%p865) target = $region28
      $region27: #{transformer_forward.3} parent=11 // pred_region
        _
      $region28: #{transformer_forward.3} parent=11 // pred_fallthru
        _
      // Predicated region
      $region29: #{transformer_forward.3} parent=11 // pred_check
        %p868 = pneg %p174
      $region30: #{transformer_forward.3} parent=11 // pred_check_branch
        %870 = sbr.rel (%p868) target = $region32
      $region31: #{transformer_forward.3} parent=11 // pred_region
        _
      $region32: #{transformer_forward.3} parent=11 // pred_fallthru
        _
      // Predicated region
      $region33: #{transformer_forward.3} parent=11 // pred_check
        %p871 = pneg %p195
      $region34: #{transformer_forward.3} parent=11 // pred_check_branch
        %873 = sbr.rel (%p871) target = $region36
      $region35: #{transformer_forward.3} parent=11 // pred_region
        _
      $region36: #{transformer_forward.3} parent=11 // pred_fallthru
        _
      // Predicated region
      $region37: #{transformer_forward.3} parent=11 // pred_check
        %p874 = pneg %p216
      $region38: #{transformer_forward.3} parent=11 // pred_check_branch
        %876 = sbr.rel (%p874) target = $region40
      $region39: #{transformer_forward.3} parent=11 // pred_region
        _
      $region40: #{transformer_forward.3} parent=11 // pred_fallthru
        _
      // Predicated region
      $region41: #{transformer_forward.3} parent=11 // pred_check
        %p877 = pneg %p757
      $region42: #{transformer_forward.3} parent=11 // pred_check_branch
        %879 = sbr.rel (%p877) target = $region44
      $region43: #{transformer_forward.3} parent=11 // pred_region
        _
      $region44: #{transformer_forward.3} parent=11 // pred_fallthru
        _
      // Predicated region
      $region45: #{transformer_forward.3} parent=11 // pred_check
        %p880 = pneg %p778
      $region46: #{transformer_forward.3} parent=11 // pred_check_branch
        %882 = sbr.rel (%p880) target = $region48
      $region47: #{transformer_forward.3} parent=11 // pred_region
        _
      $region48: #{transformer_forward.3} parent=11 // pred_fallthru
        _
      // Predicated region
      $region49: #{transformer_forward.3} parent=11 // pred_check
        %p883 = pneg %p799
      $region50: #{transformer_forward.3} parent=11 // pred_check_branch
        %885 = sbr.rel (%p883) target = $region52
      $region51: #{transformer_forward.3} parent=11 // pred_region
        _
      $region52: #{transformer_forward.3} parent=11 // pred_fallthru
        _
      // Predicated region
      $region53: #{transformer_forward.3} parent=11 // pred_check
        %p886 = pneg %p820
      $region54: #{transformer_forward.3} parent=11 // pred_check_branch
        %888 = sbr.rel (%p886) target = $region56
      $region55: #{transformer_forward.3} parent=11 // pred_region
        _
      $region56: #{transformer_forward.3} parent=11 // pred_fallthru
        _
    $region12: #{transformer_forward.3} parent=5 // pred_fallthru
      _
    %p889 = scmp.lt.s32.totalorder %s69, 2
    // Predicated region
    $region57: #{transformer_forward.3} parent=5 // pred_check
      %p890 = pneg %p889
    $region58: #{transformer_forward.3} parent=5 // pred_check_branch
      %892 = sbr.rel (%p890) target = $region60
    $region59: #{transformer_forward.3} parent=5 // pred_region
      // Predicated region
      $region61: #{transformer_forward.3} parent=59 // pred_check
        %p893 = pneg %p236
      $region62: #{transformer_forward.3} parent=59 // pred_check_branch
        %895 = sbr.rel (%p893) target = $region64
      $region63: #{transformer_forward.3} parent=59 // pred_region
        %p896 = scmp.lt.s32.totalorder %s69, 1
        %s897 = scalar_select %p896, %s69, 1
        %s898 = smul.addr %s897, 4
        %s899 = smul.addr %s898, 8
        %s900 = scalar_lea.vmem %s15, %s899
      $region64: #{transformer_forward.3} parent=59 // pred_fallthru
        _
      // Predicated region
      $region65: #{transformer_forward.3} parent=59 // pred_check
        %p901 = pneg %p262
      $region66: #{transformer_forward.3} parent=59 // pred_check_branch
        %903 = sbr.rel (%p901) target = $region68
      $region67: #{transformer_forward.3} parent=59 // pred_region
        %p904 = scmp.lt.s32.totalorder %s69, 1
        %s905 = scalar_select %p904, %s69, 1
        %s906 = scalar_lea.vmem %s17, %s905
      $region68: #{transformer_forward.3} parent=59 // pred_fallthru
        _
      // Predicated region
      $region69: #{transformer_forward.3} parent=59 // pred_check
        %p907 = pneg %p288
      $region70: #{transformer_forward.3} parent=59 // pred_check_branch
        %909 = sbr.rel (%p907) target = $region72
      $region71: #{transformer_forward.3} parent=59 // pred_region
        %p910 = scmp.lt.s32.totalorder %s69, 1
        %s911 = scalar_select %p910, %s69, 1
        %s912 = smul.addr %s911, 4
        %s913 = smul.addr %s912, 8
        %s914 = scalar_lea.vmem %s19, %s913
      $region72: #{transformer_forward.3} parent=59 // pred_fallthru
        _
      // Predicated region
      $region73: #{transformer_forward.3} parent=59 // pred_check
        %p915 = pneg %p314
      $region74: #{transformer_forward.3} parent=59 // pred_check_branch
        %917 = sbr.rel (%p915) target = $region76
      $region75: #{transformer_forward.3} parent=59 // pred_region
        %p918 = scmp.lt.s32.totalorder %s69, 1
        %s919 = scalar_select %p918, %s69, 1
        %s920 = scalar_lea.vmem %s21, %s919
      $region76: #{transformer_forward.3} parent=59 // pred_fallthru
        _
      // Predicated region
      $region77: #{transformer_forward.3} parent=59 // pred_check
        %p921 = pneg %p340
      $region78: #{transformer_forward.3} parent=59 // pred_check_branch
        %923 = sbr.rel (%p921) target = $region80
      $region79: #{transformer_forward.3} parent=59 // pred_region
        %p924 = scmp.lt.s32.totalorder %s69, 1
        %s925 = scalar_select %p924, %s69, 1
        %s926 = scalar_lea.vmem %s23, %s925
      $region80: #{transformer_forward.3} parent=59 // pred_fallthru
        _
      // Predicated region
      $region81: #{transformer_forward.3} parent=59 // pred_check
        %p927 = pneg %p366
      $region82: #{transformer_forward.3} parent=59 // pred_check_branch
        %929 = sbr.rel (%p927) target = $region84
      $region83: #{transformer_forward.3} parent=59 // pred_region
        %p930 = scmp.lt.s32.totalorder %s69, 1
        %s931 = scalar_select %p930, %s69, 1
        %s932 = scalar_lea.vmem %s25, %s931
      $region84: #{transformer_forward.3} parent=59 // pred_fallthru
        _
      // Predicated region
      $region85: #{transformer_forward.3} parent=59 // pred_check
        %p933 = pneg %p392
      $region86: #{transformer_forward.3} parent=59 // pred_check_branch
        %935 = sbr.rel (%p933) target = $region88
      $region87: #{transformer_forward.3} parent=59 // pred_region
        %p936 = scmp.lt.s32.totalorder %s69, 1
        %s937 = scalar_select %p936, %s69, 1
        %s938 = smul.addr %s937, 4
        %s939 = smul.addr %s938, 8
        %s940 = scalar_lea.vmem %s27, %s939
      $region88: #{transformer_forward.3} parent=59 // pred_fallthru
        _
      // Predicated region
      $region89: #{transformer_forward.3} parent=59 // pred_check
        %p941 = pneg %p418
      $region90: #{transformer_forward.3} parent=59 // pred_check_branch
        %943 = sbr.rel (%p941) target = $region92
      $region91: #{transformer_forward.3} parent=59 // pred_region
        %p944 = scmp.lt.s32.totalorder %s69, 1
        %s945 = scalar_select %p944, %s69, 1
        %s946 = scalar_lea.vmem %s29, %s945
      $region92: #{transformer_forward.3} parent=59 // pred_fallthru
        _
      // Predicated region
      $region93: #{transformer_forward.3} parent=59 // pred_check
        %p947 = pneg %p444
      $region94: #{transformer_forward.3} parent=59 // pred_check_branch
        %949 = sbr.rel (%p947) target = $region96
      $region95: #{transformer_forward.3} parent=59 // pred_region
        %p950 = scmp.lt.s32.totalorder %s69, 1
        %s951 = scalar_select %p950, %s69, 1
        %s952 = smul.addr %s951, 4
        %s953 = smul.addr %s952, 8
        %s954 = scalar_lea.vmem %s31, %s953
      $region96: #{transformer_forward.3} parent=59 // pred_fallthru
        _
      // Predicated region
      $region97: #{transformer_forward.3} parent=59 // pred_check
        %p955 = pneg %p470
      $region98: #{transformer_forward.3} parent=59 // pred_check_branch
        %957 = sbr.rel (%p955) target = $region100
      $region99: #{transformer_forward.3} parent=59 // pred_region
        %p958 = scmp.lt.s32.totalorder %s69, 1
        %s959 = scalar_select %p958, %s69, 1
        %s960 = scalar_lea.vmem %s33, %s959
      $region100: #{transformer_forward.3} parent=59 // pred_fallthru
        _
      // Predicated region
      $region101: #{transformer_forward.3} parent=59 // pred_check
        %p961 = pneg %p496
      $region102: #{transformer_forward.3} parent=59 // pred_check_branch
        %963 = sbr.rel (%p961) target = $region104
      $region103: #{transformer_forward.3} parent=59 // pred_region
        %p964 = scmp.lt.s32.totalorder %s69, 1
        %s965 = scalar_select %p964, %s69, 1
        %s966 = smul.addr %s965, 4
        %s967 = smul.addr %s966, 8
        %s968 = scalar_lea.vmem %s35, %s967
      $region104: #{transformer_forward.3} parent=59 // pred_fallthru
        _
      // Predicated region
      $region105: #{transformer_forward.3} parent=59 // pred_check
        %p969 = pneg %p522
      $region106: #{transformer_forward.3} parent=59 // pred_check_branch
        %971 = sbr.rel (%p969) target = $region108
      $region107: #{transformer_forward.3} parent=59 // pred_region
        %p972 = scmp.lt.s32.totalorder %s69, 1
        %s973 = scalar_select %p972, %s69, 1
        %s974 = scalar_lea.vmem %s37, %s973
      $region108: #{transformer_forward.3} parent=59 // pred_fallthru
        _
      // Predicated region
      $region109: #{transformer_forward.3} parent=59 // pred_check
        %p975 = pneg %p548
      $region110: #{transformer_forward.3} parent=59 // pred_check_branch
        %977 = sbr.rel (%p975) target = $region112
      $region111: #{transformer_forward.3} parent=59 // pred_region
        %p978 = scmp.lt.s32.totalorder %s69, 1
        %s979 = scalar_select %p978, %s69, 1
        %s980 = scalar_lea.vmem %s39, %s979
      $region112: #{transformer_forward.3} parent=59 // pred_fallthru
        _
      // Predicated region
      $region113: #{transformer_forward.3} parent=59 // pred_check
        %p981 = pneg %p574
      $region114: #{transformer_forward.3} parent=59 // pred_check_branch
        %983 = sbr.rel (%p981) target = $region116
      $region115: #{transformer_forward.3} parent=59 // pred_region
        %p984 = scmp.lt.s32.totalorder %s69, 1
        %s985 = scalar_select %p984, %s69, 1
        %s986 = scalar_lea.vmem %s41, %s985
      $region116: #{transformer_forward.3} parent=59 // pred_fallthru
        _
      // Predicated region
      $region117: #{transformer_forward.3} parent=59 // pred_check
        %p987 = pneg %p600
      $region118: #{transformer_forward.3} parent=59 // pred_check_branch
        %989 = sbr.rel (%p987) target = $region120
      $region119: #{transformer_forward.3} parent=59 // pred_region
        %p990 = scmp.lt.s32.totalorder %s69, 1
        %s991 = scalar_select %p990, %s69, 1
        %s992 = smul.addr %s991, 4
        %s993 = smul.addr %s992, 8
        %s994 = scalar_lea.vmem %s43, %s993
      $region120: #{transformer_forward.3} parent=59 // pred_fallthru
        _
      // Predicated region
      $region121: #{transformer_forward.3} parent=59 // pred_check
        %p995 = pneg %p626
      $region122: #{transformer_forward.3} parent=59 // pred_check_branch
        %997 = sbr.rel (%p995) target = $region124
      $region123: #{transformer_forward.3} parent=59 // pred_region
        %p998 = scmp.lt.s32.totalorder %s69, 1
        %s999 = scalar_select %p998, %s69, 1
        %s1000 = scalar_lea.vmem %s45, %s999
      $region124: #{transformer_forward.3} parent=59 // pred_fallthru
        _
      // Predicated region
      $region125: #{transformer_forward.3} parent=59 // pred_check
        %p1001 = pneg %p652
      $region126: #{transformer_forward.3} parent=59 // pred_check_branch
        %1003 = sbr.rel (%p1001) target = $region128
      $region127: #{transformer_forward.3} parent=59 // pred_region
        %p1004 = scmp.lt.s32.totalorder %s69, 1
        %s1005 = scalar_select %p1004, %s69, 1
        %s1006 = smul.addr %s1005, 16
        %s1007 = smul.addr %s1006, 8
        %s1008 = scalar_lea.vmem %s47, %s1007
      $region128: #{transformer_forward.3} parent=59 // pred_fallthru
        _
      // Predicated region
      $region129: #{transformer_forward.3} parent=59 // pred_check
        %p1009 = pneg %p678
      $region130: #{transformer_forward.3} parent=59 // pred_check_branch
        %1011 = sbr.rel (%p1009) target = $region132
      $region131: #{transformer_forward.3} parent=59 // pred_region
        %p1012 = scmp.lt.s32.totalorder %s69, 1
        %s1013 = scalar_select %p1012, %s69, 1
        %s1014 = scalar_lea.vmem %s49, %s1013
      $region132: #{transformer_forward.3} parent=59 // pred_fallthru
        _
      // Predicated region
      $region133: #{transformer_forward.3} parent=59 // pred_check
        %p1015 = pneg %p704
      $region134: #{transformer_forward.3} parent=59 // pred_check_branch
        %1017 = sbr.rel (%p1015) target = $region136
      $region135: #{transformer_forward.3} parent=59 // pred_region
        %p1018 = scmp.lt.s32.totalorder %s69, 1
        %s1019 = scalar_select %p1018, %s69, 1
        %s1020 = scalar_lea.vmem %s51, %s1019
      $region136: #{transformer_forward.3} parent=59 // pred_fallthru
        _
      // Predicated region
      $region137: #{transformer_forward.3} parent=59 // pred_check
        %p1021 = pneg %p730
      $region138: #{transformer_forward.3} parent=59 // pred_check_branch
        %1023 = sbr.rel (%p1021) target = $region140
      $region139: #{transformer_forward.3} parent=59 // pred_region
        %p1024 = scmp.lt.s32.totalorder %s69, 1
        %s1025 = scalar_select %p1024, %s69, 1
        %s1026 = scalar_lea.vmem %s53, %s1025
      $region140: #{transformer_forward.3} parent=59 // pred_fallthru
        _
    $region60: #{transformer_forward.3} parent=5 // pred_fallthru
      _
    %p1027 = scmp.le.s32.totalorder 1, %s69
    %p1028 = scmp.lt.s32.totalorder %s69, 3
    %p1029 = pnand %p1027, %p1028
    %p1030 = pneg %p1029
    // Predicated region
    $region141: #{transformer_forward.3} parent=5 // pred_check
      _
    $region142: #{transformer_forward.3} parent=5 // pred_check_branch
      %1032 = sbr.rel (%p1029) target = $region144
    $region143: #{transformer_forward.3} parent=5 // pred_region
      %s1033 = ssub.s32 %s69, 1
      %p1034 = pneg %p90
      %p1035 = pneg %p87
      %p1036 = pneg %p111
      %p1037 = pneg %p108
      %p1038 = pneg %p132
      %p1039 = pneg %p129
      %p1040 = pneg %p153
      %p1041 = pneg %p150
      %p1042 = pneg %p174
      %p1043 = pneg %p171
      %p1044 = pneg %p195
      %p1045 = pneg %p192
      %p1046 = pneg %p216
      %p1047 = pneg %p213
      %p1048 = scmp.lt.s32.totalorder %s74, 1
      %s1049 = scalar_select %p1048, %s74, 1
      %s1050 = smul.addr %s1049, 4
      %s1051 = smul.addr %s1050, 8
      %s1052 = scalar_lea.vmem %s15, %s1051
      %p1053 = pneg %p242
      %p1054 = pneg %p239
      %p1055 = scmp.lt.s32.totalorder %s74, 1
      %s1056 = scalar_select %p1055, %s74, 1
      %s1057 = scalar_lea.vmem %s17, %s1056
      %p1058 = pneg %p268
      %p1059 = pneg %p265
      %p1060 = scmp.lt.s32.totalorder %s74, 1
      %s1061 = scalar_select %p1060, %s74, 1
      %s1062 = smul.addr %s1061, 4
      %s1063 = smul.addr %s1062, 8
      %s1064 = scalar_lea.vmem %s19, %s1063
      %p1065 = pneg %p294
      %p1066 = pneg %p291
      %p1067 = scmp.lt.s32.totalorder %s74, 1
      %s1068 = scalar_select %p1067, %s74, 1
      %s1069 = scalar_lea.vmem %s21, %s1068
      %p1070 = pneg %p320
      %p1071 = pneg %p317
      %p1072 = scmp.lt.s32.totalorder %s74, 1
      %s1073 = scalar_select %p1072, %s74, 1
      %s1074 = scalar_lea.vmem %s23, %s1073
      %p1075 = pneg %p346
      %p1076 = pneg %p343
      %p1077 = scmp.lt.s32.totalorder %s74, 1
      %s1078 = scalar_select %p1077, %s74, 1
      %s1079 = scalar_lea.vmem %s25, %s1078
      %p1080 = pneg %p372
      %p1081 = pneg %p369
      %p1082 = scmp.lt.s32.totalorder %s74, 1
      %s1083 = scalar_select %p1082, %s74, 1
      %s1084 = smul.addr %s1083, 4
      %s1085 = smul.addr %s1084, 8
      %s1086 = scalar_lea.vmem %s27, %s1085
      %p1087 = pneg %p398
      %p1088 = pneg %p395
      %p1089 = scmp.lt.s32.totalorder %s74, 1
      %s1090 = scalar_select %p1089, %s74, 1
      %s1091 = scalar_lea.vmem %s29, %s1090
      %p1092 = pneg %p424
      %p1093 = pneg %p421
      %p1094 = scmp.lt.s32.totalorder %s74, 1
      %s1095 = scalar_select %p1094, %s74, 1
      %s1096 = smul.addr %s1095, 4
      %s1097 = smul.addr %s1096, 8
      %s1098 = scalar_lea.vmem %s31, %s1097
      %p1099 = pneg %p450
      %p1100 = pneg %p447
      %p1101 = scmp.lt.s32.totalorder %s74, 1
      %s1102 = scalar_select %p1101, %s74, 1
      %s1103 = scalar_lea.vmem %s33, %s1102
      %p1104 = pneg %p476
      %p1105 = pneg %p473
      %p1106 = scmp.lt.s32.totalorder %s74, 1
      %s1107 = scalar_select %p1106, %s74, 1
      %s1108 = smul.addr %s1107, 4
      %s1109 = smul.addr %s1108, 8
      %s1110 = scalar_lea.vmem %s35, %s1109
      %p1111 = pneg %p502
      %p1112 = pneg %p499
      %p1113 = scmp.lt.s32.totalorder %s74, 1
      %s1114 = scalar_select %p1113, %s74, 1
      %s1115 = scalar_lea.vmem %s37, %s1114
      %p1116 = pneg %p528
      %p1117 = pneg %p525
      %p1118 = scmp.lt.s32.totalorder %s74, 1
      %s1119 = scalar_select %p1118, %s74, 1
      %s1120 = scalar_lea.vmem %s39, %s1119
      %p1121 = pneg %p554
      %p1122 = pneg %p551
      %p1123 = scmp.lt.s32.totalorder %s74, 1
      %s1124 = scalar_select %p1123, %s74, 1
      %s1125 = scalar_lea.vmem %s41, %s1124
      %p1126 = pneg %p580
      %p1127 = pneg %p577
      %p1128 = scmp.lt.s32.totalorder %s74, 1
      %s1129 = scalar_select %p1128, %s74, 1
      %s1130 = smul.addr %s1129, 4
      %s1131 = smul.addr %s1130, 8
      %s1132 = scalar_lea.vmem %s43, %s1131
      %p1133 = pneg %p606
      %p1134 = pneg %p603
      %p1135 = scmp.lt.s32.totalorder %s74, 1
      %s1136 = scalar_select %p1135, %s74, 1
      %s1137 = scalar_lea.vmem %s45, %s1136
      %p1138 = pneg %p632
      %p1139 = pneg %p629
      %p1140 = scmp.lt.s32.totalorder %s74, 1
      %s1141 = scalar_select %p1140, %s74, 1
      %s1142 = smul.addr %s1141, 16
      %s1143 = smul.addr %s1142, 8
      %s1144 = scalar_lea.vmem %s47, %s1143
      %p1145 = pneg %p658
      %p1146 = pneg %p655
      %p1147 = scmp.lt.s32.totalorder %s74, 1
      %s1148 = scalar_select %p1147, %s74, 1
      %s1149 = scalar_lea.vmem %s49, %s1148
      %p1150 = pneg %p684
      %p1151 = pneg %p681
      %p1152 = scmp.lt.s32.totalorder %s74, 1
      %s1153 = scalar_select %p1152, %s74, 1
      %s1154 = scalar_lea.vmem %s51, %s1153
      %p1155 = pneg %p710
      %p1156 = pneg %p707
      %p1157 = scmp.lt.s32.totalorder %s74, 1
      %s1158 = scalar_select %p1157, %s74, 1
      %s1159 = scalar_lea.vmem %s53, %s1158
      %p1160 = pneg %p736
      %p1161 = pneg %p733
      %p1162 = pneg %p757
      %p1163 = pneg %p754
      %p1164 = pneg %p778
      %p1165 = pneg %p775
      %p1166 = pneg %p799
      %p1167 = pneg %p796
      %p1168 = pneg %p820
      %p1169 = pneg %p817
      %p1170 = pneg %p841
      %p1171 = pneg %p838
      %p1172 = scmp.lt.s32.totalorder %s74, 1
      %s1173 = scalar_select %p1172, %s74, 1
      %s1174 = smul.addr %s1173, 4
      %s1175 = smul.addr %s1174, 8
      %s1176 = scalar_lea.vmem %s15, %s1175
      %p1177 = scmp.lt.s32.totalorder %s74, 1
      %s1178 = scalar_select %p1177, %s74, 1
      %s1179 = scalar_lea.vmem %s17, %s1178
      %p1180 = scmp.lt.s32.totalorder %s74, 1
      %s1181 = scalar_select %p1180, %s74, 1
      %s1182 = smul.addr %s1181, 4
      %s1183 = smul.addr %s1182, 8
      %s1184 = scalar_lea.vmem %s19, %s1183
      %p1185 = scmp.lt.s32.totalorder %s74, 1
      %s1186 = scalar_select %p1185, %s74, 1
      %s1187 = scalar_lea.vmem %s21, %s1186
      %p1188 = scmp.lt.s32.totalorder %s74, 1
      %s1189 = scalar_select %p1188, %s74, 1
      %s1190 = scalar_lea.vmem %s23, %s1189
      %p1191 = scmp.lt.s32.totalorder %s74, 1
      %s1192 = scalar_select %p1191, %s74, 1
      %s1193 = scalar_lea.vmem %s25, %s1192
      %p1194 = scmp.lt.s32.totalorder %s74, 1
      %s1195 = scalar_select %p1194, %s74, 1
      %s1196 = smul.addr %s1195, 4
      %s1197 = smul.addr %s1196, 8
      %s1198 = scalar_lea.vmem %s27, %s1197
      %p1199 = scmp.lt.s32.totalorder %s74, 1
      %s1200 = scalar_select %p1199, %s74, 1
      %s1201 = scalar_lea.vmem %s29, %s1200
      %p1202 = scmp.lt.s32.totalorder %s74, 1
      %s1203 = scalar_select %p1202, %s74, 1
      %s1204 = smul.addr %s1203, 4
      %s1205 = smul.addr %s1204, 8
      %s1206 = scalar_lea.vmem %s31, %s1205
      %p1207 = scmp.lt.s32.totalorder %s74, 1
      %s1208 = scalar_select %p1207, %s74, 1
      %s1209 = scalar_lea.vmem %s33, %s1208
      %p1210 = scmp.lt.s32.totalorder %s74, 1
      %s1211 = scalar_select %p1210, %s74, 1
      %s1212 = smul.addr %s1211, 4
      %s1213 = smul.addr %s1212, 8
      %s1214 = scalar_lea.vmem %s35, %s1213
      %p1215 = scmp.lt.s32.totalorder %s74, 1
      %s1216 = scalar_select %p1215, %s74, 1
      %s1217 = scalar_lea.vmem %s37, %s1216
      %p1218 = scmp.lt.s32.totalorder %s74, 1
      %s1219 = scalar_select %p1218, %s74, 1
      %s1220 = scalar_lea.vmem %s39, %s1219
      %p1221 = scmp.lt.s32.totalorder %s74, 1
      %s1222 = scalar_select %p1221, %s74, 1
      %s1223 = scalar_lea.vmem %s41, %s1222
      %p1224 = scmp.lt.s32.totalorder %s74, 1
      %s1225 = scalar_select %p1224, %s74, 1
      %s1226 = smul.addr %s1225, 4
      %s1227 = smul.addr %s1226, 8
      %s1228 = scalar_lea.vmem %s43, %s1227
      %p1229 = scmp.lt.s32.totalorder %s74, 1
      %s1230 = scalar_select %p1229, %s74, 1
      %s1231 = scalar_lea.vmem %s45, %s1230
      %p1232 = scmp.lt.s32.totalorder %s74, 1
      %s1233 = scalar_select %p1232, %s74, 1
      %s1234 = smul.addr %s1233, 16
      %s1235 = smul.addr %s1234, 8
      %s1236 = scalar_lea.vmem %s47, %s1235
      %p1237 = scmp.lt.s32.totalorder %s74, 1
      %s1238 = scalar_select %p1237, %s74, 1
      %s1239 = scalar_lea.vmem %s49, %s1238
      %p1240 = scmp.lt.s32.totalorder %s74, 1
      %s1241 = scalar_select %p1240, %s74, 1
      %s1242 = scalar_lea.vmem %s51, %s1241
      %p1243 = scmp.lt.s32.totalorder %s74, 1
      %s1244 = scalar_select %p1243, %s74, 1
      %s1245 = scalar_lea.vmem %s53, %s1244
      %p1246 = scmp.eq.s32.totalorder %s74, 0
      // Predicated region
      $region145: #{transformer_forward.3} parent=143 // pred_check
        %p1247 = pneg %p1246
      $region146: #{transformer_forward.3} parent=143 // pred_check_branch
        %1249 = sbr.rel (%p1247) target = $region148
      $region147: #{transformer_forward.3} parent=143 // pred_region
        %v1250 = vld [vmem:[%s1] sm:$0xff]
        %v1251 = vld [vmem:[%s1 + $0x8] sm:$0xff]
        %v1252 = vld [vmem:[%s5] sm:$0xf]
        %v1253 = vld [vmem:[%s7] sm:$0x1]
        %v1255 = vlaneseq
        %v1256 = vshrl.u32 %v1255, 7
        %v1257 = vsub.s32 0, %v1256
        %v1258 = vrot.slane %v1253, %v1257
        %vm1260 = vcmask 31744
        %v1262 = vsel %vm1260, %v1250, 0
        %v1265 = vsel %vm1260, %v1251, 0
        %vm1267 = vcmask 1043456
        %v1269 = vsel %vm1267, %v1252, 0
        %1271 = vmatprep.subr.mxu0 0.0
        %1272 = vmatpush1.msra.mxu0 0.0
        %1273 = vmatprep.subr.mxu0 0.0
        %1274 = vmatpush1.msra.mxu0 0.0
        %1275 = vmatprep.subr.mxu0 0.0
        %1276 = vmatpush1.msra.mxu0 0.0
        %1277 = vmatprep.subr.mxu0 0.0
        %1278 = vmatpush1.msra.mxu0 0.0
        %1279 = vmatprep.subr.mxu0 0.0
        %1280 = vmatpush1.msra.mxu0 0.0
        %1281 = vmatprep.subr.mxu0 0.0
        %1282 = vmatpush1.msra.mxu0 0.0
        %1283 = vmatprep.subr.mxu0 0.0
        %1284 = vmatpush1.msra.mxu0 0.0
        %1285 = vmatprep.subr.mxu0 0.0
        %1286 = vmatpush1.msra.mxu0 0.0
        %1287 = vmatprep.subr.mxu0 0.0
        %1288 = vmatpush1.msra.mxu0 0.0
        %1289 = vmatprep.subr.mxu0 0.0
        %1290 = vmatpush1.msra.mxu0 0.0
        %1291 = vmatprep.subr.mxu0 0.0
        %1292 = vmatpush1.msra.mxu0 0.0
        %1293 = vmatprep.subr.mxu0 0.0
        %1294 = vmatpush1.msra.mxu0 0.0
        %1295 = vmatprep.subr.mxu0 0.0
        %1296 = vmatpush1.msra.mxu0 0.0
        %1297 = vmatprep.subr.mxu0 0.0
        %1298 = vmatpush1.msra.mxu0 0.0
        %1299 = vmatprep.subr.mxu0 0.0
        %1300 = vmatpush1.msra.mxu0 0.0
        %1301 = vmatprep.subr.mxu0 0.0
        %1302 = vmatpush1.msra.mxu0 %v1269
        %1303 = vmatprep.subr.mxu0 0.0
        %1304 = vmatpush2.msra.mxu0 0.0
        %1305 = vmatprep.subr.mxu0 0.0
        %1306 = vmatpush2.msra.mxu0 0.0
        %1307 = vmatprep.subr.mxu0 0.0
        %1308 = vmatpush2.msra.mxu0 0.0
        %1309 = vmatprep.subr.mxu0 0.0
        %1310 = vmatpush2.msra.mxu0 0.0
        %1311 = vmatprep.subr.mxu0 0.0
        %1312 = vmatpush2.msra.mxu0 0.0
        %1313 = vmatprep.subr.mxu0 0.0
        %1314 = vmatpush2.msra.mxu0 0.0
        %1315 = vmatprep.subr.mxu0 0.0
        %1316 = vmatpush2.msra.mxu0 0.0
        %1317 = vmatprep.subr.mxu0 0.0
        %1318 = vmatpush2.msra.mxu0 0.0
        %1319 = vmatprep.subr.mxu0 0.0
        %1320 = vmatpush2.msra.mxu0 0.0
        %1321 = vmatprep.subr.mxu0 0.0
        %1322 = vmatpush2.msra.mxu0 0.0
        %1323 = vmatprep.subr.mxu0 0.0
        %1324 = vmatpush2.msra.mxu0 0.0
        %1325 = vmatprep.subr.mxu0 0.0
        %1326 = vmatpush2.msra.mxu0 0.0
        %1327 = vmatprep.subr.mxu0 0.0
        %1328 = vmatpush2.msra.mxu0 0.0
        %1329 = vmatprep.subr.mxu0 0.0
        %1330 = vmatpush2.msra.mxu0 0.0
        %1331 = vmatprep.subr.mxu0 0.0
        %1332 = vmatpush2.msra.mxu0 0.0
        %1333 = vmatprep.subr.mxu0 0.0
        %1334 = vmatpush2.msra.mxu0 0.0
        %1335 = vmatprep.mubr.f32.mxu0 0.0
        %1336 = vmatmul.mubr.f32.gmra.mxu0 %v1262
        %v1337 = vpop.f32.mrf.mxu0
        %v1338 = vadd.f32 %v1258, %v1337
        %v1339 = vpop.f32.mrf.mxu0
        %1340 = vmatprep.mubr.f32.mxu0 0.0
        %1341 = vmatmul.mubr.f32.gmra.mxu0 %v1265
        %v1342 = vpop.f32.mrf.mxu0
        %v1343 = vadd.f32 %v1258, %v1342
        %v1344 = vpop.f32.mrf.mxu0
        %1345 = vdwg.mxu0
        %v1346 = vld [vmem:[%s3] sm:$0xff]
        %v1347 = vld [vmem:[%s3 + $0x8] sm:$0xff]
        %v1348 = vadd.f32 %v1338, %v1346
        %v1349 = vadd.f32 %v1343, %v1347
        %vm1350 = vcmask 261120
        %1351 = vst.msk [vmem:[#allocation2] sm:$0xff] %vm1350, %v1348
        %1352 = vst.msk [vmem:[#allocation2 + $0x8] sm:$0xff] %vm1350, %v1349
      $region148: #{transformer_forward.3} parent=143 // pred_fallthru
        _
      %v1353 = vld [vmem:[#allocation2] sm:$0xff]
      %v1354 = vld [vmem:[#allocation2 + $0x8] sm:$0xff]
      %v1355 = vld [vmem:[%s9] sm:$0xff]
      %v1356 = vld [vmem:[%s9 + $0x8] sm:$0xff]
      %v1357 = vld [vmem:[%s1176] sm:$0xff]
      %v1358 = vld [vmem:[%s1176 + $0x8] sm:$0xff]
      %v1359 = vld [vmem:[%s1176 + $0x10] sm:$0xff]
      %v1360 = vld [vmem:[%s1176 + $0x18] sm:$0xff]
      %v1361 = vld [vmem:[%s1179] sm:$0x1]
      %v1363 = vlaneseq
      %v1364 = vshrl.u32 %v1363, 7
      %v1365 = vsub.s32 0, %v1364
      %v1366 = vrot.slane %v1361, %v1365
      %vm1368 = vcmask 261120
      %v1370 = vsel %vm1368, %v1353, 0
      %v1373 = vsel %vm1368, %v1354, 0
      %1375 = vmatprep.subr.mxu0 0.0
      %1376 = vmatpush1.msra.mxu0 0.0
      %1377 = vmatprep.subr.mxu0 0.0
      %1378 = vmatpush1.msra.mxu0 0.0
      %1379 = vmatprep.subr.mxu0 0.0
      %1380 = vmatpush1.msra.mxu0 0.0
      %1381 = vmatprep.subr.mxu0 0.0
      %1382 = vmatpush1.msra.mxu0 0.0
      %1383 = vmatprep.subr.mxu0 0.0
      %1384 = vmatpush1.msra.mxu0 0.0
      %1385 = vmatprep.subr.mxu0 0.0
      %1386 = vmatpush1.msra.mxu0 0.0
      %1387 = vmatprep.subr.mxu0 0.0
      %1388 = vmatpush1.msra.mxu0 0.0
      %1389 = vmatprep.subr.mxu0 0.0
      %1390 = vmatpush1.msra.mxu0 0.0
      %1391 = vmatprep.subr.mxu0 0.0
      %1392 = vmatpush1.msra.mxu0 0.0
      %1393 = vmatprep.subr.mxu0 0.0
      %1394 = vmatpush1.msra.mxu0 0.0
      %1395 = vmatprep.subr.mxu0 0.0
      %1396 = vmatpush1.msra.mxu0 0.0
      %1397 = vmatprep.subr.mxu0 0.0
      %1398 = vmatpush1.msra.mxu0 0.0
      %1399 = vmatprep.subr.mxu0 0.0
      %1400 = vmatpush1.msra.mxu0 %v1360
      %1401 = vmatprep.subr.mxu0 0.0
      %1402 = vmatpush1.msra.mxu0 %v1359
      %1403 = vmatprep.subr.mxu0 0.0
      %1404 = vmatpush1.msra.mxu0 %v1358
      %1405 = vmatprep.subr.mxu0 0.0
      %1406 = vmatpush1.msra.mxu0 %v1357
      %1407 = vmatprep.subr.mxu0 0.0
      %1408 = vmatpush2.msra.mxu0 0.0
      %1409 = vmatprep.subr.mxu0 0.0
      %1410 = vmatpush2.msra.mxu0 0.0
      %1411 = vmatprep.subr.mxu0 0.0
      %1412 = vmatpush2.msra.mxu0 0.0
      %1413 = vmatprep.subr.mxu0 0.0
      %1414 = vmatpush2.msra.mxu0 0.0
      %1415 = vmatprep.subr.mxu0 0.0
      %1416 = vmatpush2.msra.mxu0 0.0
      %1417 = vmatprep.subr.mxu0 0.0
      %1418 = vmatpush2.msra.mxu0 0.0
      %1419 = vmatprep.subr.mxu0 0.0
      %1420 = vmatpush2.msra.mxu0 0.0
      %1421 = vmatprep.subr.mxu0 0.0
      %1422 = vmatpush2.msra.mxu0 0.0
      %1423 = vmatprep.subr.mxu0 0.0
      %1424 = vmatpush2.msra.mxu0 0.0
      %1425 = vmatprep.subr.mxu0 0.0
      %1426 = vmatpush2.msra.mxu0 0.0
      %1427 = vmatprep.subr.mxu0 0.0
      %1428 = vmatpush2.msra.mxu0 0.0
      %1429 = vmatprep.subr.mxu0 0.0
      %1430 = vmatpush2.msra.mxu0 0.0
      %1431 = vmatprep.subr.mxu0 0.0
      %1432 = vmatpush2.msra.mxu0 0.0
      %1433 = vmatprep.subr.mxu0 0.0
      %1434 = vmatpush2.msra.mxu0 0.0
      %1435 = vmatprep.subr.mxu0 0.0
      %1436 = vmatpush2.msra.mxu0 0.0
      %1437 = vmatprep.subr.mxu0 0.0
      %1438 = vmatpush2.msra.mxu0 0.0
      %1439 = vmatprep.mubr.f32.mxu0 0.0
      %1440 = vmatmul.mubr.f32.gmra.mxu0 %v1370
      %v1441 = vpop.f32.mrf.mxu0
      %v1442 = vadd.f32 %v1366, %v1441
      %v1443 = vpop.f32.mrf.mxu0
      %1444 = vmatprep.mubr.f32.mxu0 0.0
      %1445 = vmatmul.mubr.f32.gmra.mxu0 %v1373
      %v1446 = vpop.f32.mrf.mxu0
      %v1447 = vadd.f32 %v1366, %v1446
      %v1448 = vpop.f32.mrf.mxu0
      %1449 = vdwg.mxu0
      %v1450 = vld [vmem:[%s1184] sm:$0xff]
      %v1451 = vld [vmem:[%s1184 + $0x8] sm:$0xff]
      %v1452 = vld [vmem:[%s1184 + $0x10] sm:$0xff]
      %v1453 = vld [vmem:[%s1184 + $0x18] sm:$0xff]
      %v1454 = vld [vmem:[%s1187] sm:$0x1]
      %v1455 = vld [vmem:[%s11] sm:$0xff]
      %v1456 = vld [vmem:[%s11 + $0x8] sm:$0xff]
      %1459 = vrot.lane.b32.xlu0 %v1442, 96
      %v1460 = vpop.permute.xlu0 %1459
      %1461 = vrot.lane.b32.xlu0 %v1447, 96
      %v1462 = vpop.permute.xlu0 %1461
      %vm1463 = vcmask 64512
      %v1464 = vsel %vm1463, %v1442, 0
      %v1466 = vsel %vm1463, %v1447, 0
      %v1468 = vsel %vm1463, %v1460, 0
      %v1470 = vsel %vm1463, %v1462, 0
      %1472 = vmatprep.subr.mxu0 0.0
      %1473 = vmatpush1.xpose.msra.mxu0 0.0
      %1474 = vmatprep.subr.mxu0 0.0
      %1475 = vmatpush1.xpose.msra.mxu0 0.0
      %1476 = vmatprep.subr.mxu0 0.0
      %1477 = vmatpush1.xpose.msra.mxu0 0.0
      %1478 = vmatprep.subr.mxu0 0.0
      %1479 = vmatpush1.xpose.msra.mxu0 0.0
      %1480 = vmatprep.subr.mxu0 0.0
      %1481 = vmatpush1.xpose.msra.mxu0 0.0
      %1482 = vmatprep.subr.mxu0 0.0
      %1483 = vmatpush1.xpose.msra.mxu0 0.0
      %1484 = vmatprep.subr.mxu0 0.0
      %1485 = vmatpush1.xpose.msra.mxu0 0.0
      %1486 = vmatprep.subr.mxu0 0.0
      %1487 = vmatpush1.xpose.msra.mxu0 0.0
      %1488 = vmatprep.subr.mxu0 0.0
      %1489 = vmatpush1.xpose.msra.mxu0 0.0
      %1490 = vmatprep.subr.mxu0 0.0
      %1491 = vmatpush1.xpose.msra.mxu0 0.0
      %1492 = vmatprep.subr.mxu0 0.0
      %1493 = vmatpush1.xpose.msra.mxu0 0.0
      %1494 = vmatprep.subr.mxu0 0.0
      %1495 = vmatpush1.xpose.msra.mxu0 0.0
      %1496 = vmatprep.subr.mxu0 0.0
      %1497 = vmatpush1.xpose.msra.mxu0 0.0
      %1498 = vmatprep.subr.mxu0 0.0
      %1499 = vmatpush1.xpose.msra.mxu0 0.0
      %1500 = vmatprep.subr.mxu0 0.0
      %1501 = vmatpush1.xpose.msra.mxu0 %v1470
      %1502 = vmatprep.subr.mxu0 0.0
      %1503 = vmatpush1.xpose.msra.mxu0 %v1468
      %1504 = vmatprep.subr.mxu0 0.0
      %1505 = vmatpush2.xpose.msra.mxu0 0.0
      %1506 = vmatprep.subr.mxu0 0.0
      %1507 = vmatpush2.xpose.msra.mxu0 0.0
      %1508 = vmatprep.subr.mxu0 0.0
      %1509 = vmatpush2.xpose.msra.mxu0 0.0
      %1510 = vmatprep.subr.mxu0 0.0
      %1511 = vmatpush2.xpose.msra.mxu0 0.0
      %1512 = vmatprep.subr.mxu0 0.0
      %1513 = vmatpush2.xpose.msra.mxu0 0.0
      %1514 = vmatprep.subr.mxu0 0.0
      %1515 = vmatpush2.xpose.msra.mxu0 0.0
      %1516 = vmatprep.subr.mxu0 0.0
      %1517 = vmatpush2.xpose.msra.mxu0 0.0
      %1518 = vmatprep.subr.mxu0 0.0
      %1519 = vmatpush2.xpose.msra.mxu0 0.0
      %1520 = vmatprep.subr.mxu0 0.0
      %1521 = vmatpush2.xpose.msra.mxu0 0.0
      %1522 = vmatprep.subr.mxu0 0.0
      %1523 = vmatpush2.xpose.msra.mxu0 0.0
      %1524 = vmatprep.subr.mxu0 0.0
      %1525 = vmatpush2.xpose.msra.mxu0 0.0
      %1526 = vmatprep.subr.mxu0 0.0
      %1527 = vmatpush2.xpose.msra.mxu0 0.0
      %1528 = vmatprep.subr.mxu0 0.0
      %1529 = vmatpush2.xpose.msra.mxu0 0.0
      %1530 = vmatprep.subr.mxu0 0.0
      %1531 = vmatpush2.xpose.msra.mxu0 0.0
      %1532 = vmatprep.subr.mxu0 0.0
      %1533 = vmatpush2.xpose.msra.mxu0 0.0
      %1534 = vmatprep.subr.mxu0 0.0
      %1535 = vmatpush2.xpose.msra.mxu0 0.0
      %1536 = vmatprep.mubr.f32.mxu0 0.0
      %1537 = vmatmul.mubr.f32.gmra.mxu0 %v1464
      %v1538 = vpop.f32.mrf.mxu0
      %v1539 = vadd.f32 0.0, %v1538
      %v1540 = vpop.f32.mrf.mxu0
      %1541 = vmatprep.mubr.f32.mxu0 0.0
      %1542 = vmatmul.mubr.f32.gmra.mxu0 %v1466
      %v1543 = vpop.f32.mrf.mxu0
      %v1544 = vadd.f32 0.0, %v1543
      %v1545 = vpop.f32.mrf.mxu0
      %1546 = vdwg.mxu0
      %v1547 = vmul.f32 %v1539, 0.35355338
      %v1548 = vmul.f32 %v1544, 0.35355338
      %v1549 = vadd.f32 %v1547, %v1455
      %v1550 = vadd.f32 %v1548, %v1456
      %vm1551 = vcmask 130048
      %v1552 = vsel %vm1551, %v1549, -inf
      %1553 = vmax.xlane.f32.xlu0 %v1552
      %v1554 = vpop.xlane.xlu0 %1553
      %v1555 = vsel %vm1551, %v1550, -inf
      %1556 = vmax.xlane.f32.xlu0 %v1555
      %v1557 = vpop.xlane.xlu0 %1556
      %v1558 = vsub.f32 %v1549, %v1554
      %v1559 = vsub.f32 %v1550, %v1557
      %v1560 = vmul.f32 %v1558, 1.442695
      %v1561 = vpow.pop %v1560
      %v1562 = vmul.f32 %v1559, 1.442695
      %v1563 = vpow.pop %v1562
      %v1564 = vsel %vm1551, %v1561, 0.0
      %1565 = vadd.xlane.f32.xlu0 %v1564
      %v1566 = vpop.xlane.xlu0 %1565
      %v1567 = vsel %vm1551, %v1563, 0.0
      %1568 = vadd.xlane.f32.xlu0 %v1567
      %v1569 = vpop.xlane.xlu0 %1568
      %v1570 = vrcp.pop %v1566
      %v1571 = vmul.f32 %v1561, %v1570
      %v1572 = vrcp.pop %v1569
      %v1573 = vmul.f32 %v1563, %v1572
      %1574 = vrot.lane.b32.xlu0 %v1442, 64
      %v1575 = vpop.permute.xlu0 %1574
      %1576 = vrot.lane.b32.xlu0 %v1447, 64
      %v1577 = vpop.permute.xlu0 %1576
      %v1581 = vsel %vm1551, %v1571, 0
      %v1584 = vsel %vm1551, %v1573, 0
      %1586 = vmatprep.subr.mxu0 0.0
      %1587 = vmatpush1.msra.mxu0 0.0
      %1588 = vmatprep.subr.mxu0 0.0
      %1589 = vmatpush1.msra.mxu0 0.0
      %1590 = vmatprep.subr.mxu0 0.0
      %1591 = vmatpush1.msra.mxu0 0.0
      %1592 = vmatprep.subr.mxu0 0.0
      %1593 = vmatpush1.msra.mxu0 0.0
      %1594 = vmatprep.subr.mxu0 0.0
      %1595 = vmatpush1.msra.mxu0 0.0
      %1596 = vmatprep.subr.mxu0 0.0
      %1597 = vmatpush1.msra.mxu0 0.0
      %1598 = vmatprep.subr.mxu0 0.0
      %1599 = vmatpush1.msra.mxu0 0.0
      %1600 = vmatprep.subr.mxu0 0.0
      %1601 = vmatpush1.msra.mxu0 0.0
      %1602 = vmatprep.subr.mxu0 0.0
      %1603 = vmatpush1.msra.mxu0 0.0
      %1604 = vmatprep.subr.mxu0 0.0
      %1605 = vmatpush1.msra.mxu0 0.0
      %1606 = vmatprep.subr.mxu0 0.0
      %1607 = vmatpush1.msra.mxu0 0.0
      %1608 = vmatprep.subr.mxu0 0.0
      %1609 = vmatpush1.msra.mxu0 0.0
      %1610 = vmatprep.subr.mxu0 0.0
      %1611 = vmatpush1.msra.mxu0 0.0
      %1612 = vmatprep.subr.mxu0 0.0
      %1613 = vmatpush1.msra.mxu0 0.0
      %1614 = vmatprep.subr.mxu0 0.0
      %1615 = vmatpush1.msra.mxu0 %v1577
      %1616 = vmatprep.subr.mxu0 0.0
      %1617 = vmatpush1.msra.mxu0 %v1575
      %1618 = vmatprep.subr.mxu0 0.0
      %1619 = vmatpush2.msra.mxu0 0.0
      %1620 = vmatprep.subr.mxu0 0.0
      %1621 = vmatpush2.msra.mxu0 0.0
      %1622 = vmatprep.subr.mxu0 0.0
      %1623 = vmatpush2.msra.mxu0 0.0
      %1624 = vmatprep.subr.mxu0 0.0
      %1625 = vmatpush2.msra.mxu0 0.0
      %1626 = vmatprep.subr.mxu0 0.0
      %1627 = vmatpush2.msra.mxu0 0.0
      %1628 = vmatprep.subr.mxu0 0.0
      %1629 = vmatpush2.msra.mxu0 0.0
      %1630 = vmatprep.subr.mxu0 0.0
      %1631 = vmatpush2.msra.mxu0 0.0
      %1632 = vmatprep.subr.mxu0 0.0
      %1633 = vmatpush2.msra.mxu0 0.0
      %1634 = vmatprep.subr.mxu0 0.0
      %1635 = vmatpush2.msra.mxu0 0.0
      %1636 = vmatprep.subr.mxu0 0.0
      %1637 = vmatpush2.msra.mxu0 0.0
      %1638 = vmatprep.subr.mxu0 0.0
      %1639 = vmatpush2.msra.mxu0 0.0
      %1640 = vmatprep.subr.mxu0 0.0
      %1641 = vmatpush2.msra.mxu0 0.0
      %1642 = vmatprep.subr.mxu0 0.0
      %1643 = vmatpush2.msra.mxu0 0.0
      %1644 = vmatprep.subr.mxu0 0.0
      %1645 = vmatpush2.msra.mxu0 0.0
      %1646 = vmatprep.subr.mxu0 0.0
      %1647 = vmatpush2.msra.mxu0 0.0
      %1648 = vmatprep.subr.mxu0 0.0
      %1649 = vmatpush2.msra.mxu0 0.0
      %1650 = vmatprep.mubr.f32.mxu0 0.0
      %1651 = vmatmul.mubr.f32.gmra.mxu0 %v1581
      %v1652 = vpop.f32.mrf.mxu0
      %v1653 = vadd.f32 0.0, %v1652
      %v1654 = vpop.f32.mrf.mxu0
      %1655 = vmatprep.mubr.f32.mxu0 0.0
      %1656 = vmatmul.mubr.f32.gmra.mxu0 %v1584
      %v1657 = vpop.f32.mrf.mxu0
      %v1658 = vadd.f32 0.0, %v1657
      %v1659 = vpop.f32.mrf.mxu0
      %1660 = vdwg.mxu0
      %1661 = vrot.lane.b32.xlu0 %v1442, 120
      %v1662 = vpop.permute.xlu0 %1661
      %1663 = vrot.lane.b32.xlu0 %v1447, 120
      %v1664 = vpop.permute.xlu0 %1663
      %1665 = vrot.lane.b32.xlu0 %v1442, 88
      %v1666 = vpop.permute.xlu0 %1665
      %1667 = vrot.lane.b32.xlu0 %v1447, 88
      %v1668 = vpop.permute.xlu0 %1667
      %v1669 = vsel %vm1463, %v1662, 0
      %v1671 = vsel %vm1463, %v1664, 0
      %v1673 = vsel %vm1463, %v1666, 0
      %v1675 = vsel %vm1463, %v1668, 0
      %1677 = vmatprep.subr.mxu0 0.0
      %1678 = vmatpush1.xpose.msra.mxu0 0.0
      %1679 = vmatprep.subr.mxu0 0.0
      %1680 = vmatpush1.xpose.msra.mxu0 0.0
      %1681 = vmatprep.subr.mxu0 0.0
      %1682 = vmatpush1.xpose.msra.mxu0 0.0
      %1683 = vmatprep.subr.mxu0 0.0
      %1684 = vmatpush1.xpose.msra.mxu0 0.0
      %1685 = vmatprep.subr.mxu0 0.0
      %1686 = vmatpush1.xpose.msra.mxu0 0.0
      %1687 = vmatprep.subr.mxu0 0.0
      %1688 = vmatpush1.xpose.msra.mxu0 0.0
      %1689 = vmatprep.subr.mxu0 0.0
      %1690 = vmatpush1.xpose.msra.mxu0 0.0
      %1691 = vmatprep.subr.mxu0 0.0
      %1692 = vmatpush1.xpose.msra.mxu0 0.0
      %1693 = vmatprep.subr.mxu0 0.0
      %1694 = vmatpush1.xpose.msra.mxu0 0.0
      %1695 = vmatprep.subr.mxu0 0.0
      %1696 = vmatpush1.xpose.msra.mxu0 0.0
      %1697 = vmatprep.subr.mxu0 0.0
      %1698 = vmatpush1.xpose.msra.mxu0 0.0
      %1699 = vmatprep.subr.mxu0 0.0
      %1700 = vmatpush1.xpose.msra.mxu0 0.0
      %1701 = vmatprep.subr.mxu0 0.0
      %1702 = vmatpush1.xpose.msra.mxu0 0.0
      %1703 = vmatprep.subr.mxu0 0.0
      %1704 = vmatpush1.xpose.msra.mxu0 0.0
      %1705 = vmatprep.subr.mxu0 0.0
      %1706 = vmatpush1.xpose.msra.mxu0 %v1675
      %1707 = vmatprep.subr.mxu0 0.0
      %1708 = vmatpush1.xpose.msra.mxu0 %v1673
      %1709 = vmatprep.subr.mxu0 0.0
      %1710 = vmatpush2.xpose.msra.mxu0 0.0
      %1711 = vmatprep.subr.mxu0 0.0
      %1712 = vmatpush2.xpose.msra.mxu0 0.0
      %1713 = vmatprep.subr.mxu0 0.0
      %1714 = vmatpush2.xpose.msra.mxu0 0.0
      %1715 = vmatprep.subr.mxu0 0.0
      %1716 = vmatpush2.xpose.msra.mxu0 0.0
      %1717 = vmatprep.subr.mxu0 0.0
      %1718 = vmatpush2.xpose.msra.mxu0 0.0
      %1719 = vmatprep.subr.mxu0 0.0
      %1720 = vmatpush2.xpose.msra.mxu0 0.0
      %1721 = vmatprep.subr.mxu0 0.0
      %1722 = vmatpush2.xpose.msra.mxu0 0.0
      %1723 = vmatprep.subr.mxu0 0.0
      %1724 = vmatpush2.xpose.msra.mxu0 0.0
      %1725 = vmatprep.subr.mxu0 0.0
      %1726 = vmatpush2.xpose.msra.mxu0 0.0
      %1727 = vmatprep.subr.mxu0 0.0
      %1728 = vmatpush2.xpose.msra.mxu0 0.0
      %1729 = vmatprep.subr.mxu0 0.0
      %1730 = vmatpush2.xpose.msra.mxu0 0.0
      %1731 = vmatprep.subr.mxu0 0.0
      %1732 = vmatpush2.xpose.msra.mxu0 0.0
      %1733 = vmatprep.subr.mxu0 0.0
      %1734 = vmatpush2.xpose.msra.mxu0 0.0
      %1735 = vmatprep.subr.mxu0 0.0
      %1736 = vmatpush2.xpose.msra.mxu0 0.0
      %1737 = vmatprep.subr.mxu0 0.0
      %1738 = vmatpush2.xpose.msra.mxu0 0.0
      %1739 = vmatprep.subr.mxu0 0.0
      %1740 = vmatpush2.xpose.msra.mxu0 0.0
      %1741 = vmatprep.mubr.f32.mxu0 0.0
      %1742 = vmatmul.mubr.f32.gmra.mxu0 %v1669
      %v1743 = vpop.f32.mrf.mxu0
      %v1744 = vadd.f32 0.0, %v1743
      %v1745 = vpop.f32.mrf.mxu0
      %1746 = vmatprep.mubr.f32.mxu0 0.0
      %1747 = vmatmul.mubr.f32.gmra.mxu0 %v1671
      %v1748 = vpop.f32.mrf.mxu0
      %v1749 = vadd.f32 0.0, %v1748
      %v1750 = vpop.f32.mrf.mxu0
      %1751 = vdwg.mxu0
      %v1752 = vmul.f32 %v1744, 0.35355338
      %v1753 = vmul.f32 %v1749, 0.35355338
      %v1754 = vadd.f32 %v1752, %v1455
      %v1755 = vadd.f32 %v1753, %v1456
      %v1756 = vsel %vm1551, %v1754, -inf
      %1757 = vmax.xlane.f32.xlu0 %v1756
      %v1758 = vpop.xlane.xlu0 %1757
      %v1759 = vsel %vm1551, %v1755, -inf
      %1760 = vmax.xlane.f32.xlu0 %v1759
      %v1761 = vpop.xlane.xlu0 %1760
      %v1762 = vsub.f32 %v1754, %v1758
      %v1763 = vsub.f32 %v1755, %v1761
      %v1764 = vmul.f32 %v1762, 1.442695
      %v1765 = vpow.pop %v1764
      %v1766 = vmul.f32 %v1763, 1.442695
      %v1767 = vpow.pop %v1766
      %v1768 = vsel %vm1551, %v1765, 0.0
      %1769 = vadd.xlane.f32.xlu0 %v1768
      %v1770 = vpop.xlane.xlu0 %1769
      %v1771 = vsel %vm1551, %v1767, 0.0
      %1772 = vadd.xlane.f32.xlu0 %v1771
      %v1773 = vpop.xlane.xlu0 %1772
      %v1774 = vrcp.pop %v1770
      %v1775 = vmul.f32 %v1765, %v1774
      %v1776 = vrcp.pop %v1773
      %v1777 = vmul.f32 %v1767, %v1776
      %1778 = vrot.lane.b32.xlu0 %v1442, 56
      %v1779 = vpop.permute.xlu0 %1778
      %1780 = vrot.lane.b32.xlu0 %v1447, 56
      %v1781 = vpop.permute.xlu0 %1780
      %v1785 = vsel %vm1551, %v1775, 0
      %v1788 = vsel %vm1551, %v1777, 0
      %1790 = vmatprep.subr.mxu0 0.0
      %1791 = vmatpush1.msra.mxu0 0.0
      %1792 = vmatprep.subr.mxu0 0.0
      %1793 = vmatpush1.msra.mxu0 0.0
      %1794 = vmatprep.subr.mxu0 0.0
      %1795 = vmatpush1.msra.mxu0 0.0
      %1796 = vmatprep.subr.mxu0 0.0
      %1797 = vmatpush1.msra.mxu0 0.0
      %1798 = vmatprep.subr.mxu0 0.0
      %1799 = vmatpush1.msra.mxu0 0.0
      %1800 = vmatprep.subr.mxu0 0.0
      %1801 = vmatpush1.msra.mxu0 0.0
      %1802 = vmatprep.subr.mxu0 0.0
      %1803 = vmatpush1.msra.mxu0 0.0
      %1804 = vmatprep.subr.mxu0 0.0
      %1805 = vmatpush1.msra.mxu0 0.0
      %1806 = vmatprep.subr.mxu0 0.0
      %1807 = vmatpush1.msra.mxu0 0.0
      %1808 = vmatprep.subr.mxu0 0.0
      %1809 = vmatpush1.msra.mxu0 0.0
      %1810 = vmatprep.subr.mxu0 0.0
      %1811 = vmatpush1.msra.mxu0 0.0
      %1812 = vmatprep.subr.mxu0 0.0
      %1813 = vmatpush1.msra.mxu0 0.0
      %1814 = vmatprep.subr.mxu0 0.0
      %1815 = vmatpush1.msra.mxu0 0.0
      %1816 = vmatprep.subr.mxu0 0.0
      %1817 = vmatpush1.msra.mxu0 0.0
      %1818 = vmatprep.subr.mxu0 0.0
      %1819 = vmatpush1.msra.mxu0 %v1781
      %1820 = vmatprep.subr.mxu0 0.0
      %1821 = vmatpush1.msra.mxu0 %v1779
      %1822 = vmatprep.subr.mxu0 0.0
      %1823 = vmatpush2.msra.mxu0 0.0
      %1824 = vmatprep.subr.mxu0 0.0
      %1825 = vmatpush2.msra.mxu0 0.0
      %1826 = vmatprep.subr.mxu0 0.0
      %1827 = vmatpush2.msra.mxu0 0.0
      %1828 = vmatprep.subr.mxu0 0.0
      %1829 = vmatpush2.msra.mxu0 0.0
      %1830 = vmatprep.subr.mxu0 0.0
      %1831 = vmatpush2.msra.mxu0 0.0
      %1832 = vmatprep.subr.mxu0 0.0
      %1833 = vmatpush2.msra.mxu0 0.0
      %1834 = vmatprep.subr.mxu0 0.0
      %1835 = vmatpush2.msra.mxu0 0.0
      %1836 = vmatprep.subr.mxu0 0.0
      %1837 = vmatpush2.msra.mxu0 0.0
      %1838 = vmatprep.subr.mxu0 0.0
      %1839 = vmatpush2.msra.mxu0 0.0
      %1840 = vmatprep.subr.mxu0 0.0
      %1841 = vmatpush2.msra.mxu0 0.0
      %1842 = vmatprep.subr.mxu0 0.0
      %1843 = vmatpush2.msra.mxu0 0.0
      %1844 = vmatprep.subr.mxu0 0.0
      %1845 = vmatpush2.msra.mxu0 0.0
      %1846 = vmatprep.subr.mxu0 0.0
      %1847 = vmatpush2.msra.mxu0 0.0
      %1848 = vmatprep.subr.mxu0 0.0
      %1849 = vmatpush2.msra.mxu0 0.0
      %1850 = vmatprep.subr.mxu0 0.0
      %1851 = vmatpush2.msra.mxu0 0.0
      %1852 = vmatprep.subr.mxu0 0.0
      %1853 = vmatpush2.msra.mxu0 0.0
      %1854 = vmatprep.mubr.f32.mxu0 0.0
      %1855 = vmatmul.mubr.f32.gmra.mxu0 %v1785
      %v1856 = vpop.f32.mrf.mxu0
      %v1857 = vadd.f32 0.0, %v1856
      %v1858 = vpop.f32.mrf.mxu0
      %1859 = vmatprep.mubr.f32.mxu0 0.0
      %1860 = vmatmul.mubr.f32.gmra.mxu0 %v1788
      %v1861 = vpop.f32.mrf.mxu0
      %v1862 = vadd.f32 0.0, %v1861
      %v1863 = vpop.f32.mrf.mxu0
      %1864 = vdwg.mxu0
      %v1866 = vsel %vm1463, %v1857, 0
      %v1869 = vsel %vm1463, %v1862, 0
      %1871 = vmatprep.subr.mxu0 0.0
      %1872 = vmatpush1.msra.mxu0 0.0
      %1873 = vmatprep.subr.mxu0 0.0
      %1874 = vmatpush1.msra.mxu0 0.0
      %1875 = vmatprep.subr.mxu0 0.0
      %1876 = vmatpush1.msra.mxu0 0.0
      %1877 = vmatprep.subr.mxu0 0.0
      %1878 = vmatpush1.msra.mxu0 0.0
      %1879 = vmatprep.subr.mxu0 0.0
      %1880 = vmatpush1.msra.mxu0 0.0
      %1881 = vmatprep.subr.mxu0 0.0
      %1882 = vmatpush1.msra.mxu0 0.0
      %1883 = vmatprep.subr.mxu0 0.0
      %1884 = vmatpush1.msra.mxu0 0.0
      %1885 = vmatprep.subr.mxu0 0.0
      %1886 = vmatpush1.msra.mxu0 0.0
      %1887 = vmatprep.subr.mxu0 0.0
      %1888 = vmatpush1.msra.mxu0 0.0
      %1889 = vmatprep.subr.mxu0 0.0
      %1890 = vmatpush1.msra.mxu0 0.0
      %1891 = vmatprep.subr.mxu0 0.0
      %1892 = vmatpush1.msra.mxu0 0.0
      %1893 = vmatprep.subr.mxu0 0.0
      %1894 = vmatpush1.msra.mxu0 0.0
      %1895 = vmatprep.subr.mxu0 0.0
      %1896 = vmatpush1.msra.mxu0 0.0
      %1897 = vmatprep.subr.mxu0 0.0
      %1898 = vmatpush1.msra.mxu0 0.0
      %1899 = vmatprep.subr.mxu0 0.0
      %1900 = vmatpush1.msra.mxu0 0.0
      %1901 = vmatprep.subr.mxu0 0.0
      %1902 = vmatpush1.msra.mxu0 %v1451
      %1903 = vmatprep.subr.mxu0 0.0
      %1904 = vmatpush2.msra.mxu0 0.0
      %1905 = vmatprep.subr.mxu0 0.0
      %1906 = vmatpush2.msra.mxu0 0.0
      %1907 = vmatprep.subr.mxu0 0.0
      %1908 = vmatpush2.msra.mxu0 0.0
      %1909 = vmatprep.subr.mxu0 0.0
      %1910 = vmatpush2.msra.mxu0 0.0
      %1911 = vmatprep.subr.mxu0 0.0
      %1912 = vmatpush2.msra.mxu0 0.0
      %1913 = vmatprep.subr.mxu0 0.0
      %1914 = vmatpush2.msra.mxu0 0.0
      %1915 = vmatprep.subr.mxu0 0.0
      %1916 = vmatpush2.msra.mxu0 0.0
      %1917 = vmatprep.subr.mxu0 0.0
      %1918 = vmatpush2.msra.mxu0 0.0
      %1919 = vmatprep.subr.mxu0 0.0
      %1920 = vmatpush2.msra.mxu0 0.0
      %1921 = vmatprep.subr.mxu0 0.0
      %1922 = vmatpush2.msra.mxu0 0.0
      %1923 = vmatprep.subr.mxu0 0.0
      %1924 = vmatpush2.msra.mxu0 0.0
      %1925 = vmatprep.subr.mxu0 0.0
      %1926 = vmatpush2.msra.mxu0 0.0
      %1927 = vmatprep.subr.mxu0 0.0
      %1928 = vmatpush2.msra.mxu0 0.0
      %1929 = vmatprep.subr.mxu0 0.0
      %1930 = vmatpush2.msra.mxu0 0.0
      %1931 = vmatprep.subr.mxu0 0.0
      %1932 = vmatpush2.msra.mxu0 0.0
      %1933 = vmatprep.subr.mxu0 0.0
      %1934 = vmatpush2.msra.mxu0 0.0
      %1935 = vmatprep.mubr.f32.mxu0 0.0
      %1936 = vmatmul.mubr.f32.gmra.mxu0 %v1866
      %v1937 = vpop.f32.mrf.mxu0
      %v1938 = vadd.f32 0.0, %v1937
      %v1939 = vpop.f32.mrf.mxu0
      %1940 = vmatprep.mubr.f32.mxu0 0.0
      %1941 = vmatmul.mubr.f32.gmra.mxu0 %v1869
      %v1942 = vpop.f32.mrf.mxu0
      %v1943 = vadd.f32 0.0, %v1942
      %v1944 = vpop.f32.mrf.mxu0
      %1945 = vdwg.mxu0
      %v1947 = vsel %vm1463, %v1653, 0
      %v1950 = vsel %vm1463, %v1658, 0
      %1952 = vmatprep.subr.mxu0 0.0
      %1953 = vmatpush1.msra.mxu0 0.0
      %1954 = vmatprep.subr.mxu0 0.0
      %1955 = vmatpush1.msra.mxu0 0.0
      %1956 = vmatprep.subr.mxu0 0.0
      %1957 = vmatpush1.msra.mxu0 0.0
      %1958 = vmatprep.subr.mxu0 0.0
      %1959 = vmatpush1.msra.mxu0 0.0
      %1960 = vmatprep.subr.mxu0 0.0
      %1961 = vmatpush1.msra.mxu0 0.0
      %1962 = vmatprep.subr.mxu0 0.0
      %1963 = vmatpush1.msra.mxu0 0.0
      %1964 = vmatprep.subr.mxu0 0.0
      %1965 = vmatpush1.msra.mxu0 0.0
      %1966 = vmatprep.subr.mxu0 0.0
      %1967 = vmatpush1.msra.mxu0 0.0
      %1968 = vmatprep.subr.mxu0 0.0
      %1969 = vmatpush1.msra.mxu0 0.0
      %1970 = vmatprep.subr.mxu0 0.0
      %1971 = vmatpush1.msra.mxu0 0.0
      %1972 = vmatprep.subr.mxu0 0.0
      %1973 = vmatpush1.msra.mxu0 0.0
      %1974 = vmatprep.subr.mxu0 0.0
      %1975 = vmatpush1.msra.mxu0 0.0
      %1976 = vmatprep.subr.mxu0 0.0
      %1977 = vmatpush1.msra.mxu0 0.0
      %1978 = vmatprep.subr.mxu0 0.0
      %1979 = vmatpush1.msra.mxu0 0.0
      %1980 = vmatprep.subr.mxu0 0.0
      %1981 = vmatpush1.msra.mxu0 0.0
      %1982 = vmatprep.subr.mxu0 0.0
      %1983 = vmatpush1.msra.mxu0 %v1450
      %1984 = vmatprep.subr.mxu0 0.0
      %1985 = vmatpush2.msra.mxu0 0.0
      %1986 = vmatprep.subr.mxu0 0.0
      %1987 = vmatpush2.msra.mxu0 0.0
      %1988 = vmatprep.subr.mxu0 0.0
      %1989 = vmatpush2.msra.mxu0 0.0
      %1990 = vmatprep.subr.mxu0 0.0
      %1991 = vmatpush2.msra.mxu0 0.0
      %1992 = vmatprep.subr.mxu0 0.0
      %1993 = vmatpush2.msra.mxu0 0.0
      %1994 = vmatprep.subr.mxu0 0.0
      %1995 = vmatpush2.msra.mxu0 0.0
      %1996 = vmatprep.subr.mxu0 0.0
      %1997 = vmatpush2.msra.mxu0 0.0
      %1998 = vmatprep.subr.mxu0 0.0
      %1999 = vmatpush2.msra.mxu0 0.0
      %2000 = vmatprep.subr.mxu0 0.0
      %2001 = vmatpush2.msra.mxu0 0.0
      %2002 = vmatprep.subr.mxu0 0.0
      %2003 = vmatpush2.msra.mxu0 0.0
      %2004 = vmatprep.subr.mxu0 0.0
      %2005 = vmatpush2.msra.mxu0 0.0
      %2006 = vmatprep.subr.mxu0 0.0
      %2007 = vmatpush2.msra.mxu0 0.0
      %2008 = vmatprep.subr.mxu0 0.0
      %2009 = vmatpush2.msra.mxu0 0.0
      %2010 = vmatprep.subr.mxu0 0.0
      %2011 = vmatpush2.msra.mxu0 0.0
      %2012 = vmatprep.subr.mxu0 0.0
      %2013 = vmatpush2.msra.mxu0 0.0
      %2014 = vmatprep.subr.mxu0 0.0
      %2015 = vmatpush2.msra.mxu0 0.0
      %2016 = vmatprep.mubr.f32.mxu0 0.0
      %2017 = vmatmul.mubr.f32.gmra.mxu0 %v1947
      %v2018 = vpop.f32.mrf.mxu0
      %v2019 = vadd.f32 %v1938, %v2018
      %v2020 = vpop.f32.mrf.mxu0
      %2021 = vmatprep.mubr.f32.mxu0 0.0
      %2022 = vmatmul.mubr.f32.gmra.mxu0 %v1950
      %v2023 = vpop.f32.mrf.mxu0
      %v2024 = vadd.f32 %v1943, %v2023
      %v2025 = vpop.f32.mrf.mxu0
      %2026 = vdwg.mxu0
      %2027 = vrot.lane.b32.xlu0 %v1442, 112
      %v2028 = vpop.permute.xlu0 %2027
      %2029 = vrot.lane.b32.xlu0 %v1447, 112
      %v2030 = vpop.permute.xlu0 %2029
      %2031 = vrot.lane.b32.xlu0 %v1442, 80
      %v2032 = vpop.permute.xlu0 %2031
      %2033 = vrot.lane.b32.xlu0 %v1447, 80
      %v2034 = vpop.permute.xlu0 %2033
      %v2035 = vsel %vm1463, %v2028, 0
      %v2037 = vsel %vm1463, %v2030, 0
      %v2039 = vsel %vm1463, %v2032, 0
      %v2041 = vsel %vm1463, %v2034, 0
      %2043 = vmatprep.subr.mxu0 0.0
      %2044 = vmatpush1.xpose.msra.mxu0 0.0
      %2045 = vmatprep.subr.mxu0 0.0
      %2046 = vmatpush1.xpose.msra.mxu0 0.0
      %2047 = vmatprep.subr.mxu0 0.0
      %2048 = vmatpush1.xpose.msra.mxu0 0.0
      %2049 = vmatprep.subr.mxu0 0.0
      %2050 = vmatpush1.xpose.msra.mxu0 0.0
      %2051 = vmatprep.subr.mxu0 0.0
      %2052 = vmatpush1.xpose.msra.mxu0 0.0
      %2053 = vmatprep.subr.mxu0 0.0
      %2054 = vmatpush1.xpose.msra.mxu0 0.0
      %2055 = vmatprep.subr.mxu0 0.0
      %2056 = vmatpush1.xpose.msra.mxu0 0.0
      %2057 = vmatprep.subr.mxu0 0.0
      %2058 = vmatpush1.xpose.msra.mxu0 0.0
      %2059 = vmatprep.subr.mxu0 0.0
      %2060 = vmatpush1.xpose.msra.mxu0 0.0
      %2061 = vmatprep.subr.mxu0 0.0
      %2062 = vmatpush1.xpose.msra.mxu0 0.0
      %2063 = vmatprep.subr.mxu0 0.0
      %2064 = vmatpush1.xpose.msra.mxu0 0.0
      %2065 = vmatprep.subr.mxu0 0.0
      %2066 = vmatpush1.xpose.msra.mxu0 0.0
      %2067 = vmatprep.subr.mxu0 0.0
      %2068 = vmatpush1.xpose.msra.mxu0 0.0
      %2069 = vmatprep.subr.mxu0 0.0
      %2070 = vmatpush1.xpose.msra.mxu0 0.0
      %2071 = vmatprep.subr.mxu0 0.0
      %2072 = vmatpush1.xpose.msra.mxu0 %v2041
      %2073 = vmatprep.subr.mxu0 0.0
      %2074 = vmatpush1.xpose.msra.mxu0 %v2039
      %2075 = vmatprep.subr.mxu0 0.0
      %2076 = vmatpush2.xpose.msra.mxu0 0.0
      %2077 = vmatprep.subr.mxu0 0.0
      %2078 = vmatpush2.xpose.msra.mxu0 0.0
      %2079 = vmatprep.subr.mxu0 0.0
      %2080 = vmatpush2.xpose.msra.mxu0 0.0
      %2081 = vmatprep.subr.mxu0 0.0
      %2082 = vmatpush2.xpose.msra.mxu0 0.0
      %2083 = vmatprep.subr.mxu0 0.0
      %2084 = vmatpush2.xpose.msra.mxu0 0.0
      %2085 = vmatprep.subr.mxu0 0.0
      %2086 = vmatpush2.xpose.msra.mxu0 0.0
      %2087 = vmatprep.subr.mxu0 0.0
      %2088 = vmatpush2.xpose.msra.mxu0 0.0
      %2089 = vmatprep.subr.mxu0 0.0
      %2090 = vmatpush2.xpose.msra.mxu0 0.0
      %2091 = vmatprep.subr.mxu0 0.0
      %2092 = vmatpush2.xpose.msra.mxu0 0.0
      %2093 = vmatprep.subr.mxu0 0.0
      %2094 = vmatpush2.xpose.msra.mxu0 0.0
      %2095 = vmatprep.subr.mxu0 0.0
      %2096 = vmatpush2.xpose.msra.mxu0 0.0
      %2097 = vmatprep.subr.mxu0 0.0
      %2098 = vmatpush2.xpose.msra.mxu0 0.0
      %2099 = vmatprep.subr.mxu0 0.0
      %2100 = vmatpush2.xpose.msra.mxu0 0.0
      %2101 = vmatprep.subr.mxu0 0.0
      %2102 = vmatpush2.xpose.msra.mxu0 0.0
      %2103 = vmatprep.subr.mxu0 0.0
      %2104 = vmatpush2.xpose.msra.mxu0 0.0
      %2105 = vmatprep.subr.mxu0 0.0
      %2106 = vmatpush2.xpose.msra.mxu0 0.0
      %2107 = vmatprep.mubr.f32.mxu0 0.0
      %2108 = vmatmul.mubr.f32.gmra.mxu0 %v2035
      %v2109 = vpop.f32.mrf.mxu0
      %v2110 = vadd.f32 0.0, %v2109
      %v2111 = vpop.f32.mrf.mxu0
      %2112 = vmatprep.mubr.f32.mxu0 0.0
      %2113 = vmatmul.mubr.f32.gmra.mxu0 %v2037
      %v2114 = vpop.f32.mrf.mxu0
      %v2115 = vadd.f32 0.0, %v2114
      %v2116 = vpop.f32.mrf.mxu0
      %2117 = vdwg.mxu0
      %v2118 = vmul.f32 %v2110, 0.35355338
      %v2119 = vmul.f32 %v2115, 0.35355338
      %v2120 = vadd.f32 %v2118, %v1455
      %v2121 = vadd.f32 %v2119, %v1456
      %v2122 = vsel %vm1551, %v2120, -inf
      %2123 = vmax.xlane.f32.xlu0 %v2122
      %v2124 = vpop.xlane.xlu0 %2123
      %v2125 = vsel %vm1551, %v2121, -inf
      %2126 = vmax.xlane.f32.xlu0 %v2125
      %v2127 = vpop.xlane.xlu0 %2126
      %v2128 = vsub.f32 %v2120, %v2124
      %v2129 = vsub.f32 %v2121, %v2127
      %v2130 = vmul.f32 %v2128, 1.442695
      %v2131 = vpow.pop %v2130
      %v2132 = vmul.f32 %v2129, 1.442695
      %v2133 = vpow.pop %v2132
      %v2134 = vsel %vm1551, %v2131, 0.0
      %2135 = vadd.xlane.f32.xlu0 %v2134
      %v2136 = vpop.xlane.xlu0 %2135
      %v2137 = vsel %vm1551, %v2133, 0.0
      %2138 = vadd.xlane.f32.xlu0 %v2137
      %v2139 = vpop.xlane.xlu0 %2138
      %v2140 = vrcp.pop %v2136
      %v2141 = vmul.f32 %v2131, %v2140
      %v2142 = vrcp.pop %v2139
      %v2143 = vmul.f32 %v2133, %v2142
      %2144 = vrot.lane.b32.xlu0 %v1442, 48
      %v2145 = vpop.permute.xlu0 %2144
      %2146 = vrot.lane.b32.xlu0 %v1447, 48
      %v2147 = vpop.permute.xlu0 %2146
      %v2151 = vsel %vm1551, %v2141, 0
      %v2154 = vsel %vm1551, %v2143, 0
      %2156 = vmatprep.subr.mxu0 0.0
      %2157 = vmatpush1.msra.mxu0 0.0
      %2158 = vmatprep.subr.mxu0 0.0
      %2159 = vmatpush1.msra.mxu0 0.0
      %2160 = vmatprep.subr.mxu0 0.0
      %2161 = vmatpush1.msra.mxu0 0.0
      %2162 = vmatprep.subr.mxu0 0.0
      %2163 = vmatpush1.msra.mxu0 0.0
      %2164 = vmatprep.subr.mxu0 0.0
      %2165 = vmatpush1.msra.mxu0 0.0
      %2166 = vmatprep.subr.mxu0 0.0
      %2167 = vmatpush1.msra.mxu0 0.0
      %2168 = vmatprep.subr.mxu0 0.0
      %2169 = vmatpush1.msra.mxu0 0.0
      %2170 = vmatprep.subr.mxu0 0.0
      %2171 = vmatpush1.msra.mxu0 0.0
      %2172 = vmatprep.subr.mxu0 0.0
      %2173 = vmatpush1.msra.mxu0 0.0
      %2174 = vmatprep.subr.mxu0 0.0
      %2175 = vmatpush1.msra.mxu0 0.0
      %2176 = vmatprep.subr.mxu0 0.0
      %2177 = vmatpush1.msra.mxu0 0.0
      %2178 = vmatprep.subr.mxu0 0.0
      %2179 = vmatpush1.msra.mxu0 0.0
      %2180 = vmatprep.subr.mxu0 0.0
      %2181 = vmatpush1.msra.mxu0 0.0
      %2182 = vmatprep.subr.mxu0 0.0
      %2183 = vmatpush1.msra.mxu0 0.0
      %2184 = vmatprep.subr.mxu0 0.0
      %2185 = vmatpush1.msra.mxu0 %v2147
      %2186 = vmatprep.subr.mxu0 0.0
      %2187 = vmatpush1.msra.mxu0 %v2145
      %2188 = vmatprep.subr.mxu0 0.0
      %2189 = vmatpush2.msra.mxu0 0.0
      %2190 = vmatprep.subr.mxu0 0.0
      %2191 = vmatpush2.msra.mxu0 0.0
      %2192 = vmatprep.subr.mxu0 0.0
      %2193 = vmatpush2.msra.mxu0 0.0
      %2194 = vmatprep.subr.mxu0 0.0
      %2195 = vmatpush2.msra.mxu0 0.0
      %2196 = vmatprep.subr.mxu0 0.0
      %2197 = vmatpush2.msra.mxu0 0.0
      %2198 = vmatprep.subr.mxu0 0.0
      %2199 = vmatpush2.msra.mxu0 0.0
      %2200 = vmatprep.subr.mxu0 0.0
      %2201 = vmatpush2.msra.mxu0 0.0
      %2202 = vmatprep.subr.mxu0 0.0
      %2203 = vmatpush2.msra.mxu0 0.0
      %2204 = vmatprep.subr.mxu0 0.0
      %2205 = vmatpush2.msra.mxu0 0.0
      %2206 = vmatprep.subr.mxu0 0.0
      %2207 = vmatpush2.msra.mxu0 0.0
      %2208 = vmatprep.subr.mxu0 0.0
      %2209 = vmatpush2.msra.mxu0 0.0
      %2210 = vmatprep.subr.mxu0 0.0
      %2211 = vmatpush2.msra.mxu0 0.0
      %2212 = vmatprep.subr.mxu0 0.0
      %2213 = vmatpush2.msra.mxu0 0.0
      %2214 = vmatprep.subr.mxu0 0.0
      %2215 = vmatpush2.msra.mxu0 0.0
      %2216 = vmatprep.subr.mxu0 0.0
      %2217 = vmatpush2.msra.mxu0 0.0
      %2218 = vmatprep.subr.mxu0 0.0
      %2219 = vmatpush2.msra.mxu0 0.0
      %2220 = vmatprep.mubr.f32.mxu0 0.0
      %2221 = vmatmul.mubr.f32.gmra.mxu0 %v2151
      %v2222 = vpop.f32.mrf.mxu0
      %v2223 = vadd.f32 0.0, %v2222
      %v2224 = vpop.f32.mrf.mxu0
      %2225 = vmatprep.mubr.f32.mxu0 0.0
      %2226 = vmatmul.mubr.f32.gmra.mxu0 %v2154
      %v2227 = vpop.f32.mrf.mxu0
      %v2228 = vadd.f32 0.0, %v2227
      %v2229 = vpop.f32.mrf.mxu0
      %2230 = vdwg.mxu0
      %v2232 = vsel %vm1463, %v2223, 0
      %v2235 = vsel %vm1463, %v2228, 0
      %2237 = vmatprep.subr.mxu0 0.0
      %2238 = vmatpush1.msra.mxu0 0.0
      %2239 = vmatprep.subr.mxu0 0.0
      %2240 = vmatpush1.msra.mxu0 0.0
      %2241 = vmatprep.subr.mxu0 0.0
      %2242 = vmatpush1.msra.mxu0 0.0
      %2243 = vmatprep.subr.mxu0 0.0
      %2244 = vmatpush1.msra.mxu0 0.0
      %2245 = vmatprep.subr.mxu0 0.0
      %2246 = vmatpush1.msra.mxu0 0.0
      %2247 = vmatprep.subr.mxu0 0.0
      %2248 = vmatpush1.msra.mxu0 0.0
      %2249 = vmatprep.subr.mxu0 0.0
      %2250 = vmatpush1.msra.mxu0 0.0
      %2251 = vmatprep.subr.mxu0 0.0
      %2252 = vmatpush1.msra.mxu0 0.0
      %2253 = vmatprep.subr.mxu0 0.0
      %2254 = vmatpush1.msra.mxu0 0.0
      %2255 = vmatprep.subr.mxu0 0.0
      %2256 = vmatpush1.msra.mxu0 0.0
      %2257 = vmatprep.subr.mxu0 0.0
      %2258 = vmatpush1.msra.mxu0 0.0
      %2259 = vmatprep.subr.mxu0 0.0
      %2260 = vmatpush1.msra.mxu0 0.0
      %2261 = vmatprep.subr.mxu0 0.0
      %2262 = vmatpush1.msra.mxu0 0.0
      %2263 = vmatprep.subr.mxu0 0.0
      %2264 = vmatpush1.msra.mxu0 0.0
      %2265 = vmatprep.subr.mxu0 0.0
      %2266 = vmatpush1.msra.mxu0 0.0
      %2267 = vmatprep.subr.mxu0 0.0
      %2268 = vmatpush1.msra.mxu0 %v1452
      %2269 = vmatprep.subr.mxu0 0.0
      %2270 = vmatpush2.msra.mxu0 0.0
      %2271 = vmatprep.subr.mxu0 0.0
      %2272 = vmatpush2.msra.mxu0 0.0
      %2273 = vmatprep.subr.mxu0 0.0
      %2274 = vmatpush2.msra.mxu0 0.0
      %2275 = vmatprep.subr.mxu0 0.0
      %2276 = vmatpush2.msra.mxu0 0.0
      %2277 = vmatprep.subr.mxu0 0.0
      %2278 = vmatpush2.msra.mxu0 0.0
      %2279 = vmatprep.subr.mxu0 0.0
      %2280 = vmatpush2.msra.mxu0 0.0
      %2281 = vmatprep.subr.mxu0 0.0
      %2282 = vmatpush2.msra.mxu0 0.0
      %2283 = vmatprep.subr.mxu0 0.0
      %2284 = vmatpush2.msra.mxu0 0.0
      %2285 = vmatprep.subr.mxu0 0.0
      %2286 = vmatpush2.msra.mxu0 0.0
      %2287 = vmatprep.subr.mxu0 0.0
      %2288 = vmatpush2.msra.mxu0 0.0
      %2289 = vmatprep.subr.mxu0 0.0
      %2290 = vmatpush2.msra.mxu0 0.0
      %2291 = vmatprep.subr.mxu0 0.0
      %2292 = vmatpush2.msra.mxu0 0.0
      %2293 = vmatprep.subr.mxu0 0.0
      %2294 = vmatpush2.msra.mxu0 0.0
      %2295 = vmatprep.subr.mxu0 0.0
      %2296 = vmatpush2.msra.mxu0 0.0
      %2297 = vmatprep.subr.mxu0 0.0
      %2298 = vmatpush2.msra.mxu0 0.0
      %2299 = vmatprep.subr.mxu0 0.0
      %2300 = vmatpush2.msra.mxu0 0.0
      %2301 = vmatprep.mubr.f32.mxu0 0.0
      %2302 = vmatmul.mubr.f32.gmra.mxu0 %v2232
      %v2303 = vpop.f32.mrf.mxu0
      %v2304 = vadd.f32 0.0, %v2303
      %v2305 = vpop.f32.mrf.mxu0
      %2306 = vmatprep.mubr.f32.mxu0 0.0
      %2307 = vmatmul.mubr.f32.gmra.mxu0 %v2235
      %v2308 = vpop.f32.mrf.mxu0
      %v2309 = vadd.f32 0.0, %v2308
      %v2310 = vpop.f32.mrf.mxu0
      %2311 = vdwg.mxu0
      %v2312 = vadd.f32 %v2019, %v2304
      %v2313 = vadd.f32 %v2024, %v2309
      %2314 = vrot.lane.b32.xlu0 %v1442, 104
      %v2315 = vpop.permute.xlu0 %2314
      %2316 = vrot.lane.b32.xlu0 %v1447, 104
      %v2317 = vpop.permute.xlu0 %2316
      %2318 = vrot.lane.b32.xlu0 %v1442, 72
      %v2319 = vpop.permute.xlu0 %2318
      %2320 = vrot.lane.b32.xlu0 %v1447, 72
      %v2321 = vpop.permute.xlu0 %2320
      %v2322 = vsel %vm1463, %v2315, 0
      %v2324 = vsel %vm1463, %v2317, 0
      %v2326 = vsel %vm1463, %v2319, 0
      %v2328 = vsel %vm1463, %v2321, 0
      %2330 = vmatprep.subr.mxu0 0.0
      %2331 = vmatpush1.xpose.msra.mxu0 0.0
      %2332 = vmatprep.subr.mxu0 0.0
      %2333 = vmatpush1.xpose.msra.mxu0 0.0
      %2334 = vmatprep.subr.mxu0 0.0
      %2335 = vmatpush1.xpose.msra.mxu0 0.0
      %2336 = vmatprep.subr.mxu0 0.0
      %2337 = vmatpush1.xpose.msra.mxu0 0.0
      %2338 = vmatprep.subr.mxu0 0.0
      %2339 = vmatpush1.xpose.msra.mxu0 0.0
      %2340 = vmatprep.subr.mxu0 0.0
      %2341 = vmatpush1.xpose.msra.mxu0 0.0
      %2342 = vmatprep.subr.mxu0 0.0
      %2343 = vmatpush1.xpose.msra.mxu0 0.0
      %2344 = vmatprep.subr.mxu0 0.0
      %2345 = vmatpush1.xpose.msra.mxu0 0.0
      %2346 = vmatprep.subr.mxu0 0.0
      %2347 = vmatpush1.xpose.msra.mxu0 0.0
      %2348 = vmatprep.subr.mxu0 0.0
      %2349 = vmatpush1.xpose.msra.mxu0 0.0
      %2350 = vmatprep.subr.mxu0 0.0
      %2351 = vmatpush1.xpose.msra.mxu0 0.0
      %2352 = vmatprep.subr.mxu0 0.0
      %2353 = vmatpush1.xpose.msra.mxu0 0.0
      %2354 = vmatprep.subr.mxu0 0.0
      %2355 = vmatpush1.xpose.msra.mxu0 0.0
      %2356 = vmatprep.subr.mxu0 0.0
      %2357 = vmatpush1.xpose.msra.mxu0 0.0
      %2358 = vmatprep.subr.mxu0 0.0
      %2359 = vmatpush1.xpose.msra.mxu0 %v2328
      %2360 = vmatprep.subr.mxu0 0.0
      %2361 = vmatpush1.xpose.msra.mxu0 %v2326
      %2362 = vmatprep.subr.mxu0 0.0
      %2363 = vmatpush2.xpose.msra.mxu0 0.0
      %2364 = vmatprep.subr.mxu0 0.0
      %2365 = vmatpush2.xpose.msra.mxu0 0.0
      %2366 = vmatprep.subr.mxu0 0.0
      %2367 = vmatpush2.xpose.msra.mxu0 0.0
      %2368 = vmatprep.subr.mxu0 0.0
      %2369 = vmatpush2.xpose.msra.mxu0 0.0
      %2370 = vmatprep.subr.mxu0 0.0
      %2371 = vmatpush2.xpose.msra.mxu0 0.0
      %2372 = vmatprep.subr.mxu0 0.0
      %2373 = vmatpush2.xpose.msra.mxu0 0.0
      %2374 = vmatprep.subr.mxu0 0.0
      %2375 = vmatpush2.xpose.msra.mxu0 0.0
      %2376 = vmatprep.subr.mxu0 0.0
      %2377 = vmatpush2.xpose.msra.mxu0 0.0
      %2378 = vmatprep.subr.mxu0 0.0
      %2379 = vmatpush2.xpose.msra.mxu0 0.0
      %2380 = vmatprep.subr.mxu0 0.0
      %2381 = vmatpush2.xpose.msra.mxu0 0.0
      %2382 = vmatprep.subr.mxu0 0.0
      %2383 = vmatpush2.xpose.msra.mxu0 0.0
      %2384 = vmatprep.subr.mxu0 0.0
      %2385 = vmatpush2.xpose.msra.mxu0 0.0
      %2386 = vmatprep.subr.mxu0 0.0
      %2387 = vmatpush2.xpose.msra.mxu0 0.0
      %2388 = vmatprep.subr.mxu0 0.0
      %2389 = vmatpush2.xpose.msra.mxu0 0.0
      %2390 = vmatprep.subr.mxu0 0.0
      %2391 = vmatpush2.xpose.msra.mxu0 0.0
      %2392 = vmatprep.subr.mxu0 0.0
      %2393 = vmatpush2.xpose.msra.mxu0 0.0
      %2394 = vmatprep.mubr.f32.mxu0 0.0
      %2395 = vmatmul.mubr.f32.gmra.mxu0 %v2322
      %v2396 = vpop.f32.mrf.mxu0
      %v2397 = vadd.f32 0.0, %v2396
      %v2398 = vpop.f32.mrf.mxu0
      %2399 = vmatprep.mubr.f32.mxu0 0.0
      %2400 = vmatmul.mubr.f32.gmra.mxu0 %v2324
      %v2401 = vpop.f32.mrf.mxu0
      %v2402 = vadd.f32 0.0, %v2401
      %v2403 = vpop.f32.mrf.mxu0
      %2404 = vdwg.mxu0
      %v2405 = vmul.f32 %v2397, 0.35355338
      %v2406 = vmul.f32 %v2402, 0.35355338
      %v2407 = vadd.f32 %v2405, %v1455
      %v2408 = vadd.f32 %v2406, %v1456
      %v2409 = vsel %vm1551, %v2407, -inf
      %2410 = vmax.xlane.f32.xlu0 %v2409
      %v2411 = vpop.xlane.xlu0 %2410
      %v2412 = vsel %vm1551, %v2408, -inf
      %2413 = vmax.xlane.f32.xlu0 %v2412
      %v2414 = vpop.xlane.xlu0 %2413
      %v2415 = vsub.f32 %v2407, %v2411
      %v2416 = vsub.f32 %v2408, %v2414
      %v2417 = vmul.f32 %v2415, 1.442695
      %v2418 = vpow.pop %v2417
      %v2419 = vmul.f32 %v2416, 1.442695
      %v2420 = vpow.pop %v2419
      %v2421 = vsel %vm1551, %v2418, 0.0
      %2422 = vadd.xlane.f32.xlu0 %v2421
      %v2423 = vpop.xlane.xlu0 %2422
      %v2424 = vsel %vm1551, %v2420, 0.0
      %2425 = vadd.xlane.f32.xlu0 %v2424
      %v2426 = vpop.xlane.xlu0 %2425
      %v2427 = vrcp.pop %v2423
      %v2428 = vmul.f32 %v2418, %v2427
      %v2429 = vrcp.pop %v2426
      %v2430 = vmul.f32 %v2420, %v2429
      %2431 = vrot.lane.b32.xlu0 %v1442, 40
      %v2432 = vpop.permute.xlu0 %2431
      %2433 = vrot.lane.b32.xlu0 %v1447, 40
      %v2434 = vpop.permute.xlu0 %2433
      %v2438 = vsel %vm1551, %v2428, 0
      %v2441 = vsel %vm1551, %v2430, 0
      %2443 = vmatprep.subr.mxu0 0.0
      %2444 = vmatpush1.msra.mxu0 0.0
      %2445 = vmatprep.subr.mxu0 0.0
      %2446 = vmatpush1.msra.mxu0 0.0
      %2447 = vmatprep.subr.mxu0 0.0
      %2448 = vmatpush1.msra.mxu0 0.0
      %2449 = vmatprep.subr.mxu0 0.0
      %2450 = vmatpush1.msra.mxu0 0.0
      %2451 = vmatprep.subr.mxu0 0.0
      %2452 = vmatpush1.msra.mxu0 0.0
      %2453 = vmatprep.subr.mxu0 0.0
      %2454 = vmatpush1.msra.mxu0 0.0
      %2455 = vmatprep.subr.mxu0 0.0
      %2456 = vmatpush1.msra.mxu0 0.0
      %2457 = vmatprep.subr.mxu0 0.0
      %2458 = vmatpush1.msra.mxu0 0.0
      %2459 = vmatprep.subr.mxu0 0.0
      %2460 = vmatpush1.msra.mxu0 0.0
      %2461 = vmatprep.subr.mxu0 0.0
      %2462 = vmatpush1.msra.mxu0 0.0
      %2463 = vmatprep.subr.mxu0 0.0
      %2464 = vmatpush1.msra.mxu0 0.0
      %2465 = vmatprep.subr.mxu0 0.0
      %2466 = vmatpush1.msra.mxu0 0.0
      %2467 = vmatprep.subr.mxu0 0.0
      %2468 = vmatpush1.msra.mxu0 0.0
      %2469 = vmatprep.subr.mxu0 0.0
      %2470 = vmatpush1.msra.mxu0 0.0
      %2471 = vmatprep.subr.mxu0 0.0
      %2472 = vmatpush1.msra.mxu0 %v2434
      %2473 = vmatprep.subr.mxu0 0.0
      %2474 = vmatpush1.msra.mxu0 %v2432
      %2475 = vmatprep.subr.mxu0 0.0
      %2476 = vmatpush2.msra.mxu0 0.0
      %2477 = vmatprep.subr.mxu0 0.0
      %2478 = vmatpush2.msra.mxu0 0.0
      %2479 = vmatprep.subr.mxu0 0.0
      %2480 = vmatpush2.msra.mxu0 0.0
      %2481 = vmatprep.subr.mxu0 0.0
      %2482 = vmatpush2.msra.mxu0 0.0
      %2483 = vmatprep.subr.mxu0 0.0
      %2484 = vmatpush2.msra.mxu0 0.0
      %2485 = vmatprep.subr.mxu0 0.0
      %2486 = vmatpush2.msra.mxu0 0.0
      %2487 = vmatprep.subr.mxu0 0.0
      %2488 = vmatpush2.msra.mxu0 0.0
      %2489 = vmatprep.subr.mxu0 0.0
      %2490 = vmatpush2.msra.mxu0 0.0
      %2491 = vmatprep.subr.mxu0 0.0
      %2492 = vmatpush2.msra.mxu0 0.0
      %2493 = vmatprep.subr.mxu0 0.0
      %2494 = vmatpush2.msra.mxu0 0.0
      %2495 = vmatprep.subr.mxu0 0.0
      %2496 = vmatpush2.msra.mxu0 0.0
      %2497 = vmatprep.subr.mxu0 0.0
      %2498 = vmatpush2.msra.mxu0 0.0
      %2499 = vmatprep.subr.mxu0 0.0
      %2500 = vmatpush2.msra.mxu0 0.0
      %2501 = vmatprep.subr.mxu0 0.0
      %2502 = vmatpush2.msra.mxu0 0.0
      %2503 = vmatprep.subr.mxu0 0.0
      %2504 = vmatpush2.msra.mxu0 0.0
      %2505 = vmatprep.subr.mxu0 0.0
      %2506 = vmatpush2.msra.mxu0 0.0
      %2507 = vmatprep.mubr.f32.mxu0 0.0
      %2508 = vmatmul.mubr.f32.gmra.mxu0 %v2438
      %v2509 = vpop.f32.mrf.mxu0
      %v2510 = vadd.f32 0.0, %v2509
      %v2511 = vpop.f32.mrf.mxu0
      %2512 = vmatprep.mubr.f32.mxu0 0.0
      %2513 = vmatmul.mubr.f32.gmra.mxu0 %v2441
      %v2514 = vpop.f32.mrf.mxu0
      %v2515 = vadd.f32 0.0, %v2514
      %v2516 = vpop.f32.mrf.mxu0
      %2517 = vdwg.mxu0
      %v2519 = vsel %vm1463, %v2510, 0
      %v2522 = vsel %vm1463, %v2515, 0
      %2524 = vmatprep.subr.mxu0 0.0
      %2525 = vmatpush1.msra.mxu0 0.0
      %2526 = vmatprep.subr.mxu0 0.0
      %2527 = vmatpush1.msra.mxu0 0.0
      %2528 = vmatprep.subr.mxu0 0.0
      %2529 = vmatpush1.msra.mxu0 0.0
      %2530 = vmatprep.subr.mxu0 0.0
      %2531 = vmatpush1.msra.mxu0 0.0
      %2532 = vmatprep.subr.mxu0 0.0
      %2533 = vmatpush1.msra.mxu0 0.0
      %2534 = vmatprep.subr.mxu0 0.0
      %2535 = vmatpush1.msra.mxu0 0.0
      %2536 = vmatprep.subr.mxu0 0.0
      %2537 = vmatpush1.msra.mxu0 0.0
      %2538 = vmatprep.subr.mxu0 0.0
      %2539 = vmatpush1.msra.mxu0 0.0
      %2540 = vmatprep.subr.mxu0 0.0
      %2541 = vmatpush1.msra.mxu0 0.0
      %2542 = vmatprep.subr.mxu0 0.0
      %2543 = vmatpush1.msra.mxu0 0.0
      %2544 = vmatprep.subr.mxu0 0.0
      %2545 = vmatpush1.msra.mxu0 0.0
      %2546 = vmatprep.subr.mxu0 0.0
      %2547 = vmatpush1.msra.mxu0 0.0
      %2548 = vmatprep.subr.mxu0 0.0
      %2549 = vmatpush1.msra.mxu0 0.0
      %2550 = vmatprep.subr.mxu0 0.0
      %2551 = vmatpush1.msra.mxu0 0.0
      %2552 = vmatprep.subr.mxu0 0.0
      %2553 = vmatpush1.msra.mxu0 0.0
      %2554 = vmatprep.subr.mxu0 0.0
      %2555 = vmatpush1.msra.mxu0 %v1453
      %2556 = vmatprep.subr.mxu0 0.0
      %2557 = vmatpush2.msra.mxu0 0.0
      %2558 = vmatprep.subr.mxu0 0.0
      %2559 = vmatpush2.msra.mxu0 0.0
      %2560 = vmatprep.subr.mxu0 0.0
      %2561 = vmatpush2.msra.mxu0 0.0
      %2562 = vmatprep.subr.mxu0 0.0
      %2563 = vmatpush2.msra.mxu0 0.0
      %2564 = vmatprep.subr.mxu0 0.0
      %2565 = vmatpush2.msra.mxu0 0.0
      %2566 = vmatprep.subr.mxu0 0.0
      %2567 = vmatpush2.msra.mxu0 0.0
      %2568 = vmatprep.subr.mxu0 0.0
      %2569 = vmatpush2.msra.mxu0 0.0
      %2570 = vmatprep.subr.mxu0 0.0
      %2571 = vmatpush2.msra.mxu0 0.0
      %2572 = vmatprep.subr.mxu0 0.0
      %2573 = vmatpush2.msra.mxu0 0.0
      %2574 = vmatprep.subr.mxu0 0.0
      %2575 = vmatpush2.msra.mxu0 0.0
      %2576 = vmatprep.subr.mxu0 0.0
      %2577 = vmatpush2.msra.mxu0 0.0
      %2578 = vmatprep.subr.mxu0 0.0
      %2579 = vmatpush2.msra.mxu0 0.0
      %2580 = vmatprep.subr.mxu0 0.0
      %2581 = vmatpush2.msra.mxu0 0.0
      %2582 = vmatprep.subr.mxu0 0.0
      %2583 = vmatpush2.msra.mxu0 0.0
      %2584 = vmatprep.subr.mxu0 0.0
      %2585 = vmatpush2.msra.mxu0 0.0
      %2586 = vmatprep.subr.mxu0 0.0
      %2587 = vmatpush2.msra.mxu0 0.0
      %2588 = vmatprep.mubr.f32.mxu0 0.0
      %2589 = vmatmul.mubr.f32.gmra.mxu0 %v2519
      %v2590 = vpop.f32.mrf.mxu0
      %v2591 = vadd.f32 0.0, %v2590
      %v2592 = vpop.f32.mrf.mxu0
      %2593 = vmatprep.mubr.f32.mxu0 0.0
      %2594 = vmatmul.mubr.f32.gmra.mxu0 %v2522
      %v2595 = vpop.f32.mrf.mxu0
      %v2596 = vadd.f32 0.0, %v2595
      %v2597 = vpop.f32.mrf.mxu0
      %2598 = vdwg.mxu0
      %v2599 = vadd.f32 %v2312, %v2591
      %v2600 = vadd.f32 %v2313, %v2596
      %v2602 = vlaneseq
      %v2603 = vshrl.u32 %v2602, 7
      %v2604 = vsub.s32 0, %v2603
      %v2605 = vrot.slane %v1454, %v2604
      %v2607 = vadd.f32 %v2599, %v2605
      %v2608 = vadd.f32 %v2600, %v2605
      %v2609 = vadd.f32 %v1353, %v2607
      %v2610 = vadd.f32 %v1354, %v2608
      %v2611 = vld [vmem:[%s1190] sm:$0x1]
      %v2612 = vld [vmem:[%s1193] sm:$0x1]
      %v2613 = vsel %vm1368, %v2609, 0.0
      %2614 = vadd.xlane.f32.xlu0 %v2613
      %v2615 = vpop.xlane.xlu0 %2614
      %v2616 = vsel %vm1368, %v2610, 0.0
      %2617 = vadd.xlane.f32.xlu0 %v2616
      %v2618 = vpop.xlane.xlu0 %2617
      %v2619 = vrcp.pop 32.0
      %v2620 = vmul.f32 %v2615, %v2619
      %v2621 = vmul.f32 %v2618, %v2619
      %v2622 = vsub.f32 %v2609, %v2620
      %v2623 = vsub.f32 %v2610, %v2621
      %v2624 = vmul.f32 %v2622, %v2622
      %v2625 = vmul.f32 %v2623, %v2623
      %v2626 = vsel %vm1368, %v2624, 0.0
      %2627 = vadd.xlane.f32.xlu0 %v2626
      %v2628 = vpop.xlane.xlu0 %2627
      %v2629 = vsel %vm1368, %v2625, 0.0
      %2630 = vadd.xlane.f32.xlu0 %v2629
      %v2631 = vpop.xlane.xlu0 %2630
      %v2632 = vmul.f32 %v2628, %v2619
      %v2633 = vmul.f32 %v2631, %v2619
      %v2634 = vadd.f32 %v2632, 1e-05
      %v2635 = vadd.f32 %v2633, 1e-05
      %v2636 = vrsqrt.pop %v2634
      %v2637 = vrsqrt.pop %v2635
      %v2638 = vmul.f32 %v2622, %v2636
      %v2639 = vmul.f32 %v2623, %v2637
      %v2641 = vlaneseq
      %v2642 = vshrl.u32 %v2641, 7
      %v2643 = vsub.s32 0, %v2642
      %v2644 = vrot.slane %v2611, %v2643
      %v2646 = vmul.f32 %v2638, %v2644
      %v2647 = vmul.f32 %v2639, %v2644
      %v2649 = vlaneseq
      %v2650 = vshrl.u32 %v2649, 7
      %v2651 = vsub.s32 0, %v2650
      %v2652 = vrot.slane %v2612, %v2651
      %v2654 = vadd.f32 %v2646, %v2652
      %v2655 = vadd.f32 %v2647, %v2652
      %v2656 = vld [vmem:[%s1198] sm:$0xff]
      %v2657 = vld [vmem:[%s1198 + $0x8] sm:$0xff]
      %v2658 = vld [vmem:[%s1198 + $0x10] sm:$0xff]
      %v2659 = vld [vmem:[%s1198 + $0x18] sm:$0xff]
      %v2660 = vld [vmem:[%s1201] sm:$0x1]
      %v2662 = vlaneseq
      %v2663 = vshrl.u32 %v2662, 7
      %v2664 = vsub.s32 0, %v2663
      %v2665 = vrot.slane %v2660, %v2664
      %v2668 = vsel %vm1368, %v2654, 0
      %v2671 = vsel %vm1368, %v2655, 0
      %2673 = vmatprep.subr.mxu0 0.0
      %2674 = vmatpush1.msra.mxu0 0.0
      %2675 = vmatprep.subr.mxu0 0.0
      %2676 = vmatpush1.msra.mxu0 0.0
      %2677 = vmatprep.subr.mxu0 0.0
      %2678 = vmatpush1.msra.mxu0 0.0
      %2679 = vmatprep.subr.mxu0 0.0
      %2680 = vmatpush1.msra.mxu0 0.0
      %2681 = vmatprep.subr.mxu0 0.0
      %2682 = vmatpush1.msra.mxu0 0.0
      %2683 = vmatprep.subr.mxu0 0.0
      %2684 = vmatpush1.msra.mxu0 0.0
      %2685 = vmatprep.subr.mxu0 0.0
      %2686 = vmatpush1.msra.mxu0 0.0
      %2687 = vmatprep.subr.mxu0 0.0
      %2688 = vmatpush1.msra.mxu0 0.0
      %2689 = vmatprep.subr.mxu0 0.0
      %2690 = vmatpush1.msra.mxu0 0.0
      %2691 = vmatprep.subr.mxu0 0.0
      %2692 = vmatpush1.msra.mxu0 0.0
      %2693 = vmatprep.subr.mxu0 0.0
      %2694 = vmatpush1.msra.mxu0 0.0
      %2695 = vmatprep.subr.mxu0 0.0
      %2696 = vmatpush1.msra.mxu0 0.0
      %2697 = vmatprep.subr.mxu0 0.0
      %2698 = vmatpush1.msra.mxu0 %v2659
      %2699 = vmatprep.subr.mxu0 0.0
      %2700 = vmatpush1.msra.mxu0 %v2658
      %2701 = vmatprep.subr.mxu0 0.0
      %2702 = vmatpush1.msra.mxu0 %v2657
      %2703 = vmatprep.subr.mxu0 0.0
      %2704 = vmatpush1.msra.mxu0 %v2656
      %2705 = vmatprep.subr.mxu0 0.0
      %2706 = vmatpush2.msra.mxu0 0.0
      %2707 = vmatprep.subr.mxu0 0.0
      %2708 = vmatpush2.msra.mxu0 0.0
      %2709 = vmatprep.subr.mxu0 0.0
      %2710 = vmatpush2.msra.mxu0 0.0
      %2711 = vmatprep.subr.mxu0 0.0
      %2712 = vmatpush2.msra.mxu0 0.0
      %2713 = vmatprep.subr.mxu0 0.0
      %2714 = vmatpush2.msra.mxu0 0.0
      %2715 = vmatprep.subr.mxu0 0.0
      %2716 = vmatpush2.msra.mxu0 0.0
      %2717 = vmatprep.subr.mxu0 0.0
      %2718 = vmatpush2.msra.mxu0 0.0
      %2719 = vmatprep.subr.mxu0 0.0
      %2720 = vmatpush2.msra.mxu0 0.0
      %2721 = vmatprep.subr.mxu0 0.0
      %2722 = vmatpush2.msra.mxu0 0.0
      %2723 = vmatprep.subr.mxu0 0.0
      %2724 = vmatpush2.msra.mxu0 0.0
      %2725 = vmatprep.subr.mxu0 0.0
      %2726 = vmatpush2.msra.mxu0 0.0
      %2727 = vmatprep.subr.mxu0 0.0
      %2728 = vmatpush2.msra.mxu0 0.0
      %2729 = vmatprep.subr.mxu0 0.0
      %2730 = vmatpush2.msra.mxu0 0.0
      %2731 = vmatprep.subr.mxu0 0.0
      %2732 = vmatpush2.msra.mxu0 0.0
      %2733 = vmatprep.subr.mxu0 0.0
      %2734 = vmatpush2.msra.mxu0 0.0
      %2735 = vmatprep.subr.mxu0 0.0
      %2736 = vmatpush2.msra.mxu0 0.0
      %2737 = vmatprep.mubr.f32.mxu0 0.0
      %2738 = vmatmul.mubr.f32.gmra.mxu0 %v2668
      %v2739 = vpop.f32.mrf.mxu0
      %v2740 = vadd.f32 %v2665, %v2739
      %v2741 = vpop.f32.mrf.mxu0
      %2742 = vmatprep.mubr.f32.mxu0 0.0
      %2743 = vmatmul.mubr.f32.gmra.mxu0 %v2671
      %v2744 = vpop.f32.mrf.mxu0
      %v2745 = vadd.f32 %v2665, %v2744
      %v2746 = vpop.f32.mrf.mxu0
      %2747 = vdwg.mxu0
      %v2748 = vld [vmem:[%s1206] sm:$0xff]
      %v2749 = vld [vmem:[%s1206 + $0x8] sm:$0xff]
      %v2750 = vld [vmem:[%s1206 + $0x10] sm:$0xff]
      %v2751 = vld [vmem:[%s1206 + $0x18] sm:$0xff]
      %v2752 = vld [vmem:[%s1209] sm:$0x1]
      %v2754 = vlaneseq
      %v2755 = vshrl.u32 %v2754, 7
      %v2756 = vsub.s32 0, %v2755
      %v2757 = vrot.slane %v2752, %v2756
      %v2760 = vsel %vm1368, %v1355, 0
      %v2763 = vsel %vm1368, %v1356, 0
      %2765 = vmatprep.subr.mxu0 0.0
      %2766 = vmatpush1.msra.mxu0 0.0
      %2767 = vmatprep.subr.mxu0 0.0
      %2768 = vmatpush1.msra.mxu0 0.0
      %2769 = vmatprep.subr.mxu0 0.0
      %2770 = vmatpush1.msra.mxu0 0.0
      %2771 = vmatprep.subr.mxu0 0.0
      %2772 = vmatpush1.msra.mxu0 0.0
      %2773 = vmatprep.subr.mxu0 0.0
      %2774 = vmatpush1.msra.mxu0 0.0
      %2775 = vmatprep.subr.mxu0 0.0
      %2776 = vmatpush1.msra.mxu0 0.0
      %2777 = vmatprep.subr.mxu0 0.0
      %2778 = vmatpush1.msra.mxu0 0.0
      %2779 = vmatprep.subr.mxu0 0.0
      %2780 = vmatpush1.msra.mxu0 0.0
      %2781 = vmatprep.subr.mxu0 0.0
      %2782 = vmatpush1.msra.mxu0 0.0
      %2783 = vmatprep.subr.mxu0 0.0
      %2784 = vmatpush1.msra.mxu0 0.0
      %2785 = vmatprep.subr.mxu0 0.0
      %2786 = vmatpush1.msra.mxu0 0.0
      %2787 = vmatprep.subr.mxu0 0.0
      %2788 = vmatpush1.msra.mxu0 0.0
      %2789 = vmatprep.subr.mxu0 0.0
      %2790 = vmatpush1.msra.mxu0 %v2751
      %2791 = vmatprep.subr.mxu0 0.0
      %2792 = vmatpush1.msra.mxu0 %v2750
      %2793 = vmatprep.subr.mxu0 0.0
      %2794 = vmatpush1.msra.mxu0 %v2749
      %2795 = vmatprep.subr.mxu0 0.0
      %2796 = vmatpush1.msra.mxu0 %v2748
      %2797 = vmatprep.subr.mxu0 0.0
      %2798 = vmatpush2.msra.mxu0 0.0
      %2799 = vmatprep.subr.mxu0 0.0
      %2800 = vmatpush2.msra.mxu0 0.0
      %2801 = vmatprep.subr.mxu0 0.0
      %2802 = vmatpush2.msra.mxu0 0.0
      %2803 = vmatprep.subr.mxu0 0.0
      %2804 = vmatpush2.msra.mxu0 0.0
      %2805 = vmatprep.subr.mxu0 0.0
      %2806 = vmatpush2.msra.mxu0 0.0
      %2807 = vmatprep.subr.mxu0 0.0
      %2808 = vmatpush2.msra.mxu0 0.0
      %2809 = vmatprep.subr.mxu0 0.0
      %2810 = vmatpush2.msra.mxu0 0.0
      %2811 = vmatprep.subr.mxu0 0.0
      %2812 = vmatpush2.msra.mxu0 0.0
      %2813 = vmatprep.subr.mxu0 0.0
      %2814 = vmatpush2.msra.mxu0 0.0
      %2815 = vmatprep.subr.mxu0 0.0
      %2816 = vmatpush2.msra.mxu0 0.0
      %2817 = vmatprep.subr.mxu0 0.0
      %2818 = vmatpush2.msra.mxu0 0.0
      %2819 = vmatprep.subr.mxu0 0.0
      %2820 = vmatpush2.msra.mxu0 0.0
      %2821 = vmatprep.subr.mxu0 0.0
      %2822 = vmatpush2.msra.mxu0 0.0
      %2823 = vmatprep.subr.mxu0 0.0
      %2824 = vmatpush2.msra.mxu0 0.0
      %2825 = vmatprep.subr.mxu0 0.0
      %2826 = vmatpush2.msra.mxu0 0.0
      %2827 = vmatprep.subr.mxu0 0.0
      %2828 = vmatpush2.msra.mxu0 0.0
      %2829 = vmatprep.mubr.f32.mxu0 0.0
      %2830 = vmatmul.mubr.f32.gmra.mxu0 %v2760
      %v2831 = vpop.f32.mrf.mxu0
      %v2832 = vadd.f32 %v2757, %v2831
      %v2833 = vpop.f32.mrf.mxu0
      %2834 = vmatprep.mubr.f32.mxu0 0.0
      %2835 = vmatmul.mubr.f32.gmra.mxu0 %v2763
      %v2836 = vpop.f32.mrf.mxu0
      %v2837 = vadd.f32 %v2757, %v2836
      %v2838 = vpop.f32.mrf.mxu0
      %2839 = vdwg.mxu0
      %v2840 = vld [vmem:[%s1214] sm:$0xff]
      %v2841 = vld [vmem:[%s1214 + $0x8] sm:$0xff]
      %v2842 = vld [vmem:[%s1214 + $0x10] sm:$0xff]
      %v2843 = vld [vmem:[%s1214 + $0x18] sm:$0xff]
      %v2844 = vld [vmem:[%s1217] sm:$0x1]
      %v2845 = vld [vmem:[%s13] sm:$0xff]
      %v2846 = vld [vmem:[%s13 + $0x8] sm:$0xff]
      %v2848 = vsel %vm1463, %v2740, 0
      %v2851 = vsel %vm1463, %v2745, 0
      %v2854 = vsel %vm1463, %v2832, 0
      %v2857 = vsel %vm1463, %v2837, 0
      %2859 = vmatprep.subr.mxu0 0.0
      %2860 = vmatpush1.xpose.msra.mxu0 0.0
      %2861 = vmatprep.subr.mxu0 0.0
      %2862 = vmatpush1.xpose.msra.mxu0 0.0
      %2863 = vmatprep.subr.mxu0 0.0
      %2864 = vmatpush1.xpose.msra.mxu0 0.0
      %2865 = vmatprep.subr.mxu0 0.0
      %2866 = vmatpush1.xpose.msra.mxu0 0.0
      %2867 = vmatprep.subr.mxu0 0.0
      %2868 = vmatpush1.xpose.msra.mxu0 0.0
      %2869 = vmatprep.subr.mxu0 0.0
      %2870 = vmatpush1.xpose.msra.mxu0 0.0
      %2871 = vmatprep.subr.mxu0 0.0
      %2872 = vmatpush1.xpose.msra.mxu0 0.0
      %2873 = vmatprep.subr.mxu0 0.0
      %2874 = vmatpush1.xpose.msra.mxu0 0.0
      %2875 = vmatprep.subr.mxu0 0.0
      %2876 = vmatpush1.xpose.msra.mxu0 0.0
      %2877 = vmatprep.subr.mxu0 0.0
      %2878 = vmatpush1.xpose.msra.mxu0 0.0
      %2879 = vmatprep.subr.mxu0 0.0
      %2880 = vmatpush1.xpose.msra.mxu0 0.0
      %2881 = vmatprep.subr.mxu0 0.0
      %2882 = vmatpush1.xpose.msra.mxu0 0.0
      %2883 = vmatprep.subr.mxu0 0.0
      %2884 = vmatpush1.xpose.msra.mxu0 0.0
      %2885 = vmatprep.subr.mxu0 0.0
      %2886 = vmatpush1.xpose.msra.mxu0 0.0
      %2887 = vmatprep.subr.mxu0 0.0
      %2888 = vmatpush1.xpose.msra.mxu0 %v2857
      %2889 = vmatprep.subr.mxu0 0.0
      %2890 = vmatpush1.xpose.msra.mxu0 %v2854
      %2891 = vmatprep.subr.mxu0 0.0
      %2892 = vmatpush2.xpose.msra.mxu0 0.0
      %2893 = vmatprep.subr.mxu0 0.0
      %2894 = vmatpush2.xpose.msra.mxu0 0.0
      %2895 = vmatprep.subr.mxu0 0.0
      %2896 = vmatpush2.xpose.msra.mxu0 0.0
      %2897 = vmatprep.subr.mxu0 0.0
      %2898 = vmatpush2.xpose.msra.mxu0 0.0
      %2899 = vmatprep.subr.mxu0 0.0
      %2900 = vmatpush2.xpose.msra.mxu0 0.0
      %2901 = vmatprep.subr.mxu0 0.0
      %2902 = vmatpush2.xpose.msra.mxu0 0.0
      %2903 = vmatprep.subr.mxu0 0.0
      %2904 = vmatpush2.xpose.msra.mxu0 0.0
      %2905 = vmatprep.subr.mxu0 0.0
      %2906 = vmatpush2.xpose.msra.mxu0 0.0
      %2907 = vmatprep.subr.mxu0 0.0
      %2908 = vmatpush2.xpose.msra.mxu0 0.0
      %2909 = vmatprep.subr.mxu0 0.0
      %2910 = vmatpush2.xpose.msra.mxu0 0.0
      %2911 = vmatprep.subr.mxu0 0.0
      %2912 = vmatpush2.xpose.msra.mxu0 0.0
      %2913 = vmatprep.subr.mxu0 0.0
      %2914 = vmatpush2.xpose.msra.mxu0 0.0
      %2915 = vmatprep.subr.mxu0 0.0
      %2916 = vmatpush2.xpose.msra.mxu0 0.0
      %2917 = vmatprep.subr.mxu0 0.0
      %2918 = vmatpush2.xpose.msra.mxu0 0.0
      %2919 = vmatprep.subr.mxu0 0.0
      %2920 = vmatpush2.xpose.msra.mxu0 0.0
      %2921 = vmatprep.subr.mxu0 0.0
      %2922 = vmatpush2.xpose.msra.mxu0 0.0
      %2923 = vmatprep.mubr.f32.mxu0 0.0
      %2924 = vmatmul.mubr.f32.gmra.mxu0 %v2848
      %v2925 = vpop.f32.mrf.mxu0
      %v2926 = vadd.f32 0.0, %v2925
      %v2927 = vpop.f32.mrf.mxu0
      %2928 = vmatprep.mubr.f32.mxu0 0.0
      %2929 = vmatmul.mubr.f32.gmra.mxu0 %v2851
      %v2930 = vpop.f32.mrf.mxu0
      %v2931 = vadd.f32 0.0, %v2930
      %v2932 = vpop.f32.mrf.mxu0
      %2933 = vdwg.mxu0
      %v2934 = vmul.f32 %v2926, 0.35355338
      %v2935 = vmul.f32 %v2931, 0.35355338
      %v2936 = vadd.f32 %v2934, %v2845
      %v2937 = vadd.f32 %v2935, %v2846
      %v2938 = vsel %vm1551, %v2936, -inf
      %2939 = vmax.xlane.f32.xlu0 %v2938
      %v2940 = vpop.xlane.xlu0 %2939
      %v2941 = vsel %vm1551, %v2937, -inf
      %2942 = vmax.xlane.f32.xlu0 %v2941
      %v2943 = vpop.xlane.xlu0 %2942
      %v2944 = vsub.f32 %v2936, %v2940
      %v2945 = vsub.f32 %v2937, %v2943
      %v2946 = vmul.f32 %v2944, 1.442695
      %v2947 = vpow.pop %v2946
      %v2948 = vmul.f32 %v2945, 1.442695
      %v2949 = vpow.pop %v2948
      %v2950 = vsel %vm1551, %v2947, 0.0
      %2951 = vadd.xlane.f32.xlu0 %v2950
      %v2952 = vpop.xlane.xlu0 %2951
      %v2953 = vsel %vm1551, %v2949, 0.0
      %2954 = vadd.xlane.f32.xlu0 %v2953
      %v2955 = vpop.xlane.xlu0 %2954
      %v2956 = vrcp.pop %v2952
      %v2957 = vmul.f32 %v2947, %v2956
      %v2958 = vrcp.pop %v2955
      %v2959 = vmul.f32 %v2949, %v2958
      %2960 = vrot.lane.b32.xlu0 %v2832, 96
      %v2961 = vpop.permute.xlu0 %2960
      %2962 = vrot.lane.b32.xlu0 %v2837, 96
      %v2963 = vpop.permute.xlu0 %2962
      %v2967 = vsel %vm1551, %v2957, 0
      %v2970 = vsel %vm1551, %v2959, 0
      %2972 = vmatprep.subr.mxu0 0.0
      %2973 = vmatpush1.msra.mxu0 0.0
      %2974 = vmatprep.subr.mxu0 0.0
      %2975 = vmatpush1.msra.mxu0 0.0
      %2976 = vmatprep.subr.mxu0 0.0
      %2977 = vmatpush1.msra.mxu0 0.0
      %2978 = vmatprep.subr.mxu0 0.0
      %2979 = vmatpush1.msra.mxu0 0.0
      %2980 = vmatprep.subr.mxu0 0.0
      %2981 = vmatpush1.msra.mxu0 0.0
      %2982 = vmatprep.subr.mxu0 0.0
      %2983 = vmatpush1.msra.mxu0 0.0
      %2984 = vmatprep.subr.mxu0 0.0
      %2985 = vmatpush1.msra.mxu0 0.0
      %2986 = vmatprep.subr.mxu0 0.0
      %2987 = vmatpush1.msra.mxu0 0.0
      %2988 = vmatprep.subr.mxu0 0.0
      %2989 = vmatpush1.msra.mxu0 0.0
      %2990 = vmatprep.subr.mxu0 0.0
      %2991 = vmatpush1.msra.mxu0 0.0
      %2992 = vmatprep.subr.mxu0 0.0
      %2993 = vmatpush1.msra.mxu0 0.0
      %2994 = vmatprep.subr.mxu0 0.0
      %2995 = vmatpush1.msra.mxu0 0.0
      %2996 = vmatprep.subr.mxu0 0.0
      %2997 = vmatpush1.msra.mxu0 0.0
      %2998 = vmatprep.subr.mxu0 0.0
      %2999 = vmatpush1.msra.mxu0 0.0
      %3000 = vmatprep.subr.mxu0 0.0
      %3001 = vmatpush1.msra.mxu0 %v2963
      %3002 = vmatprep.subr.mxu0 0.0
      %3003 = vmatpush1.msra.mxu0 %v2961
      %3004 = vmatprep.subr.mxu0 0.0
      %3005 = vmatpush2.msra.mxu0 0.0
      %3006 = vmatprep.subr.mxu0 0.0
      %3007 = vmatpush2.msra.mxu0 0.0
      %3008 = vmatprep.subr.mxu0 0.0
      %3009 = vmatpush2.msra.mxu0 0.0
      %3010 = vmatprep.subr.mxu0 0.0
      %3011 = vmatpush2.msra.mxu0 0.0
      %3012 = vmatprep.subr.mxu0 0.0
      %3013 = vmatpush2.msra.mxu0 0.0
      %3014 = vmatprep.subr.mxu0 0.0
      %3015 = vmatpush2.msra.mxu0 0.0
      %3016 = vmatprep.subr.mxu0 0.0
      %3017 = vmatpush2.msra.mxu0 0.0
      %3018 = vmatprep.subr.mxu0 0.0
      %3019 = vmatpush2.msra.mxu0 0.0
      %3020 = vmatprep.subr.mxu0 0.0
      %3021 = vmatpush2.msra.mxu0 0.0
      %3022 = vmatprep.subr.mxu0 0.0
      %3023 = vmatpush2.msra.mxu0 0.0
      %3024 = vmatprep.subr.mxu0 0.0
      %3025 = vmatpush2.msra.mxu0 0.0
      %3026 = vmatprep.subr.mxu0 0.0
      %3027 = vmatpush2.msra.mxu0 0.0
      %3028 = vmatprep.subr.mxu0 0.0
      %3029 = vmatpush2.msra.mxu0 0.0
      %3030 = vmatprep.subr.mxu0 0.0
      %3031 = vmatpush2.msra.mxu0 0.0
      %3032 = vmatprep.subr.mxu0 0.0
      %3033 = vmatpush2.msra.mxu0 0.0
      %3034 = vmatprep.subr.mxu0 0.0
      %3035 = vmatpush2.msra.mxu0 0.0
      %3036 = vmatprep.mubr.f32.mxu0 0.0
      %3037 = vmatmul.mubr.f32.gmra.mxu0 %v2967
      %v3038 = vpop.f32.mrf.mxu0
      %v3039 = vadd.f32 0.0, %v3038
      %v3040 = vpop.f32.mrf.mxu0
      %3041 = vmatprep.mubr.f32.mxu0 0.0
      %3042 = vmatmul.mubr.f32.gmra.mxu0 %v2970
      %v3043 = vpop.f32.mrf.mxu0
      %v3044 = vadd.f32 0.0, %v3043
      %v3045 = vpop.f32.mrf.mxu0
      %3046 = vdwg.mxu0
      %3047 = vrot.lane.b32.xlu0 %v2740, 120
      %v3048 = vpop.permute.xlu0 %3047
      %3049 = vrot.lane.b32.xlu0 %v2745, 120
      %v3050 = vpop.permute.xlu0 %3049
      %3051 = vrot.lane.b32.xlu0 %v2832, 120
      %v3052 = vpop.permute.xlu0 %3051
      %3053 = vrot.lane.b32.xlu0 %v2837, 120
      %v3054 = vpop.permute.xlu0 %3053
      %v3055 = vsel %vm1463, %v3048, 0
      %v3057 = vsel %vm1463, %v3050, 0
      %v3059 = vsel %vm1463, %v3052, 0
      %v3061 = vsel %vm1463, %v3054, 0
      %3063 = vmatprep.subr.mxu0 0.0
      %3064 = vmatpush1.xpose.msra.mxu0 0.0
      %3065 = vmatprep.subr.mxu0 0.0
      %3066 = vmatpush1.xpose.msra.mxu0 0.0
      %3067 = vmatprep.subr.mxu0 0.0
      %3068 = vmatpush1.xpose.msra.mxu0 0.0
      %3069 = vmatprep.subr.mxu0 0.0
      %3070 = vmatpush1.xpose.msra.mxu0 0.0
      %3071 = vmatprep.subr.mxu0 0.0
      %3072 = vmatpush1.xpose.msra.mxu0 0.0
      %3073 = vmatprep.subr.mxu0 0.0
      %3074 = vmatpush1.xpose.msra.mxu0 0.0
      %3075 = vmatprep.subr.mxu0 0.0
      %3076 = vmatpush1.xpose.msra.mxu0 0.0
      %3077 = vmatprep.subr.mxu0 0.0
      %3078 = vmatpush1.xpose.msra.mxu0 0.0
      %3079 = vmatprep.subr.mxu0 0.0
      %3080 = vmatpush1.xpose.msra.mxu0 0.0
      %3081 = vmatprep.subr.mxu0 0.0
      %3082 = vmatpush1.xpose.msra.mxu0 0.0
      %3083 = vmatprep.subr.mxu0 0.0
      %3084 = vmatpush1.xpose.msra.mxu0 0.0
      %3085 = vmatprep.subr.mxu0 0.0
      %3086 = vmatpush1.xpose.msra.mxu0 0.0
      %3087 = vmatprep.subr.mxu0 0.0
      %3088 = vmatpush1.xpose.msra.mxu0 0.0
      %3089 = vmatprep.subr.mxu0 0.0
      %3090 = vmatpush1.xpose.msra.mxu0 0.0
      %3091 = vmatprep.subr.mxu0 0.0
      %3092 = vmatpush1.xpose.msra.mxu0 %v3061
      %3093 = vmatprep.subr.mxu0 0.0
      %3094 = vmatpush1.xpose.msra.mxu0 %v3059
      %3095 = vmatprep.subr.mxu0 0.0
      %3096 = vmatpush2.xpose.msra.mxu0 0.0
      %3097 = vmatprep.subr.mxu0 0.0
      %3098 = vmatpush2.xpose.msra.mxu0 0.0
      %3099 = vmatprep.subr.mxu0 0.0
      %3100 = vmatpush2.xpose.msra.mxu0 0.0
      %3101 = vmatprep.subr.mxu0 0.0
      %3102 = vmatpush2.xpose.msra.mxu0 0.0
      %3103 = vmatprep.subr.mxu0 0.0
      %3104 = vmatpush2.xpose.msra.mxu0 0.0
      %3105 = vmatprep.subr.mxu0 0.0
      %3106 = vmatpush2.xpose.msra.mxu0 0.0
      %3107 = vmatprep.subr.mxu0 0.0
      %3108 = vmatpush2.xpose.msra.mxu0 0.0
      %3109 = vmatprep.subr.mxu0 0.0
      %3110 = vmatpush2.xpose.msra.mxu0 0.0
      %3111 = vmatprep.subr.mxu0 0.0
      %3112 = vmatpush2.xpose.msra.mxu0 0.0
      %3113 = vmatprep.subr.mxu0 0.0
      %3114 = vmatpush2.xpose.msra.mxu0 0.0
      %3115 = vmatprep.subr.mxu0 0.0
      %3116 = vmatpush2.xpose.msra.mxu0 0.0
      %3117 = vmatprep.subr.mxu0 0.0
      %3118 = vmatpush2.xpose.msra.mxu0 0.0
      %3119 = vmatprep.subr.mxu0 0.0
      %3120 = vmatpush2.xpose.msra.mxu0 0.0
      %3121 = vmatprep.subr.mxu0 0.0
      %3122 = vmatpush2.xpose.msra.mxu0 0.0
      %3123 = vmatprep.subr.mxu0 0.0
      %3124 = vmatpush2.xpose.msra.mxu0 0.0
      %3125 = vmatprep.subr.mxu0 0.0
      %3126 = vmatpush2.xpose.msra.mxu0 0.0
      %3127 = vmatprep.mubr.f32.mxu0 0.0
      %3128 = vmatmul.mubr.f32.gmra.mxu0 %v3055
      %v3129 = vpop.f32.mrf.mxu0
      %v3130 = vadd.f32 0.0, %v3129
      %v3131 = vpop.f32.mrf.mxu0
      %3132 = vmatprep.mubr.f32.mxu0 0.0
      %3133 = vmatmul.mubr.f32.gmra.mxu0 %v3057
      %v3134 = vpop.f32.mrf.mxu0
      %v3135 = vadd.f32 0.0, %v3134
      %v3136 = vpop.f32.mrf.mxu0
      %3137 = vdwg.mxu0
      %v3138 = vmul.f32 %v3130, 0.35355338
      %v3139 = vmul.f32 %v3135, 0.35355338
      %v3140 = vadd.f32 %v3138, %v2845
      %v3141 = vadd.f32 %v3139, %v2846
      %v3142 = vsel %vm1551, %v3140, -inf
      %3143 = vmax.xlane.f32.xlu0 %v3142
      %v3144 = vpop.xlane.xlu0 %3143
      %v3145 = vsel %vm1551, %v3141, -inf
      %3146 = vmax.xlane.f32.xlu0 %v3145
      %v3147 = vpop.xlane.xlu0 %3146
      %v3148 = vsub.f32 %v3140, %v3144
      %v3149 = vsub.f32 %v3141, %v3147
      %v3150 = vmul.f32 %v3148, 1.442695
      %v3151 = vpow.pop %v3150
      %v3152 = vmul.f32 %v3149, 1.442695
      %v3153 = vpow.pop %v3152
      %v3154 = vsel %vm1551, %v3151, 0.0
      %3155 = vadd.xlane.f32.xlu0 %v3154
      %v3156 = vpop.xlane.xlu0 %3155
      %v3157 = vsel %vm1551, %v3153, 0.0
      %3158 = vadd.xlane.f32.xlu0 %v3157
      %v3159 = vpop.xlane.xlu0 %3158
      %v3160 = vrcp.pop %v3156
      %v3161 = vmul.f32 %v3151, %v3160
      %v3162 = vrcp.pop %v3159
      %v3163 = vmul.f32 %v3153, %v3162
      %3164 = vrot.lane.b32.xlu0 %v2832, 88
      %v3165 = vpop.permute.xlu0 %3164
      %3166 = vrot.lane.b32.xlu0 %v2837, 88
      %v3167 = vpop.permute.xlu0 %3166
      %v3171 = vsel %vm1551, %v3161, 0
      %v3174 = vsel %vm1551, %v3163, 0
      %3176 = vmatprep.subr.mxu0 0.0
      %3177 = vmatpush1.msra.mxu0 0.0
      %3178 = vmatprep.subr.mxu0 0.0
      %3179 = vmatpush1.msra.mxu0 0.0
      %3180 = vmatprep.subr.mxu0 0.0
      %3181 = vmatpush1.msra.mxu0 0.0
      %3182 = vmatprep.subr.mxu0 0.0
      %3183 = vmatpush1.msra.mxu0 0.0
      %3184 = vmatprep.subr.mxu0 0.0
      %3185 = vmatpush1.msra.mxu0 0.0
      %3186 = vmatprep.subr.mxu0 0.0
      %3187 = vmatpush1.msra.mxu0 0.0
      %3188 = vmatprep.subr.mxu0 0.0
      %3189 = vmatpush1.msra.mxu0 0.0
      %3190 = vmatprep.subr.mxu0 0.0
      %3191 = vmatpush1.msra.mxu0 0.0
      %3192 = vmatprep.subr.mxu0 0.0
      %3193 = vmatpush1.msra.mxu0 0.0
      %3194 = vmatprep.subr.mxu0 0.0
      %3195 = vmatpush1.msra.mxu0 0.0
      %3196 = vmatprep.subr.mxu0 0.0
      %3197 = vmatpush1.msra.mxu0 0.0
      %3198 = vmatprep.subr.mxu0 0.0
      %3199 = vmatpush1.msra.mxu0 0.0
      %3200 = vmatprep.subr.mxu0 0.0
      %3201 = vmatpush1.msra.mxu0 0.0
      %3202 = vmatprep.subr.mxu0 0.0
      %3203 = vmatpush1.msra.mxu0 0.0
      %3204 = vmatprep.subr.mxu0 0.0
      %3205 = vmatpush1.msra.mxu0 %v3167
      %3206 = vmatprep.subr.mxu0 0.0
      %3207 = vmatpush1.msra.mxu0 %v3165
      %3208 = vmatprep.subr.mxu0 0.0
      %3209 = vmatpush2.msra.mxu0 0.0
      %3210 = vmatprep.subr.mxu0 0.0
      %3211 = vmatpush2.msra.mxu0 0.0
      %3212 = vmatprep.subr.mxu0 0.0
      %3213 = vmatpush2.msra.mxu0 0.0
      %3214 = vmatprep.subr.mxu0 0.0
      %3215 = vmatpush2.msra.mxu0 0.0
      %3216 = vmatprep.subr.mxu0 0.0
      %3217 = vmatpush2.msra.mxu0 0.0
      %3218 = vmatprep.subr.mxu0 0.0
      %3219 = vmatpush2.msra.mxu0 0.0
      %3220 = vmatprep.subr.mxu0 0.0
      %3221 = vmatpush2.msra.mxu0 0.0
      %3222 = vmatprep.subr.mxu0 0.0
      %3223 = vmatpush2.msra.mxu0 0.0
      %3224 = vmatprep.subr.mxu0 0.0
      %3225 = vmatpush2.msra.mxu0 0.0
      %3226 = vmatprep.subr.mxu0 0.0
      %3227 = vmatpush2.msra.mxu0 0.0
      %3228 = vmatprep.subr.mxu0 0.0
      %3229 = vmatpush2.msra.mxu0 0.0
      %3230 = vmatprep.subr.mxu0 0.0
      %3231 = vmatpush2.msra.mxu0 0.0
      %3232 = vmatprep.subr.mxu0 0.0
      %3233 = vmatpush2.msra.mxu0 0.0
      %3234 = vmatprep.subr.mxu0 0.0
      %3235 = vmatpush2.msra.mxu0 0.0
      %3236 = vmatprep.subr.mxu0 0.0
      %3237 = vmatpush2.msra.mxu0 0.0
      %3238 = vmatprep.subr.mxu0 0.0
      %3239 = vmatpush2.msra.mxu0 0.0
      %3240 = vmatprep.mubr.f32.mxu0 0.0
      %3241 = vmatmul.mubr.f32.gmra.mxu0 %v3171
      %v3242 = vpop.f32.mrf.mxu0
      %v3243 = vadd.f32 0.0, %v3242
      %v3244 = vpop.f32.mrf.mxu0
      %3245 = vmatprep.mubr.f32.mxu0 0.0
      %3246 = vmatmul.mubr.f32.gmra.mxu0 %v3174
      %v3247 = vpop.f32.mrf.mxu0
      %v3248 = vadd.f32 0.0, %v3247
      %v3249 = vpop.f32.mrf.mxu0
      %3250 = vdwg.mxu0
      %v3252 = vsel %vm1463, %v3243, 0
      %v3255 = vsel %vm1463, %v3248, 0
      %3257 = vmatprep.subr.mxu0 0.0
      %3258 = vmatpush1.msra.mxu0 0.0
      %3259 = vmatprep.subr.mxu0 0.0
      %3260 = vmatpush1.msra.mxu0 0.0
      %3261 = vmatprep.subr.mxu0 0.0
      %3262 = vmatpush1.msra.mxu0 0.0
      %3263 = vmatprep.subr.mxu0 0.0
      %3264 = vmatpush1.msra.mxu0 0.0
      %3265 = vmatprep.subr.mxu0 0.0
      %3266 = vmatpush1.msra.mxu0 0.0
      %3267 = vmatprep.subr.mxu0 0.0
      %3268 = vmatpush1.msra.mxu0 0.0
      %3269 = vmatprep.subr.mxu0 0.0
      %3270 = vmatpush1.msra.mxu0 0.0
      %3271 = vmatprep.subr.mxu0 0.0
      %3272 = vmatpush1.msra.mxu0 0.0
      %3273 = vmatprep.subr.mxu0 0.0
      %3274 = vmatpush1.msra.mxu0 0.0
      %3275 = vmatprep.subr.mxu0 0.0
      %3276 = vmatpush1.msra.mxu0 0.0
      %3277 = vmatprep.subr.mxu0 0.0
      %3278 = vmatpush1.msra.mxu0 0.0
      %3279 = vmatprep.subr.mxu0 0.0
      %3280 = vmatpush1.msra.mxu0 0.0
      %3281 = vmatprep.subr.mxu0 0.0
      %3282 = vmatpush1.msra.mxu0 0.0
      %3283 = vmatprep.subr.mxu0 0.0
      %3284 = vmatpush1.msra.mxu0 0.0
      %3285 = vmatprep.subr.mxu0 0.0
      %3286 = vmatpush1.msra.mxu0 0.0
      %3287 = vmatprep.subr.mxu0 0.0
      %3288 = vmatpush1.msra.mxu0 %v2841
      %3289 = vmatprep.subr.mxu0 0.0
      %3290 = vmatpush2.msra.mxu0 0.0
      %3291 = vmatprep.subr.mxu0 0.0
      %3292 = vmatpush2.msra.mxu0 0.0
      %3293 = vmatprep.subr.mxu0 0.0
      %3294 = vmatpush2.msra.mxu0 0.0
      %3295 = vmatprep.subr.mxu0 0.0
      %3296 = vmatpush2.msra.mxu0 0.0
      %3297 = vmatprep.subr.mxu0 0.0
      %3298 = vmatpush2.msra.mxu0 0.0
      %3299 = vmatprep.subr.mxu0 0.0
      %3300 = vmatpush2.msra.mxu0 0.0
      %3301 = vmatprep.subr.mxu0 0.0
      %3302 = vmatpush2.msra.mxu0 0.0
      %3303 = vmatprep.subr.mxu0 0.0
      %3304 = vmatpush2.msra.mxu0 0.0
      %3305 = vmatprep.subr.mxu0 0.0
      %3306 = vmatpush2.msra.mxu0 0.0
      %3307 = vmatprep.subr.mxu0 0.0
      %3308 = vmatpush2.msra.mxu0 0.0
      %3309 = vmatprep.subr.mxu0 0.0
      %3310 = vmatpush2.msra.mxu0 0.0
      %3311 = vmatprep.subr.mxu0 0.0
      %3312 = vmatpush2.msra.mxu0 0.0
      %3313 = vmatprep.subr.mxu0 0.0
      %3314 = vmatpush2.msra.mxu0 0.0
      %3315 = vmatprep.subr.mxu0 0.0
      %3316 = vmatpush2.msra.mxu0 0.0
      %3317 = vmatprep.subr.mxu0 0.0
      %3318 = vmatpush2.msra.mxu0 0.0
      %3319 = vmatprep.subr.mxu0 0.0
      %3320 = vmatpush2.msra.mxu0 0.0
      %3321 = vmatprep.mubr.f32.mxu0 0.0
      %3322 = vmatmul.mubr.f32.gmra.mxu0 %v3252
      %v3323 = vpop.f32.mrf.mxu0
      %v3324 = vadd.f32 0.0, %v3323
      %v3325 = vpop.f32.mrf.mxu0
      %3326 = vmatprep.mubr.f32.mxu0 0.0
      %3327 = vmatmul.mubr.f32.gmra.mxu0 %v3255
      %v3328 = vpop.f32.mrf.mxu0
      %v3329 = vadd.f32 0.0, %v3328
      %v3330 = vpop.f32.mrf.mxu0
      %3331 = vdwg.mxu0
      %v3333 = vsel %vm1463, %v3039, 0
      %v3336 = vsel %vm1463, %v3044, 0
      %3338 = vmatprep.subr.mxu0 0.0
      %3339 = vmatpush1.msra.mxu0 0.0
      %3340 = vmatprep.subr.mxu0 0.0
      %3341 = vmatpush1.msra.mxu0 0.0
      %3342 = vmatprep.subr.mxu0 0.0
      %3343 = vmatpush1.msra.mxu0 0.0
      %3344 = vmatprep.subr.mxu0 0.0
      %3345 = vmatpush1.msra.mxu0 0.0
      %3346 = vmatprep.subr.mxu0 0.0
      %3347 = vmatpush1.msra.mxu0 0.0
      %3348 = vmatprep.subr.mxu0 0.0
      %3349 = vmatpush1.msra.mxu0 0.0
      %3350 = vmatprep.subr.mxu0 0.0
      %3351 = vmatpush1.msra.mxu0 0.0
      %3352 = vmatprep.subr.mxu0 0.0
      %3353 = vmatpush1.msra.mxu0 0.0
      %3354 = vmatprep.subr.mxu0 0.0
      %3355 = vmatpush1.msra.mxu0 0.0
      %3356 = vmatprep.subr.mxu0 0.0
      %3357 = vmatpush1.msra.mxu0 0.0
      %3358 = vmatprep.subr.mxu0 0.0
      %3359 = vmatpush1.msra.mxu0 0.0
      %3360 = vmatprep.subr.mxu0 0.0
      %3361 = vmatpush1.msra.mxu0 0.0
      %3362 = vmatprep.subr.mxu0 0.0
      %3363 = vmatpush1.msra.mxu0 0.0
      %3364 = vmatprep.subr.mxu0 0.0
      %3365 = vmatpush1.msra.mxu0 0.0
      %3366 = vmatprep.subr.mxu0 0.0
      %3367 = vmatpush1.msra.mxu0 0.0
      %3368 = vmatprep.subr.mxu0 0.0
      %3369 = vmatpush1.msra.mxu0 %v2840
      %3370 = vmatprep.subr.mxu0 0.0
      %3371 = vmatpush2.msra.mxu0 0.0
      %3372 = vmatprep.subr.mxu0 0.0
      %3373 = vmatpush2.msra.mxu0 0.0
      %3374 = vmatprep.subr.mxu0 0.0
      %3375 = vmatpush2.msra.mxu0 0.0
      %3376 = vmatprep.subr.mxu0 0.0
      %3377 = vmatpush2.msra.mxu0 0.0
      %3378 = vmatprep.subr.mxu0 0.0
      %3379 = vmatpush2.msra.mxu0 0.0
      %3380 = vmatprep.subr.mxu0 0.0
      %3381 = vmatpush2.msra.mxu0 0.0
      %3382 = vmatprep.subr.mxu0 0.0
      %3383 = vmatpush2.msra.mxu0 0.0
      %3384 = vmatprep.subr.mxu0 0.0
      %3385 = vmatpush2.msra.mxu0 0.0
      %3386 = vmatprep.subr.mxu0 0.0
      %3387 = vmatpush2.msra.mxu0 0.0
      %3388 = vmatprep.subr.mxu0 0.0
      %3389 = vmatpush2.msra.mxu0 0.0
      %3390 = vmatprep.subr.mxu0 0.0
      %3391 = vmatpush2.msra.mxu0 0.0
      %3392 = vmatprep.subr.mxu0 0.0
      %3393 = vmatpush2.msra.mxu0 0.0
      %3394 = vmatprep.subr.mxu0 0.0
      %3395 = vmatpush2.msra.mxu0 0.0
      %3396 = vmatprep.subr.mxu0 0.0
      %3397 = vmatpush2.msra.mxu0 0.0
      %3398 = vmatprep.subr.mxu0 0.0
      %3399 = vmatpush2.msra.mxu0 0.0
      %3400 = vmatprep.subr.mxu0 0.0
      %3401 = vmatpush2.msra.mxu0 0.0
      %3402 = vmatprep.mubr.f32.mxu0 0.0
      %3403 = vmatmul.mubr.f32.gmra.mxu0 %v3333
      %v3404 = vpop.f32.mrf.mxu0
      %v3405 = vadd.f32 %v3324, %v3404
      %v3406 = vpop.f32.mrf.mxu0
      %3407 = vmatprep.mubr.f32.mxu0 0.0
      %3408 = vmatmul.mubr.f32.gmra.mxu0 %v3336
      %v3409 = vpop.f32.mrf.mxu0
      %v3410 = vadd.f32 %v3329, %v3409
      %v3411 = vpop.f32.mrf.mxu0
      %3412 = vdwg.mxu0
      %3413 = vrot.lane.b32.xlu0 %v2740, 112
      %v3414 = vpop.permute.xlu0 %3413
      %3415 = vrot.lane.b32.xlu0 %v2745, 112
      %v3416 = vpop.permute.xlu0 %3415
      %3417 = vrot.lane.b32.xlu0 %v2832, 112
      %v3418 = vpop.permute.xlu0 %3417
      %3419 = vrot.lane.b32.xlu0 %v2837, 112
      %v3420 = vpop.permute.xlu0 %3419
      %v3421 = vsel %vm1463, %v3414, 0
      %v3423 = vsel %vm1463, %v3416, 0
      %v3425 = vsel %vm1463, %v3418, 0
      %v3427 = vsel %vm1463, %v3420, 0
      %3429 = vmatprep.subr.mxu0 0.0
      %3430 = vmatpush1.xpose.msra.mxu0 0.0
      %3431 = vmatprep.subr.mxu0 0.0
      %3432 = vmatpush1.xpose.msra.mxu0 0.0
      %3433 = vmatprep.subr.mxu0 0.0
      %3434 = vmatpush1.xpose.msra.mxu0 0.0
      %3435 = vmatprep.subr.mxu0 0.0
      %3436 = vmatpush1.xpose.msra.mxu0 0.0
      %3437 = vmatprep.subr.mxu0 0.0
      %3438 = vmatpush1.xpose.msra.mxu0 0.0
      %3439 = vmatprep.subr.mxu0 0.0
      %3440 = vmatpush1.xpose.msra.mxu0 0.0
      %3441 = vmatprep.subr.mxu0 0.0
      %3442 = vmatpush1.xpose.msra.mxu0 0.0
      %3443 = vmatprep.subr.mxu0 0.0
      %3444 = vmatpush1.xpose.msra.mxu0 0.0
      %3445 = vmatprep.subr.mxu0 0.0
      %3446 = vmatpush1.xpose.msra.mxu0 0.0
      %3447 = vmatprep.subr.mxu0 0.0
      %3448 = vmatpush1.xpose.msra.mxu0 0.0
      %3449 = vmatprep.subr.mxu0 0.0
      %3450 = vmatpush1.xpose.msra.mxu0 0.0
      %3451 = vmatprep.subr.mxu0 0.0
      %3452 = vmatpush1.xpose.msra.mxu0 0.0
      %3453 = vmatprep.subr.mxu0 0.0
      %3454 = vmatpush1.xpose.msra.mxu0 0.0
      %3455 = vmatprep.subr.mxu0 0.0
      %3456 = vmatpush1.xpose.msra.mxu0 0.0
      %3457 = vmatprep.subr.mxu0 0.0
      %3458 = vmatpush1.xpose.msra.mxu0 %v3427
      %3459 = vmatprep.subr.mxu0 0.0
      %3460 = vmatpush1.xpose.msra.mxu0 %v3425
      %3461 = vmatprep.subr.mxu0 0.0
      %3462 = vmatpush2.xpose.msra.mxu0 0.0
      %3463 = vmatprep.subr.mxu0 0.0
      %3464 = vmatpush2.xpose.msra.mxu0 0.0
      %3465 = vmatprep.subr.mxu0 0.0
      %3466 = vmatpush2.xpose.msra.mxu0 0.0
      %3467 = vmatprep.subr.mxu0 0.0
      %3468 = vmatpush2.xpose.msra.mxu0 0.0
      %3469 = vmatprep.subr.mxu0 0.0
      %3470 = vmatpush2.xpose.msra.mxu0 0.0
      %3471 = vmatprep.subr.mxu0 0.0
      %3472 = vmatpush2.xpose.msra.mxu0 0.0
      %3473 = vmatprep.subr.mxu0 0.0
      %3474 = vmatpush2.xpose.msra.mxu0 0.0
      %3475 = vmatprep.subr.mxu0 0.0
      %3476 = vmatpush2.xpose.msra.mxu0 0.0
      %3477 = vmatprep.subr.mxu0 0.0
      %3478 = vmatpush2.xpose.msra.mxu0 0.0
      %3479 = vmatprep.subr.mxu0 0.0
      %3480 = vmatpush2.xpose.msra.mxu0 0.0
      %3481 = vmatprep.subr.mxu0 0.0
      %3482 = vmatpush2.xpose.msra.mxu0 0.0
      %3483 = vmatprep.subr.mxu0 0.0
      %3484 = vmatpush2.xpose.msra.mxu0 0.0
      %3485 = vmatprep.subr.mxu0 0.0
      %3486 = vmatpush2.xpose.msra.mxu0 0.0
      %3487 = vmatprep.subr.mxu0 0.0
      %3488 = vmatpush2.xpose.msra.mxu0 0.0
      %3489 = vmatprep.subr.mxu0 0.0
      %3490 = vmatpush2.xpose.msra.mxu0 0.0
      %3491 = vmatprep.subr.mxu0 0.0
      %3492 = vmatpush2.xpose.msra.mxu0 0.0
      %3493 = vmatprep.mubr.f32.mxu0 0.0
      %3494 = vmatmul.mubr.f32.gmra.mxu0 %v3421
      %v3495 = vpop.f32.mrf.mxu0
      %v3496 = vadd.f32 0.0, %v3495
      %v3497 = vpop.f32.mrf.mxu0
      %3498 = vmatprep.mubr.f32.mxu0 0.0
      %3499 = vmatmul.mubr.f32.gmra.mxu0 %v3423
      %v3500 = vpop.f32.mrf.mxu0
      %v3501 = vadd.f32 0.0, %v3500
      %v3502 = vpop.f32.mrf.mxu0
      %3503 = vdwg.mxu0
      %v3504 = vmul.f32 %v3496, 0.35355338
      %v3505 = vmul.f32 %v3501, 0.35355338
      %v3506 = vadd.f32 %v3504, %v2845
      %v3507 = vadd.f32 %v3505, %v2846
      %v3508 = vsel %vm1551, %v3506, -inf
      %3509 = vmax.xlane.f32.xlu0 %v3508
      %v3510 = vpop.xlane.xlu0 %3509
      %v3511 = vsel %vm1551, %v3507, -inf
      %3512 = vmax.xlane.f32.xlu0 %v3511
      %v3513 = vpop.xlane.xlu0 %3512
      %v3514 = vsub.f32 %v3506, %v3510
      %v3515 = vsub.f32 %v3507, %v3513
      %v3516 = vmul.f32 %v3514, 1.442695
      %v3517 = vpow.pop %v3516
      %v3518 = vmul.f32 %v3515, 1.442695
      %v3519 = vpow.pop %v3518
      %v3520 = vsel %vm1551, %v3517, 0.0
      %3521 = vadd.xlane.f32.xlu0 %v3520
      %v3522 = vpop.xlane.xlu0 %3521
      %v3523 = vsel %vm1551, %v3519, 0.0
      %3524 = vadd.xlane.f32.xlu0 %v3523
      %v3525 = vpop.xlane.xlu0 %3524
      %v3526 = vrcp.pop %v3522
      %v3527 = vmul.f32 %v3517, %v3526
      %v3528 = vrcp.pop %v3525
      %v3529 = vmul.f32 %v3519, %v3528
      %3530 = vrot.lane.b32.xlu0 %v2832, 80
      %v3531 = vpop.permute.xlu0 %3530
      %3532 = vrot.lane.b32.xlu0 %v2837, 80
      %v3533 = vpop.permute.xlu0 %3532
      %v3537 = vsel %vm1551, %v3527, 0
      %v3540 = vsel %vm1551, %v3529, 0
      %3542 = vmatprep.subr.mxu0 0.0
      %3543 = vmatpush1.msra.mxu0 0.0
      %3544 = vmatprep.subr.mxu0 0.0
      %3545 = vmatpush1.msra.mxu0 0.0
      %3546 = vmatprep.subr.mxu0 0.0
      %3547 = vmatpush1.msra.mxu0 0.0
      %3548 = vmatprep.subr.mxu0 0.0
      %3549 = vmatpush1.msra.mxu0 0.0
      %3550 = vmatprep.subr.mxu0 0.0
      %3551 = vmatpush1.msra.mxu0 0.0
      %3552 = vmatprep.subr.mxu0 0.0
      %3553 = vmatpush1.msra.mxu0 0.0
      %3554 = vmatprep.subr.mxu0 0.0
      %3555 = vmatpush1.msra.mxu0 0.0
      %3556 = vmatprep.subr.mxu0 0.0
      %3557 = vmatpush1.msra.mxu0 0.0
      %3558 = vmatprep.subr.mxu0 0.0
      %3559 = vmatpush1.msra.mxu0 0.0
      %3560 = vmatprep.subr.mxu0 0.0
      %3561 = vmatpush1.msra.mxu0 0.0
      %3562 = vmatprep.subr.mxu0 0.0
      %3563 = vmatpush1.msra.mxu0 0.0
      %3564 = vmatprep.subr.mxu0 0.0
      %3565 = vmatpush1.msra.mxu0 0.0
      %3566 = vmatprep.subr.mxu0 0.0
      %3567 = vmatpush1.msra.mxu0 0.0
      %3568 = vmatprep.subr.mxu0 0.0
      %3569 = vmatpush1.msra.mxu0 0.0
      %3570 = vmatprep.subr.mxu0 0.0
      %3571 = vmatpush1.msra.mxu0 %v3533
      %3572 = vmatprep.subr.mxu0 0.0
      %3573 = vmatpush1.msra.mxu0 %v3531
      %3574 = vmatprep.subr.mxu0 0.0
      %3575 = vmatpush2.msra.mxu0 0.0
      %3576 = vmatprep.subr.mxu0 0.0
      %3577 = vmatpush2.msra.mxu0 0.0
      %3578 = vmatprep.subr.mxu0 0.0
      %3579 = vmatpush2.msra.mxu0 0.0
      %3580 = vmatprep.subr.mxu0 0.0
      %3581 = vmatpush2.msra.mxu0 0.0
      %3582 = vmatprep.subr.mxu0 0.0
      %3583 = vmatpush2.msra.mxu0 0.0
      %3584 = vmatprep.subr.mxu0 0.0
      %3585 = vmatpush2.msra.mxu0 0.0
      %3586 = vmatprep.subr.mxu0 0.0
      %3587 = vmatpush2.msra.mxu0 0.0
      %3588 = vmatprep.subr.mxu0 0.0
      %3589 = vmatpush2.msra.mxu0 0.0
      %3590 = vmatprep.subr.mxu0 0.0
      %3591 = vmatpush2.msra.mxu0 0.0
      %3592 = vmatprep.subr.mxu0 0.0
      %3593 = vmatpush2.msra.mxu0 0.0
      %3594 = vmatprep.subr.mxu0 0.0
      %3595 = vmatpush2.msra.mxu0 0.0
      %3596 = vmatprep.subr.mxu0 0.0
      %3597 = vmatpush2.msra.mxu0 0.0
      %3598 = vmatprep.subr.mxu0 0.0
      %3599 = vmatpush2.msra.mxu0 0.0
      %3600 = vmatprep.subr.mxu0 0.0
      %3601 = vmatpush2.msra.mxu0 0.0
      %3602 = vmatprep.subr.mxu0 0.0
      %3603 = vmatpush2.msra.mxu0 0.0
      %3604 = vmatprep.subr.mxu0 0.0
      %3605 = vmatpush2.msra.mxu0 0.0
      %3606 = vmatprep.mubr.f32.mxu0 0.0
      %3607 = vmatmul.mubr.f32.gmra.mxu0 %v3537
      %v3608 = vpop.f32.mrf.mxu0
      %v3609 = vadd.f32 0.0, %v3608
      %v3610 = vpop.f32.mrf.mxu0
      %3611 = vmatprep.mubr.f32.mxu0 0.0
      %3612 = vmatmul.mubr.f32.gmra.mxu0 %v3540
      %v3613 = vpop.f32.mrf.mxu0
      %v3614 = vadd.f32 0.0, %v3613
      %v3615 = vpop.f32.mrf.mxu0
      %3616 = vdwg.mxu0
      %v3618 = vsel %vm1463, %v3609, 0
      %v3621 = vsel %vm1463, %v3614, 0
      %3623 = vmatprep.subr.mxu0 0.0
      %3624 = vmatpush1.msra.mxu0 0.0
      %3625 = vmatprep.subr.mxu0 0.0
      %3626 = vmatpush1.msra.mxu0 0.0
      %3627 = vmatprep.subr.mxu0 0.0
      %3628 = vmatpush1.msra.mxu0 0.0
      %3629 = vmatprep.subr.mxu0 0.0
      %3630 = vmatpush1.msra.mxu0 0.0
      %3631 = vmatprep.subr.mxu0 0.0
      %3632 = vmatpush1.msra.mxu0 0.0
      %3633 = vmatprep.subr.mxu0 0.0
      %3634 = vmatpush1.msra.mxu0 0.0
      %3635 = vmatprep.subr.mxu0 0.0
      %3636 = vmatpush1.msra.mxu0 0.0
      %3637 = vmatprep.subr.mxu0 0.0
      %3638 = vmatpush1.msra.mxu0 0.0
      %3639 = vmatprep.subr.mxu0 0.0
      %3640 = vmatpush1.msra.mxu0 0.0
      %3641 = vmatprep.subr.mxu0 0.0
      %3642 = vmatpush1.msra.mxu0 0.0
      %3643 = vmatprep.subr.mxu0 0.0
      %3644 = vmatpush1.msra.mxu0 0.0
      %3645 = vmatprep.subr.mxu0 0.0
      %3646 = vmatpush1.msra.mxu0 0.0
      %3647 = vmatprep.subr.mxu0 0.0
      %3648 = vmatpush1.msra.mxu0 0.0
      %3649 = vmatprep.subr.mxu0 0.0
      %3650 = vmatpush1.msra.mxu0 0.0
      %3651 = vmatprep.subr.mxu0 0.0
      %3652 = vmatpush1.msra.mxu0 0.0
      %3653 = vmatprep.subr.mxu0 0.0
      %3654 = vmatpush1.msra.mxu0 %v2842
      %3655 = vmatprep.subr.mxu0 0.0
      %3656 = vmatpush2.msra.mxu0 0.0
      %3657 = vmatprep.subr.mxu0 0.0
      %3658 = vmatpush2.msra.mxu0 0.0
      %3659 = vmatprep.subr.mxu0 0.0
      %3660 = vmatpush2.msra.mxu0 0.0
      %3661 = vmatprep.subr.mxu0 0.0
      %3662 = vmatpush2.msra.mxu0 0.0
      %3663 = vmatprep.subr.mxu0 0.0
      %3664 = vmatpush2.msra.mxu0 0.0
      %3665 = vmatprep.subr.mxu0 0.0
      %3666 = vmatpush2.msra.mxu0 0.0
      %3667 = vmatprep.subr.mxu0 0.0
      %3668 = vmatpush2.msra.mxu0 0.0
      %3669 = vmatprep.subr.mxu0 0.0
      %3670 = vmatpush2.msra.mxu0 0.0
      %3671 = vmatprep.subr.mxu0 0.0
      %3672 = vmatpush2.msra.mxu0 0.0
      %3673 = vmatprep.subr.mxu0 0.0
      %3674 = vmatpush2.msra.mxu0 0.0
      %3675 = vmatprep.subr.mxu0 0.0
      %3676 = vmatpush2.msra.mxu0 0.0
      %3677 = vmatprep.subr.mxu0 0.0
      %3678 = vmatpush2.msra.mxu0 0.0
      %3679 = vmatprep.subr.mxu0 0.0
      %3680 = vmatpush2.msra.mxu0 0.0
      %3681 = vmatprep.subr.mxu0 0.0
      %3682 = vmatpush2.msra.mxu0 0.0
      %3683 = vmatprep.subr.mxu0 0.0
      %3684 = vmatpush2.msra.mxu0 0.0
      %3685 = vmatprep.subr.mxu0 0.0
      %3686 = vmatpush2.msra.mxu0 0.0
      %3687 = vmatprep.mubr.f32.mxu0 0.0
      %3688 = vmatmul.mubr.f32.gmra.mxu0 %v3618
      %v3689 = vpop.f32.mrf.mxu0
      %v3690 = vadd.f32 0.0, %v3689
      %v3691 = vpop.f32.mrf.mxu0
      %3692 = vmatprep.mubr.f32.mxu0 0.0
      %3693 = vmatmul.mubr.f32.gmra.mxu0 %v3621
      %v3694 = vpop.f32.mrf.mxu0
      %v3695 = vadd.f32 0.0, %v3694
      %v3696 = vpop.f32.mrf.mxu0
      %3697 = vdwg.mxu0
      %v3698 = vadd.f32 %v3405, %v3690
      %v3699 = vadd.f32 %v3410, %v3695
      %3700 = vrot.lane.b32.xlu0 %v2740, 104
      %v3701 = vpop.permute.xlu0 %3700
      %3702 = vrot.lane.b32.xlu0 %v2745, 104
      %v3703 = vpop.permute.xlu0 %3702
      %3704 = vrot.lane.b32.xlu0 %v2832, 104
      %v3705 = vpop.permute.xlu0 %3704
      %3706 = vrot.lane.b32.xlu0 %v2837, 104
      %v3707 = vpop.permute.xlu0 %3706
      %v3708 = vsel %vm1463, %v3701, 0
      %v3710 = vsel %vm1463, %v3703, 0
      %v3712 = vsel %vm1463, %v3705, 0
      %v3714 = vsel %vm1463, %v3707, 0
      %3716 = vmatprep.subr.mxu0 0.0
      %3717 = vmatpush1.xpose.msra.mxu0 0.0
      %3718 = vmatprep.subr.mxu0 0.0
      %3719 = vmatpush1.xpose.msra.mxu0 0.0
      %3720 = vmatprep.subr.mxu0 0.0
      %3721 = vmatpush1.xpose.msra.mxu0 0.0
      %3722 = vmatprep.subr.mxu0 0.0
      %3723 = vmatpush1.xpose.msra.mxu0 0.0
      %3724 = vmatprep.subr.mxu0 0.0
      %3725 = vmatpush1.xpose.msra.mxu0 0.0
      %3726 = vmatprep.subr.mxu0 0.0
      %3727 = vmatpush1.xpose.msra.mxu0 0.0
      %3728 = vmatprep.subr.mxu0 0.0
      %3729 = vmatpush1.xpose.msra.mxu0 0.0
      %3730 = vmatprep.subr.mxu0 0.0
      %3731 = vmatpush1.xpose.msra.mxu0 0.0
      %3732 = vmatprep.subr.mxu0 0.0
      %3733 = vmatpush1.xpose.msra.mxu0 0.0
      %3734 = vmatprep.subr.mxu0 0.0
      %3735 = vmatpush1.xpose.msra.mxu0 0.0
      %3736 = vmatprep.subr.mxu0 0.0
      %3737 = vmatpush1.xpose.msra.mxu0 0.0
      %3738 = vmatprep.subr.mxu0 0.0
      %3739 = vmatpush1.xpose.msra.mxu0 0.0
      %3740 = vmatprep.subr.mxu0 0.0
      %3741 = vmatpush1.xpose.msra.mxu0 0.0
      %3742 = vmatprep.subr.mxu0 0.0
      %3743 = vmatpush1.xpose.msra.mxu0 0.0
      %3744 = vmatprep.subr.mxu0 0.0
      %3745 = vmatpush1.xpose.msra.mxu0 %v3714
      %3746 = vmatprep.subr.mxu0 0.0
      %3747 = vmatpush1.xpose.msra.mxu0 %v3712
      %3748 = vmatprep.subr.mxu0 0.0
      %3749 = vmatpush2.xpose.msra.mxu0 0.0
      %3750 = vmatprep.subr.mxu0 0.0
      %3751 = vmatpush2.xpose.msra.mxu0 0.0
      %3752 = vmatprep.subr.mxu0 0.0
      %3753 = vmatpush2.xpose.msra.mxu0 0.0
      %3754 = vmatprep.subr.mxu0 0.0
      %3755 = vmatpush2.xpose.msra.mxu0 0.0
      %3756 = vmatprep.subr.mxu0 0.0
      %3757 = vmatpush2.xpose.msra.mxu0 0.0
      %3758 = vmatprep.subr.mxu0 0.0
      %3759 = vmatpush2.xpose.msra.mxu0 0.0
      %3760 = vmatprep.subr.mxu0 0.0
      %3761 = vmatpush2.xpose.msra.mxu0 0.0
      %3762 = vmatprep.subr.mxu0 0.0
      %3763 = vmatpush2.xpose.msra.mxu0 0.0
      %3764 = vmatprep.subr.mxu0 0.0
      %3765 = vmatpush2.xpose.msra.mxu0 0.0
      %3766 = vmatprep.subr.mxu0 0.0
      %3767 = vmatpush2.xpose.msra.mxu0 0.0
      %3768 = vmatprep.subr.mxu0 0.0
      %3769 = vmatpush2.xpose.msra.mxu0 0.0
      %3770 = vmatprep.subr.mxu0 0.0
      %3771 = vmatpush2.xpose.msra.mxu0 0.0
      %3772 = vmatprep.subr.mxu0 0.0
      %3773 = vmatpush2.xpose.msra.mxu0 0.0
      %3774 = vmatprep.subr.mxu0 0.0
      %3775 = vmatpush2.xpose.msra.mxu0 0.0
      %3776 = vmatprep.subr.mxu0 0.0
      %3777 = vmatpush2.xpose.msra.mxu0 0.0
      %3778 = vmatprep.subr.mxu0 0.0
      %3779 = vmatpush2.xpose.msra.mxu0 0.0
      %3780 = vmatprep.mubr.f32.mxu0 0.0
      %3781 = vmatmul.mubr.f32.gmra.mxu0 %v3708
      %v3782 = vpop.f32.mrf.mxu0
      %v3783 = vadd.f32 0.0, %v3782
      %v3784 = vpop.f32.mrf.mxu0
      %3785 = vmatprep.mubr.f32.mxu0 0.0
      %3786 = vmatmul.mubr.f32.gmra.mxu0 %v3710
      %v3787 = vpop.f32.mrf.mxu0
      %v3788 = vadd.f32 0.0, %v3787
      %v3789 = vpop.f32.mrf.mxu0
      %3790 = vdwg.mxu0
      %v3791 = vmul.f32 %v3783, 0.35355338
      %v3792 = vmul.f32 %v3788, 0.35355338
      %v3793 = vadd.f32 %v3791, %v2845
      %v3794 = vadd.f32 %v3792, %v2846
      %v3795 = vsel %vm1551, %v3793, -inf
      %3796 = vmax.xlane.f32.xlu0 %v3795
      %v3797 = vpop.xlane.xlu0 %3796
      %v3798 = vsel %vm1551, %v3794, -inf
      %3799 = vmax.xlane.f32.xlu0 %v3798
      %v3800 = vpop.xlane.xlu0 %3799
      %v3801 = vsub.f32 %v3793, %v3797
      %v3802 = vsub.f32 %v3794, %v3800
      %v3803 = vmul.f32 %v3801, 1.442695
      %v3804 = vpow.pop %v3803
      %v3805 = vmul.f32 %v3802, 1.442695
      %v3806 = vpow.pop %v3805
      %v3807 = vsel %vm1551, %v3804, 0.0
      %3808 = vadd.xlane.f32.xlu0 %v3807
      %v3809 = vpop.xlane.xlu0 %3808
      %v3810 = vsel %vm1551, %v3806, 0.0
      %3811 = vadd.xlane.f32.xlu0 %v3810
      %v3812 = vpop.xlane.xlu0 %3811
      %v3813 = vrcp.pop %v3809
      %v3814 = vmul.f32 %v3804, %v3813
      %v3815 = vrcp.pop %v3812
      %v3816 = vmul.f32 %v3806, %v3815
      %3817 = vrot.lane.b32.xlu0 %v2832, 72
      %v3818 = vpop.permute.xlu0 %3817
      %3819 = vrot.lane.b32.xlu0 %v2837, 72
      %v3820 = vpop.permute.xlu0 %3819
      %v3824 = vsel %vm1551, %v3814, 0
      %v3827 = vsel %vm1551, %v3816, 0
      %3829 = vmatprep.subr.mxu0 0.0
      %3830 = vmatpush1.msra.mxu0 0.0
      %3831 = vmatprep.subr.mxu0 0.0
      %3832 = vmatpush1.msra.mxu0 0.0
      %3833 = vmatprep.subr.mxu0 0.0
      %3834 = vmatpush1.msra.mxu0 0.0
      %3835 = vmatprep.subr.mxu0 0.0
      %3836 = vmatpush1.msra.mxu0 0.0
      %3837 = vmatprep.subr.mxu0 0.0
      %3838 = vmatpush1.msra.mxu0 0.0
      %3839 = vmatprep.subr.mxu0 0.0
      %3840 = vmatpush1.msra.mxu0 0.0
      %3841 = vmatprep.subr.mxu0 0.0
      %3842 = vmatpush1.msra.mxu0 0.0
      %3843 = vmatprep.subr.mxu0 0.0
      %3844 = vmatpush1.msra.mxu0 0.0
      %3845 = vmatprep.subr.mxu0 0.0
      %3846 = vmatpush1.msra.mxu0 0.0
      %3847 = vmatprep.subr.mxu0 0.0
      %3848 = vmatpush1.msra.mxu0 0.0
      %3849 = vmatprep.subr.mxu0 0.0
      %3850 = vmatpush1.msra.mxu0 0.0
      %3851 = vmatprep.subr.mxu0 0.0
      %3852 = vmatpush1.msra.mxu0 0.0
      %3853 = vmatprep.subr.mxu0 0.0
      %3854 = vmatpush1.msra.mxu0 0.0
      %3855 = vmatprep.subr.mxu0 0.0
      %3856 = vmatpush1.msra.mxu0 0.0
      %3857 = vmatprep.subr.mxu0 0.0
      %3858 = vmatpush1.msra.mxu0 %v3820
      %3859 = vmatprep.subr.mxu0 0.0
      %3860 = vmatpush1.msra.mxu0 %v3818
      %3861 = vmatprep.subr.mxu0 0.0
      %3862 = vmatpush2.msra.mxu0 0.0
      %3863 = vmatprep.subr.mxu0 0.0
      %3864 = vmatpush2.msra.mxu0 0.0
      %3865 = vmatprep.subr.mxu0 0.0
      %3866 = vmatpush2.msra.mxu0 0.0
      %3867 = vmatprep.subr.mxu0 0.0
      %3868 = vmatpush2.msra.mxu0 0.0
      %3869 = vmatprep.subr.mxu0 0.0
      %3870 = vmatpush2.msra.mxu0 0.0
      %3871 = vmatprep.subr.mxu0 0.0
      %3872 = vmatpush2.msra.mxu0 0.0
      %3873 = vmatprep.subr.mxu0 0.0
      %3874 = vmatpush2.msra.mxu0 0.0
      %3875 = vmatprep.subr.mxu0 0.0
      %3876 = vmatpush2.msra.mxu0 0.0
      %3877 = vmatprep.subr.mxu0 0.0
      %3878 = vmatpush2.msra.mxu0 0.0
      %3879 = vmatprep.subr.mxu0 0.0
      %3880 = vmatpush2.msra.mxu0 0.0
      %3881 = vmatprep.subr.mxu0 0.0
      %3882 = vmatpush2.msra.mxu0 0.0
      %3883 = vmatprep.subr.mxu0 0.0
      %3884 = vmatpush2.msra.mxu0 0.0
      %3885 = vmatprep.subr.mxu0 0.0
      %3886 = vmatpush2.msra.mxu0 0.0
      %3887 = vmatprep.subr.mxu0 0.0
      %3888 = vmatpush2.msra.mxu0 0.0
      %3889 = vmatprep.subr.mxu0 0.0
      %3890 = vmatpush2.msra.mxu0 0.0
      %3891 = vmatprep.subr.mxu0 0.0
      %3892 = vmatpush2.msra.mxu0 0.0
      %3893 = vmatprep.mubr.f32.mxu0 0.0
      %3894 = vmatmul.mubr.f32.gmra.mxu0 %v3824
      %v3895 = vpop.f32.mrf.mxu0
      %v3896 = vadd.f32 0.0, %v3895
      %v3897 = vpop.f32.mrf.mxu0
      %3898 = vmatprep.mubr.f32.mxu0 0.0
      %3899 = vmatmul.mubr.f32.gmra.mxu0 %v3827
      %v3900 = vpop.f32.mrf.mxu0
      %v3901 = vadd.f32 0.0, %v3900
      %v3902 = vpop.f32.mrf.mxu0
      %3903 = vdwg.mxu0
      %v3905 = vsel %vm1463, %v3896, 0
      %v3908 = vsel %vm1463, %v3901, 0
      %3910 = vmatprep.subr.mxu0 0.0
      %3911 = vmatpush1.msra.mxu0 0.0
      %3912 = vmatprep.subr.mxu0 0.0
      %3913 = vmatpush1.msra.mxu0 0.0
      %3914 = vmatprep.subr.mxu0 0.0
      %3915 = vmatpush1.msra.mxu0 0.0
      %3916 = vmatprep.subr.mxu0 0.0
      %3917 = vmatpush1.msra.mxu0 0.0
      %3918 = vmatprep.subr.mxu0 0.0
      %3919 = vmatpush1.msra.mxu0 0.0
      %3920 = vmatprep.subr.mxu0 0.0
      %3921 = vmatpush1.msra.mxu0 0.0
      %3922 = vmatprep.subr.mxu0 0.0
      %3923 = vmatpush1.msra.mxu0 0.0
      %3924 = vmatprep.subr.mxu0 0.0
      %3925 = vmatpush1.msra.mxu0 0.0
      %3926 = vmatprep.subr.mxu0 0.0
      %3927 = vmatpush1.msra.mxu0 0.0
      %3928 = vmatprep.subr.mxu0 0.0
      %3929 = vmatpush1.msra.mxu0 0.0
      %3930 = vmatprep.subr.mxu0 0.0
      %3931 = vmatpush1.msra.mxu0 0.0
      %3932 = vmatprep.subr.mxu0 0.0
      %3933 = vmatpush1.msra.mxu0 0.0
      %3934 = vmatprep.subr.mxu0 0.0
      %3935 = vmatpush1.msra.mxu0 0.0
      %3936 = vmatprep.subr.mxu0 0.0
      %3937 = vmatpush1.msra.mxu0 0.0
      %3938 = vmatprep.subr.mxu0 0.0
      %3939 = vmatpush1.msra.mxu0 0.0
      %3940 = vmatprep.subr.mxu0 0.0
      %3941 = vmatpush1.msra.mxu0 %v2843
      %3942 = vmatprep.subr.mxu0 0.0
      %3943 = vmatpush2.msra.mxu0 0.0
      %3944 = vmatprep.subr.mxu0 0.0
      %3945 = vmatpush2.msra.mxu0 0.0
      %3946 = vmatprep.subr.mxu0 0.0
      %3947 = vmatpush2.msra.mxu0 0.0
      %3948 = vmatprep.subr.mxu0 0.0
      %3949 = vmatpush2.msra.mxu0 0.0
      %3950 = vmatprep.subr.mxu0 0.0
      %3951 = vmatpush2.msra.mxu0 0.0
      %3952 = vmatprep.subr.mxu0 0.0
      %3953 = vmatpush2.msra.mxu0 0.0
      %3954 = vmatprep.subr.mxu0 0.0
      %3955 = vmatpush2.msra.mxu0 0.0
      %3956 = vmatprep.subr.mxu0 0.0
      %3957 = vmatpush2.msra.mxu0 0.0
      %3958 = vmatprep.subr.mxu0 0.0
      %3959 = vmatpush2.msra.mxu0 0.0
      %3960 = vmatprep.subr.mxu0 0.0
      %3961 = vmatpush2.msra.mxu0 0.0
      %3962 = vmatprep.subr.mxu0 0.0
      %3963 = vmatpush2.msra.mxu0 0.0
      %3964 = vmatprep.subr.mxu0 0.0
      %3965 = vmatpush2.msra.mxu0 0.0
      %3966 = vmatprep.subr.mxu0 0.0
      %3967 = vmatpush2.msra.mxu0 0.0
      %3968 = vmatprep.subr.mxu0 0.0
      %3969 = vmatpush2.msra.mxu0 0.0
      %3970 = vmatprep.subr.mxu0 0.0
      %3971 = vmatpush2.msra.mxu0 0.0
      %3972 = vmatprep.subr.mxu0 0.0
      %3973 = vmatpush2.msra.mxu0 0.0
      %3974 = vmatprep.mubr.f32.mxu0 0.0
      %3975 = vmatmul.mubr.f32.gmra.mxu0 %v3905
      %v3976 = vpop.f32.mrf.mxu0
      %v3977 = vadd.f32 0.0, %v3976
      %v3978 = vpop.f32.mrf.mxu0
      %3979 = vmatprep.mubr.f32.mxu0 0.0
      %3980 = vmatmul.mubr.f32.gmra.mxu0 %v3908
      %v3981 = vpop.f32.mrf.mxu0
      %v3982 = vadd.f32 0.0, %v3981
      %v3983 = vpop.f32.mrf.mxu0
      %3984 = vdwg.mxu0
      %v3985 = vadd.f32 %v3698, %v3977
      %v3986 = vadd.f32 %v3699, %v3982
      %v3988 = vlaneseq
      %v3989 = vshrl.u32 %v3988, 7
      %v3990 = vsub.s32 0, %v3989
      %v3991 = vrot.slane %v2844, %v3990
      %v3993 = vadd.f32 %v3985, %v3991
      %v3994 = vadd.f32 %v3986, %v3991
      %v3995 = vadd.f32 %v2654, %v3993
      %v3996 = vadd.f32 %v2655, %v3994
      %v3997 = vld [vmem:[%s1220] sm:$0x1]
      %v3998 = vld [vmem:[%s1223] sm:$0x1]
      %v3999 = vsel %vm1368, %v3995, 0.0
      %4000 = vadd.xlane.f32.xlu0 %v3999
      %v4001 = vpop.xlane.xlu0 %4000
      %v4002 = vsel %vm1368, %v3996, 0.0
      %4003 = vadd.xlane.f32.xlu0 %v4002
      %v4004 = vpop.xlane.xlu0 %4003
      %v4005 = vmul.f32 %v4001, %v2619
      %v4006 = vmul.f32 %v4004, %v2619
      %v4007 = vsub.f32 %v3995, %v4005
      %v4008 = vsub.f32 %v3996, %v4006
      %v4009 = vmul.f32 %v4007, %v4007
      %v4010 = vmul.f32 %v4008, %v4008
      %v4011 = vsel %vm1368, %v4009, 0.0
      %4012 = vadd.xlane.f32.xlu0 %v4011
      %v4013 = vpop.xlane.xlu0 %4012
      %v4014 = vsel %vm1368, %v4010, 0.0
      %4015 = vadd.xlane.f32.xlu0 %v4014
      %v4016 = vpop.xlane.xlu0 %4015
      %v4017 = vmul.f32 %v4013, %v2619
      %v4018 = vmul.f32 %v4016, %v2619
      %v4019 = vadd.f32 %v4017, 1e-05
      %v4020 = vadd.f32 %v4018, 1e-05
      %v4021 = vrsqrt.pop %v4019
      %v4022 = vrsqrt.pop %v4020
      %v4023 = vmul.f32 %v4007, %v4021
      %v4024 = vmul.f32 %v4008, %v4022
      %v4026 = vlaneseq
      %v4027 = vshrl.u32 %v4026, 7
      %v4028 = vsub.s32 0, %v4027
      %v4029 = vrot.slane %v3997, %v4028
      %v4031 = vmul.f32 %v4023, %v4029
      %v4032 = vmul.f32 %v4024, %v4029
      %v4034 = vlaneseq
      %v4035 = vshrl.u32 %v4034, 7
      %v4036 = vsub.s32 0, %v4035
      %v4037 = vrot.slane %v3998, %v4036
      %v4039 = vadd.f32 %v4031, %v4037
      %v4040 = vadd.f32 %v4032, %v4037
      %v4041 = vld [vmem:[%s1228] sm:$0xff]
      %v4042 = vld [vmem:[%s1228 + $0x8] sm:$0xff]
      %v4043 = vld [vmem:[%s1228 + $0x10] sm:$0xff]
      %v4044 = vld [vmem:[%s1228 + $0x18] sm:$0xff]
      %v4045 = vld [vmem:[%s1231] sm:$0x1]
      %v4047 = vlaneseq
      %v4048 = vshrl.u32 %v4047, 7
      %v4049 = vsub.s32 0, %v4048
      %v4050 = vrot.slane %v4045, %v4049
      %v4053 = vsel %vm1368, %v4039, 0
      %v4056 = vsel %vm1368, %v4040, 0
      %4058 = vmatprep.subr.mxu0 0.0
      %4059 = vmatpush1.msra.mxu0 0.0
      %4060 = vmatprep.subr.mxu0 0.0
      %4061 = vmatpush1.msra.mxu0 0.0
      %4062 = vmatprep.subr.mxu0 0.0
      %4063 = vmatpush1.msra.mxu0 0.0
      %4064 = vmatprep.subr.mxu0 0.0
      %4065 = vmatpush1.msra.mxu0 0.0
      %4066 = vmatprep.subr.mxu0 0.0
      %4067 = vmatpush1.msra.mxu0 0.0
      %4068 = vmatprep.subr.mxu0 0.0
      %4069 = vmatpush1.msra.mxu0 0.0
      %4070 = vmatprep.subr.mxu0 0.0
      %4071 = vmatpush1.msra.mxu0 0.0
      %4072 = vmatprep.subr.mxu0 0.0
      %4073 = vmatpush1.msra.mxu0 0.0
      %4074 = vmatprep.subr.mxu0 0.0
      %4075 = vmatpush1.msra.mxu0 0.0
      %4076 = vmatprep.subr.mxu0 0.0
      %4077 = vmatpush1.msra.mxu0 0.0
      %4078 = vmatprep.subr.mxu0 0.0
      %4079 = vmatpush1.msra.mxu0 0.0
      %4080 = vmatprep.subr.mxu0 0.0
      %4081 = vmatpush1.msra.mxu0 0.0
      %4082 = vmatprep.subr.mxu0 0.0
      %4083 = vmatpush1.msra.mxu0 %v4044
      %4084 = vmatprep.subr.mxu0 0.0
      %4085 = vmatpush1.msra.mxu0 %v4043
      %4086 = vmatprep.subr.mxu0 0.0
      %4087 = vmatpush1.msra.mxu0 %v4042
      %4088 = vmatprep.subr.mxu0 0.0
      %4089 = vmatpush1.msra.mxu0 %v4041
      %4090 = vmatprep.subr.mxu0 0.0
      %4091 = vmatpush2.msra.mxu0 0.0
      %4092 = vmatprep.subr.mxu0 0.0
      %4093 = vmatpush2.msra.mxu0 0.0
      %4094 = vmatprep.subr.mxu0 0.0
      %4095 = vmatpush2.msra.mxu0 0.0
      %4096 = vmatprep.subr.mxu0 0.0
      %4097 = vmatpush2.msra.mxu0 0.0
      %4098 = vmatprep.subr.mxu0 0.0
      %4099 = vmatpush2.msra.mxu0 0.0
      %4100 = vmatprep.subr.mxu0 0.0
      %4101 = vmatpush2.msra.mxu0 0.0
      %4102 = vmatprep.subr.mxu0 0.0
      %4103 = vmatpush2.msra.mxu0 0.0
      %4104 = vmatprep.subr.mxu0 0.0
      %4105 = vmatpush2.msra.mxu0 0.0
      %4106 = vmatprep.subr.mxu0 0.0
      %4107 = vmatpush2.msra.mxu0 0.0
      %4108 = vmatprep.subr.mxu0 0.0
      %4109 = vmatpush2.msra.mxu0 0.0
      %4110 = vmatprep.subr.mxu0 0.0
      %4111 = vmatpush2.msra.mxu0 0.0
      %4112 = vmatprep.subr.mxu0 0.0
      %4113 = vmatpush2.msra.mxu0 0.0
      %4114 = vmatprep.subr.mxu0 0.0
      %4115 = vmatpush2.msra.mxu0 0.0
      %4116 = vmatprep.subr.mxu0 0.0
      %4117 = vmatpush2.msra.mxu0 0.0
      %4118 = vmatprep.subr.mxu0 0.0
      %4119 = vmatpush2.msra.mxu0 0.0
      %4120 = vmatprep.subr.mxu0 0.0
      %4121 = vmatpush2.msra.mxu0 0.0
      %4122 = vmatprep.mubr.f32.mxu0 0.0
      %4123 = vmatmul.mubr.f32.gmra.mxu0 %v4053
      %v4124 = vpop.f32.mrf.mxu0
      %v4125 = vadd.f32 %v4050, %v4124
      %v4126 = vpop.f32.mrf.mxu0
      %4127 = vmatprep.mubr.f32.mxu0 0.0
      %4128 = vmatmul.mubr.f32.gmra.mxu0 %v4056
      %v4129 = vpop.f32.mrf.mxu0
      %v4130 = vadd.f32 %v4050, %v4129
      %v4131 = vpop.f32.mrf.mxu0
      %4132 = vdwg.mxu0
      %v4133 = vmax.f32 %v4125, 0.0
      %v4134 = vmax.f32 %v4130, 0.0
      %v4135 = vld [vmem:[%s1236] sm:$0xff]
      %v4136 = vld [vmem:[%s1236 + $0x8] sm:$0xff]
      %v4137 = vld [vmem:[%s1236 + $0x10] sm:$0xff]
      %v4138 = vld [vmem:[%s1236 + $0x18] sm:$0xff]
      %v4139 = vld [vmem:[%s1236 + $0x20] sm:$0xff]
      %v4140 = vld [vmem:[%s1236 + $0x28] sm:$0xff]
      %v4141 = vld [vmem:[%s1236 + $0x30] sm:$0xff]
      %v4142 = vld [vmem:[%s1236 + $0x38] sm:$0xff]
      %v4143 = vld [vmem:[%s1236 + $0x40] sm:$0xff]
      %v4144 = vld [vmem:[%s1236 + $0x48] sm:$0xff]
      %v4145 = vld [vmem:[%s1236 + $0x50] sm:$0xff]
      %v4146 = vld [vmem:[%s1236 + $0x58] sm:$0xff]
      %v4147 = vld [vmem:[%s1236 + $0x60] sm:$0xff]
      %v4148 = vld [vmem:[%s1236 + $0x68] sm:$0xff]
      %v4149 = vld [vmem:[%s1236 + $0x70] sm:$0xff]
      %v4150 = vld [vmem:[%s1236 + $0x78] sm:$0xff]
      %v4151 = vld [vmem:[%s1239] sm:$0x1]
      %v4153 = vlaneseq
      %v4154 = vshrl.u32 %v4153, 7
      %v4155 = vsub.s32 0, %v4154
      %v4156 = vrot.slane %v4151, %v4155
      %4158 = vmatprep.subr.mxu0 0.0
      %4159 = vmatpush1.msra.mxu0 %v4150
      %4160 = vmatprep.subr.mxu0 0.0
      %4161 = vmatpush1.msra.mxu0 %v4149
      %4162 = vmatprep.subr.mxu0 0.0
      %4163 = vmatpush1.msra.mxu0 %v4148
      %4164 = vmatprep.subr.mxu0 0.0
      %4165 = vmatpush1.msra.mxu0 %v4147
      %4166 = vmatprep.subr.mxu0 0.0
      %4167 = vmatpush1.msra.mxu0 %v4146
      %4168 = vmatprep.subr.mxu0 0.0
      %4169 = vmatpush1.msra.mxu0 %v4145
      %4170 = vmatprep.subr.mxu0 0.0
      %4171 = vmatpush1.msra.mxu0 %v4144
      %4172 = vmatprep.subr.mxu0 0.0
      %4173 = vmatpush1.msra.mxu0 %v4143
      %4174 = vmatprep.subr.mxu0 0.0
      %4175 = vmatpush1.msra.mxu0 %v4142
      %4176 = vmatprep.subr.mxu0 0.0
      %4177 = vmatpush1.msra.mxu0 %v4141
      %4178 = vmatprep.subr.mxu0 0.0
      %4179 = vmatpush1.msra.mxu0 %v4140
      %4180 = vmatprep.subr.mxu0 0.0
      %4181 = vmatpush1.msra.mxu0 %v4139
      %4182 = vmatprep.subr.mxu0 0.0
      %4183 = vmatpush1.msra.mxu0 %v4138
      %4184 = vmatprep.subr.mxu0 0.0
      %4185 = vmatpush1.msra.mxu0 %v4137
      %4186 = vmatprep.subr.mxu0 0.0
      %4187 = vmatpush1.msra.mxu0 %v4136
      %4188 = vmatprep.subr.mxu0 0.0
      %4189 = vmatpush1.msra.mxu0 %v4135
      %4190 = vmatprep.subr.mxu0 0.0
      %4191 = vmatpush2.msra.mxu0 0.0
      %4192 = vmatprep.subr.mxu0 0.0
      %4193 = vmatpush2.msra.mxu0 0.0
      %4194 = vmatprep.subr.mxu0 0.0
      %4195 = vmatpush2.msra.mxu0 0.0
      %4196 = vmatprep.subr.mxu0 0.0
      %4197 = vmatpush2.msra.mxu0 0.0
      %4198 = vmatprep.subr.mxu0 0.0
      %4199 = vmatpush2.msra.mxu0 0.0
      %4200 = vmatprep.subr.mxu0 0.0
      %4201 = vmatpush2.msra.mxu0 0.0
      %4202 = vmatprep.subr.mxu0 0.0
      %4203 = vmatpush2.msra.mxu0 0.0
      %4204 = vmatprep.subr.mxu0 0.0
      %4205 = vmatpush2.msra.mxu0 0.0
      %4206 = vmatprep.subr.mxu0 0.0
      %4207 = vmatpush2.msra.mxu0 0.0
      %4208 = vmatprep.subr.mxu0 0.0
      %4209 = vmatpush2.msra.mxu0 0.0
      %4210 = vmatprep.subr.mxu0 0.0
      %4211 = vmatpush2.msra.mxu0 0.0
      %4212 = vmatprep.subr.mxu0 0.0
      %4213 = vmatpush2.msra.mxu0 0.0
      %4214 = vmatprep.subr.mxu0 0.0
      %4215 = vmatpush2.msra.mxu0 0.0
      %4216 = vmatprep.subr.mxu0 0.0
      %4217 = vmatpush2.msra.mxu0 0.0
      %4218 = vmatprep.subr.mxu0 0.0
      %4219 = vmatpush2.msra.mxu0 0.0
      %4220 = vmatprep.subr.mxu0 0.0
      %4221 = vmatpush2.msra.mxu0 0.0
      %4222 = vmatprep.mubr.f32.mxu0 0.0
      %4223 = vmatmul.mubr.f32.gmra.mxu0 %v4133
      %v4224 = vpop.f32.mrf.mxu0
      %v4225 = vadd.f32 %v4156, %v4224
      %v4226 = vpop.f32.mrf.mxu0
      %4227 = vmatprep.mubr.f32.mxu0 0.0
      %4228 = vmatmul.mubr.f32.gmra.mxu0 %v4134
      %v4229 = vpop.f32.mrf.mxu0
      %v4230 = vadd.f32 %v4156, %v4229
      %v4231 = vpop.f32.mrf.mxu0
      %4232 = vdwg.mxu0
      %v4233 = vadd.f32 %v4039, %v4225
      %v4234 = vadd.f32 %v4040, %v4230
      %v4235 = vld [vmem:[%s1242] sm:$0x1]
      %v4236 = vld [vmem:[%s1245] sm:$0x1]
      %v4237 = vsel %vm1368, %v4233, 0.0
      %4238 = vadd.xlane.f32.xlu0 %v4237
      %v4239 = vpop.xlane.xlu0 %4238
      %v4240 = vsel %vm1368, %v4234, 0.0
      %4241 = vadd.xlane.f32.xlu0 %v4240
      %v4242 = vpop.xlane.xlu0 %4241
      %v4243 = vmul.f32 %v4239, %v2619
      %v4244 = vmul.f32 %v4242, %v2619
      %v4245 = vsub.f32 %v4233, %v4243
      %v4246 = vsub.f32 %v4234, %v4244
      %v4247 = vmul.f32 %v4245, %v4245
      %v4248 = vmul.f32 %v4246, %v4246
      %v4249 = vsel %vm1368, %v4247, 0.0
      %4250 = vadd.xlane.f32.xlu0 %v4249
      %v4251 = vpop.xlane.xlu0 %4250
      %v4252 = vsel %vm1368, %v4248, 0.0
      %4253 = vadd.xlane.f32.xlu0 %v4252
      %v4254 = vpop.xlane.xlu0 %4253
      %v4255 = vmul.f32 %v4251, %v2619
      %v4256 = vmul.f32 %v4254, %v2619
      %v4257 = vadd.f32 %v4255, 1e-05
      %v4258 = vadd.f32 %v4256, 1e-05
      %v4259 = vrsqrt.pop %v4257
      %v4260 = vrsqrt.pop %v4258
      %v4261 = vmul.f32 %v4245, %v4259
      %v4262 = vmul.f32 %v4246, %v4260
      %v4264 = vlaneseq
      %v4265 = vshrl.u32 %v4264, 7
      %v4266 = vsub.s32 0, %v4265
      %v4267 = vrot.slane %v4235, %v4266
      %v4269 = vmul.f32 %v4261, %v4267
      %v4270 = vmul.f32 %v4262, %v4267
      %v4272 = vlaneseq
      %v4273 = vshrl.u32 %v4272, 7
      %v4274 = vsub.s32 0, %v4273
      %v4275 = vrot.slane %v4236, %v4274
      %v4277 = vadd.f32 %v4269, %v4275
      %v4278 = vadd.f32 %v4270, %v4275
      %4279 = vst.msk [vmem:[#allocation2] sm:$0xff] %vm1368, %v4277
      %4280 = vst.msk [vmem:[#allocation2 + $0x8] sm:$0xff] %vm1368, %v4278
      %p4281 = scmp.eq.s32.totalorder %s74, 1
      // Predicated region
      $region149: #{transformer_forward.3} parent=143 // pred_check
        %p4282 = pneg %p4281
      $region150: #{transformer_forward.3} parent=143 // pred_check_branch
        %4284 = sbr.rel (%p4282) target = $region152
      $region151: #{transformer_forward.3} parent=143 // pred_region
        %v4285 = vld [vmem:[%s55] sm:$0xff]
        %v4286 = vld [vmem:[%s55 + $0x8] sm:$0xff]
        %v4287 = vld [vmem:[%s55 + $0x10] sm:$0xff]
        %v4288 = vld [vmem:[%s55 + $0x18] sm:$0xff]
        %v4289 = vld [vmem:[%s57] sm:$0x1]
        %v4291 = vlaneseq
        %v4292 = vshrl.u32 %v4291, 7
        %v4293 = vsub.s32 0, %v4292
        %v4294 = vrot.slane %v4289, %v4293
        %v4297 = vsel %vm1368, %v4277, 0
        %v4300 = vsel %vm1368, %v4278, 0
        %4302 = vmatprep.subr.mxu0 0.0
        %4303 = vmatpush1.msra.mxu0 0.0
        %4304 = vmatprep.subr.mxu0 0.0
        %4305 = vmatpush1.msra.mxu0 0.0
        %4306 = vmatprep.subr.mxu0 0.0
        %4307 = vmatpush1.msra.mxu0 0.0
        %4308 = vmatprep.subr.mxu0 0.0
        %4309 = vmatpush1.msra.mxu0 0.0
        %4310 = vmatprep.subr.mxu0 0.0
        %4311 = vmatpush1.msra.mxu0 0.0
        %4312 = vmatprep.subr.mxu0 0.0
        %4313 = vmatpush1.msra.mxu0 0.0
        %4314 = vmatprep.subr.mxu0 0.0
        %4315 = vmatpush1.msra.mxu0 0.0
        %4316 = vmatprep.subr.mxu0 0.0
        %4317 = vmatpush1.msra.mxu0 0.0
        %4318 = vmatprep.subr.mxu0 0.0
        %4319 = vmatpush1.msra.mxu0 0.0
        %4320 = vmatprep.subr.mxu0 0.0
        %4321 = vmatpush1.msra.mxu0 0.0
        %4322 = vmatprep.subr.mxu0 0.0
        %4323 = vmatpush1.msra.mxu0 0.0
        %4324 = vmatprep.subr.mxu0 0.0
        %4325 = vmatpush1.msra.mxu0 0.0
        %4326 = vmatprep.subr.mxu0 0.0
        %4327 = vmatpush1.msra.mxu0 %v4288
        %4328 = vmatprep.subr.mxu0 0.0
        %4329 = vmatpush1.msra.mxu0 %v4287
        %4330 = vmatprep.subr.mxu0 0.0
        %4331 = vmatpush1.msra.mxu0 %v4286
        %4332 = vmatprep.subr.mxu0 0.0
        %4333 = vmatpush1.msra.mxu0 %v4285
        %4334 = vmatprep.subr.mxu0 0.0
        %4335 = vmatpush2.msra.mxu0 0.0
        %4336 = vmatprep.subr.mxu0 0.0
        %4337 = vmatpush2.msra.mxu0 0.0
        %4338 = vmatprep.subr.mxu0 0.0
        %4339 = vmatpush2.msra.mxu0 0.0
        %4340 = vmatprep.subr.mxu0 0.0
        %4341 = vmatpush2.msra.mxu0 0.0
        %4342 = vmatprep.subr.mxu0 0.0
        %4343 = vmatpush2.msra.mxu0 0.0
        %4344 = vmatprep.subr.mxu0 0.0
        %4345 = vmatpush2.msra.mxu0 0.0
        %4346 = vmatprep.subr.mxu0 0.0
        %4347 = vmatpush2.msra.mxu0 0.0
        %4348 = vmatprep.subr.mxu0 0.0
        %4349 = vmatpush2.msra.mxu0 0.0
        %4350 = vmatprep.subr.mxu0 0.0
        %4351 = vmatpush2.msra.mxu0 0.0
        %4352 = vmatprep.subr.mxu0 0.0
        %4353 = vmatpush2.msra.mxu0 0.0
        %4354 = vmatprep.subr.mxu0 0.0
        %4355 = vmatpush2.msra.mxu0 0.0
        %4356 = vmatprep.subr.mxu0 0.0
        %4357 = vmatpush2.msra.mxu0 0.0
        %4358 = vmatprep.subr.mxu0 0.0
        %4359 = vmatpush2.msra.mxu0 0.0
        %4360 = vmatprep.subr.mxu0 0.0
        %4361 = vmatpush2.msra.mxu0 0.0
        %4362 = vmatprep.subr.mxu0 0.0
        %4363 = vmatpush2.msra.mxu0 0.0
        %4364 = vmatprep.subr.mxu0 0.0
        %4365 = vmatpush2.msra.mxu0 0.0
        %4366 = vmatprep.mubr.f32.mxu0 0.0
        %4367 = vmatmul.mubr.f32.gmra.mxu0 %v4297
        %v4368 = vpop.f32.mrf.mxu0
        %v4369 = vadd.f32 %v4294, %v4368
        %v4370 = vpop.f32.mrf.mxu0
        %4371 = vmatprep.mubr.f32.mxu0 0.0
        %4372 = vmatmul.mubr.f32.gmra.mxu0 %v4300
        %v4373 = vpop.f32.mrf.mxu0
        %v4374 = vadd.f32 %v4294, %v4373
        %v4375 = vpop.f32.mrf.mxu0
        %4376 = vdwg.mxu0
        %v4377 = vmax.f32 %v4369, 0.0
        %v4378 = vmax.f32 %v4374, 0.0
        %v4379 = vld [vmem:[%s59] sm:$0xff]
        %v4380 = vld [vmem:[%s59 + $0x8] sm:$0xff]
        %v4381 = vld [vmem:[%s59 + $0x10] sm:$0xff]
        %v4382 = vld [vmem:[%s59 + $0x18] sm:$0xff]
        %v4383 = vld [vmem:[%s59 + $0x20] sm:$0xff]
        %v4384 = vld [vmem:[%s59 + $0x28] sm:$0xff]
        %v4385 = vld [vmem:[%s59 + $0x30] sm:$0xff]
        %v4386 = vld [vmem:[%s59 + $0x38] sm:$0xff]
        %v4387 = vld [vmem:[%s61] sm:$0x1]
        %v4389 = vlaneseq
        %v4390 = vshrl.u32 %v4389, 7
        %v4391 = vsub.s32 0, %v4390
        %v4392 = vrot.slane %v4387, %v4391
        %vm4394 = vcmask 523264
        %v4396 = vsel %vm4394, %v4377, 0
        %v4399 = vsel %vm4394, %v4378, 0
        %4401 = vmatprep.subr.mxu0 0.0
        %4402 = vmatpush1.msra.mxu0 0.0
        %4403 = vmatprep.subr.mxu0 0.0
        %4404 = vmatpush1.msra.mxu0 0.0
        %4405 = vmatprep.subr.mxu0 0.0
        %4406 = vmatpush1.msra.mxu0 0.0
        %4407 = vmatprep.subr.mxu0 0.0
        %4408 = vmatpush1.msra.mxu0 0.0
        %4409 = vmatprep.subr.mxu0 0.0
        %4410 = vmatpush1.msra.mxu0 0.0
        %4411 = vmatprep.subr.mxu0 0.0
        %4412 = vmatpush1.msra.mxu0 0.0
        %4413 = vmatprep.subr.mxu0 0.0
        %4414 = vmatpush1.msra.mxu0 0.0
        %4415 = vmatprep.subr.mxu0 0.0
        %4416 = vmatpush1.msra.mxu0 0.0
        %4417 = vmatprep.subr.mxu0 0.0
        %4418 = vmatpush1.msra.mxu0 %v4386
        %4419 = vmatprep.subr.mxu0 0.0
        %4420 = vmatpush1.msra.mxu0 %v4385
        %4421 = vmatprep.subr.mxu0 0.0
        %4422 = vmatpush1.msra.mxu0 %v4384
        %4423 = vmatprep.subr.mxu0 0.0
        %4424 = vmatpush1.msra.mxu0 %v4383
        %4425 = vmatprep.subr.mxu0 0.0
        %4426 = vmatpush1.msra.mxu0 %v4382
        %4427 = vmatprep.subr.mxu0 0.0
        %4428 = vmatpush1.msra.mxu0 %v4381
        %4429 = vmatprep.subr.mxu0 0.0
        %4430 = vmatpush1.msra.mxu0 %v4380
        %4431 = vmatprep.subr.mxu0 0.0
        %4432 = vmatpush1.msra.mxu0 %v4379
        %4433 = vmatprep.subr.mxu0 0.0
        %4434 = vmatpush2.msra.mxu0 0.0
        %4435 = vmatprep.subr.mxu0 0.0
        %4436 = vmatpush2.msra.mxu0 0.0
        %4437 = vmatprep.subr.mxu0 0.0
        %4438 = vmatpush2.msra.mxu0 0.0
        %4439 = vmatprep.subr.mxu0 0.0
        %4440 = vmatpush2.msra.mxu0 0.0
        %4441 = vmatprep.subr.mxu0 0.0
        %4442 = vmatpush2.msra.mxu0 0.0
        %4443 = vmatprep.subr.mxu0 0.0
        %4444 = vmatpush2.msra.mxu0 0.0
        %4445 = vmatprep.subr.mxu0 0.0
        %4446 = vmatpush2.msra.mxu0 0.0
        %4447 = vmatprep.subr.mxu0 0.0
        %4448 = vmatpush2.msra.mxu0 0.0
        %4449 = vmatprep.subr.mxu0 0.0
        %4450 = vmatpush2.msra.mxu0 0.0
        %4451 = vmatprep.subr.mxu0 0.0
        %4452 = vmatpush2.msra.mxu0 0.0
        %4453 = vmatprep.subr.mxu0 0.0
        %4454 = vmatpush2.msra.mxu0 0.0
        %4455 = vmatprep.subr.mxu0 0.0
        %4456 = vmatpush2.msra.mxu0 0.0
        %4457 = vmatprep.subr.mxu0 0.0
        %4458 = vmatpush2.msra.mxu0 0.0
        %4459 = vmatprep.subr.mxu0 0.0
        %4460 = vmatpush2.msra.mxu0 0.0
        %4461 = vmatprep.subr.mxu0 0.0
        %4462 = vmatpush2.msra.mxu0 0.0
        %4463 = vmatprep.subr.mxu0 0.0
        %4464 = vmatpush2.msra.mxu0 0.0
        %4465 = vmatprep.mubr.f32.mxu0 0.0
        %4466 = vmatmul.mubr.f32.gmra.mxu0 %v4396
        %v4467 = vpop.f32.mrf.mxu0
        %v4468 = vadd.f32 %v4392, %v4467
        %v4469 = vpop.f32.mrf.mxu0
        %4470 = vmatprep.mubr.f32.mxu0 0.0
        %4471 = vmatmul.mubr.f32.gmra.mxu0 %v4399
        %v4472 = vpop.f32.mrf.mxu0
        %v4473 = vadd.f32 %v4392, %v4472
        %v4474 = vpop.f32.mrf.mxu0
        %4475 = vdwg.mxu0
        %vm4476 = vcmask 31744
        %4477 = vst.msk [vmem:[%s63] sm:$0xff] %vm4476, %v4468
        %4478 = vst.msk [vmem:[%s63 + $0x8] sm:$0xff] %vm4476, %v4473
      $region152: #{transformer_forward.3} parent=143 // pred_fallthru
        _
      // Predicated region
      $region153: #{transformer_forward.3} parent=143 // pred_check
        %p4479 = pneg %p838
      $region154: #{transformer_forward.3} parent=143 // pred_check_branch
        %4481 = sbr.rel (%p4479) target = $region156
      $region155: #{transformer_forward.3} parent=143 // pred_region
        _
      $region156: #{transformer_forward.3} parent=143 // pred_fallthru
        _
      // Predicated region
      $region157: #{transformer_forward.3} parent=143 // pred_check
        %p4482 = pneg %p838
      $region158: #{transformer_forward.3} parent=143 // pred_check_branch
        %4484 = sbr.rel (%p4482) target = $region160
      $region159: #{transformer_forward.3} parent=143 // pred_region
        _
      $region160: #{transformer_forward.3} parent=143 // pred_fallthru
        _
    $region144: #{transformer_forward.3} parent=5 // pred_fallthru
      _
    %p4485 = scmp.le.s32.totalorder 2, %s69
    // Predicated region
    $region161: #{transformer_forward.3} parent=5 // pred_check
      %p4486 = pneg %p4485
    $region162: #{transformer_forward.3} parent=5 // pred_check_branch
      %4488 = sbr.rel (%p4486) target = $region164
    $region163: #{transformer_forward.3} parent=5 // pred_region
      %s4489 = ssub.s32 %s69, 2
    $region164: #{transformer_forward.3} parent=5 // pred_fallthru
      _
  $region6: #{transformer_forward.3} parent=0 // loop_footer
    %s73 = sadd.s32 1, %s69
  $region7: #{transformer_forward.3} parent=0 // loop_footer_branch
    %68 = sbr.rel target = $region3
  $region8: #{transformer_forward.3} parent=0 // loop_exit
    _

</llo_original>
